<compile_context>
chip_gen: v6e
topology: v6e:2x2x1
jax: 0.10.0
libtpu: 0.0.40
codegen_flags: <defaults>
</compile_context>

<pallas_src>
import jax
import jax.numpy as jnp
import numpy as np
from jax.experimental import pallas as pl
from jax.experimental.pallas import tpu as pltpu

_KSIZE = 6
_STRIDE = 2
_CONV_DEFS = [(3, 16), (16, 32), (32, 64), (64, 128)]   # (C_in, C_out)
# Valid sequence lengths per stage: 476 -> 236 -> 116 -> 56 -> 26 (matches Linear(128*26, .))
_L = (476, 236, 116, 56, 26)
# Per-batch physical row pitch of the batch-folded activation buffers.  Each stage halves
# the pitch (240 -> 120 -> 60 -> 30), so a single stride-2 slice over the WHOLE folded
# buffer lands every batch's conv windows in its own contiguous per-batch chunk; the few
# slack rows (pitch - valid_len <= 4) are never consumed by any valid output row.
_P = (240, 120, 60, 30)
_PAD_ROWS = 8            # trailing pad rows so the k=5 strided tap reads stay in-bounds


# ------------------------------ fused kernel ------------------------------- #
def _fused_kernel(x1_ref, x2_ref, c1_w, c2_w, c3_w, c4_w, il1_hbm, b_ref, t_ref,
                  o_ref, a1, a2, a3, a4, il1_vmem, il1_sem):
    batch = x2_ref.shape[0]

    # Kick off the 1.7 MiB image_linear weight DMA immediately; it overlaps with the
    # whole conv stack and is only waited on right before the image_linear contraction.
    il1_copy = pltpu.make_async_copy(il1_hbm, il1_vmem, il1_sem)
    il1_copy.start()

    # Zero the slack tail rows so no uninitialised VMEM is ever read (values computed
    # from them are discarded anyway; this just keeps runs deterministic).
    a2[pl.ds(batch * _P[1], _PAD_ROWS), :] = jnp.zeros((_PAD_ROWS, a2.shape[1]), jnp.float32)
    a3[pl.ds(batch * _P[2], _PAD_ROWS), :] = jnp.zeros((_PAD_ROWS, a3.shape[1]), jnp.float32)

    # ---- conv1: the 6 taps were pre-concatenated along lanes by the wrapper (im2col),
    # so the whole first conv is a single (B*240+8, 18) x (18, 16) matmul. ----
    a1[...] = (jnp.dot(x1_ref[...], c1_w[...], preferred_element_type=jnp.float32)
               + b_ref[pl.ds(0, 1), pl.ds(0, 16)])

    # ---- conv2..conv4: stride-2 Conv1d = 6 shifted strided-slice loads, one matmul per
    # tap, accumulated directly at the output row count for the WHOLE batch
    # (no per-batch Python loop, no even-row selection matmul). ----
    def conv(x_ref, w_ref, bias, out_ref, n_rows):
        acc = jnp.dot(x_ref[pl.ds(0, n_rows, stride=_STRIDE), :], w_ref[0],
                      preferred_element_type=jnp.float32)
        for k in range(1, _KSIZE):
            acc = acc + jnp.dot(x_ref[pl.ds(k, n_rows, stride=_STRIDE), :], w_ref[k],
                                preferred_element_type=jnp.float32)
        out_ref[pl.ds(0, n_rows), :] = acc + bias

    conv(a1, c2_w, b_ref[pl.ds(1, 1), pl.ds(0, 32)], a2, batch * _P[1])
    conv(a2, c3_w, b_ref[pl.ds(2, 1), pl.ds(0, 64)], a3, batch * _P[2])
    conv(a3, c4_w, b_ref[pl.ds(3, 1), pl.ds(0, 128)], a4, batch * _P[3])

    # TODO(synk): nn.Dropout(0.5) omitted — identity in eval/inference mode.

    # ---- image_linear: Linear(128*26 -> 128) + ReLU, Linear(128 -> 10) + ReLU.
    # torch.flatten's channel-major order is folded into il1_w's (pos, chan, out) layout.
    il1_copy.wait()
    acc = jnp.zeros((batch, 128), jnp.float32)
    for l in range(_L[4]):
        rows = a4[pl.ds(l, batch, stride=_P[3]), :]        # row b*30 + l for every batch b
        acc = acc + jnp.dot(rows, il1_vmem[l], preferred_element_type=jnp.float32)
    h1 = jnp.maximum(acc + b_ref[pl.ds(4, 1), :], 0.0)
    il2_w = t_ref[pl.ds(0, 128), pl.ds(0, 10)]
    h2 = jnp.maximum(jnp.dot(h1, il2_w, preferred_element_type=jnp.float32)
                     + b_ref[pl.ds(5, 1), pl.ds(0, 10)], 0.0)

    # ---- numeric_features_: Linear(10 -> 5) + ReLU, Linear(5 -> 5) + ReLU. ----
    nf1_w = t_ref[pl.ds(128, 10), pl.ds(0, 5)]
    nf2_w = t_ref[pl.ds(138, 5), pl.ds(0, 5)]
    n1 = jnp.maximum(jnp.dot(x2_ref[...], nf1_w, preferred_element_type=jnp.float32)
                     + b_ref[pl.ds(6, 1), pl.ds(0, 5)], 0.0)
    n2 = jnp.maximum(jnp.dot(n1, nf2_w, preferred_element_type=jnp.float32)
                     + b_ref[pl.ds(7, 1), pl.ds(0, 5)], 0.0)

    # ---- combined_featuers_: Linear(15 -> 1) + Sigmoid; the concat is folded into two
    # partial matmuls (weight rows [0:10] hit the image path, [10:15] the numeric path).
    cf_img = t_ref[pl.ds(143, 10), pl.ds(0, 1)]
    cf_num = t_ref[pl.ds(153, 5), pl.ds(0, 1)]
    logit = (jnp.dot(h2, cf_img, preferred_element_type=jnp.float32)
             + jnp.dot(n2, cf_num, preferred_element_type=jnp.float32)
             + b_ref[pl.ds(8, 1), pl.ds(0, 1)])
    pos = 1.0 / (1.0 + jnp.exp(-jnp.abs(logit)))           # numerically-stable sigmoid
    o_ref[...] = jnp.where(logit >= 0, pos, 1.0 - pos)


# --------------------------------- wrapper --------------------------------- #
def _full_spec(shape):
    zeros = (0,) * len(shape)
    return pl.BlockSpec(tuple(shape), lambda: zeros)


def forward(kparams, x1, x2):
    """x1: (B, 3, 476) NCW (PyTorch layout), x2: (B, 10)  ->  (B, 1)."""
    batch = x1.shape[0]
    # --- input layout prep (layout plumbing only, no model FLOPs hoisted) ---
    # im2col for conv1 so the first conv is one K=18 matmul inside the kernel:
    #   folded row b*240 + l, lane k*3 + i   <-   x1[b, i, 2l + k]
    l1 = _L[1]
    idx = _STRIDE * jnp.arange(l1)[:, None] + jnp.arange(_KSIZE)[None, :]      # (236, 6)
    patches = jnp.transpose(x1[:, :, idx], (0, 2, 3, 1)).reshape(batch, l1, _KSIZE * 3)
    patches = jnp.pad(patches, ((0, 0), (0, _P[0] - l1), (0, 0)))              # (B, 240, 18)
    x1_fold = jnp.pad(patches.reshape(batch * _P[0], _KSIZE * 3),
                      ((0, _PAD_ROWS), (0, 0)))                                # (B*240+8, 18)

    args = (x1_fold, x2,
            kparams["c1_w"], kparams["c2_w"], kparams["c3_w"], kparams["c4_w"],
            kparams["il1_w"], kparams["biases"], kparams["tail_w"])
    in_specs = [
        _full_spec(x1_fold.shape), _full_spec(x2.shape),
        _full_spec(kparams["c1_w"].shape), _full_spec(kparams["c2_w"].shape),
        _full_spec(kparams["c3_w"].shape), _full_spec(kparams["c4_w"].shape),
        pl.BlockSpec(memory_space=pl.ANY),       # il1_w (1.7 MiB) stays in HBM; manual DMA
        _full_spec(kparams["biases"].shape), _full_spec(kparams["tail_w"].shape),
    ]
    # NOTE: at large batch (or to use both v7x TensorCores) this would become a batch grid
    # with dimension_semantics=("parallel",); at B=2 one grid-less call (~3 MiB VMEM) wins.
    return pl.pallas_call(
        _fused_kernel,
        out_shape=jax.ShapeDtypeStruct((batch, 1), jnp.float32),
        in_specs=in_specs,
        out_specs=_full_spec((batch, 1)),
        scratch_shapes=[
            pltpu.VMEM((batch * _P[0] + _PAD_ROWS, 16), jnp.float32),   # a1
            pltpu.VMEM((batch * _P[1] + _PAD_ROWS, 32), jnp.float32),   # a2
            pltpu.VMEM((batch * _P[2] + _PAD_ROWS, 64), jnp.float32),   # a3
            pltpu.VMEM((batch * _P[3] + _PAD_ROWS, 128), jnp.float32),  # a4
            pltpu.VMEM((26, 128, 128), jnp.float32),                    # il1_w landing buf
            pltpu.SemaphoreType.DMA(()),
        ],
    )(*args)


# ------------------------- parameters (torch layout) ------------------------ #
def init_params(key):
    def uniform(k, shape, fan_in):
        bound = 1.0 / jnp.sqrt(jnp.float32(fan_in))
        return jax.random.uniform(k, shape, jnp.float32, -bound, bound)

    keys = jax.random.split(key, 20)
    it = iter(keys)
    p = {"convs": []}
    for c_in, c_out in _CONV_DEFS:
        fan = c_in * _KSIZE
        w = uniform(next(it), (c_out, c_in, _KSIZE), fan)   # PyTorch Conv1d (O, I, K)
        b = uniform(next(it), (c_out,), fan)
        p["convs"].append((w, b))
    p["il1_w"] = uniform(next(it), (128, 128 * 26), 128 * 26)   # PyTorch Linear (out, in)
    p["il1_b"] = uniform(next(it), (128,), 128 * 26)
    p["il2_w"] = uniform(next(it), (10, 128), 128)
    p["il2_b"] = uniform(next(it), (10,), 128)
    p["nf1_w"] = uniform(next(it), (5, 10), 10)
    p["nf1_b"] = uniform(next(it), (5,), 10)
    p["nf2_w"] = uniform(next(it), (5, 5), 5)
    p["nf2_b"] = uniform(next(it), (5,), 5)
    p["cf_w"] = uniform(next(it), (1, 15), 15)
    p["cf_b"] = uniform(next(it), (1,), 15)
    return p


def prepare_params(p):
    """One-time re-layout from PyTorch layout to the fused-kernel layout."""
    kp = {}
    (w1, b1), (w2, b2), (w3, b3), (w4, b4) = p["convs"]
    # conv1: im2col-fused weight, row index = k*3 + i (matches the wrapper lane order).
    kp["c1_w"] = jnp.transpose(w1, (2, 1, 0)).reshape(_KSIZE * 3, 16)
    kp["c2_w"] = jnp.transpose(w2, (2, 1, 0))                # (K, C_in, C_out)
    kp["c3_w"] = jnp.transpose(w3, (2, 1, 0))
    kp["c4_w"] = jnp.transpose(w4, (2, 1, 0))
    # image_linear layer 1 weight, (pos, chan, out); in-index of torch weight = c*26 + l.
    kp["il1_w"] = jnp.transpose(p["il1_w"].reshape(128, 128, 26), (2, 1, 0))  # (26,128,128)

    # All biases packed into one (16, 128) array (row layout documented in the kernel).
    bz = jnp.zeros((16, 128), jnp.float32)
    bz = bz.at[0, :16].set(b1).at[1, :32].set(b2).at[2, :64].set(b3).at[3, :].set(b4)
    bz = bz.at[4, :].set(p["il1_b"]).at[5, :10].set(p["il2_b"])
    bz = bz.at[6, :5].set(p["nf1_b"]).at[7, :5].set(p["nf2_b"]).at[8, :1].set(p["cf_b"])
    kp["biases"] = bz

    # Tail weights packed into one (160, 16) array, sliced with static offsets in-kernel.
    tw = jnp.zeros((160, 16), jnp.float32)
    tw = tw.at[0:128, 0:10].set(p["il2_w"].T)        # rows   0..127 : il2_w (128, 10)
    tw = tw.at[128:138, 0:5].set(p["nf1_w"].T)       # rows 128..137 : nf1_w (10, 5)
    tw = tw.at[138:143, 0:5].set(p["nf2_w"].T)       # rows 138..142 : nf2_w (5, 5)
    cw = p["cf_w"].T                                 # (15, 1)
    tw = tw.at[143:153, 0:1].set(cw[:10])            # rows 143..152 : cf_w image part
    tw = tw.at[153:158, 0:1].set(cw[10:])            # rows 153..157 : cf_w numeric part
    kp["tail_w"] = tw
    return kp


# ------------------------- pure-JAX reference model ------------------------- #
def _ref_conv1d(x, w, b, stride=2):
    B, C_in, L = x.shape
    C_out, _, K = w.shape
    L_out = (L - K) // stride + 1
    idx = stride * jnp.arange(L_out)[:, None] + jnp.arange(K)[None, :]
    patches = x[:, :, idx].transpose(0, 2, 1, 3).reshape(B * L_out, C_in * K)
    y = patches @ w.reshape(C_out, C_in * K).T + b
    return y.reshape(B, L_out, C_out).transpose(0, 2, 1)


def reference_forward(p, x1, x2):
    out = x1
    for w, b in p["convs"]:
        out = _ref_conv1d(out, w, b)
    out1 = out.reshape(out.shape[0], -1)                     # torch.flatten of NCW
    out1 = jnp.maximum(out1 @ p["il1_w"].T + p["il1_b"], 0.0)
    out1 = jnp.maximum(out1 @ p["il2_w"].T + p["il2_b"], 0.0)
    out2 = jnp.maximum(x2 @ p["nf1_w"].T + p["nf1_b"], 0.0)
    out2 = jnp.maximum(out2 @ p["nf2_w"].T + p["nf2_b"], 0.0)
    xc = jnp.concatenate([out1, out2], axis=1)
    return jax.nn.sigmoid(xc @ p["cf_w"].T + p["cf_b"])


# ----------------------------------- main ----------------------------------- #
if __name__ == "__main__":
    key = jax.random.PRNGKey(0)
    k_params, k_x1, k_x2 = jax.random.split(key, 3)

    torch_params = init_params(k_params)
    kernel_params = prepare_params(torch_params)   # weight re-layout hoisted out of forward

    B = 2
    x1 = jax.random.normal(k_x1, (B, 3, 476), dtype=jnp.float32)
    x2 = jax.random.normal(k_x2, (B, 10), dtype=jnp.float32)

    out = jax.jit(forward)(kernel_params, x1, x2)
    out = jax.block_until_ready(out)
    assert out.shape == (B, 1), out.shape

    ref = jax.block_until_ready(jax.jit(reference_forward)(torch_params, x1, x2))
    np.testing.assert_allclose(np.asarray(out), np.asarray(ref), rtol=1e-3, atol=1e-3)

    print("KERNEL_OK")
</pallas_src>

<mosaic_0001>
module attributes {stable_mosaic.version = 11 : i64} {
  func.func @_fused_kernel(%arg0: memref<488x18xf32, #tpu.memory_space<vmem>>, %arg1: memref<2x10xf32, #tpu.memory_space<vmem>>, %arg2: memref<18x16xf32, #tpu.memory_space<vmem>>, %arg3: memref<6x16x32xf32, #tpu.memory_space<vmem>>, %arg4: memref<6x32x64xf32, #tpu.memory_space<vmem>>, %arg5: memref<6x64x128xf32, #tpu.memory_space<vmem>>, %arg6: memref<26x128x128xf32, #tpu.memory_space<any>>, %arg7: memref<16x128xf32, #tpu.memory_space<vmem>>, %arg8: memref<160x16xf32, #tpu.memory_space<vmem>>, %arg9: memref<2x1xf32, #tpu.memory_space<vmem>>, %arg10: memref<488x16xf32, #tpu.memory_space<vmem>>, %arg11: memref<248x32xf32, #tpu.memory_space<vmem>>, %arg12: memref<128x64xf32, #tpu.memory_space<vmem>>, %arg13: memref<68x128xf32, #tpu.memory_space<vmem>>, %arg14: memref<26x128x128xf32, #tpu.memory_space<vmem>>, %arg15: memref<!tpu.dma_semaphore, #tpu.memory_space<semaphore_mem>>) attributes {dimension_semantics = [], scalar_prefetch = 0 : i64, scratch_operands = 6 : i64, tpu.core_type = #tpu.core_type<tc>} {
    tpu.enqueue_dma source(%arg6 : memref<26x128x128xf32, #tpu.memory_space<any>>) target(%arg14 : memref<26x128x128xf32, #tpu.memory_space<vmem>>) target_semaphore(%arg15 : memref<!tpu.dma_semaphore, #tpu.memory_space<semaphore_mem>>)
    %cst = arith.constant 0.000000e+00 : f32
    %0 = vector.broadcast %cst : f32 to vector<8x32xf32>
    %c240 = arith.constant 240 : index
    %c0 = arith.constant 0 : index
    %1 = vector.load %arg11[%c240, %c0] : memref<248x32xf32, #tpu.memory_space<vmem>>, vector<8x32xf32>
    tpu.vector_store %arg11[%c240, %c0], %0 {strides = array<i32>} : memref<248x32xf32, #tpu.memory_space<vmem>>, vector<8x32xf32>,
    %cst_0 = arith.constant 0.000000e+00 : f32
    %2 = vector.broadcast %cst_0 : f32 to vector<8x64xf32>
    %c120 = arith.constant 120 : index
    %c0_1 = arith.constant 0 : index
    %3 = vector.load %arg12[%c120, %c0_1] : memref<128x64xf32, #tpu.memory_space<vmem>>, vector<8x64xf32>
    tpu.vector_store %arg12[%c120, %c0_1], %2 {strides = array<i32>} : memref<128x64xf32, #tpu.memory_space<vmem>>, vector<8x64xf32>,
    %c0_2 = arith.constant 0 : index
    %c0_3 = arith.constant 0 : index
    %4 = vector.load %arg0[%c0_2, %c0_3] : memref<488x18xf32, #tpu.memory_space<vmem>>, vector<488x18xf32>
    %c0_4 = arith.constant 0 : index
    %c0_5 = arith.constant 0 : index
    %5 = vector.load %arg2[%c0_4, %c0_5] : memref<18x16xf32, #tpu.memory_space<vmem>>, vector<18x16xf32>
    %cst_6 = arith.constant dense<0.000000e+00> : vector<488x16xf32>
    %6 = tpu.matmul %4, %5, %cst_6 {dimension_numbers = #tpu.dot_dimension_numbers<[1], [0], [0], [1], [0, 0, 1, 1], [], []>} : vector<488x18xf32>, vector<18x16xf32>, vector<488x16xf32> -> vector<488x16xf32>
    %c0_7 = arith.constant 0 : index
    %c0_8 = arith.constant 0 : index
    %7 = vector.load %arg7[%c0_7, %c0_8] : memref<16x128xf32, #tpu.memory_space<vmem>>, vector<1x16xf32>
    %8 = vector.broadcast %7 : vector<1x16xf32> to vector<488x16xf32>
    %9 = arith.addf %6, %8 : vector<488x16xf32>
    %c0_9 = arith.constant 0 : index
    %c0_10 = arith.constant 0 : index
    %10 = vector.load %arg10[%c0_9, %c0_10] : memref<488x16xf32, #tpu.memory_space<vmem>>, vector<488x16xf32>
    tpu.vector_store %arg10[%c0_9, %c0_10], %9 {strides = array<i32>} : memref<488x16xf32, #tpu.memory_space<vmem>>, vector<488x16xf32>,
    %c1 = arith.constant 1 : index
    %c0_11 = arith.constant 0 : index
    %11 = vector.load %arg7[%c1, %c0_11] : memref<16x128xf32, #tpu.memory_space<vmem>>, vector<1x32xf32>
    %c0_12 = arith.constant 0 : index
    %c0_13 = arith.constant 0 : index
    %12 = tpu.strided_load %arg10[%c0_12, %c0_13] {strides = array<i32: 2, 1>} : memref<488x16xf32, #tpu.memory_space<vmem>>, vector<240x16xf32>
    %c0_14 = arith.constant 0 : index
    %c0_15 = arith.constant 0 : index
    %c0_16 = arith.constant 0 : index
    %13 = vector.load %arg3[%c0_14, %c0_15, %c0_16] : memref<6x16x32xf32, #tpu.memory_space<vmem>>, vector<1x16x32xf32>
    %14 = vector.shape_cast %13 : vector<1x16x32xf32> to vector<16x32xf32>
    %cst_17 = arith.constant dense<0.000000e+00> : vector<240x32xf32>
    %15 = tpu.matmul %12, %14, %cst_17 {dimension_numbers = #tpu.dot_dimension_numbers<[1], [0], [0], [1], [0, 0, 1, 1], [], []>} : vector<240x16xf32>, vector<16x32xf32>, vector<240x32xf32> -> vector<240x32xf32>
    %c1_18 = arith.constant 1 : index
    %c0_19 = arith.constant 0 : index
    %16 = tpu.strided_load %arg10[%c1_18, %c0_19] {strides = array<i32: 2, 1>} : memref<488x16xf32, #tpu.memory_space<vmem>>, vector<240x16xf32>
    %c1_20 = arith.constant 1 : index
    %c0_21 = arith.constant 0 : index
    %c0_22 = arith.constant 0 : index
    %17 = vector.load %arg3[%c1_20, %c0_21, %c0_22] : memref<6x16x32xf32, #tpu.memory_space<vmem>>, vector<1x16x32xf32>
    %18 = vector.shape_cast %17 : vector<1x16x32xf32> to vector<16x32xf32>
    %cst_23 = arith.constant dense<0.000000e+00> : vector<240x32xf32>
    %19 = tpu.matmul %16, %18, %cst_23 {dimension_numbers = #tpu.dot_dimension_numbers<[1], [0], [0], [1], [0, 0, 1, 1], [], []>} : vector<240x16xf32>, vector<16x32xf32>, vector<240x32xf32> -> vector<240x32xf32>
    %20 = arith.addf %15, %19 : vector<240x32xf32>
    %c2 = arith.constant 2 : index
    %c0_24 = arith.constant 0 : index
    %21 = tpu.strided_load %arg10[%c2, %c0_24] {strides = array<i32: 2, 1>} : memref<488x16xf32, #tpu.memory_space<vmem>>, vector<240x16xf32>
    %c2_25 = arith.constant 2 : index
    %c0_26 = arith.constant 0 : index
    %c0_27 = arith.constant 0 : index
    %22 = vector.load %arg3[%c2_25, %c0_26, %c0_27] : memref<6x16x32xf32, #tpu.memory_space<vmem>>, vector<1x16x32xf32>
    %23 = vector.shape_cast %22 : vector<1x16x32xf32> to vector<16x32xf32>
    %cst_28 = arith.constant dense<0.000000e+00> : vector<240x32xf32>
    %24 = tpu.matmul %21, %23, %cst_28 {dimension_numbers = #tpu.dot_dimension_numbers<[1], [0], [0], [1], [0, 0, 1, 1], [], []>} : vector<240x16xf32>, vector<16x32xf32>, vector<240x32xf32> -> vector<240x32xf32>
    %25 = arith.addf %20, %24 : vector<240x32xf32>
    %c3 = arith.constant 3 : index
    %c0_29 = arith.constant 0 : index
    %26 = tpu.strided_load %arg10[%c3, %c0_29] {strides = array<i32: 2, 1>} : memref<488x16xf32, #tpu.memory_space<vmem>>, vector<240x16xf32>
    %c3_30 = arith.constant 3 : index
    %c0_31 = arith.constant 0 : index
    %c0_32 = arith.constant 0 : index
    %27 = vector.load %arg3[%c3_30, %c0_31, %c0_32] : memref<6x16x32xf32, #tpu.memory_space<vmem>>, vector<1x16x32xf32>
    %28 = vector.shape_cast %27 : vector<1x16x32xf32> to vector<16x32xf32>
    %cst_33 = arith.constant dense<0.000000e+00> : vector<240x32xf32>
    %29 = tpu.matmul %26, %28, %cst_33 {dimension_numbers = #tpu.dot_dimension_numbers<[1], [0], [0], [1], [0, 0, 1, 1], [], []>} : vector<240x16xf32>, vector<16x32xf32>, vector<240x32xf32> -> vector<240x32xf32>
    %30 = arith.addf %25, %29 : vector<240x32xf32>
    %c4 = arith.constant 4 : index
    %c0_34 = arith.constant 0 : index
    %31 = tpu.strided_load %arg10[%c4, %c0_34] {strides = array<i32: 2, 1>} : memref<488x16xf32, #tpu.memory_space<vmem>>, vector<240x16xf32>
    %c4_35 = arith.constant 4 : index
    %c0_36 = arith.constant 0 : index
    %c0_37 = arith.constant 0 : index
    %32 = vector.load %arg3[%c4_35, %c0_36, %c0_37] : memref<6x16x32xf32, #tpu.memory_space<vmem>>, vector<1x16x32xf32>
    %33 = vector.shape_cast %32 : vector<1x16x32xf32> to vector<16x32xf32>
    %cst_38 = arith.constant dense<0.000000e+00> : vector<240x32xf32>
    %34 = tpu.matmul %31, %33, %cst_38 {dimension_numbers = #tpu.dot_dimension_numbers<[1], [0], [0], [1], [0, 0, 1, 1], [], []>} : vector<240x16xf32>, vector<16x32xf32>, vector<240x32xf32> -> vector<240x32xf32>
    %35 = arith.addf %30, %34 : vector<240x32xf32>
    %c5 = arith.constant 5 : index
    %c0_39 = arith.constant 0 : index
    %36 = tpu.strided_load %arg10[%c5, %c0_39] {strides = array<i32: 2, 1>} : memref<488x16xf32, #tpu.memory_space<vmem>>, vector<240x16xf32>
    %c5_40 = arith.constant 5 : index
    %c0_41 = arith.constant 0 : index
    %c0_42 = arith.constant 0 : index
    %37 = vector.load %arg3[%c5_40, %c0_41, %c0_42] : memref<6x16x32xf32, #tpu.memory_space<vmem>>, vector<1x16x32xf32>
    %38 = vector.shape_cast %37 : vector<1x16x32xf32> to vector<16x32xf32>
    %cst_43 = arith.constant dense<0.000000e+00> : vector<240x32xf32>
    %39 = tpu.matmul %36, %38, %cst_43 {dimension_numbers = #tpu.dot_dimension_numbers<[1], [0], [0], [1], [0, 0, 1, 1], [], []>} : vector<240x16xf32>, vector<16x32xf32>, vector<240x32xf32> -> vector<240x32xf32>
    %40 = arith.addf %35, %39 : vector<240x32xf32>
    %41 = vector.broadcast %11 : vector<1x32xf32> to vector<240x32xf32>
    %42 = arith.addf %40, %41 : vector<240x32xf32>
    %c0_44 = arith.constant 0 : index
    %c0_45 = arith.constant 0 : index
    %43 = vector.load %arg11[%c0_44, %c0_45] : memref<248x32xf32, #tpu.memory_space<vmem>>, vector<240x32xf32>
    tpu.vector_store %arg11[%c0_44, %c0_45], %42 {strides = array<i32>} : memref<248x32xf32, #tpu.memory_space<vmem>>, vector<240x32xf32>,
    %c2_46 = arith.constant 2 : index
    %c0_47 = arith.constant 0 : index
    %44 = vector.load %arg7[%c2_46, %c0_47] : memref<16x128xf32, #tpu.memory_space<vmem>>, vector<1x64xf32>
    %c0_48 = arith.constant 0 : index
    %c0_49 = arith.constant 0 : index
    %45 = tpu.strided_load %arg11[%c0_48, %c0_49] {strides = array<i32: 2, 1>} : memref<248x32xf32, #tpu.memory_space<vmem>>, vector<120x32xf32>
    %c0_50 = arith.constant 0 : index
    %c0_51 = arith.constant 0 : index
    %c0_52 = arith.constant 0 : index
    %46 = vector.load %arg4[%c0_50, %c0_51, %c0_52] : memref<6x32x64xf32, #tpu.memory_space<vmem>>, vector<1x32x64xf32>
    %47 = vector.shape_cast %46 : vector<1x32x64xf32> to vector<32x64xf32>
    %cst_53 = arith.constant dense<0.000000e+00> : vector<120x64xf32>
    %48 = tpu.matmul %45, %47, %cst_53 {dimension_numbers = #tpu.dot_dimension_numbers<[1], [0], [0], [1], [0, 0, 1, 1], [], []>} : vector<120x32xf32>, vector<32x64xf32>, vector<120x64xf32> -> vector<120x64xf32>
    %c1_54 = arith.constant 1 : index
    %c0_55 = arith.constant 0 : index
    %49 = tpu.strided_load %arg11[%c1_54, %c0_55] {strides = array<i32: 2, 1>} : memref<248x32xf32, #tpu.memory_space<vmem>>, vector<120x32xf32>
    %c1_56 = arith.constant 1 : index
    %c0_57 = arith.constant 0 : index
    %c0_58 = arith.constant 0 : index
    %50 = vector.load %arg4[%c1_56, %c0_57, %c0_58] : memref<6x32x64xf32, #tpu.memory_space<vmem>>, vector<1x32x64xf32>
    %51 = vector.shape_cast %50 : vector<1x32x64xf32> to vector<32x64xf32>
    %cst_59 = arith.constant dense<0.000000e+00> : vector<120x64xf32>
    %52 = tpu.matmul %49, %51, %cst_59 {dimension_numbers = #tpu.dot_dimension_numbers<[1], [0], [0], [1], [0, 0, 1, 1], [], []>} : vector<120x32xf32>, vector<32x64xf32>, vector<120x64xf32> -> vector<120x64xf32>
    %53 = arith.addf %48, %52 : vector<120x64xf32>
    %c2_60 = arith.constant 2 : index
    %c0_61 = arith.constant 0 : index
    %54 = tpu.strided_load %arg11[%c2_60, %c0_61] {strides = array<i32: 2, 1>} : memref<248x32xf32, #tpu.memory_space<vmem>>, vector<120x32xf32>
    %c2_62 = arith.constant 2 : index
    %c0_63 = arith.constant 0 : index
    %c0_64 = arith.constant 0 : index
    %55 = vector.load %arg4[%c2_62, %c0_63, %c0_64] : memref<6x32x64xf32, #tpu.memory_space<vmem>>, vector<1x32x64xf32>
    %56 = vector.shape_cast %55 : vector<1x32x64xf32> to vector<32x64xf32>
    %cst_65 = arith.constant dense<0.000000e+00> : vector<120x64xf32>
    %57 = tpu.matmul %54, %56, %cst_65 {dimension_numbers = #tpu.dot_dimension_numbers<[1], [0], [0], [1], [0, 0, 1, 1], [], []>} : vector<120x32xf32>, vector<32x64xf32>, vector<120x64xf32> -> vector<120x64xf32>
    %58 = arith.addf %53, %57 : vector<120x64xf32>
    %c3_66 = arith.constant 3 : index
    %c0_67 = arith.constant 0 : index
    %59 = tpu.strided_load %arg11[%c3_66, %c0_67] {strides = array<i32: 2, 1>} : memref<248x32xf32, #tpu.memory_space<vmem>>, vector<120x32xf32>
    %c3_68 = arith.constant 3 : index
    %c0_69 = arith.constant 0 : index
    %c0_70 = arith.constant 0 : index
    %60 = vector.load %arg4[%c3_68, %c0_69, %c0_70] : memref<6x32x64xf32, #tpu.memory_space<vmem>>, vector<1x32x64xf32>
    %61 = vector.shape_cast %60 : vector<1x32x64xf32> to vector<32x64xf32>
    %cst_71 = arith.constant dense<0.000000e+00> : vector<120x64xf32>
    %62 = tpu.matmul %59, %61, %cst_71 {dimension_numbers = #tpu.dot_dimension_numbers<[1], [0], [0], [1], [0, 0, 1, 1], [], []>} : vector<120x32xf32>, vector<32x64xf32>, vector<120x64xf32> -> vector<120x64xf32>
    %63 = arith.addf %58, %62 : vector<120x64xf32>
    %c4_72 = arith.constant 4 : index
    %c0_73 = arith.constant 0 : index
    %64 = tpu.strided_load %arg11[%c4_72, %c0_73] {strides = array<i32: 2, 1>} : memref<248x32xf32, #tpu.memory_space<vmem>>, vector<120x32xf32>
    %c4_74 = arith.constant 4 : index
    %c0_75 = arith.constant 0 : index
    %c0_76 = arith.constant 0 : index
    %65 = vector.load %arg4[%c4_74, %c0_75, %c0_76] : memref<6x32x64xf32, #tpu.memory_space<vmem>>, vector<1x32x64xf32>
    %66 = vector.shape_cast %65 : vector<1x32x64xf32> to vector<32x64xf32>
    %cst_77 = arith.constant dense<0.000000e+00> : vector<120x64xf32>
    %67 = tpu.matmul %64, %66, %cst_77 {dimension_numbers = #tpu.dot_dimension_numbers<[1], [0], [0], [1], [0, 0, 1, 1], [], []>} : vector<120x32xf32>, vector<32x64xf32>, vector<120x64xf32> -> vector<120x64xf32>
    %68 = arith.addf %63, %67 : vector<120x64xf32>
    %c5_78 = arith.constant 5 : index
    %c0_79 = arith.constant 0 : index
    %69 = tpu.strided_load %arg11[%c5_78, %c0_79] {strides = array<i32: 2, 1>} : memref<248x32xf32, #tpu.memory_space<vmem>>, vector<120x32xf32>
    %c5_80 = arith.constant 5 : index
    %c0_81 = arith.constant 0 : index
    %c0_82 = arith.constant 0 : index
    %70 = vector.load %arg4[%c5_80, %c0_81, %c0_82] : memref<6x32x64xf32, #tpu.memory_space<vmem>>, vector<1x32x64xf32>
    %71 = vector.shape_cast %70 : vector<1x32x64xf32> to vector<32x64xf32>
    %cst_83 = arith.constant dense<0.000000e+00> : vector<120x64xf32>
    %72 = tpu.matmul %69, %71, %cst_83 {dimension_numbers = #tpu.dot_dimension_numbers<[1], [0], [0], [1], [0, 0, 1, 1], [], []>} : vector<120x32xf32>, vector<32x64xf32>, vector<120x64xf32> -> vector<120x64xf32>
    %73 = arith.addf %68, %72 : vector<120x64xf32>
    %74 = vector.broadcast %44 : vector<1x64xf32> to vector<120x64xf32>
    %75 = arith.addf %73, %74 : vector<120x64xf32>
    %c0_84 = arith.constant 0 : index
    %c0_85 = arith.constant 0 : index
    %76 = vector.load %arg12[%c0_84, %c0_85] : memref<128x64xf32, #tpu.memory_space<vmem>>, vector<120x64xf32>
    tpu.vector_store %arg12[%c0_84, %c0_85], %75 {strides = array<i32>} : memref<128x64xf32, #tpu.memory_space<vmem>>, vector<120x64xf32>,
    %c3_86 = arith.constant 3 : index
    %c0_87 = arith.constant 0 : index
    %77 = vector.load %arg7[%c3_86, %c0_87] : memref<16x128xf32, #tpu.memory_space<vmem>>, vector<1x128xf32>
    %c0_88 = arith.constant 0 : index
    %c0_89 = arith.constant 0 : index
    %78 = tpu.strided_load %arg12[%c0_88, %c0_89] {strides = array<i32: 2, 1>} : memref<128x64xf32, #tpu.memory_space<vmem>>, vector<60x64xf32>
    %c0_90 = arith.constant 0 : index
    %c0_91 = arith.constant 0 : index
    %c0_92 = arith.constant 0 : index
    %79 = vector.load %arg5[%c0_90, %c0_91, %c0_92] : memref<6x64x128xf32, #tpu.memory_space<vmem>>, vector<1x64x128xf32>
    %80 = vector.shape_cast %79 : vector<1x64x128xf32> to vector<64x128xf32>
    %cst_93 = arith.constant dense<0.000000e+00> : vector<60x128xf32>
    %81 = tpu.matmul %78, %80, %cst_93 {dimension_numbers = #tpu.dot_dimension_numbers<[1], [0], [0], [1], [0, 0, 1, 1], [], []>} : vector<60x64xf32>, vector<64x128xf32>, vector<60x128xf32> -> vector<60x128xf32>
    %c1_94 = arith.constant 1 : index
    %c0_95 = arith.constant 0 : index
    %82 = tpu.strided_load %arg12[%c1_94, %c0_95] {strides = array<i32: 2, 1>} : memref<128x64xf32, #tpu.memory_space<vmem>>, vector<60x64xf32>
    %c1_96 = arith.constant 1 : index
    %c0_97 = arith.constant 0 : index
    %c0_98 = arith.constant 0 : index
    %83 = vector.load %arg5[%c1_96, %c0_97, %c0_98] : memref<6x64x128xf32, #tpu.memory_space<vmem>>, vector<1x64x128xf32>
    %84 = vector.shape_cast %83 : vector<1x64x128xf32> to vector<64x128xf32>
    %cst_99 = arith.constant dense<0.000000e+00> : vector<60x128xf32>
    %85 = tpu.matmul %82, %84, %cst_99 {dimension_numbers = #tpu.dot_dimension_numbers<[1], [0], [0], [1], [0, 0, 1, 1], [], []>} : vector<60x64xf32>, vector<64x128xf32>, vector<60x128xf32> -> vector<60x128xf32>
    %86 = arith.addf %81, %85 : vector<60x128xf32>
    %c2_100 = arith.constant 2 : index
    %c0_101 = arith.constant 0 : index
    %87 = tpu.strided_load %arg12[%c2_100, %c0_101] {strides = array<i32: 2, 1>} : memref<128x64xf32, #tpu.memory_space<vmem>>, vector<60x64xf32>
    %c2_102 = arith.constant 2 : index
    %c0_103 = arith.constant 0 : index
    %c0_104 = arith.constant 0 : index
    %88 = vector.load %arg5[%c2_102, %c0_103, %c0_104] : memref<6x64x128xf32, #tpu.memory_space<vmem>>, vector<1x64x128xf32>
    %89 = vector.shape_cast %88 : vector<1x64x128xf32> to vector<64x128xf32>
    %cst_105 = arith.constant dense<0.000000e+00> : vector<60x128xf32>
    %90 = tpu.matmul %87, %89, %cst_105 {dimension_numbers = #tpu.dot_dimension_numbers<[1], [0], [0], [1], [0, 0, 1, 1], [], []>} : vector<60x64xf32>, vector<64x128xf32>, vector<60x128xf32> -> vector<60x128xf32>
    %91 = arith.addf %86, %90 : vector<60x128xf32>
    %c3_106 = arith.constant 3 : index
    %c0_107 = arith.constant 0 : index
    %92 = tpu.strided_load %arg12[%c3_106, %c0_107] {strides = array<i32: 2, 1>} : memref<128x64xf32, #tpu.memory_space<vmem>>, vector<60x64xf32>
    %c3_108 = arith.constant 3 : index
    %c0_109 = arith.constant 0 : index
    %c0_110 = arith.constant 0 : index
    %93 = vector.load %arg5[%c3_108, %c0_109, %c0_110] : memref<6x64x128xf32, #tpu.memory_space<vmem>>, vector<1x64x128xf32>
    %94 = vector.shape_cast %93 : vector<1x64x128xf32> to vector<64x128xf32>
    %cst_111 = arith.constant dense<0.000000e+00> : vector<60x128xf32>
    %95 = tpu.matmul %92, %94, %cst_111 {dimension_numbers = #tpu.dot_dimension_numbers<[1], [0], [0], [1], [0, 0, 1, 1], [], []>} : vector<60x64xf32>, vector<64x128xf32>, vector<60x128xf32> -> vector<60x128xf32>
    %96 = arith.addf %91, %95 : vector<60x128xf32>
    %c4_112 = arith.constant 4 : index
    %c0_113 = arith.constant 0 : index
    %97 = tpu.strided_load %arg12[%c4_112, %c0_113] {strides = array<i32: 2, 1>} : memref<128x64xf32, #tpu.memory_space<vmem>>, vector<60x64xf32>
    %c4_114 = arith.constant 4 : index
    %c0_115 = arith.constant 0 : index
    %c0_116 = arith.constant 0 : index
    %98 = vector.load %arg5[%c4_114, %c0_115, %c0_116] : memref<6x64x128xf32, #tpu.memory_space<vmem>>, vector<1x64x128xf32>
    %99 = vector.shape_cast %98 : vector<1x64x128xf32> to vector<64x128xf32>
    %cst_117 = arith.constant dense<0.000000e+00> : vector<60x128xf32>
    %100 = tpu.matmul %97, %99, %cst_117 {dimension_numbers = #tpu.dot_dimension_numbers<[1], [0], [0], [1], [0, 0, 1, 1], [], []>} : vector<60x64xf32>, vector<64x128xf32>, vector<60x128xf32> -> vector<60x128xf32>
    %101 = arith.addf %96, %100 : vector<60x128xf32>
    %c5_118 = arith.constant 5 : index
    %c0_119 = arith.constant 0 : index
    %102 = tpu.strided_load %arg12[%c5_118, %c0_119] {strides = array<i32: 2, 1>} : memref<128x64xf32, #tpu.memory_space<vmem>>, vector<60x64xf32>
    %c5_120 = arith.constant 5 : index
    %c0_121 = arith.constant 0 : index
    %c0_122 = arith.constant 0 : index
    %103 = vector.load %arg5[%c5_120, %c0_121, %c0_122] : memref<6x64x128xf32, #tpu.memory_space<vmem>>, vector<1x64x128xf32>
    %104 = vector.shape_cast %103 : vector<1x64x128xf32> to vector<64x128xf32>
    %cst_123 = arith.constant dense<0.000000e+00> : vector<60x128xf32>
    %105 = tpu.matmul %102, %104, %cst_123 {dimension_numbers = #tpu.dot_dimension_numbers<[1], [0], [0], [1], [0, 0, 1, 1], [], []>} : vector<60x64xf32>, vector<64x128xf32>, vector<60x128xf32> -> vector<60x128xf32>
    %106 = arith.addf %101, %105 : vector<60x128xf32>
    %107 = vector.broadcast %77 : vector<1x128xf32> to vector<60x128xf32>
    %108 = arith.addf %106, %107 : vector<60x128xf32>
    %c0_124 = arith.constant 0 : index
    %c0_125 = arith.constant 0 : index
    %109 = vector.load %arg13[%c0_124, %c0_125] : memref<68x128xf32, #tpu.memory_space<vmem>>, vector<60x128xf32>
    tpu.vector_store %arg13[%c0_124, %c0_125], %108 {strides = array<i32>} : memref<68x128xf32, #tpu.memory_space<vmem>>, vector<60x128xf32>,
    tpu.wait_dma2 semaphore(%arg15 : memref<!tpu.dma_semaphore, #tpu.memory_space<semaphore_mem>>) src(%arg6 : memref<26x128x128xf32, #tpu.memory_space<any>>) dst(%arg14 : memref<26x128x128xf32, #tpu.memory_space<vmem>>)
    %cst_126 = arith.constant 0.000000e+00 : f32
    %110 = vector.broadcast %cst_126 : f32 to vector<2x128xf32>
    %c0_127 = arith.constant 0 : index
    %c0_128 = arith.constant 0 : index
    %111 = tpu.strided_load %arg13[%c0_127, %c0_128] {strides = array<i32: 30, 1>} : memref<68x128xf32, #tpu.memory_space<vmem>>, vector<2x128xf32>
    %c0_129 = arith.constant 0 : index
    %c0_130 = arith.constant 0 : index
    %c0_131 = arith.constant 0 : index
    %112 = vector.load %arg14[%c0_129, %c0_130, %c0_131] : memref<26x128x128xf32, #tpu.memory_space<vmem>>, vector<1x128x128xf32>
    %113 = vector.shape_cast %112 : vector<1x128x128xf32> to vector<128x128xf32>
    %cst_132 = arith.constant dense<0.000000e+00> : vector<2x128xf32>
    %114 = tpu.matmul %111, %113, %cst_132 {dimension_numbers = #tpu.dot_dimension_numbers<[1], [0], [0], [1], [0, 0, 1, 1], [], []>} : vector<2x128xf32>, vector<128x128xf32>, vector<2x128xf32> -> vector<2x128xf32>
    %115 = arith.addf %110, %114 : vector<2x128xf32>
    %c1_133 = arith.constant 1 : index
    %c0_134 = arith.constant 0 : index
    %116 = tpu.strided_load %arg13[%c1_133, %c0_134] {strides = array<i32: 30, 1>} : memref<68x128xf32, #tpu.memory_space<vmem>>, vector<2x128xf32>
    %c1_135 = arith.constant 1 : index
    %c0_136 = arith.constant 0 : index
    %c0_137 = arith.constant 0 : index
    %117 = vector.load %arg14[%c1_135, %c0_136, %c0_137] : memref<26x128x128xf32, #tpu.memory_space<vmem>>, vector<1x128x128xf32>
    %118 = vector.shape_cast %117 : vector<1x128x128xf32> to vector<128x128xf32>
    %cst_138 = arith.constant dense<0.000000e+00> : vector<2x128xf32>
    %119 = tpu.matmul %116, %118, %cst_138 {dimension_numbers = #tpu.dot_dimension_numbers<[1], [0], [0], [1], [0, 0, 1, 1], [], []>} : vector<2x128xf32>, vector<128x128xf32>, vector<2x128xf32> -> vector<2x128xf32>
    %120 = arith.addf %115, %119 : vector<2x128xf32>
    %c2_139 = arith.constant 2 : index
    %c0_140 = arith.constant 0 : index
    %121 = tpu.strided_load %arg13[%c2_139, %c0_140] {strides = array<i32: 30, 1>} : memref<68x128xf32, #tpu.memory_space<vmem>>, vector<2x128xf32>
    %c2_141 = arith.constant 2 : index
    %c0_142 = arith.constant 0 : index
    %c0_143 = arith.constant 0 : index
    %122 = vector.load %arg14[%c2_141, %c0_142, %c0_143] : memref<26x128x128xf32, #tpu.memory_space<vmem>>, vector<1x128x128xf32>
    %123 = vector.shape_cast %122 : vector<1x128x128xf32> to vector<128x128xf32>
    %cst_144 = arith.constant dense<0.000000e+00> : vector<2x128xf32>
    %124 = tpu.matmul %121, %123, %cst_144 {dimension_numbers = #tpu.dot_dimension_numbers<[1], [0], [0], [1], [0, 0, 1, 1], [], []>} : vector<2x128xf32>, vector<128x128xf32>, vector<2x128xf32> -> vector<2x128xf32>
    %125 = arith.addf %120, %124 : vector<2x128xf32>
    %c3_145 = arith.constant 3 : index
    %c0_146 = arith.constant 0 : index
    %126 = tpu.strided_load %arg13[%c3_145, %c0_146] {strides = array<i32: 30, 1>} : memref<68x128xf32, #tpu.memory_space<vmem>>, vector<2x128xf32>
    %c3_147 = arith.constant 3 : index
    %c0_148 = arith.constant 0 : index
    %c0_149 = arith.constant 0 : index
    %127 = vector.load %arg14[%c3_147, %c0_148, %c0_149] : memref<26x128x128xf32, #tpu.memory_space<vmem>>, vector<1x128x128xf32>
    %128 = vector.shape_cast %127 : vector<1x128x128xf32> to vector<128x128xf32>
    %cst_150 = arith.constant dense<0.000000e+00> : vector<2x128xf32>
    %129 = tpu.matmul %126, %128, %cst_150 {dimension_numbers = #tpu.dot_dimension_numbers<[1], [0], [0], [1], [0, 0, 1, 1], [], []>} : vector<2x128xf32>, vector<128x128xf32>, vector<2x128xf32> -> vector<2x128xf32>
    %130 = arith.addf %125, %129 : vector<2x128xf32>
    %c4_151 = arith.constant 4 : index
    %c0_152 = arith.constant 0 : index
    %131 = tpu.strided_load %arg13[%c4_151, %c0_152] {strides = array<i32: 30, 1>} : memref<68x128xf32, #tpu.memory_space<vmem>>, vector<2x128xf32>
    %c4_153 = arith.constant 4 : index
    %c0_154 = arith.constant 0 : index
    %c0_155 = arith.constant 0 : index
    %132 = vector.load %arg14[%c4_153, %c0_154, %c0_155] : memref<26x128x128xf32, #tpu.memory_space<vmem>>, vector<1x128x128xf32>
    %133 = vector.shape_cast %132 : vector<1x128x128xf32> to vector<128x128xf32>
    %cst_156 = arith.constant dense<0.000000e+00> : vector<2x128xf32>
    %134 = tpu.matmul %131, %133, %cst_156 {dimension_numbers = #tpu.dot_dimension_numbers<[1], [0], [0], [1], [0, 0, 1, 1], [], []>} : vector<2x128xf32>, vector<128x128xf32>, vector<2x128xf32> -> vector<2x128xf32>
    %135 = arith.addf %130, %134 : vector<2x128xf32>
    %c5_157 = arith.constant 5 : index
    %c0_158 = arith.constant 0 : index
    %136 = tpu.strided_load %arg13[%c5_157, %c0_158] {strides = array<i32: 30, 1>} : memref<68x128xf32, #tpu.memory_space<vmem>>, vector<2x128xf32>
    %c5_159 = arith.constant 5 : index
    %c0_160 = arith.constant 0 : index
    %c0_161 = arith.constant 0 : index
    %137 = vector.load %arg14[%c5_159, %c0_160, %c0_161] : memref<26x128x128xf32, #tpu.memory_space<vmem>>, vector<1x128x128xf32>
    %138 = vector.shape_cast %137 : vector<1x128x128xf32> to vector<128x128xf32>
    %cst_162 = arith.constant dense<0.000000e+00> : vector<2x128xf32>
    %139 = tpu.matmul %136, %138, %cst_162 {dimension_numbers = #tpu.dot_dimension_numbers<[1], [0], [0], [1], [0, 0, 1, 1], [], []>} : vector<2x128xf32>, vector<128x128xf32>, vector<2x128xf32> -> vector<2x128xf32>
    %140 = arith.addf %135, %139 : vector<2x128xf32>
    %c6 = arith.constant 6 : index
    %c0_163 = arith.constant 0 : index
    %141 = tpu.strided_load %arg13[%c6, %c0_163] {strides = array<i32: 30, 1>} : memref<68x128xf32, #tpu.memory_space<vmem>>, vector<2x128xf32>
    %c6_164 = arith.constant 6 : index
    %c0_165 = arith.constant 0 : index
    %c0_166 = arith.constant 0 : index
    %142 = vector.load %arg14[%c6_164, %c0_165, %c0_166] : memref<26x128x128xf32, #tpu.memory_space<vmem>>, vector<1x128x128xf32>
    %143 = vector.shape_cast %142 : vector<1x128x128xf32> to vector<128x128xf32>
    %cst_167 = arith.constant dense<0.000000e+00> : vector<2x128xf32>
    %144 = tpu.matmul %141, %143, %cst_167 {dimension_numbers = #tpu.dot_dimension_numbers<[1], [0], [0], [1], [0, 0, 1, 1], [], []>} : vector<2x128xf32>, vector<128x128xf32>, vector<2x128xf32> -> vector<2x128xf32>
    %145 = arith.addf %140, %144 : vector<2x128xf32>
    %c7 = arith.constant 7 : index
    %c0_168 = arith.constant 0 : index
    %146 = tpu.strided_load %arg13[%c7, %c0_168] {strides = array<i32: 30, 1>} : memref<68x128xf32, #tpu.memory_space<vmem>>, vector<2x128xf32>
    %c7_169 = arith.constant 7 : index
    %c0_170 = arith.constant 0 : index
    %c0_171 = arith.constant 0 : index
    %147 = vector.load %arg14[%c7_169, %c0_170, %c0_171] : memref<26x128x128xf32, #tpu.memory_space<vmem>>, vector<1x128x128xf32>
    %148 = vector.shape_cast %147 : vector<1x128x128xf32> to vector<128x128xf32>
    %cst_172 = arith.constant dense<0.000000e+00> : vector<2x128xf32>
    %149 = tpu.matmul %146, %148, %cst_172 {dimension_numbers = #tpu.dot_dimension_numbers<[1], [0], [0], [1], [0, 0, 1, 1], [], []>} : vector<2x128xf32>, vector<128x128xf32>, vector<2x128xf32> -> vector<2x128xf32>
    %150 = arith.addf %145, %149 : vector<2x128xf32>
    %c8 = arith.constant 8 : index
    %c0_173 = arith.constant 0 : index
    %151 = tpu.strided_load %arg13[%c8, %c0_173] {strides = array<i32: 30, 1>} : memref<68x128xf32, #tpu.memory_space<vmem>>, vector<2x128xf32>
    %c8_174 = arith.constant 8 : index
    %c0_175 = arith.constant 0 : index
    %c0_176 = arith.constant 0 : index
    %152 = vector.load %arg14[%c8_174, %c0_175, %c0_176] : memref<26x128x128xf32, #tpu.memory_space<vmem>>, vector<1x128x128xf32>
    %153 = vector.shape_cast %152 : vector<1x128x128xf32> to vector<128x128xf32>
    %cst_177 = arith.constant dense<0.000000e+00> : vector<2x128xf32>
    %154 = tpu.matmul %151, %153, %cst_177 {dimension_numbers = #tpu.dot_dimension_numbers<[1], [0], [0], [1], [0, 0, 1, 1], [], []>} : vector<2x128xf32>, vector<128x128xf32>, vector<2x128xf32> -> vector<2x128xf32>
    %155 = arith.addf %150, %154 : vector<2x128xf32>
    %c9 = arith.constant 9 : index
    %c0_178 = arith.constant 0 : index
    %156 = tpu.strided_load %arg13[%c9, %c0_178] {strides = array<i32: 30, 1>} : memref<68x128xf32, #tpu.memory_space<vmem>>, vector<2x128xf32>
    %c9_179 = arith.constant 9 : index
    %c0_180 = arith.constant 0 : index
    %c0_181 = arith.constant 0 : index
    %157 = vector.load %arg14[%c9_179, %c0_180, %c0_181] : memref<26x128x128xf32, #tpu.memory_space<vmem>>, vector<1x128x128xf32>
    %158 = vector.shape_cast %157 : vector<1x128x128xf32> to vector<128x128xf32>
    %cst_182 = arith.constant dense<0.000000e+00> : vector<2x128xf32>
    %159 = tpu.matmul %156, %158, %cst_182 {dimension_numbers = #tpu.dot_dimension_numbers<[1], [0], [0], [1], [0, 0, 1, 1], [], []>} : vector<2x128xf32>, vector<128x128xf32>, vector<2x128xf32> -> vector<2x128xf32>
    %160 = arith.addf %155, %159 : vector<2x128xf32>
    %c10 = arith.constant 10 : index
    %c0_183 = arith.constant 0 : index
    %161 = tpu.strided_load %arg13[%c10, %c0_183] {strides = array<i32: 30, 1>} : memref<68x128xf32, #tpu.memory_space<vmem>>, vector<2x128xf32>
    %c10_184 = arith.constant 10 : index
    %c0_185 = arith.constant 0 : index
    %c0_186 = arith.constant 0 : index
    %162 = vector.load %arg14[%c10_184, %c0_185, %c0_186] : memref<26x128x128xf32, #tpu.memory_space<vmem>>, vector<1x128x128xf32>
    %163 = vector.shape_cast %162 : vector<1x128x128xf32> to vector<128x128xf32>
    %cst_187 = arith.constant dense<0.000000e+00> : vector<2x128xf32>
    %164 = tpu.matmul %161, %163, %cst_187 {dimension_numbers = #tpu.dot_dimension_numbers<[1], [0], [0], [1], [0, 0, 1, 1], [], []>} : vector<2x128xf32>, vector<128x128xf32>, vector<2x128xf32> -> vector<2x128xf32>
    %165 = arith.addf %160, %164 : vector<2x128xf32>
    %c11 = arith.constant 11 : index
    %c0_188 = arith.constant 0 : index
    %166 = tpu.strided_load %arg13[%c11, %c0_188] {strides = array<i32: 30, 1>} : memref<68x128xf32, #tpu.memory_space<vmem>>, vector<2x128xf32>
    %c11_189 = arith.constant 11 : index
    %c0_190 = arith.constant 0 : index
    %c0_191 = arith.constant 0 : index
    %167 = vector.load %arg14[%c11_189, %c0_190, %c0_191] : memref<26x128x128xf32, #tpu.memory_space<vmem>>, vector<1x128x128xf32>
    %168 = vector.shape_cast %167 : vector<1x128x128xf32> to vector<128x128xf32>
    %cst_192 = arith.constant dense<0.000000e+00> : vector<2x128xf32>
    %169 = tpu.matmul %166, %168, %cst_192 {dimension_numbers = #tpu.dot_dimension_numbers<[1], [0], [0], [1], [0, 0, 1, 1], [], []>} : vector<2x128xf32>, vector<128x128xf32>, vector<2x128xf32> -> vector<2x128xf32>
    %170 = arith.addf %165, %169 : vector<2x128xf32>
    %c12 = arith.constant 12 : index
    %c0_193 = arith.constant 0 : index
    %171 = tpu.strided_load %arg13[%c12, %c0_193] {strides = array<i32: 30, 1>} : memref<68x128xf32, #tpu.memory_space<vmem>>, vector<2x128xf32>
    %c12_194 = arith.constant 12 : index
    %c0_195 = arith.constant 0 : index
    %c0_196 = arith.constant 0 : index
    %172 = vector.load %arg14[%c12_194, %c0_195, %c0_196] : memref<26x128x128xf32, #tpu.memory_space<vmem>>, vector<1x128x128xf32>
    %173 = vector.shape_cast %172 : vector<1x128x128xf32> to vector<128x128xf32>
    %cst_197 = arith.constant dense<0.000000e+00> : vector<2x128xf32>
    %174 = tpu.matmul %171, %173, %cst_197 {dimension_numbers = #tpu.dot_dimension_numbers<[1], [0], [0], [1], [0, 0, 1, 1], [], []>} : vector<2x128xf32>, vector<128x128xf32>, vector<2x128xf32> -> vector<2x128xf32>
    %175 = arith.addf %170, %174 : vector<2x128xf32>
    %c13 = arith.constant 13 : index
    %c0_198 = arith.constant 0 : index
    %176 = tpu.strided_load %arg13[%c13, %c0_198] {strides = array<i32: 30, 1>} : memref<68x128xf32, #tpu.memory_space<vmem>>, vector<2x128xf32>
    %c13_199 = arith.constant 13 : index
    %c0_200 = arith.constant 0 : index
    %c0_201 = arith.constant 0 : index
    %177 = vector.load %arg14[%c13_199, %c0_200, %c0_201] : memref<26x128x128xf32, #tpu.memory_space<vmem>>, vector<1x128x128xf32>
    %178 = vector.shape_cast %177 : vector<1x128x128xf32> to vector<128x128xf32>
    %cst_202 = arith.constant dense<0.000000e+00> : vector<2x128xf32>
    %179 = tpu.matmul %176, %178, %cst_202 {dimension_numbers = #tpu.dot_dimension_numbers<[1], [0], [0], [1], [0, 0, 1, 1], [], []>} : vector<2x128xf32>, vector<128x128xf32>, vector<2x128xf32> -> vector<2x128xf32>
    %180 = arith.addf %175, %179 : vector<2x128xf32>
    %c14 = arith.constant 14 : index
    %c0_203 = arith.constant 0 : index
    %181 = tpu.strided_load %arg13[%c14, %c0_203] {strides = array<i32: 30, 1>} : memref<68x128xf32, #tpu.memory_space<vmem>>, vector<2x128xf32>
    %c14_204 = arith.constant 14 : index
    %c0_205 = arith.constant 0 : index
    %c0_206 = arith.constant 0 : index
    %182 = vector.load %arg14[%c14_204, %c0_205, %c0_206] : memref<26x128x128xf32, #tpu.memory_space<vmem>>, vector<1x128x128xf32>
    %183 = vector.shape_cast %182 : vector<1x128x128xf32> to vector<128x128xf32>
    %cst_207 = arith.constant dense<0.000000e+00> : vector<2x128xf32>
    %184 = tpu.matmul %181, %183, %cst_207 {dimension_numbers = #tpu.dot_dimension_numbers<[1], [0], [0], [1], [0, 0, 1, 1], [], []>} : vector<2x128xf32>, vector<128x128xf32>, vector<2x128xf32> -> vector<2x128xf32>
    %185 = arith.addf %180, %184 : vector<2x128xf32>
    %c15 = arith.constant 15 : index
    %c0_208 = arith.constant 0 : index
    %186 = tpu.strided_load %arg13[%c15, %c0_208] {strides = array<i32: 30, 1>} : memref<68x128xf32, #tpu.memory_space<vmem>>, vector<2x128xf32>
    %c15_209 = arith.constant 15 : index
    %c0_210 = arith.constant 0 : index
    %c0_211 = arith.constant 0 : index
    %187 = vector.load %arg14[%c15_209, %c0_210, %c0_211] : memref<26x128x128xf32, #tpu.memory_space<vmem>>, vector<1x128x128xf32>
    %188 = vector.shape_cast %187 : vector<1x128x128xf32> to vector<128x128xf32>
    %cst_212 = arith.constant dense<0.000000e+00> : vector<2x128xf32>
    %189 = tpu.matmul %186, %188, %cst_212 {dimension_numbers = #tpu.dot_dimension_numbers<[1], [0], [0], [1], [0, 0, 1, 1], [], []>} : vector<2x128xf32>, vector<128x128xf32>, vector<2x128xf32> -> vector<2x128xf32>
    %190 = arith.addf %185, %189 : vector<2x128xf32>
    %c16 = arith.constant 16 : index
    %c0_213 = arith.constant 0 : index
    %191 = tpu.strided_load %arg13[%c16, %c0_213] {strides = array<i32: 30, 1>} : memref<68x128xf32, #tpu.memory_space<vmem>>, vector<2x128xf32>
    %c16_214 = arith.constant 16 : index
    %c0_215 = arith.constant 0 : index
    %c0_216 = arith.constant 0 : index
    %192 = vector.load %arg14[%c16_214, %c0_215, %c0_216] : memref<26x128x128xf32, #tpu.memory_space<vmem>>, vector<1x128x128xf32>
    %193 = vector.shape_cast %192 : vector<1x128x128xf32> to vector<128x128xf32>
    %cst_217 = arith.constant dense<0.000000e+00> : vector<2x128xf32>
    %194 = tpu.matmul %191, %193, %cst_217 {dimension_numbers = #tpu.dot_dimension_numbers<[1], [0], [0], [1], [0, 0, 1, 1], [], []>} : vector<2x128xf32>, vector<128x128xf32>, vector<2x128xf32> -> vector<2x128xf32>
    %195 = arith.addf %190, %194 : vector<2x128xf32>
    %c17 = arith.constant 17 : index
    %c0_218 = arith.constant 0 : index
    %196 = tpu.strided_load %arg13[%c17, %c0_218] {strides = array<i32: 30, 1>} : memref<68x128xf32, #tpu.memory_space<vmem>>, vector<2x128xf32>
    %c17_219 = arith.constant 17 : index
    %c0_220 = arith.constant 0 : index
    %c0_221 = arith.constant 0 : index
    %197 = vector.load %arg14[%c17_219, %c0_220, %c0_221] : memref<26x128x128xf32, #tpu.memory_space<vmem>>, vector<1x128x128xf32>
    %198 = vector.shape_cast %197 : vector<1x128x128xf32> to vector<128x128xf32>
    %cst_222 = arith.constant dense<0.000000e+00> : vector<2x128xf32>
    %199 = tpu.matmul %196, %198, %cst_222 {dimension_numbers = #tpu.dot_dimension_numbers<[1], [0], [0], [1], [0, 0, 1, 1], [], []>} : vector<2x128xf32>, vector<128x128xf32>, vector<2x128xf32> -> vector<2x128xf32>
    %200 = arith.addf %195, %199 : vector<2x128xf32>
    %c18 = arith.constant 18 : index
    %c0_223 = arith.constant 0 : index
    %201 = tpu.strided_load %arg13[%c18, %c0_223] {strides = array<i32: 30, 1>} : memref<68x128xf32, #tpu.memory_space<vmem>>, vector<2x128xf32>
    %c18_224 = arith.constant 18 : index
    %c0_225 = arith.constant 0 : index
    %c0_226 = arith.constant 0 : index
    %202 = vector.load %arg14[%c18_224, %c0_225, %c0_226] : memref<26x128x128xf32, #tpu.memory_space<vmem>>, vector<1x128x128xf32>
    %203 = vector.shape_cast %202 : vector<1x128x128xf32> to vector<128x128xf32>
    %cst_227 = arith.constant dense<0.000000e+00> : vector<2x128xf32>
    %204 = tpu.matmul %201, %203, %cst_227 {dimension_numbers = #tpu.dot_dimension_numbers<[1], [0], [0], [1], [0, 0, 1, 1], [], []>} : vector<2x128xf32>, vector<128x128xf32>, vector<2x128xf32> -> vector<2x128xf32>
    %205 = arith.addf %200, %204 : vector<2x128xf32>
    %c19 = arith.constant 19 : index
    %c0_228 = arith.constant 0 : index
    %206 = tpu.strided_load %arg13[%c19, %c0_228] {strides = array<i32: 30, 1>} : memref<68x128xf32, #tpu.memory_space<vmem>>, vector<2x128xf32>
    %c19_229 = arith.constant 19 : index
    %c0_230 = arith.constant 0 : index
    %c0_231 = arith.constant 0 : index
    %207 = vector.load %arg14[%c19_229, %c0_230, %c0_231] : memref<26x128x128xf32, #tpu.memory_space<vmem>>, vector<1x128x128xf32>
    %208 = vector.shape_cast %207 : vector<1x128x128xf32> to vector<128x128xf32>
    %cst_232 = arith.constant dense<0.000000e+00> : vector<2x128xf32>
    %209 = tpu.matmul %206, %208, %cst_232 {dimension_numbers = #tpu.dot_dimension_numbers<[1], [0], [0], [1], [0, 0, 1, 1], [], []>} : vector<2x128xf32>, vector<128x128xf32>, vector<2x128xf32> -> vector<2x128xf32>
    %210 = arith.addf %205, %209 : vector<2x128xf32>
    %c20 = arith.constant 20 : index
    %c0_233 = arith.constant 0 : index
    %211 = tpu.strided_load %arg13[%c20, %c0_233] {strides = array<i32: 30, 1>} : memref<68x128xf32, #tpu.memory_space<vmem>>, vector<2x128xf32>
    %c20_234 = arith.constant 20 : index
    %c0_235 = arith.constant 0 : index
    %c0_236 = arith.constant 0 : index
    %212 = vector.load %arg14[%c20_234, %c0_235, %c0_236] : memref<26x128x128xf32, #tpu.memory_space<vmem>>, vector<1x128x128xf32>
    %213 = vector.shape_cast %212 : vector<1x128x128xf32> to vector<128x128xf32>
    %cst_237 = arith.constant dense<0.000000e+00> : vector<2x128xf32>
    %214 = tpu.matmul %211, %213, %cst_237 {dimension_numbers = #tpu.dot_dimension_numbers<[1], [0], [0], [1], [0, 0, 1, 1], [], []>} : vector<2x128xf32>, vector<128x128xf32>, vector<2x128xf32> -> vector<2x128xf32>
    %215 = arith.addf %210, %214 : vector<2x128xf32>
    %c21 = arith.constant 21 : index
    %c0_238 = arith.constant 0 : index
    %216 = tpu.strided_load %arg13[%c21, %c0_238] {strides = array<i32: 30, 1>} : memref<68x128xf32, #tpu.memory_space<vmem>>, vector<2x128xf32>
    %c21_239 = arith.constant 21 : index
    %c0_240 = arith.constant 0 : index
    %c0_241 = arith.constant 0 : index
    %217 = vector.load %arg14[%c21_239, %c0_240, %c0_241] : memref<26x128x128xf32, #tpu.memory_space<vmem>>, vector<1x128x128xf32>
    %218 = vector.shape_cast %217 : vector<1x128x128xf32> to vector<128x128xf32>
    %cst_242 = arith.constant dense<0.000000e+00> : vector<2x128xf32>
    %219 = tpu.matmul %216, %218, %cst_242 {dimension_numbers = #tpu.dot_dimension_numbers<[1], [0], [0], [1], [0, 0, 1, 1], [], []>} : vector<2x128xf32>, vector<128x128xf32>, vector<2x128xf32> -> vector<2x128xf32>
    %220 = arith.addf %215, %219 : vector<2x128xf32>
    %c22 = arith.constant 22 : index
    %c0_243 = arith.constant 0 : index
    %221 = tpu.strided_load %arg13[%c22, %c0_243] {strides = array<i32: 30, 1>} : memref<68x128xf32, #tpu.memory_space<vmem>>, vector<2x128xf32>
    %c22_244 = arith.constant 22 : index
    %c0_245 = arith.constant 0 : index
    %c0_246 = arith.constant 0 : index
    %222 = vector.load %arg14[%c22_244, %c0_245, %c0_246] : memref<26x128x128xf32, #tpu.memory_space<vmem>>, vector<1x128x128xf32>
    %223 = vector.shape_cast %222 : vector<1x128x128xf32> to vector<128x128xf32>
    %cst_247 = arith.constant dense<0.000000e+00> : vector<2x128xf32>
    %224 = tpu.matmul %221, %223, %cst_247 {dimension_numbers = #tpu.dot_dimension_numbers<[1], [0], [0], [1], [0, 0, 1, 1], [], []>} : vector<2x128xf32>, vector<128x128xf32>, vector<2x128xf32> -> vector<2x128xf32>
    %225 = arith.addf %220, %224 : vector<2x128xf32>
    %c23 = arith.constant 23 : index
    %c0_248 = arith.constant 0 : index
    %226 = tpu.strided_load %arg13[%c23, %c0_248] {strides = array<i32: 30, 1>} : memref<68x128xf32, #tpu.memory_space<vmem>>, vector<2x128xf32>
    %c23_249 = arith.constant 23 : index
    %c0_250 = arith.constant 0 : index
    %c0_251 = arith.constant 0 : index
    %227 = vector.load %arg14[%c23_249, %c0_250, %c0_251] : memref<26x128x128xf32, #tpu.memory_space<vmem>>, vector<1x128x128xf32>
    %228 = vector.shape_cast %227 : vector<1x128x128xf32> to vector<128x128xf32>
    %cst_252 = arith.constant dense<0.000000e+00> : vector<2x128xf32>
    %229 = tpu.matmul %226, %228, %cst_252 {dimension_numbers = #tpu.dot_dimension_numbers<[1], [0], [0], [1], [0, 0, 1, 1], [], []>} : vector<2x128xf32>, vector<128x128xf32>, vector<2x128xf32> -> vector<2x128xf32>
    %230 = arith.addf %225, %229 : vector<2x128xf32>
    %c24 = arith.constant 24 : index
    %c0_253 = arith.constant 0 : index
    %231 = tpu.strided_load %arg13[%c24, %c0_253] {strides = array<i32: 30, 1>} : memref<68x128xf32, #tpu.memory_space<vmem>>, vector<2x128xf32>
    %c24_254 = arith.constant 24 : index
    %c0_255 = arith.constant 0 : index
    %c0_256 = arith.constant 0 : index
    %232 = vector.load %arg14[%c24_254, %c0_255, %c0_256] : memref<26x128x128xf32, #tpu.memory_space<vmem>>, vector<1x128x128xf32>
    %233 = vector.shape_cast %232 : vector<1x128x128xf32> to vector<128x128xf32>
    %cst_257 = arith.constant dense<0.000000e+00> : vector<2x128xf32>
    %234 = tpu.matmul %231, %233, %cst_257 {dimension_numbers = #tpu.dot_dimension_numbers<[1], [0], [0], [1], [0, 0, 1, 1], [], []>} : vector<2x128xf32>, vector<128x128xf32>, vector<2x128xf32> -> vector<2x128xf32>
    %235 = arith.addf %230, %234 : vector<2x128xf32>
    %c25 = arith.constant 25 : index
    %c0_258 = arith.constant 0 : index
    %236 = tpu.strided_load %arg13[%c25, %c0_258] {strides = array<i32: 30, 1>} : memref<68x128xf32, #tpu.memory_space<vmem>>, vector<2x128xf32>
    %c25_259 = arith.constant 25 : index
    %c0_260 = arith.constant 0 : index
    %c0_261 = arith.constant 0 : index
    %237 = vector.load %arg14[%c25_259, %c0_260, %c0_261] : memref<26x128x128xf32, #tpu.memory_space<vmem>>, vector<1x128x128xf32>
    %238 = vector.shape_cast %237 : vector<1x128x128xf32> to vector<128x128xf32>
    %cst_262 = arith.constant dense<0.000000e+00> : vector<2x128xf32>
    %239 = tpu.matmul %236, %238, %cst_262 {dimension_numbers = #tpu.dot_dimension_numbers<[1], [0], [0], [1], [0, 0, 1, 1], [], []>} : vector<2x128xf32>, vector<128x128xf32>, vector<2x128xf32> -> vector<2x128xf32>
    %240 = arith.addf %235, %239 : vector<2x128xf32>
    %c4_263 = arith.constant 4 : index
    %c0_264 = arith.constant 0 : index
    %241 = vector.load %arg7[%c4_263, %c0_264] : memref<16x128xf32, #tpu.memory_space<vmem>>, vector<1x128xf32>
    %242 = vector.broadcast %241 : vector<1x128xf32> to vector<2x128xf32>
    %243 = arith.addf %240, %242 : vector<2x128xf32>
    %cst_265 = arith.constant 0.000000e+00 : f32
    %244 = vector.broadcast %cst_265 : f32 to vector<2x128xf32>
    %245 = arith.maximumf %243, %244 : vector<2x128xf32>
    %c0_266 = arith.constant 0 : index
    %c0_267 = arith.constant 0 : index
    %246 = vector.load %arg8[%c0_266, %c0_267] : memref<160x16xf32, #tpu.memory_space<vmem>>, vector<128x10xf32>
    %cst_268 = arith.constant dense<0.000000e+00> : vector<2x10xf32>
    %247 = tpu.matmul %245, %246, %cst_268 {dimension_numbers = #tpu.dot_dimension_numbers<[1], [0], [0], [1], [0, 0, 1, 1], [], []>} : vector<2x128xf32>, vector<128x10xf32>, vector<2x10xf32> -> vector<2x10xf32>
    %c5_269 = arith.constant 5 : index
    %c0_270 = arith.constant 0 : index
    %248 = vector.load %arg7[%c5_269, %c0_270] : memref<16x128xf32, #tpu.memory_space<vmem>>, vector<1x10xf32>
    %249 = vector.broadcast %248 : vector<1x10xf32> to vector<2x10xf32>
    %250 = arith.addf %247, %249 : vector<2x10xf32>
    %cst_271 = arith.constant 0.000000e+00 : f32
    %251 = vector.broadcast %cst_271 : f32 to vector<2x10xf32>
    %252 = arith.maximumf %250, %251 : vector<2x10xf32>
    %c128 = arith.constant 128 : index
    %c0_272 = arith.constant 0 : index
    %253 = vector.load %arg8[%c128, %c0_272] : memref<160x16xf32, #tpu.memory_space<vmem>>, vector<10x5xf32>
    %c138 = arith.constant 138 : index
    %c0_273 = arith.constant 0 : index
    %254 = vector.load %arg8[%c138, %c0_273] : memref<160x16xf32, #tpu.memory_space<vmem>>, vector<5x5xf32>
    %c0_274 = arith.constant 0 : index
    %c0_275 = arith.constant 0 : index
    %255 = vector.load %arg1[%c0_274, %c0_275] : memref<2x10xf32, #tpu.memory_space<vmem>>, vector<2x10xf32>
    %cst_276 = arith.constant dense<0.000000e+00> : vector<2x5xf32>
    %256 = tpu.matmul %255, %253, %cst_276 {dimension_numbers = #tpu.dot_dimension_numbers<[1], [0], [0], [1], [0, 0, 1, 1], [], []>} : vector<2x10xf32>, vector<10x5xf32>, vector<2x5xf32> -> vector<2x5xf32>
    %c6_277 = arith.constant 6 : index
    %c0_278 = arith.constant 0 : index
    %257 = vector.load %arg7[%c6_277, %c0_278] : memref<16x128xf32, #tpu.memory_space<vmem>>, vector<1x5xf32>
    %258 = vector.broadcast %257 : vector<1x5xf32> to vector<2x5xf32>
    %259 = arith.addf %256, %258 : vector<2x5xf32>
    %cst_279 = arith.constant 0.000000e+00 : f32
    %260 = vector.broadcast %cst_279 : f32 to vector<2x5xf32>
    %261 = arith.maximumf %259, %260 : vector<2x5xf32>
    %cst_280 = arith.constant dense<0.000000e+00> : vector<2x5xf32>
    %262 = tpu.matmul %261, %254, %cst_280 {dimension_numbers = #tpu.dot_dimension_numbers<[1], [0], [0], [1], [0, 0, 1, 1], [], []>} : vector<2x5xf32>, vector<5x5xf32>, vector<2x5xf32> -> vector<2x5xf32>
    %c7_281 = arith.constant 7 : index
    %c0_282 = arith.constant 0 : index
    %263 = vector.load %arg7[%c7_281, %c0_282] : memref<16x128xf32, #tpu.memory_space<vmem>>, vector<1x5xf32>
    %264 = vector.broadcast %263 : vector<1x5xf32> to vector<2x5xf32>
    %265 = arith.addf %262, %264 : vector<2x5xf32>
    %cst_283 = arith.constant 0.000000e+00 : f32
    %266 = vector.broadcast %cst_283 : f32 to vector<2x5xf32>
    %267 = arith.maximumf %265, %266 : vector<2x5xf32>
    %c143 = arith.constant 143 : index
    %c0_284 = arith.constant 0 : index
    %268 = vector.load %arg8[%c143, %c0_284] : memref<160x16xf32, #tpu.memory_space<vmem>>, vector<10x1xf32>
    %c153 = arith.constant 153 : index
    %c0_285 = arith.constant 0 : index
    %269 = vector.load %arg8[%c153, %c0_285] : memref<160x16xf32, #tpu.memory_space<vmem>>, vector<5x1xf32>
    %cst_286 = arith.constant dense<0.000000e+00> : vector<2x1xf32>
    %270 = tpu.matmul %252, %268, %cst_286 {dimension_numbers = #tpu.dot_dimension_numbers<[1], [0], [0], [1], [0, 0, 1, 1], [], []>} : vector<2x10xf32>, vector<10x1xf32>, vector<2x1xf32> -> vector<2x1xf32>
    %cst_287 = arith.constant dense<0.000000e+00> : vector<2x1xf32>
    %271 = tpu.matmul %267, %269, %cst_287 {dimension_numbers = #tpu.dot_dimension_numbers<[1], [0], [0], [1], [0, 0, 1, 1], [], []>} : vector<2x5xf32>, vector<5x1xf32>, vector<2x1xf32> -> vector<2x1xf32>
    %272 = arith.addf %270, %271 : vector<2x1xf32>
    %c8_288 = arith.constant 8 : index
    %c0_289 = arith.constant 0 : index
    %273 = vector.load %arg7[%c8_288, %c0_289] : memref<16x128xf32, #tpu.memory_space<vmem>>, vector<1x1xf32>
    %274 = vector.broadcast %273 : vector<1x1xf32> to vector<2x1xf32>
    %275 = arith.addf %272, %274 : vector<2x1xf32>
    %276 = math.absf %275 : vector<2x1xf32>
    %cst_290 = arith.constant 0.000000e+00 : f32
    %277 = vector.broadcast %cst_290 : f32 to vector<2x1xf32>
    %278 = arith.subf %277, %276 : vector<2x1xf32>
    %279 = math.exp %278 : vector<2x1xf32>
    %cst_291 = arith.constant 1.000000e+00 : f32
    %280 = vector.broadcast %cst_291 : f32 to vector<2x1xf32>
    %281 = arith.addf %280, %279 : vector<2x1xf32>
    %cst_292 = arith.constant 1.000000e+00 : f32
    %282 = vector.broadcast %cst_292 : f32 to vector<2x1xf32>
    %283 = arith.divf %282, %281 : vector<2x1xf32>
    %cst_293 = arith.constant 0.000000e+00 : f32
    %284 = vector.broadcast %cst_293 : f32 to vector<2x1xf32>
    %285 = arith.cmpf oge, %275, %284 : vector<2x1xf32>
    %cst_294 = arith.constant 1.000000e+00 : f32
    %286 = vector.broadcast %cst_294 : f32 to vector<2x1xf32>
    %287 = arith.subf %286, %283 : vector<2x1xf32>
    %288 = arith.select %285, %283, %287 : vector<2x1xi1>, vector<2x1xf32>
    %c0_295 = arith.constant 0 : index
    %c0_296 = arith.constant 0 : index
    %289 = vector.load %arg9[%c0_295, %c0_296] : memref<2x1xf32, #tpu.memory_space<vmem>>, vector<2x1xf32>
    tpu.vector_store %arg9[%c0_295, %c0_296], %288 {strides = array<i32>} : memref<2x1xf32, #tpu.memory_space<vmem>>, vector<2x1xf32>,
    return
  }
}

</mosaic_0001>

<llo_original>
// kernel: forward.1
$region0: #{forward.1}
  #allocation0 [shape = 'u32[]', space=smem, size = 0x4, offset = 0x4, fixed_abs, tag = 'smem constant byte address 0x4 - core index']
  #allocation1 [shape = 'u32[144,128]{1,0:T(1,128)}', space=vmem, size = 0x12000, scoped, tag = 'internal scratch']
  #allocation2 [shape = 'f32[488,16]{1,0:T(8,128)}', space=vmem, size = 0x3d000, scoped, tag = 'scratch operand']
  #allocation3 [shape = 'f32[248,32]{1,0:T(8,128)}', space=vmem, size = 0x1f000, scoped, tag = 'scratch operand']
  #allocation4 [shape = 'f32[128,64]{1,0:T(8,128)}', space=vmem, size = 0x10000, scoped, tag = 'scratch operand']
  #allocation5 [shape = 'f32[68,128]{1,0:T(8,128)}', space=vmem, size = 0x9000, scoped, tag = 'scratch operand']
  #allocation6 [shape = 'f32[26,128,128]{2,1,0:T(8,128)}', space=vmem, size = 0x1a0000, scoped, tag = 'scratch operand']
  #allocation7 [shape = 's32[1]{0}', space=sflag, size = 0x4, scoped, tag = 'scratch operand']
  #allocation8 [shape = 's32[]', space=sflag, size = 0x4, offset = 0, fixed_abs, tag = 'sflag constant byte address 0x0 - dummy sync flag']
  %s0 = inlined_call_operand.vmem [shape: f32[488,18], index: 0, kind: input, shape index: {}]
  %s1 = inlined_call_operand.vmem [shape: f32[2,10], index: 1, kind: input, shape index: {}]
  %s2 = inlined_call_operand.vmem [shape: f32[18,16], index: 2, kind: input, shape index: {}]
  %s3 = inlined_call_operand.vmem [shape: f32[6,16,32], index: 3, kind: input, shape index: {}]
  %s4 = inlined_call_operand.vmem [shape: f32[6,32,64], index: 4, kind: input, shape index: {}]
  %s5 = inlined_call_operand.vmem [shape: f32[6,64,128], index: 5, kind: input, shape index: {}]
  %s6 = inlined_call_operand.vmem [shape: f32[26,128,128], index: 6, kind: input, shape index: {}]
  %s7 = inlined_call_operand.vmem [shape: f32[16,128], index: 7, kind: input, shape index: {}]
  %s8 = inlined_call_operand.vmem [shape: f32[160,16], index: 8, kind: input, shape index: {}]
  %s9 = inlined_call_operand.vmem [shape: f32[2,1], index: 9, kind: output, shape index: {}]
  %s10 = sld [smem:[#allocation0]]
  $region76: #{forward.1} parent=0
    _
  %s12 = ssub.s32 1, %s10
  %s13 = scalar_select 0, %s12, %s10
  // Predicated region
  $region2: #{forward.1} parent=0 // pred_check
    _
  $region3: #{forward.1} parent=0 // pred_check_branch
    %15 = sbr.rel (0) target = $region5
  $region4: #{forward.1} parent=0 // pred_region
    _
  $region5: #{forward.1} parent=0 // pred_fallthru
    _
  // Predicated region
  $region6: #{forward.1} parent=0 // pred_check
    _
  $region7: #{forward.1} parent=0 // pred_check_branch
    %17 = sbr.rel (0) target = $region9
  $region8: #{forward.1} parent=0 // pred_region
    _
  $region9: #{forward.1} parent=0 // pred_fallthru
    _
  // Predicated region
  $region10: #{forward.1} parent=0 // pred_check
    _
  $region11: #{forward.1} parent=0 // pred_check_branch
    %19 = sbr.rel (0) target = $region13
  $region12: #{forward.1} parent=0 // pred_region
    _
  $region13: #{forward.1} parent=0 // pred_fallthru
    _
  // Predicated region
  $region14: #{forward.1} parent=0 // pred_check
    _
  $region15: #{forward.1} parent=0 // pred_check_branch
    %21 = sbr.rel (0) target = $region17
  $region16: #{forward.1} parent=0 // pred_region
    _
  $region17: #{forward.1} parent=0 // pred_fallthru
    _
  // Predicated region
  $region18: #{forward.1} parent=0 // pred_check
    _
  $region19: #{forward.1} parent=0 // pred_check_branch
    %23 = sbr.rel (0) target = $region21
  $region20: #{forward.1} parent=0 // pred_region
    _
  $region21: #{forward.1} parent=0 // pred_fallthru
    _
  // Predicated region
  $region22: #{forward.1} parent=0 // pred_check
    _
  $region23: #{forward.1} parent=0 // pred_check_branch
    %25 = sbr.rel (0) target = $region25
  $region24: #{forward.1} parent=0 // pred_region
    _
  $region25: #{forward.1} parent=0 // pred_fallthru
    _
  // Predicated region
  $region26: #{forward.1} parent=0 // pred_check
    _
  $region27: #{forward.1} parent=0 // pred_check_branch
    %27 = sbr.rel (0) target = $region29
  $region28: #{forward.1} parent=0 // pred_region
    _
  $region29: #{forward.1} parent=0 // pred_fallthru
    _
  // Predicated region
  $region30: #{forward.1} parent=0 // pred_check
    _
  $region31: #{forward.1} parent=0 // pred_check_branch
    %29 = sbr.rel (0) target = $region33
  $region32: #{forward.1} parent=0 // pred_region
    _
  $region33: #{forward.1} parent=0 // pred_fallthru
    _
  %p31 = scmp.lt.u32.totalorder 3328, 8
  %p32 = pneg %p31
  // Predicated region
  $region34: #{forward.1} parent=0 // pred_check
    _
  $region35: #{forward.1} parent=0 // pred_check_branch
    %34 = sbr.rel (%p31) target = $region37
  $region36: #{forward.1} parent=0 // pred_region
    %s50 = sand.u32 3328, 7
    %p51 = scmp.eq.s32.totalorder %s50, 0
    // Predicated region
    $region49: #{forward.1} parent=36 // pred_check
      %p52 = pneg %p51
    $region50: #{forward.1} parent=36 // pred_check_branch
      %54 = sbr.rel (%p52) target = $region52
    $region51: #{forward.1} parent=36 // pred_region
      loop: start=0, step=1, limit=1
      $region53: #{forward.1} parent=51 // loop_pre_header
        _
      $region54: #{forward.1} parent=51 // loop_header
        %s56 = sphi 0, %s60
        %p57 = scmp.ge.s32.totalorder %s56, 1
        %s61 = sphi %s6, %s6
        %s62 = sphi [#allocation6], [#allocation6]
      $region55: #{forward.1} parent=51 // loop_header_branch
        %59 = sbr.rel (%p57) target = $region59
      $region56: #{forward.1} parent=51 // loop_body
        %v63 = vld [vmem:[%s61] sm:$0xff]
        %64 = vst [vmem:[%s62] sm:$0xff] %v63
        %v65 = vld [vmem:[%s61 + $0x8] sm:$0xff]
        %66 = vst [vmem:[%s62 + $0x8] sm:$0xff] %v65
        %v67 = vld [vmem:[%s61 + $0x10] sm:$0xff]
        %68 = vst [vmem:[%s62 + $0x10] sm:$0xff] %v67
        %v69 = vld [vmem:[%s61 + $0x18] sm:$0xff]
        %70 = vst [vmem:[%s62 + $0x18] sm:$0xff] %v69
        %v71 = vld [vmem:[%s61 + $0x20] sm:$0xff]
        %72 = vst [vmem:[%s62 + $0x20] sm:$0xff] %v71
        %v73 = vld [vmem:[%s61 + $0x28] sm:$0xff]
        %74 = vst [vmem:[%s62 + $0x28] sm:$0xff] %v73
        %v75 = vld [vmem:[%s61 + $0x30] sm:$0xff]
        %76 = vst [vmem:[%s62 + $0x30] sm:$0xff] %v75
        %v77 = vld [vmem:[%s61 + $0x38] sm:$0xff]
        %78 = vst [vmem:[%s62 + $0x38] sm:$0xff] %v77
        %v79 = vld [vmem:[%s61 + $0x40] sm:$0xff]
        %80 = vst [vmem:[%s62 + $0x40] sm:$0xff] %v79
        %v81 = vld [vmem:[%s61 + $0x48] sm:$0xff]
        %82 = vst [vmem:[%s62 + $0x48] sm:$0xff] %v81
        %v83 = vld [vmem:[%s61 + $0x50] sm:$0xff]
        %84 = vst [vmem:[%s62 + $0x50] sm:$0xff] %v83
        %v85 = vld [vmem:[%s61 + $0x58] sm:$0xff]
        %86 = vst [vmem:[%s62 + $0x58] sm:$0xff] %v85
        %v87 = vld [vmem:[%s61 + $0x60] sm:$0xff]
        %88 = vst [vmem:[%s62 + $0x60] sm:$0xff] %v87
        %v89 = vld [vmem:[%s61 + $0x68] sm:$0xff]
        %90 = vst [vmem:[%s62 + $0x68] sm:$0xff] %v89
        %v91 = vld [vmem:[%s61 + $0x70] sm:$0xff]
        %92 = vst [vmem:[%s62 + $0x70] sm:$0xff] %v91
        %v93 = vld [vmem:[%s61 + $0x78] sm:$0xff]
        %94 = vst [vmem:[%s62 + $0x78] sm:$0xff] %v93
        %v95 = vld [vmem:[%s61 + $0x80] sm:$0xff]
        %96 = vst [vmem:[%s62 + $0x80] sm:$0xff] %v95
        %v97 = vld [vmem:[%s61 + $0x88] sm:$0xff]
        %98 = vst [vmem:[%s62 + $0x88] sm:$0xff] %v97
        %v99 = vld [vmem:[%s61 + $0x90] sm:$0xff]
        %100 = vst [vmem:[%s62 + $0x90] sm:$0xff] %v99
        %v101 = vld [vmem:[%s61 + $0x98] sm:$0xff]
        %102 = vst [vmem:[%s62 + $0x98] sm:$0xff] %v101
        %v103 = vld [vmem:[%s61 + $0xa0] sm:$0xff]
        %104 = vst [vmem:[%s62 + $0xa0] sm:$0xff] %v103
        %v105 = vld [vmem:[%s61 + $0xa8] sm:$0xff]
        %106 = vst [vmem:[%s62 + $0xa8] sm:$0xff] %v105
        %v107 = vld [vmem:[%s61 + $0xb0] sm:$0xff]
        %108 = vst [vmem:[%s62 + $0xb0] sm:$0xff] %v107
        %v109 = vld [vmem:[%s61 + $0xb8] sm:$0xff]
        %110 = vst [vmem:[%s62 + $0xb8] sm:$0xff] %v109
        %v111 = vld [vmem:[%s61 + $0xc0] sm:$0xff]
        %112 = vst [vmem:[%s62 + $0xc0] sm:$0xff] %v111
        %v113 = vld [vmem:[%s61 + $0xc8] sm:$0xff]
        %114 = vst [vmem:[%s62 + $0xc8] sm:$0xff] %v113
        %v115 = vld [vmem:[%s61 + $0xd0] sm:$0xff]
        %116 = vst [vmem:[%s62 + $0xd0] sm:$0xff] %v115
        %v117 = vld [vmem:[%s61 + $0xd8] sm:$0xff]
        %118 = vst [vmem:[%s62 + $0xd8] sm:$0xff] %v117
        %v119 = vld [vmem:[%s61 + $0xe0] sm:$0xff]
        %120 = vst [vmem:[%s62 + $0xe0] sm:$0xff] %v119
        %v121 = vld [vmem:[%s61 + $0xe8] sm:$0xff]
        %122 = vst [vmem:[%s62 + $0xe8] sm:$0xff] %v121
        %v123 = vld [vmem:[%s61 + $0xf0] sm:$0xff]
        %124 = vst [vmem:[%s62 + $0xf0] sm:$0xff] %v123
        %v125 = vld [vmem:[%s61 + $0xf8] sm:$0xff]
        %126 = vst [vmem:[%s62 + $0xf8] sm:$0xff] %v125
        %v127 = vld [vmem:[%s61 + $0x100] sm:$0xff]
        %128 = vst [vmem:[%s62 + $0x100] sm:$0xff] %v127
        %v129 = vld [vmem:[%s61 + $0x108] sm:$0xff]
        %130 = vst [vmem:[%s62 + $0x108] sm:$0xff] %v129
        %v131 = vld [vmem:[%s61 + $0x110] sm:$0xff]
        %132 = vst [vmem:[%s62 + $0x110] sm:$0xff] %v131
        %v133 = vld [vmem:[%s61 + $0x118] sm:$0xff]
        %134 = vst [vmem:[%s62 + $0x118] sm:$0xff] %v133
        %v135 = vld [vmem:[%s61 + $0x120] sm:$0xff]
        %136 = vst [vmem:[%s62 + $0x120] sm:$0xff] %v135
        %v137 = vld [vmem:[%s61 + $0x128] sm:$0xff]
        %138 = vst [vmem:[%s62 + $0x128] sm:$0xff] %v137
        %v139 = vld [vmem:[%s61 + $0x130] sm:$0xff]
        %140 = vst [vmem:[%s62 + $0x130] sm:$0xff] %v139
        %v141 = vld [vmem:[%s61 + $0x138] sm:$0xff]
        %142 = vst [vmem:[%s62 + $0x138] sm:$0xff] %v141
        %v143 = vld [vmem:[%s61 + $0x140] sm:$0xff]
        %144 = vst [vmem:[%s62 + $0x140] sm:$0xff] %v143
        %v145 = vld [vmem:[%s61 + $0x148] sm:$0xff]
        %146 = vst [vmem:[%s62 + $0x148] sm:$0xff] %v145
        %v147 = vld [vmem:[%s61 + $0x150] sm:$0xff]
        %148 = vst [vmem:[%s62 + $0x150] sm:$0xff] %v147
        %v149 = vld [vmem:[%s61 + $0x158] sm:$0xff]
        %150 = vst [vmem:[%s62 + $0x158] sm:$0xff] %v149
        %v151 = vld [vmem:[%s61 + $0x160] sm:$0xff]
        %152 = vst [vmem:[%s62 + $0x160] sm:$0xff] %v151
        %v153 = vld [vmem:[%s61 + $0x168] sm:$0xff]
        %154 = vst [vmem:[%s62 + $0x168] sm:$0xff] %v153
        %v155 = vld [vmem:[%s61 + $0x170] sm:$0xff]
        %156 = vst [vmem:[%s62 + $0x170] sm:$0xff] %v155
        %v157 = vld [vmem:[%s61 + $0x178] sm:$0xff]
        %158 = vst [vmem:[%s62 + $0x178] sm:$0xff] %v157
        %v159 = vld [vmem:[%s61 + $0x180] sm:$0xff]
        %160 = vst [vmem:[%s62 + $0x180] sm:$0xff] %v159
        %v161 = vld [vmem:[%s61 + $0x188] sm:$0xff]
        %162 = vst [vmem:[%s62 + $0x188] sm:$0xff] %v161
        %v163 = vld [vmem:[%s61 + $0x190] sm:$0xff]
        %164 = vst [vmem:[%s62 + $0x190] sm:$0xff] %v163
        %v165 = vld [vmem:[%s61 + $0x198] sm:$0xff]
        %166 = vst [vmem:[%s62 + $0x198] sm:$0xff] %v165
        %v167 = vld [vmem:[%s61 + $0x1a0] sm:$0xff]
        %168 = vst [vmem:[%s62 + $0x1a0] sm:$0xff] %v167
        %v169 = vld [vmem:[%s61 + $0x1a8] sm:$0xff]
        %170 = vst [vmem:[%s62 + $0x1a8] sm:$0xff] %v169
        %v171 = vld [vmem:[%s61 + $0x1b0] sm:$0xff]
        %172 = vst [vmem:[%s62 + $0x1b0] sm:$0xff] %v171
        %v173 = vld [vmem:[%s61 + $0x1b8] sm:$0xff]
        %174 = vst [vmem:[%s62 + $0x1b8] sm:$0xff] %v173
        %v175 = vld [vmem:[%s61 + $0x1c0] sm:$0xff]
        %176 = vst [vmem:[%s62 + $0x1c0] sm:$0xff] %v175
        %v177 = vld [vmem:[%s61 + $0x1c8] sm:$0xff]
        %178 = vst [vmem:[%s62 + $0x1c8] sm:$0xff] %v177
        %v179 = vld [vmem:[%s61 + $0x1d0] sm:$0xff]
        %180 = vst [vmem:[%s62 + $0x1d0] sm:$0xff] %v179
        %v181 = vld [vmem:[%s61 + $0x1d8] sm:$0xff]
        %182 = vst [vmem:[%s62 + $0x1d8] sm:$0xff] %v181
        %v183 = vld [vmem:[%s61 + $0x1e0] sm:$0xff]
        %184 = vst [vmem:[%s62 + $0x1e0] sm:$0xff] %v183
        %v185 = vld [vmem:[%s61 + $0x1e8] sm:$0xff]
        %186 = vst [vmem:[%s62 + $0x1e8] sm:$0xff] %v185
        %v187 = vld [vmem:[%s61 + $0x1f0] sm:$0xff]
        %188 = vst [vmem:[%s62 + $0x1f0] sm:$0xff] %v187
        %v189 = vld [vmem:[%s61 + $0x1f8] sm:$0xff]
        %190 = vst [vmem:[%s62 + $0x1f8] sm:$0xff] %v189
        %v191 = vld [vmem:[%s61 + $0x200] sm:$0xff]
        %192 = vst [vmem:[%s62 + $0x200] sm:$0xff] %v191
        %v193 = vld [vmem:[%s61 + $0x208] sm:$0xff]
        %194 = vst [vmem:[%s62 + $0x208] sm:$0xff] %v193
        %v195 = vld [vmem:[%s61 + $0x210] sm:$0xff]
        %196 = vst [vmem:[%s62 + $0x210] sm:$0xff] %v195
        %v197 = vld [vmem:[%s61 + $0x218] sm:$0xff]
        %198 = vst [vmem:[%s62 + $0x218] sm:$0xff] %v197
        %v199 = vld [vmem:[%s61 + $0x220] sm:$0xff]
        %200 = vst [vmem:[%s62 + $0x220] sm:$0xff] %v199
        %v201 = vld [vmem:[%s61 + $0x228] sm:$0xff]
        %202 = vst [vmem:[%s62 + $0x228] sm:$0xff] %v201
        %v203 = vld [vmem:[%s61 + $0x230] sm:$0xff]
        %204 = vst [vmem:[%s62 + $0x230] sm:$0xff] %v203
        %v205 = vld [vmem:[%s61 + $0x238] sm:$0xff]
        %206 = vst [vmem:[%s62 + $0x238] sm:$0xff] %v205
        %v207 = vld [vmem:[%s61 + $0x240] sm:$0xff]
        %208 = vst [vmem:[%s62 + $0x240] sm:$0xff] %v207
        %v209 = vld [vmem:[%s61 + $0x248] sm:$0xff]
        %210 = vst [vmem:[%s62 + $0x248] sm:$0xff] %v209
        %v211 = vld [vmem:[%s61 + $0x250] sm:$0xff]
        %212 = vst [vmem:[%s62 + $0x250] sm:$0xff] %v211
        %v213 = vld [vmem:[%s61 + $0x258] sm:$0xff]
        %214 = vst [vmem:[%s62 + $0x258] sm:$0xff] %v213
        %v215 = vld [vmem:[%s61 + $0x260] sm:$0xff]
        %216 = vst [vmem:[%s62 + $0x260] sm:$0xff] %v215
        %v217 = vld [vmem:[%s61 + $0x268] sm:$0xff]
        %218 = vst [vmem:[%s62 + $0x268] sm:$0xff] %v217
        %v219 = vld [vmem:[%s61 + $0x270] sm:$0xff]
        %220 = vst [vmem:[%s62 + $0x270] sm:$0xff] %v219
        %v221 = vld [vmem:[%s61 + $0x278] sm:$0xff]
        %222 = vst [vmem:[%s62 + $0x278] sm:$0xff] %v221
        %v223 = vld [vmem:[%s61 + $0x280] sm:$0xff]
        %224 = vst [vmem:[%s62 + $0x280] sm:$0xff] %v223
        %v225 = vld [vmem:[%s61 + $0x288] sm:$0xff]
        %226 = vst [vmem:[%s62 + $0x288] sm:$0xff] %v225
        %v227 = vld [vmem:[%s61 + $0x290] sm:$0xff]
        %228 = vst [vmem:[%s62 + $0x290] sm:$0xff] %v227
        %v229 = vld [vmem:[%s61 + $0x298] sm:$0xff]
        %230 = vst [vmem:[%s62 + $0x298] sm:$0xff] %v229
        %v231 = vld [vmem:[%s61 + $0x2a0] sm:$0xff]
        %232 = vst [vmem:[%s62 + $0x2a0] sm:$0xff] %v231
        %v233 = vld [vmem:[%s61 + $0x2a8] sm:$0xff]
        %234 = vst [vmem:[%s62 + $0x2a8] sm:$0xff] %v233
        %v235 = vld [vmem:[%s61 + $0x2b0] sm:$0xff]
        %236 = vst [vmem:[%s62 + $0x2b0] sm:$0xff] %v235
        %v237 = vld [vmem:[%s61 + $0x2b8] sm:$0xff]
        %238 = vst [vmem:[%s62 + $0x2b8] sm:$0xff] %v237
        %v239 = vld [vmem:[%s61 + $0x2c0] sm:$0xff]
        %240 = vst [vmem:[%s62 + $0x2c0] sm:$0xff] %v239
        %v241 = vld [vmem:[%s61 + $0x2c8] sm:$0xff]
        %242 = vst [vmem:[%s62 + $0x2c8] sm:$0xff] %v241
        %v243 = vld [vmem:[%s61 + $0x2d0] sm:$0xff]
        %244 = vst [vmem:[%s62 + $0x2d0] sm:$0xff] %v243
        %v245 = vld [vmem:[%s61 + $0x2d8] sm:$0xff]
        %246 = vst [vmem:[%s62 + $0x2d8] sm:$0xff] %v245
        %v247 = vld [vmem:[%s61 + $0x2e0] sm:$0xff]
        %248 = vst [vmem:[%s62 + $0x2e0] sm:$0xff] %v247
        %v249 = vld [vmem:[%s61 + $0x2e8] sm:$0xff]
        %250 = vst [vmem:[%s62 + $0x2e8] sm:$0xff] %v249
        %v251 = vld [vmem:[%s61 + $0x2f0] sm:$0xff]
        %252 = vst [vmem:[%s62 + $0x2f0] sm:$0xff] %v251
        %v253 = vld [vmem:[%s61 + $0x2f8] sm:$0xff]
        %254 = vst [vmem:[%s62 + $0x2f8] sm:$0xff] %v253
        %v255 = vld [vmem:[%s61 + $0x300] sm:$0xff]
        %256 = vst [vmem:[%s62 + $0x300] sm:$0xff] %v255
        %v257 = vld [vmem:[%s61 + $0x308] sm:$0xff]
        %258 = vst [vmem:[%s62 + $0x308] sm:$0xff] %v257
        %v259 = vld [vmem:[%s61 + $0x310] sm:$0xff]
        %260 = vst [vmem:[%s62 + $0x310] sm:$0xff] %v259
        %v261 = vld [vmem:[%s61 + $0x318] sm:$0xff]
        %262 = vst [vmem:[%s62 + $0x318] sm:$0xff] %v261
        %v263 = vld [vmem:[%s61 + $0x320] sm:$0xff]
        %264 = vst [vmem:[%s62 + $0x320] sm:$0xff] %v263
        %v265 = vld [vmem:[%s61 + $0x328] sm:$0xff]
        %266 = vst [vmem:[%s62 + $0x328] sm:$0xff] %v265
        %v267 = vld [vmem:[%s61 + $0x330] sm:$0xff]
        %268 = vst [vmem:[%s62 + $0x330] sm:$0xff] %v267
        %v269 = vld [vmem:[%s61 + $0x338] sm:$0xff]
        %270 = vst [vmem:[%s62 + $0x338] sm:$0xff] %v269
        %v271 = vld [vmem:[%s61 + $0x340] sm:$0xff]
        %272 = vst [vmem:[%s62 + $0x340] sm:$0xff] %v271
        %v273 = vld [vmem:[%s61 + $0x348] sm:$0xff]
        %274 = vst [vmem:[%s62 + $0x348] sm:$0xff] %v273
        %v275 = vld [vmem:[%s61 + $0x350] sm:$0xff]
        %276 = vst [vmem:[%s62 + $0x350] sm:$0xff] %v275
        %v277 = vld [vmem:[%s61 + $0x358] sm:$0xff]
        %278 = vst [vmem:[%s62 + $0x358] sm:$0xff] %v277
        %v279 = vld [vmem:[%s61 + $0x360] sm:$0xff]
        %280 = vst [vmem:[%s62 + $0x360] sm:$0xff] %v279
        %v281 = vld [vmem:[%s61 + $0x368] sm:$0xff]
        %282 = vst [vmem:[%s62 + $0x368] sm:$0xff] %v281
        %v283 = vld [vmem:[%s61 + $0x370] sm:$0xff]
        %284 = vst [vmem:[%s62 + $0x370] sm:$0xff] %v283
        %v285 = vld [vmem:[%s61 + $0x378] sm:$0xff]
        %286 = vst [vmem:[%s62 + $0x378] sm:$0xff] %v285
        %v287 = vld [vmem:[%s61 + $0x380] sm:$0xff]
        %288 = vst [vmem:[%s62 + $0x380] sm:$0xff] %v287
        %v289 = vld [vmem:[%s61 + $0x388] sm:$0xff]
        %290 = vst [vmem:[%s62 + $0x388] sm:$0xff] %v289
        %v291 = vld [vmem:[%s61 + $0x390] sm:$0xff]
        %292 = vst [vmem:[%s62 + $0x390] sm:$0xff] %v291
        %v293 = vld [vmem:[%s61 + $0x398] sm:$0xff]
        %294 = vst [vmem:[%s62 + $0x398] sm:$0xff] %v293
        %v295 = vld [vmem:[%s61 + $0x3a0] sm:$0xff]
        %296 = vst [vmem:[%s62 + $0x3a0] sm:$0xff] %v295
        %v297 = vld [vmem:[%s61 + $0x3a8] sm:$0xff]
        %298 = vst [vmem:[%s62 + $0x3a8] sm:$0xff] %v297
        %v299 = vld [vmem:[%s61 + $0x3b0] sm:$0xff]
        %300 = vst [vmem:[%s62 + $0x3b0] sm:$0xff] %v299
        %v301 = vld [vmem:[%s61 + $0x3b8] sm:$0xff]
        %302 = vst [vmem:[%s62 + $0x3b8] sm:$0xff] %v301
        %v303 = vld [vmem:[%s61 + $0x3c0] sm:$0xff]
        %304 = vst [vmem:[%s62 + $0x3c0] sm:$0xff] %v303
        %v305 = vld [vmem:[%s61 + $0x3c8] sm:$0xff]
        %306 = vst [vmem:[%s62 + $0x3c8] sm:$0xff] %v305
        %v307 = vld [vmem:[%s61 + $0x3d0] sm:$0xff]
        %308 = vst [vmem:[%s62 + $0x3d0] sm:$0xff] %v307
        %v309 = vld [vmem:[%s61 + $0x3d8] sm:$0xff]
        %310 = vst [vmem:[%s62 + $0x3d8] sm:$0xff] %v309
        %v311 = vld [vmem:[%s61 + $0x3e0] sm:$0xff]
        %312 = vst [vmem:[%s62 + $0x3e0] sm:$0xff] %v311
        %v313 = vld [vmem:[%s61 + $0x3e8] sm:$0xff]
        %314 = vst [vmem:[%s62 + $0x3e8] sm:$0xff] %v313
        %v315 = vld [vmem:[%s61 + $0x3f0] sm:$0xff]
        %316 = vst [vmem:[%s62 + $0x3f0] sm:$0xff] %v315
        %v317 = vld [vmem:[%s61 + $0x3f8] sm:$0xff]
        %318 = vst [vmem:[%s62 + $0x3f8] sm:$0xff] %v317
        %v319 = vld [vmem:[%s61 + $0x400] sm:$0xff]
        %320 = vst [vmem:[%s62 + $0x400] sm:$0xff] %v319
        %v321 = vld [vmem:[%s61 + $0x408] sm:$0xff]
        %322 = vst [vmem:[%s62 + $0x408] sm:$0xff] %v321
        %v323 = vld [vmem:[%s61 + $0x410] sm:$0xff]
        %324 = vst [vmem:[%s62 + $0x410] sm:$0xff] %v323
        %v325 = vld [vmem:[%s61 + $0x418] sm:$0xff]
        %326 = vst [vmem:[%s62 + $0x418] sm:$0xff] %v325
        %v327 = vld [vmem:[%s61 + $0x420] sm:$0xff]
        %328 = vst [vmem:[%s62 + $0x420] sm:$0xff] %v327
        %v329 = vld [vmem:[%s61 + $0x428] sm:$0xff]
        %330 = vst [vmem:[%s62 + $0x428] sm:$0xff] %v329
        %v331 = vld [vmem:[%s61 + $0x430] sm:$0xff]
        %332 = vst [vmem:[%s62 + $0x430] sm:$0xff] %v331
        %v333 = vld [vmem:[%s61 + $0x438] sm:$0xff]
        %334 = vst [vmem:[%s62 + $0x438] sm:$0xff] %v333
        %v335 = vld [vmem:[%s61 + $0x440] sm:$0xff]
        %336 = vst [vmem:[%s62 + $0x440] sm:$0xff] %v335
        %v337 = vld [vmem:[%s61 + $0x448] sm:$0xff]
        %338 = vst [vmem:[%s62 + $0x448] sm:$0xff] %v337
        %v339 = vld [vmem:[%s61 + $0x450] sm:$0xff]
        %340 = vst [vmem:[%s62 + $0x450] sm:$0xff] %v339
        %v341 = vld [vmem:[%s61 + $0x458] sm:$0xff]
        %342 = vst [vmem:[%s62 + $0x458] sm:$0xff] %v341
        %v343 = vld [vmem:[%s61 + $0x460] sm:$0xff]
        %344 = vst [vmem:[%s62 + $0x460] sm:$0xff] %v343
        %v345 = vld [vmem:[%s61 + $0x468] sm:$0xff]
        %346 = vst [vmem:[%s62 + $0x468] sm:$0xff] %v345
        %v347 = vld [vmem:[%s61 + $0x470] sm:$0xff]
        %348 = vst [vmem:[%s62 + $0x470] sm:$0xff] %v347
        %v349 = vld [vmem:[%s61 + $0x478] sm:$0xff]
        %350 = vst [vmem:[%s62 + $0x478] sm:$0xff] %v349
        %v351 = vld [vmem:[%s61 + $0x480] sm:$0xff]
        %352 = vst [vmem:[%s62 + $0x480] sm:$0xff] %v351
        %v353 = vld [vmem:[%s61 + $0x488] sm:$0xff]
        %354 = vst [vmem:[%s62 + $0x488] sm:$0xff] %v353
        %v355 = vld [vmem:[%s61 + $0x490] sm:$0xff]
        %356 = vst [vmem:[%s62 + $0x490] sm:$0xff] %v355
        %v357 = vld [vmem:[%s61 + $0x498] sm:$0xff]
        %358 = vst [vmem:[%s62 + $0x498] sm:$0xff] %v357
        %v359 = vld [vmem:[%s61 + $0x4a0] sm:$0xff]
        %360 = vst [vmem:[%s62 + $0x4a0] sm:$0xff] %v359
        %v361 = vld [vmem:[%s61 + $0x4a8] sm:$0xff]
        %362 = vst [vmem:[%s62 + $0x4a8] sm:$0xff] %v361
        %v363 = vld [vmem:[%s61 + $0x4b0] sm:$0xff]
        %364 = vst [vmem:[%s62 + $0x4b0] sm:$0xff] %v363
        %v365 = vld [vmem:[%s61 + $0x4b8] sm:$0xff]
        %366 = vst [vmem:[%s62 + $0x4b8] sm:$0xff] %v365
        %v367 = vld [vmem:[%s61 + $0x4c0] sm:$0xff]
        %368 = vst [vmem:[%s62 + $0x4c0] sm:$0xff] %v367
        %v369 = vld [vmem:[%s61 + $0x4c8] sm:$0xff]
        %370 = vst [vmem:[%s62 + $0x4c8] sm:$0xff] %v369
        %v371 = vld [vmem:[%s61 + $0x4d0] sm:$0xff]
        %372 = vst [vmem:[%s62 + $0x4d0] sm:$0xff] %v371
        %v373 = vld [vmem:[%s61 + $0x4d8] sm:$0xff]
        %374 = vst [vmem:[%s62 + $0x4d8] sm:$0xff] %v373
        %v375 = vld [vmem:[%s61 + $0x4e0] sm:$0xff]
        %376 = vst [vmem:[%s62 + $0x4e0] sm:$0xff] %v375
        %v377 = vld [vmem:[%s61 + $0x4e8] sm:$0xff]
        %378 = vst [vmem:[%s62 + $0x4e8] sm:$0xff] %v377
        %v379 = vld [vmem:[%s61 + $0x4f0] sm:$0xff]
        %380 = vst [vmem:[%s62 + $0x4f0] sm:$0xff] %v379
        %v381 = vld [vmem:[%s61 + $0x4f8] sm:$0xff]
        %382 = vst [vmem:[%s62 + $0x4f8] sm:$0xff] %v381
        %v383 = vld [vmem:[%s61 + $0x500] sm:$0xff]
        %384 = vst [vmem:[%s62 + $0x500] sm:$0xff] %v383
        %v385 = vld [vmem:[%s61 + $0x508] sm:$0xff]
        %386 = vst [vmem:[%s62 + $0x508] sm:$0xff] %v385
        %v387 = vld [vmem:[%s61 + $0x510] sm:$0xff]
        %388 = vst [vmem:[%s62 + $0x510] sm:$0xff] %v387
        %v389 = vld [vmem:[%s61 + $0x518] sm:$0xff]
        %390 = vst [vmem:[%s62 + $0x518] sm:$0xff] %v389
        %v391 = vld [vmem:[%s61 + $0x520] sm:$0xff]
        %392 = vst [vmem:[%s62 + $0x520] sm:$0xff] %v391
        %v393 = vld [vmem:[%s61 + $0x528] sm:$0xff]
        %394 = vst [vmem:[%s62 + $0x528] sm:$0xff] %v393
        %v395 = vld [vmem:[%s61 + $0x530] sm:$0xff]
        %396 = vst [vmem:[%s62 + $0x530] sm:$0xff] %v395
        %v397 = vld [vmem:[%s61 + $0x538] sm:$0xff]
        %398 = vst [vmem:[%s62 + $0x538] sm:$0xff] %v397
        %v399 = vld [vmem:[%s61 + $0x540] sm:$0xff]
        %400 = vst [vmem:[%s62 + $0x540] sm:$0xff] %v399
        %v401 = vld [vmem:[%s61 + $0x548] sm:$0xff]
        %402 = vst [vmem:[%s62 + $0x548] sm:$0xff] %v401
        %v403 = vld [vmem:[%s61 + $0x550] sm:$0xff]
        %404 = vst [vmem:[%s62 + $0x550] sm:$0xff] %v403
        %v405 = vld [vmem:[%s61 + $0x558] sm:$0xff]
        %406 = vst [vmem:[%s62 + $0x558] sm:$0xff] %v405
        %v407 = vld [vmem:[%s61 + $0x560] sm:$0xff]
        %408 = vst [vmem:[%s62 + $0x560] sm:$0xff] %v407
        %v409 = vld [vmem:[%s61 + $0x568] sm:$0xff]
        %410 = vst [vmem:[%s62 + $0x568] sm:$0xff] %v409
        %v411 = vld [vmem:[%s61 + $0x570] sm:$0xff]
        %412 = vst [vmem:[%s62 + $0x570] sm:$0xff] %v411
        %v413 = vld [vmem:[%s61 + $0x578] sm:$0xff]
        %414 = vst [vmem:[%s62 + $0x578] sm:$0xff] %v413
        %v415 = vld [vmem:[%s61 + $0x580] sm:$0xff]
        %416 = vst [vmem:[%s62 + $0x580] sm:$0xff] %v415
        %v417 = vld [vmem:[%s61 + $0x588] sm:$0xff]
        %418 = vst [vmem:[%s62 + $0x588] sm:$0xff] %v417
        %v419 = vld [vmem:[%s61 + $0x590] sm:$0xff]
        %420 = vst [vmem:[%s62 + $0x590] sm:$0xff] %v419
        %v421 = vld [vmem:[%s61 + $0x598] sm:$0xff]
        %422 = vst [vmem:[%s62 + $0x598] sm:$0xff] %v421
        %v423 = vld [vmem:[%s61 + $0x5a0] sm:$0xff]
        %424 = vst [vmem:[%s62 + $0x5a0] sm:$0xff] %v423
        %v425 = vld [vmem:[%s61 + $0x5a8] sm:$0xff]
        %426 = vst [vmem:[%s62 + $0x5a8] sm:$0xff] %v425
        %v427 = vld [vmem:[%s61 + $0x5b0] sm:$0xff]
        %428 = vst [vmem:[%s62 + $0x5b0] sm:$0xff] %v427
        %v429 = vld [vmem:[%s61 + $0x5b8] sm:$0xff]
        %430 = vst [vmem:[%s62 + $0x5b8] sm:$0xff] %v429
        %v431 = vld [vmem:[%s61 + $0x5c0] sm:$0xff]
        %432 = vst [vmem:[%s62 + $0x5c0] sm:$0xff] %v431
        %v433 = vld [vmem:[%s61 + $0x5c8] sm:$0xff]
        %434 = vst [vmem:[%s62 + $0x5c8] sm:$0xff] %v433
        %v435 = vld [vmem:[%s61 + $0x5d0] sm:$0xff]
        %436 = vst [vmem:[%s62 + $0x5d0] sm:$0xff] %v435
        %v437 = vld [vmem:[%s61 + $0x5d8] sm:$0xff]
        %438 = vst [vmem:[%s62 + $0x5d8] sm:$0xff] %v437
        %v439 = vld [vmem:[%s61 + $0x5e0] sm:$0xff]
        %440 = vst [vmem:[%s62 + $0x5e0] sm:$0xff] %v439
        %v441 = vld [vmem:[%s61 + $0x5e8] sm:$0xff]
        %442 = vst [vmem:[%s62 + $0x5e8] sm:$0xff] %v441
        %v443 = vld [vmem:[%s61 + $0x5f0] sm:$0xff]
        %444 = vst [vmem:[%s62 + $0x5f0] sm:$0xff] %v443
        %v445 = vld [vmem:[%s61 + $0x5f8] sm:$0xff]
        %446 = vst [vmem:[%s62 + $0x5f8] sm:$0xff] %v445
        %v447 = vld [vmem:[%s61 + $0x600] sm:$0xff]
        %448 = vst [vmem:[%s62 + $0x600] sm:$0xff] %v447
        %v449 = vld [vmem:[%s61 + $0x608] sm:$0xff]
        %450 = vst [vmem:[%s62 + $0x608] sm:$0xff] %v449
        %v451 = vld [vmem:[%s61 + $0x610] sm:$0xff]
        %452 = vst [vmem:[%s62 + $0x610] sm:$0xff] %v451
        %v453 = vld [vmem:[%s61 + $0x618] sm:$0xff]
        %454 = vst [vmem:[%s62 + $0x618] sm:$0xff] %v453
        %v455 = vld [vmem:[%s61 + $0x620] sm:$0xff]
        %456 = vst [vmem:[%s62 + $0x620] sm:$0xff] %v455
        %v457 = vld [vmem:[%s61 + $0x628] sm:$0xff]
        %458 = vst [vmem:[%s62 + $0x628] sm:$0xff] %v457
        %v459 = vld [vmem:[%s61 + $0x630] sm:$0xff]
        %460 = vst [vmem:[%s62 + $0x630] sm:$0xff] %v459
        %v461 = vld [vmem:[%s61 + $0x638] sm:$0xff]
        %462 = vst [vmem:[%s62 + $0x638] sm:$0xff] %v461
        %v463 = vld [vmem:[%s61 + $0x640] sm:$0xff]
        %464 = vst [vmem:[%s62 + $0x640] sm:$0xff] %v463
        %v465 = vld [vmem:[%s61 + $0x648] sm:$0xff]
        %466 = vst [vmem:[%s62 + $0x648] sm:$0xff] %v465
        %v467 = vld [vmem:[%s61 + $0x650] sm:$0xff]
        %468 = vst [vmem:[%s62 + $0x650] sm:$0xff] %v467
        %v469 = vld [vmem:[%s61 + $0x658] sm:$0xff]
        %470 = vst [vmem:[%s62 + $0x658] sm:$0xff] %v469
        %v471 = vld [vmem:[%s61 + $0x660] sm:$0xff]
        %472 = vst [vmem:[%s62 + $0x660] sm:$0xff] %v471
        %v473 = vld [vmem:[%s61 + $0x668] sm:$0xff]
        %474 = vst [vmem:[%s62 + $0x668] sm:$0xff] %v473
        %v475 = vld [vmem:[%s61 + $0x670] sm:$0xff]
        %476 = vst [vmem:[%s62 + $0x670] sm:$0xff] %v475
        %v477 = vld [vmem:[%s61 + $0x678] sm:$0xff]
        %478 = vst [vmem:[%s62 + $0x678] sm:$0xff] %v477
        %v479 = vld [vmem:[%s61 + $0x680] sm:$0xff]
        %480 = vst [vmem:[%s62 + $0x680] sm:$0xff] %v479
        %v481 = vld [vmem:[%s61 + $0x688] sm:$0xff]
        %482 = vst [vmem:[%s62 + $0x688] sm:$0xff] %v481
        %v483 = vld [vmem:[%s61 + $0x690] sm:$0xff]
        %484 = vst [vmem:[%s62 + $0x690] sm:$0xff] %v483
        %v485 = vld [vmem:[%s61 + $0x698] sm:$0xff]
        %486 = vst [vmem:[%s62 + $0x698] sm:$0xff] %v485
        %v487 = vld [vmem:[%s61 + $0x6a0] sm:$0xff]
        %488 = vst [vmem:[%s62 + $0x6a0] sm:$0xff] %v487
        %v489 = vld [vmem:[%s61 + $0x6a8] sm:$0xff]
        %490 = vst [vmem:[%s62 + $0x6a8] sm:$0xff] %v489
        %v491 = vld [vmem:[%s61 + $0x6b0] sm:$0xff]
        %492 = vst [vmem:[%s62 + $0x6b0] sm:$0xff] %v491
        %v493 = vld [vmem:[%s61 + $0x6b8] sm:$0xff]
        %494 = vst [vmem:[%s62 + $0x6b8] sm:$0xff] %v493
        %v495 = vld [vmem:[%s61 + $0x6c0] sm:$0xff]
        %496 = vst [vmem:[%s62 + $0x6c0] sm:$0xff] %v495
        %v497 = vld [vmem:[%s61 + $0x6c8] sm:$0xff]
        %498 = vst [vmem:[%s62 + $0x6c8] sm:$0xff] %v497
        %v499 = vld [vmem:[%s61 + $0x6d0] sm:$0xff]
        %500 = vst [vmem:[%s62 + $0x6d0] sm:$0xff] %v499
        %v501 = vld [vmem:[%s61 + $0x6d8] sm:$0xff]
        %502 = vst [vmem:[%s62 + $0x6d8] sm:$0xff] %v501
        %v503 = vld [vmem:[%s61 + $0x6e0] sm:$0xff]
        %504 = vst [vmem:[%s62 + $0x6e0] sm:$0xff] %v503
        %v505 = vld [vmem:[%s61 + $0x6e8] sm:$0xff]
        %506 = vst [vmem:[%s62 + $0x6e8] sm:$0xff] %v505
        %v507 = vld [vmem:[%s61 + $0x6f0] sm:$0xff]
        %508 = vst [vmem:[%s62 + $0x6f0] sm:$0xff] %v507
        %v509 = vld [vmem:[%s61 + $0x6f8] sm:$0xff]
        %510 = vst [vmem:[%s62 + $0x6f8] sm:$0xff] %v509
        %v511 = vld [vmem:[%s61 + $0x700] sm:$0xff]
        %512 = vst [vmem:[%s62 + $0x700] sm:$0xff] %v511
        %v513 = vld [vmem:[%s61 + $0x708] sm:$0xff]
        %514 = vst [vmem:[%s62 + $0x708] sm:$0xff] %v513
        %v515 = vld [vmem:[%s61 + $0x710] sm:$0xff]
        %516 = vst [vmem:[%s62 + $0x710] sm:$0xff] %v515
        %v517 = vld [vmem:[%s61 + $0x718] sm:$0xff]
        %518 = vst [vmem:[%s62 + $0x718] sm:$0xff] %v517
        %v519 = vld [vmem:[%s61 + $0x720] sm:$0xff]
        %520 = vst [vmem:[%s62 + $0x720] sm:$0xff] %v519
        %v521 = vld [vmem:[%s61 + $0x728] sm:$0xff]
        %522 = vst [vmem:[%s62 + $0x728] sm:$0xff] %v521
        %v523 = vld [vmem:[%s61 + $0x730] sm:$0xff]
        %524 = vst [vmem:[%s62 + $0x730] sm:$0xff] %v523
        %v525 = vld [vmem:[%s61 + $0x738] sm:$0xff]
        %526 = vst [vmem:[%s62 + $0x738] sm:$0xff] %v525
        %v527 = vld [vmem:[%s61 + $0x740] sm:$0xff]
        %528 = vst [vmem:[%s62 + $0x740] sm:$0xff] %v527
        %v529 = vld [vmem:[%s61 + $0x748] sm:$0xff]
        %530 = vst [vmem:[%s62 + $0x748] sm:$0xff] %v529
        %v531 = vld [vmem:[%s61 + $0x750] sm:$0xff]
        %532 = vst [vmem:[%s62 + $0x750] sm:$0xff] %v531
        %v533 = vld [vmem:[%s61 + $0x758] sm:$0xff]
        %534 = vst [vmem:[%s62 + $0x758] sm:$0xff] %v533
        %v535 = vld [vmem:[%s61 + $0x760] sm:$0xff]
        %536 = vst [vmem:[%s62 + $0x760] sm:$0xff] %v535
        %v537 = vld [vmem:[%s61 + $0x768] sm:$0xff]
        %538 = vst [vmem:[%s62 + $0x768] sm:$0xff] %v537
        %v539 = vld [vmem:[%s61 + $0x770] sm:$0xff]
        %540 = vst [vmem:[%s62 + $0x770] sm:$0xff] %v539
        %v541 = vld [vmem:[%s61 + $0x778] sm:$0xff]
        %542 = vst [vmem:[%s62 + $0x778] sm:$0xff] %v541
        %v543 = vld [vmem:[%s61 + $0x780] sm:$0xff]
        %544 = vst [vmem:[%s62 + $0x780] sm:$0xff] %v543
        %v545 = vld [vmem:[%s61 + $0x788] sm:$0xff]
        %546 = vst [vmem:[%s62 + $0x788] sm:$0xff] %v545
        %v547 = vld [vmem:[%s61 + $0x790] sm:$0xff]
        %548 = vst [vmem:[%s62 + $0x790] sm:$0xff] %v547
        %v549 = vld [vmem:[%s61 + $0x798] sm:$0xff]
        %550 = vst [vmem:[%s62 + $0x798] sm:$0xff] %v549
        %v551 = vld [vmem:[%s61 + $0x7a0] sm:$0xff]
        %552 = vst [vmem:[%s62 + $0x7a0] sm:$0xff] %v551
        %v553 = vld [vmem:[%s61 + $0x7a8] sm:$0xff]
        %554 = vst [vmem:[%s62 + $0x7a8] sm:$0xff] %v553
        %v555 = vld [vmem:[%s61 + $0x7b0] sm:$0xff]
        %556 = vst [vmem:[%s62 + $0x7b0] sm:$0xff] %v555
        %v557 = vld [vmem:[%s61 + $0x7b8] sm:$0xff]
        %558 = vst [vmem:[%s62 + $0x7b8] sm:$0xff] %v557
        %v559 = vld [vmem:[%s61 + $0x7c0] sm:$0xff]
        %560 = vst [vmem:[%s62 + $0x7c0] sm:$0xff] %v559
        %v561 = vld [vmem:[%s61 + $0x7c8] sm:$0xff]
        %562 = vst [vmem:[%s62 + $0x7c8] sm:$0xff] %v561
        %v563 = vld [vmem:[%s61 + $0x7d0] sm:$0xff]
        %564 = vst [vmem:[%s62 + $0x7d0] sm:$0xff] %v563
        %v565 = vld [vmem:[%s61 + $0x7d8] sm:$0xff]
        %566 = vst [vmem:[%s62 + $0x7d8] sm:$0xff] %v565
        %v567 = vld [vmem:[%s61 + $0x7e0] sm:$0xff]
        %568 = vst [vmem:[%s62 + $0x7e0] sm:$0xff] %v567
        %v569 = vld [vmem:[%s61 + $0x7e8] sm:$0xff]
        %570 = vst [vmem:[%s62 + $0x7e8] sm:$0xff] %v569
        %v571 = vld [vmem:[%s61 + $0x7f0] sm:$0xff]
        %572 = vst [vmem:[%s62 + $0x7f0] sm:$0xff] %v571
        %v573 = vld [vmem:[%s61 + $0x7f8] sm:$0xff]
        %574 = vst [vmem:[%s62 + $0x7f8] sm:$0xff] %v573
        %v575 = vld [vmem:[%s61 + $0x800] sm:$0xff]
        %576 = vst [vmem:[%s62 + $0x800] sm:$0xff] %v575
        %v577 = vld [vmem:[%s61 + $0x808] sm:$0xff]
        %578 = vst [vmem:[%s62 + $0x808] sm:$0xff] %v577
        %v579 = vld [vmem:[%s61 + $0x810] sm:$0xff]
        %580 = vst [vmem:[%s62 + $0x810] sm:$0xff] %v579
        %v581 = vld [vmem:[%s61 + $0x818] sm:$0xff]
        %582 = vst [vmem:[%s62 + $0x818] sm:$0xff] %v581
        %v583 = vld [vmem:[%s61 + $0x820] sm:$0xff]
        %584 = vst [vmem:[%s62 + $0x820] sm:$0xff] %v583
        %v585 = vld [vmem:[%s61 + $0x828] sm:$0xff]
        %586 = vst [vmem:[%s62 + $0x828] sm:$0xff] %v585
        %v587 = vld [vmem:[%s61 + $0x830] sm:$0xff]
        %588 = vst [vmem:[%s62 + $0x830] sm:$0xff] %v587
        %v589 = vld [vmem:[%s61 + $0x838] sm:$0xff]
        %590 = vst [vmem:[%s62 + $0x838] sm:$0xff] %v589
        %v591 = vld [vmem:[%s61 + $0x840] sm:$0xff]
        %592 = vst [vmem:[%s62 + $0x840] sm:$0xff] %v591
        %v593 = vld [vmem:[%s61 + $0x848] sm:$0xff]
        %594 = vst [vmem:[%s62 + $0x848] sm:$0xff] %v593
        %v595 = vld [vmem:[%s61 + $0x850] sm:$0xff]
        %596 = vst [vmem:[%s62 + $0x850] sm:$0xff] %v595
        %v597 = vld [vmem:[%s61 + $0x858] sm:$0xff]
        %598 = vst [vmem:[%s62 + $0x858] sm:$0xff] %v597
        %v599 = vld [vmem:[%s61 + $0x860] sm:$0xff]
        %600 = vst [vmem:[%s62 + $0x860] sm:$0xff] %v599
        %v601 = vld [vmem:[%s61 + $0x868] sm:$0xff]
        %602 = vst [vmem:[%s62 + $0x868] sm:$0xff] %v601
        %v603 = vld [vmem:[%s61 + $0x870] sm:$0xff]
        %604 = vst [vmem:[%s62 + $0x870] sm:$0xff] %v603
        %v605 = vld [vmem:[%s61 + $0x878] sm:$0xff]
        %606 = vst [vmem:[%s62 + $0x878] sm:$0xff] %v605
        %v607 = vld [vmem:[%s61 + $0x880] sm:$0xff]
        %608 = vst [vmem:[%s62 + $0x880] sm:$0xff] %v607
        %v609 = vld [vmem:[%s61 + $0x888] sm:$0xff]
        %610 = vst [vmem:[%s62 + $0x888] sm:$0xff] %v609
        %v611 = vld [vmem:[%s61 + $0x890] sm:$0xff]
        %612 = vst [vmem:[%s62 + $0x890] sm:$0xff] %v611
        %v613 = vld [vmem:[%s61 + $0x898] sm:$0xff]
        %614 = vst [vmem:[%s62 + $0x898] sm:$0xff] %v613
        %v615 = vld [vmem:[%s61 + $0x8a0] sm:$0xff]
        %616 = vst [vmem:[%s62 + $0x8a0] sm:$0xff] %v615
        %v617 = vld [vmem:[%s61 + $0x8a8] sm:$0xff]
        %618 = vst [vmem:[%s62 + $0x8a8] sm:$0xff] %v617
        %v619 = vld [vmem:[%s61 + $0x8b0] sm:$0xff]
        %620 = vst [vmem:[%s62 + $0x8b0] sm:$0xff] %v619
        %v621 = vld [vmem:[%s61 + $0x8b8] sm:$0xff]
        %622 = vst [vmem:[%s62 + $0x8b8] sm:$0xff] %v621
        %v623 = vld [vmem:[%s61 + $0x8c0] sm:$0xff]
        %624 = vst [vmem:[%s62 + $0x8c0] sm:$0xff] %v623
        %v625 = vld [vmem:[%s61 + $0x8c8] sm:$0xff]
        %626 = vst [vmem:[%s62 + $0x8c8] sm:$0xff] %v625
        %v627 = vld [vmem:[%s61 + $0x8d0] sm:$0xff]
        %628 = vst [vmem:[%s62 + $0x8d0] sm:$0xff] %v627
        %v629 = vld [vmem:[%s61 + $0x8d8] sm:$0xff]
        %630 = vst [vmem:[%s62 + $0x8d8] sm:$0xff] %v629
        %v631 = vld [vmem:[%s61 + $0x8e0] sm:$0xff]
        %632 = vst [vmem:[%s62 + $0x8e0] sm:$0xff] %v631
        %v633 = vld [vmem:[%s61 + $0x8e8] sm:$0xff]
        %634 = vst [vmem:[%s62 + $0x8e8] sm:$0xff] %v633
        %v635 = vld [vmem:[%s61 + $0x8f0] sm:$0xff]
        %636 = vst [vmem:[%s62 + $0x8f0] sm:$0xff] %v635
        %v637 = vld [vmem:[%s61 + $0x8f8] sm:$0xff]
        %638 = vst [vmem:[%s62 + $0x8f8] sm:$0xff] %v637
        %v639 = vld [vmem:[%s61 + $0x900] sm:$0xff]
        %640 = vst [vmem:[%s62 + $0x900] sm:$0xff] %v639
        %v641 = vld [vmem:[%s61 + $0x908] sm:$0xff]
        %642 = vst [vmem:[%s62 + $0x908] sm:$0xff] %v641
        %v643 = vld [vmem:[%s61 + $0x910] sm:$0xff]
        %644 = vst [vmem:[%s62 + $0x910] sm:$0xff] %v643
        %v645 = vld [vmem:[%s61 + $0x918] sm:$0xff]
        %646 = vst [vmem:[%s62 + $0x918] sm:$0xff] %v645
        %v647 = vld [vmem:[%s61 + $0x920] sm:$0xff]
        %648 = vst [vmem:[%s62 + $0x920] sm:$0xff] %v647
        %v649 = vld [vmem:[%s61 + $0x928] sm:$0xff]
        %650 = vst [vmem:[%s62 + $0x928] sm:$0xff] %v649
        %v651 = vld [vmem:[%s61 + $0x930] sm:$0xff]
        %652 = vst [vmem:[%s62 + $0x930] sm:$0xff] %v651
        %v653 = vld [vmem:[%s61 + $0x938] sm:$0xff]
        %654 = vst [vmem:[%s62 + $0x938] sm:$0xff] %v653
        %v655 = vld [vmem:[%s61 + $0x940] sm:$0xff]
        %656 = vst [vmem:[%s62 + $0x940] sm:$0xff] %v655
        %v657 = vld [vmem:[%s61 + $0x948] sm:$0xff]
        %658 = vst [vmem:[%s62 + $0x948] sm:$0xff] %v657
        %v659 = vld [vmem:[%s61 + $0x950] sm:$0xff]
        %660 = vst [vmem:[%s62 + $0x950] sm:$0xff] %v659
        %v661 = vld [vmem:[%s61 + $0x958] sm:$0xff]
        %662 = vst [vmem:[%s62 + $0x958] sm:$0xff] %v661
        %v663 = vld [vmem:[%s61 + $0x960] sm:$0xff]
        %664 = vst [vmem:[%s62 + $0x960] sm:$0xff] %v663
        %v665 = vld [vmem:[%s61 + $0x968] sm:$0xff]
        %666 = vst [vmem:[%s62 + $0x968] sm:$0xff] %v665
        %v667 = vld [vmem:[%s61 + $0x970] sm:$0xff]
        %668 = vst [vmem:[%s62 + $0x970] sm:$0xff] %v667
        %v669 = vld [vmem:[%s61 + $0x978] sm:$0xff]
        %670 = vst [vmem:[%s62 + $0x978] sm:$0xff] %v669
        %v671 = vld [vmem:[%s61 + $0x980] sm:$0xff]
        %672 = vst [vmem:[%s62 + $0x980] sm:$0xff] %v671
        %v673 = vld [vmem:[%s61 + $0x988] sm:$0xff]
        %674 = vst [vmem:[%s62 + $0x988] sm:$0xff] %v673
        %v675 = vld [vmem:[%s61 + $0x990] sm:$0xff]
        %676 = vst [vmem:[%s62 + $0x990] sm:$0xff] %v675
        %v677 = vld [vmem:[%s61 + $0x998] sm:$0xff]
        %678 = vst [vmem:[%s62 + $0x998] sm:$0xff] %v677
        %v679 = vld [vmem:[%s61 + $0x9a0] sm:$0xff]
        %680 = vst [vmem:[%s62 + $0x9a0] sm:$0xff] %v679
        %v681 = vld [vmem:[%s61 + $0x9a8] sm:$0xff]
        %682 = vst [vmem:[%s62 + $0x9a8] sm:$0xff] %v681
        %v683 = vld [vmem:[%s61 + $0x9b0] sm:$0xff]
        %684 = vst [vmem:[%s62 + $0x9b0] sm:$0xff] %v683
        %v685 = vld [vmem:[%s61 + $0x9b8] sm:$0xff]
        %686 = vst [vmem:[%s62 + $0x9b8] sm:$0xff] %v685
        %v687 = vld [vmem:[%s61 + $0x9c0] sm:$0xff]
        %688 = vst [vmem:[%s62 + $0x9c0] sm:$0xff] %v687
        %v689 = vld [vmem:[%s61 + $0x9c8] sm:$0xff]
        %690 = vst [vmem:[%s62 + $0x9c8] sm:$0xff] %v689
        %v691 = vld [vmem:[%s61 + $0x9d0] sm:$0xff]
        %692 = vst [vmem:[%s62 + $0x9d0] sm:$0xff] %v691
        %v693 = vld [vmem:[%s61 + $0x9d8] sm:$0xff]
        %694 = vst [vmem:[%s62 + $0x9d8] sm:$0xff] %v693
        %v695 = vld [vmem:[%s61 + $0x9e0] sm:$0xff]
        %696 = vst [vmem:[%s62 + $0x9e0] sm:$0xff] %v695
        %v697 = vld [vmem:[%s61 + $0x9e8] sm:$0xff]
        %698 = vst [vmem:[%s62 + $0x9e8] sm:$0xff] %v697
        %v699 = vld [vmem:[%s61 + $0x9f0] sm:$0xff]
        %700 = vst [vmem:[%s62 + $0x9f0] sm:$0xff] %v699
        %v701 = vld [vmem:[%s61 + $0x9f8] sm:$0xff]
        %702 = vst [vmem:[%s62 + $0x9f8] sm:$0xff] %v701
        %v703 = vld [vmem:[%s61 + $0xa00] sm:$0xff]
        %704 = vst [vmem:[%s62 + $0xa00] sm:$0xff] %v703
        %v705 = vld [vmem:[%s61 + $0xa08] sm:$0xff]
        %706 = vst [vmem:[%s62 + $0xa08] sm:$0xff] %v705
        %v707 = vld [vmem:[%s61 + $0xa10] sm:$0xff]
        %708 = vst [vmem:[%s62 + $0xa10] sm:$0xff] %v707
        %v709 = vld [vmem:[%s61 + $0xa18] sm:$0xff]
        %710 = vst [vmem:[%s62 + $0xa18] sm:$0xff] %v709
        %v711 = vld [vmem:[%s61 + $0xa20] sm:$0xff]
        %712 = vst [vmem:[%s62 + $0xa20] sm:$0xff] %v711
        %v713 = vld [vmem:[%s61 + $0xa28] sm:$0xff]
        %714 = vst [vmem:[%s62 + $0xa28] sm:$0xff] %v713
        %v715 = vld [vmem:[%s61 + $0xa30] sm:$0xff]
        %716 = vst [vmem:[%s62 + $0xa30] sm:$0xff] %v715
        %v717 = vld [vmem:[%s61 + $0xa38] sm:$0xff]
        %718 = vst [vmem:[%s62 + $0xa38] sm:$0xff] %v717
        %v719 = vld [vmem:[%s61 + $0xa40] sm:$0xff]
        %720 = vst [vmem:[%s62 + $0xa40] sm:$0xff] %v719
        %v721 = vld [vmem:[%s61 + $0xa48] sm:$0xff]
        %722 = vst [vmem:[%s62 + $0xa48] sm:$0xff] %v721
        %v723 = vld [vmem:[%s61 + $0xa50] sm:$0xff]
        %724 = vst [vmem:[%s62 + $0xa50] sm:$0xff] %v723
        %v725 = vld [vmem:[%s61 + $0xa58] sm:$0xff]
        %726 = vst [vmem:[%s62 + $0xa58] sm:$0xff] %v725
        %v727 = vld [vmem:[%s61 + $0xa60] sm:$0xff]
        %728 = vst [vmem:[%s62 + $0xa60] sm:$0xff] %v727
        %v729 = vld [vmem:[%s61 + $0xa68] sm:$0xff]
        %730 = vst [vmem:[%s62 + $0xa68] sm:$0xff] %v729
        %v731 = vld [vmem:[%s61 + $0xa70] sm:$0xff]
        %732 = vst [vmem:[%s62 + $0xa70] sm:$0xff] %v731
        %v733 = vld [vmem:[%s61 + $0xa78] sm:$0xff]
        %734 = vst [vmem:[%s62 + $0xa78] sm:$0xff] %v733
        %v735 = vld [vmem:[%s61 + $0xa80] sm:$0xff]
        %736 = vst [vmem:[%s62 + $0xa80] sm:$0xff] %v735
        %v737 = vld [vmem:[%s61 + $0xa88] sm:$0xff]
        %738 = vst [vmem:[%s62 + $0xa88] sm:$0xff] %v737
        %v739 = vld [vmem:[%s61 + $0xa90] sm:$0xff]
        %740 = vst [vmem:[%s62 + $0xa90] sm:$0xff] %v739
        %v741 = vld [vmem:[%s61 + $0xa98] sm:$0xff]
        %742 = vst [vmem:[%s62 + $0xa98] sm:$0xff] %v741
        %v743 = vld [vmem:[%s61 + $0xaa0] sm:$0xff]
        %744 = vst [vmem:[%s62 + $0xaa0] sm:$0xff] %v743
        %v745 = vld [vmem:[%s61 + $0xaa8] sm:$0xff]
        %746 = vst [vmem:[%s62 + $0xaa8] sm:$0xff] %v745
        %v747 = vld [vmem:[%s61 + $0xab0] sm:$0xff]
        %748 = vst [vmem:[%s62 + $0xab0] sm:$0xff] %v747
        %v749 = vld [vmem:[%s61 + $0xab8] sm:$0xff]
        %750 = vst [vmem:[%s62 + $0xab8] sm:$0xff] %v749
        %v751 = vld [vmem:[%s61 + $0xac0] sm:$0xff]
        %752 = vst [vmem:[%s62 + $0xac0] sm:$0xff] %v751
        %v753 = vld [vmem:[%s61 + $0xac8] sm:$0xff]
        %754 = vst [vmem:[%s62 + $0xac8] sm:$0xff] %v753
        %v755 = vld [vmem:[%s61 + $0xad0] sm:$0xff]
        %756 = vst [vmem:[%s62 + $0xad0] sm:$0xff] %v755
        %v757 = vld [vmem:[%s61 + $0xad8] sm:$0xff]
        %758 = vst [vmem:[%s62 + $0xad8] sm:$0xff] %v757
        %v759 = vld [vmem:[%s61 + $0xae0] sm:$0xff]
        %760 = vst [vmem:[%s62 + $0xae0] sm:$0xff] %v759
        %v761 = vld [vmem:[%s61 + $0xae8] sm:$0xff]
        %762 = vst [vmem:[%s62 + $0xae8] sm:$0xff] %v761
        %v763 = vld [vmem:[%s61 + $0xaf0] sm:$0xff]
        %764 = vst [vmem:[%s62 + $0xaf0] sm:$0xff] %v763
        %v765 = vld [vmem:[%s61 + $0xaf8] sm:$0xff]
        %766 = vst [vmem:[%s62 + $0xaf8] sm:$0xff] %v765
        %v767 = vld [vmem:[%s61 + $0xb00] sm:$0xff]
        %768 = vst [vmem:[%s62 + $0xb00] sm:$0xff] %v767
        %v769 = vld [vmem:[%s61 + $0xb08] sm:$0xff]
        %770 = vst [vmem:[%s62 + $0xb08] sm:$0xff] %v769
        %v771 = vld [vmem:[%s61 + $0xb10] sm:$0xff]
        %772 = vst [vmem:[%s62 + $0xb10] sm:$0xff] %v771
        %v773 = vld [vmem:[%s61 + $0xb18] sm:$0xff]
        %774 = vst [vmem:[%s62 + $0xb18] sm:$0xff] %v773
        %v775 = vld [vmem:[%s61 + $0xb20] sm:$0xff]
        %776 = vst [vmem:[%s62 + $0xb20] sm:$0xff] %v775
        %v777 = vld [vmem:[%s61 + $0xb28] sm:$0xff]
        %778 = vst [vmem:[%s62 + $0xb28] sm:$0xff] %v777
        %v779 = vld [vmem:[%s61 + $0xb30] sm:$0xff]
        %780 = vst [vmem:[%s62 + $0xb30] sm:$0xff] %v779
        %v781 = vld [vmem:[%s61 + $0xb38] sm:$0xff]
        %782 = vst [vmem:[%s62 + $0xb38] sm:$0xff] %v781
        %v783 = vld [vmem:[%s61 + $0xb40] sm:$0xff]
        %784 = vst [vmem:[%s62 + $0xb40] sm:$0xff] %v783
        %v785 = vld [vmem:[%s61 + $0xb48] sm:$0xff]
        %786 = vst [vmem:[%s62 + $0xb48] sm:$0xff] %v785
        %v787 = vld [vmem:[%s61 + $0xb50] sm:$0xff]
        %788 = vst [vmem:[%s62 + $0xb50] sm:$0xff] %v787
        %v789 = vld [vmem:[%s61 + $0xb58] sm:$0xff]
        %790 = vst [vmem:[%s62 + $0xb58] sm:$0xff] %v789
        %v791 = vld [vmem:[%s61 + $0xb60] sm:$0xff]
        %792 = vst [vmem:[%s62 + $0xb60] sm:$0xff] %v791
        %v793 = vld [vmem:[%s61 + $0xb68] sm:$0xff]
        %794 = vst [vmem:[%s62 + $0xb68] sm:$0xff] %v793
        %v795 = vld [vmem:[%s61 + $0xb70] sm:$0xff]
        %796 = vst [vmem:[%s62 + $0xb70] sm:$0xff] %v795
        %v797 = vld [vmem:[%s61 + $0xb78] sm:$0xff]
        %798 = vst [vmem:[%s62 + $0xb78] sm:$0xff] %v797
        %v799 = vld [vmem:[%s61 + $0xb80] sm:$0xff]
        %800 = vst [vmem:[%s62 + $0xb80] sm:$0xff] %v799
        %v801 = vld [vmem:[%s61 + $0xb88] sm:$0xff]
        %802 = vst [vmem:[%s62 + $0xb88] sm:$0xff] %v801
        %v803 = vld [vmem:[%s61 + $0xb90] sm:$0xff]
        %804 = vst [vmem:[%s62 + $0xb90] sm:$0xff] %v803
        %v805 = vld [vmem:[%s61 + $0xb98] sm:$0xff]
        %806 = vst [vmem:[%s62 + $0xb98] sm:$0xff] %v805
        %v807 = vld [vmem:[%s61 + $0xba0] sm:$0xff]
        %808 = vst [vmem:[%s62 + $0xba0] sm:$0xff] %v807
        %v809 = vld [vmem:[%s61 + $0xba8] sm:$0xff]
        %810 = vst [vmem:[%s62 + $0xba8] sm:$0xff] %v809
        %v811 = vld [vmem:[%s61 + $0xbb0] sm:$0xff]
        %812 = vst [vmem:[%s62 + $0xbb0] sm:$0xff] %v811
        %v813 = vld [vmem:[%s61 + $0xbb8] sm:$0xff]
        %814 = vst [vmem:[%s62 + $0xbb8] sm:$0xff] %v813
        %v815 = vld [vmem:[%s61 + $0xbc0] sm:$0xff]
        %816 = vst [vmem:[%s62 + $0xbc0] sm:$0xff] %v815
        %v817 = vld [vmem:[%s61 + $0xbc8] sm:$0xff]
        %818 = vst [vmem:[%s62 + $0xbc8] sm:$0xff] %v817
        %v819 = vld [vmem:[%s61 + $0xbd0] sm:$0xff]
        %820 = vst [vmem:[%s62 + $0xbd0] sm:$0xff] %v819
        %v821 = vld [vmem:[%s61 + $0xbd8] sm:$0xff]
        %822 = vst [vmem:[%s62 + $0xbd8] sm:$0xff] %v821
        %v823 = vld [vmem:[%s61 + $0xbe0] sm:$0xff]
        %824 = vst [vmem:[%s62 + $0xbe0] sm:$0xff] %v823
        %v825 = vld [vmem:[%s61 + $0xbe8] sm:$0xff]
        %826 = vst [vmem:[%s62 + $0xbe8] sm:$0xff] %v825
        %v827 = vld [vmem:[%s61 + $0xbf0] sm:$0xff]
        %828 = vst [vmem:[%s62 + $0xbf0] sm:$0xff] %v827
        %v829 = vld [vmem:[%s61 + $0xbf8] sm:$0xff]
        %830 = vst [vmem:[%s62 + $0xbf8] sm:$0xff] %v829
        %v831 = vld [vmem:[%s61 + $0xc00] sm:$0xff]
        %832 = vst [vmem:[%s62 + $0xc00] sm:$0xff] %v831
        %v833 = vld [vmem:[%s61 + $0xc08] sm:$0xff]
        %834 = vst [vmem:[%s62 + $0xc08] sm:$0xff] %v833
        %v835 = vld [vmem:[%s61 + $0xc10] sm:$0xff]
        %836 = vst [vmem:[%s62 + $0xc10] sm:$0xff] %v835
        %v837 = vld [vmem:[%s61 + $0xc18] sm:$0xff]
        %838 = vst [vmem:[%s62 + $0xc18] sm:$0xff] %v837
        %v839 = vld [vmem:[%s61 + $0xc20] sm:$0xff]
        %840 = vst [vmem:[%s62 + $0xc20] sm:$0xff] %v839
        %v841 = vld [vmem:[%s61 + $0xc28] sm:$0xff]
        %842 = vst [vmem:[%s62 + $0xc28] sm:$0xff] %v841
        %v843 = vld [vmem:[%s61 + $0xc30] sm:$0xff]
        %844 = vst [vmem:[%s62 + $0xc30] sm:$0xff] %v843
        %v845 = vld [vmem:[%s61 + $0xc38] sm:$0xff]
        %846 = vst [vmem:[%s62 + $0xc38] sm:$0xff] %v845
        %v847 = vld [vmem:[%s61 + $0xc40] sm:$0xff]
        %848 = vst [vmem:[%s62 + $0xc40] sm:$0xff] %v847
        %v849 = vld [vmem:[%s61 + $0xc48] sm:$0xff]
        %850 = vst [vmem:[%s62 + $0xc48] sm:$0xff] %v849
        %v851 = vld [vmem:[%s61 + $0xc50] sm:$0xff]
        %852 = vst [vmem:[%s62 + $0xc50] sm:$0xff] %v851
        %v853 = vld [vmem:[%s61 + $0xc58] sm:$0xff]
        %854 = vst [vmem:[%s62 + $0xc58] sm:$0xff] %v853
        %v855 = vld [vmem:[%s61 + $0xc60] sm:$0xff]
        %856 = vst [vmem:[%s62 + $0xc60] sm:$0xff] %v855
        %v857 = vld [vmem:[%s61 + $0xc68] sm:$0xff]
        %858 = vst [vmem:[%s62 + $0xc68] sm:$0xff] %v857
        %v859 = vld [vmem:[%s61 + $0xc70] sm:$0xff]
        %860 = vst [vmem:[%s62 + $0xc70] sm:$0xff] %v859
        %v861 = vld [vmem:[%s61 + $0xc78] sm:$0xff]
        %862 = vst [vmem:[%s62 + $0xc78] sm:$0xff] %v861
        %v863 = vld [vmem:[%s61 + $0xc80] sm:$0xff]
        %864 = vst [vmem:[%s62 + $0xc80] sm:$0xff] %v863
        %v865 = vld [vmem:[%s61 + $0xc88] sm:$0xff]
        %866 = vst [vmem:[%s62 + $0xc88] sm:$0xff] %v865
        %v867 = vld [vmem:[%s61 + $0xc90] sm:$0xff]
        %868 = vst [vmem:[%s62 + $0xc90] sm:$0xff] %v867
        %v869 = vld [vmem:[%s61 + $0xc98] sm:$0xff]
        %870 = vst [vmem:[%s62 + $0xc98] sm:$0xff] %v869
        %v871 = vld [vmem:[%s61 + $0xca0] sm:$0xff]
        %872 = vst [vmem:[%s62 + $0xca0] sm:$0xff] %v871
        %v873 = vld [vmem:[%s61 + $0xca8] sm:$0xff]
        %874 = vst [vmem:[%s62 + $0xca8] sm:$0xff] %v873
        %v875 = vld [vmem:[%s61 + $0xcb0] sm:$0xff]
        %876 = vst [vmem:[%s62 + $0xcb0] sm:$0xff] %v875
        %v877 = vld [vmem:[%s61 + $0xcb8] sm:$0xff]
        %878 = vst [vmem:[%s62 + $0xcb8] sm:$0xff] %v877
        %v879 = vld [vmem:[%s61 + $0xcc0] sm:$0xff]
        %880 = vst [vmem:[%s62 + $0xcc0] sm:$0xff] %v879
        %v881 = vld [vmem:[%s61 + $0xcc8] sm:$0xff]
        %882 = vst [vmem:[%s62 + $0xcc8] sm:$0xff] %v881
        %v883 = vld [vmem:[%s61 + $0xcd0] sm:$0xff]
        %884 = vst [vmem:[%s62 + $0xcd0] sm:$0xff] %v883
        %v885 = vld [vmem:[%s61 + $0xcd8] sm:$0xff]
        %886 = vst [vmem:[%s62 + $0xcd8] sm:$0xff] %v885
        %v887 = vld [vmem:[%s61 + $0xce0] sm:$0xff]
        %888 = vst [vmem:[%s62 + $0xce0] sm:$0xff] %v887
        %v889 = vld [vmem:[%s61 + $0xce8] sm:$0xff]
        %890 = vst [vmem:[%s62 + $0xce8] sm:$0xff] %v889
        %v891 = vld [vmem:[%s61 + $0xcf0] sm:$0xff]
        %892 = vst [vmem:[%s62 + $0xcf0] sm:$0xff] %v891
        %v893 = vld [vmem:[%s61 + $0xcf8] sm:$0xff]
        %894 = vst [vmem:[%s62 + $0xcf8] sm:$0xff] %v893
      $region57: #{forward.1} parent=51 // loop_footer
        %s60 = sadd.s32 1, %s56
      $region58: #{forward.1} parent=51 // loop_footer_branch
        %55 = sbr.rel target = $region54
      $region59: #{forward.1} parent=51 // loop_exit
        _
    $region52: #{forward.1} parent=36 // pred_fallthru
      _
    %p895 = pneg %p51
    // Predicated region
    $region60: #{forward.1} parent=36 // pred_check
      _
    $region61: #{forward.1} parent=36 // pred_check_branch
      %897 = sbr.rel (%p51) target = $region63
    $region62: #{forward.1} parent=36 // pred_region
      %s898 = sand.u32 3328, 7
    $region63: #{forward.1} parent=36 // pred_fallthru
      _
  $region37: #{forward.1} parent=0 // pred_fallthru
    _
  // Predicated region
  $region38: #{forward.1} parent=0 // pred_check
    %p35 = pneg %p31
  $region39: #{forward.1} parent=0 // pred_check_branch
    %37 = sbr.rel (%p35) target = $region41
  $region40: #{forward.1} parent=0 // pred_region
    %s38 = sshll.u32 1, 3328
    %s39 = ssub.s32 %s38, 1
    loop: start=0, step=1, limit=1
    $region42: #{forward.1} parent=40 // loop_pre_header
      _
    $region43: #{forward.1} parent=40 // loop_header
      %s41 = sphi 0, %s45
      %p42 = scmp.ge.s32.totalorder %s41, 1
      %s46 = sphi %s6, %s6
      %s47 = sphi [#allocation6], [#allocation6]
    $region44: #{forward.1} parent=40 // loop_header_branch
      %44 = sbr.rel (%p42) target = $region48
    $region45: #{forward.1} parent=40 // loop_body
      %v48 = vld [vmem:[%s46] sm:%s39]
      %49 = vst [vmem:[%s47] sm:%s39] %v48
    $region46: #{forward.1} parent=40 // loop_footer
      %s45 = sadd.s32 1, %s41
    $region47: #{forward.1} parent=40 // loop_footer_branch
      %40 = sbr.rel target = $region43
    $region48: #{forward.1} parent=40 // loop_exit
      _
  $region41: #{forward.1} parent=0 // pred_fallthru
    _
  // Predicated region
  $region64: #{forward.1} parent=0 // pred_check
    _
  $region65: #{forward.1} parent=0 // pred_check_branch
    %901 = sbr.rel (0) target = $region67
  $region66: #{forward.1} parent=0 // pred_region
    %902 = vsyncadd [#allocation7], 53248
  $region67: #{forward.1} parent=0 // pred_fallthru
    _
  %vm903 = vcmask 261120
  %904 = vst.msk [vmem:[#allocation3 + $0xf0] sm:$0xff] %vm903, 0.0
  %vm905 = vcmask 523264
  %906 = vst.msk [vmem:[#allocation4 + $0x78] sm:$0xff] %vm905, 0.0
  %v907 = vld [vmem:[%s0] sm:$0xff]
  %v908 = vld [vmem:[%s0 + $0x8] sm:$0xff]
  %v909 = vld [vmem:[%s0 + $0x10] sm:$0xff]
  %v910 = vld [vmem:[%s0 + $0x18] sm:$0xff]
  %v911 = vld [vmem:[%s0 + $0x20] sm:$0xff]
  %v912 = vld [vmem:[%s0 + $0x28] sm:$0xff]
  %v913 = vld [vmem:[%s0 + $0x30] sm:$0xff]
  %v914 = vld [vmem:[%s0 + $0x38] sm:$0xff]
  %v915 = vld [vmem:[%s0 + $0x40] sm:$0xff]
  %v916 = vld [vmem:[%s0 + $0x48] sm:$0xff]
  %v917 = vld [vmem:[%s0 + $0x50] sm:$0xff]
  %v918 = vld [vmem:[%s0 + $0x58] sm:$0xff]
  %v919 = vld [vmem:[%s0 + $0x60] sm:$0xff]
  %v920 = vld [vmem:[%s0 + $0x68] sm:$0xff]
  %v921 = vld [vmem:[%s0 + $0x70] sm:$0xff]
  %v922 = vld [vmem:[%s0 + $0x78] sm:$0xff]
  %v923 = vld [vmem:[%s0 + $0x80] sm:$0xff]
  %v924 = vld [vmem:[%s0 + $0x88] sm:$0xff]
  %v925 = vld [vmem:[%s0 + $0x90] sm:$0xff]
  %v926 = vld [vmem:[%s0 + $0x98] sm:$0xff]
  %v927 = vld [vmem:[%s0 + $0xa0] sm:$0xff]
  %v928 = vld [vmem:[%s0 + $0xa8] sm:$0xff]
  %v929 = vld [vmem:[%s0 + $0xb0] sm:$0xff]
  %v930 = vld [vmem:[%s0 + $0xb8] sm:$0xff]
  %v931 = vld [vmem:[%s0 + $0xc0] sm:$0xff]
  %v932 = vld [vmem:[%s0 + $0xc8] sm:$0xff]
  %v933 = vld [vmem:[%s0 + $0xd0] sm:$0xff]
  %v934 = vld [vmem:[%s0 + $0xd8] sm:$0xff]
  %v935 = vld [vmem:[%s0 + $0xe0] sm:$0xff]
  %v936 = vld [vmem:[%s0 + $0xe8] sm:$0xff]
  %v937 = vld [vmem:[%s0 + $0xf0] sm:$0xff]
  %v938 = vld [vmem:[%s0 + $0xf8] sm:$0xff]
  %v939 = vld [vmem:[%s0 + $0x100] sm:$0xff]
  %v940 = vld [vmem:[%s0 + $0x108] sm:$0xff]
  %v941 = vld [vmem:[%s0 + $0x110] sm:$0xff]
  %v942 = vld [vmem:[%s0 + $0x118] sm:$0xff]
  %v943 = vld [vmem:[%s0 + $0x120] sm:$0xff]
  %v944 = vld [vmem:[%s0 + $0x128] sm:$0xff]
  %v945 = vld [vmem:[%s0 + $0x130] sm:$0xff]
  %v946 = vld [vmem:[%s0 + $0x138] sm:$0xff]
  %v947 = vld [vmem:[%s0 + $0x140] sm:$0xff]
  %v948 = vld [vmem:[%s0 + $0x148] sm:$0xff]
  %v949 = vld [vmem:[%s0 + $0x150] sm:$0xff]
  %v950 = vld [vmem:[%s0 + $0x158] sm:$0xff]
  %v951 = vld [vmem:[%s0 + $0x160] sm:$0xff]
  %v952 = vld [vmem:[%s0 + $0x168] sm:$0xff]
  %v953 = vld [vmem:[%s0 + $0x170] sm:$0xff]
  %v954 = vld [vmem:[%s0 + $0x178] sm:$0xff]
  %v955 = vld [vmem:[%s0 + $0x180] sm:$0xff]
  %v956 = vld [vmem:[%s0 + $0x188] sm:$0xff]
  %v957 = vld [vmem:[%s0 + $0x190] sm:$0xff]
  %v958 = vld [vmem:[%s0 + $0x198] sm:$0xff]
  %v959 = vld [vmem:[%s0 + $0x1a0] sm:$0xff]
  %v960 = vld [vmem:[%s0 + $0x1a8] sm:$0xff]
  %v961 = vld [vmem:[%s0 + $0x1b0] sm:$0xff]
  %v962 = vld [vmem:[%s0 + $0x1b8] sm:$0xff]
  %v963 = vld [vmem:[%s0 + $0x1c0] sm:$0xff]
  %v964 = vld [vmem:[%s0 + $0x1c8] sm:$0xff]
  %v965 = vld [vmem:[%s0 + $0x1d0] sm:$0xff]
  %v966 = vld [vmem:[%s0 + $0x1d8] sm:$0xff]
  %v967 = vld [vmem:[%s0 + $0x1e0] sm:$0xff]
  %v968 = vld [vmem:[%s2] sm:$0xff]
  %v969 = vld [vmem:[%s2 + $0x8] sm:$0xff]
  %v970 = vld [vmem:[%s2 + $0x10] sm:$0x3]
  %v971 = vld [vmem:[%s7] sm:$0x1]
  %v972 = vlaneseq
  %v973 = vshrl.u32 %v972, 7
  %v974 = vsub.s32 0, %v973
  %v975 = vrot.slane %v971, %v974
  %vm976 = vcmask 146432
  %v978 = vsel %vm976, %v907, 0
  %v981 = vsel %vm976, %v908, 0
  %v984 = vsel %vm976, %v909, 0
  %v987 = vsel %vm976, %v910, 0
  %v990 = vsel %vm976, %v911, 0
  %v993 = vsel %vm976, %v912, 0
  %v996 = vsel %vm976, %v913, 0
  %v999 = vsel %vm976, %v914, 0
  %v1002 = vsel %vm976, %v915, 0
  %v1005 = vsel %vm976, %v916, 0
  %v1008 = vsel %vm976, %v917, 0
  %v1011 = vsel %vm976, %v918, 0
  %v1014 = vsel %vm976, %v919, 0
  %v1017 = vsel %vm976, %v920, 0
  %v1020 = vsel %vm976, %v921, 0
  %v1023 = vsel %vm976, %v922, 0
  %v1026 = vsel %vm976, %v923, 0
  %v1029 = vsel %vm976, %v924, 0
  %v1032 = vsel %vm976, %v925, 0
  %v1035 = vsel %vm976, %v926, 0
  %v1038 = vsel %vm976, %v927, 0
  %v1041 = vsel %vm976, %v928, 0
  %v1044 = vsel %vm976, %v929, 0
  %v1047 = vsel %vm976, %v930, 0
  %v1050 = vsel %vm976, %v931, 0
  %v1053 = vsel %vm976, %v932, 0
  %v1056 = vsel %vm976, %v933, 0
  %v1059 = vsel %vm976, %v934, 0
  %v1062 = vsel %vm976, %v935, 0
  %v1065 = vsel %vm976, %v936, 0
  %v1068 = vsel %vm976, %v937, 0
  %v1071 = vsel %vm976, %v938, 0
  %v1074 = vsel %vm976, %v939, 0
  %v1077 = vsel %vm976, %v940, 0
  %v1080 = vsel %vm976, %v941, 0
  %v1083 = vsel %vm976, %v942, 0
  %v1086 = vsel %vm976, %v943, 0
  %v1089 = vsel %vm976, %v944, 0
  %v1092 = vsel %vm976, %v945, 0
  %v1095 = vsel %vm976, %v946, 0
  %v1098 = vsel %vm976, %v947, 0
  %v1101 = vsel %vm976, %v948, 0
  %v1104 = vsel %vm976, %v949, 0
  %v1107 = vsel %vm976, %v950, 0
  %v1110 = vsel %vm976, %v951, 0
  %v1113 = vsel %vm976, %v952, 0
  %v1116 = vsel %vm976, %v953, 0
  %v1119 = vsel %vm976, %v954, 0
  %v1122 = vsel %vm976, %v955, 0
  %v1125 = vsel %vm976, %v956, 0
  %v1128 = vsel %vm976, %v957, 0
  %v1131 = vsel %vm976, %v958, 0
  %v1134 = vsel %vm976, %v959, 0
  %v1137 = vsel %vm976, %v960, 0
  %v1140 = vsel %vm976, %v961, 0
  %v1143 = vsel %vm976, %v962, 0
  %v1146 = vsel %vm976, %v963, 0
  %v1149 = vsel %vm976, %v964, 0
  %v1152 = vsel %vm976, %v965, 0
  %v1155 = vsel %vm976, %v966, 0
  %v1158 = vsel %vm976, %v967, 0
  %vm1160 = vcmask 1041408
  %v1162 = vsel %vm1160, %v970, 0
  %1164 = vmatprep.subr.mxu0 0.0
  %1165 = vmatpush1.msra.mxu0 0.0
  %1166 = vmatprep.subr.mxu0 0.0
  %1167 = vmatpush1.msra.mxu0 0.0
  %1168 = vmatprep.subr.mxu0 0.0
  %1169 = vmatpush1.msra.mxu0 0.0
  %1170 = vmatprep.subr.mxu0 0.0
  %1171 = vmatpush1.msra.mxu0 0.0
  %1172 = vmatprep.subr.mxu0 0.0
  %1173 = vmatpush1.msra.mxu0 0.0
  %1174 = vmatprep.subr.mxu0 0.0
  %1175 = vmatpush1.msra.mxu0 0.0
  %1176 = vmatprep.subr.mxu0 0.0
  %1177 = vmatpush1.msra.mxu0 0.0
  %1178 = vmatprep.subr.mxu0 0.0
  %1179 = vmatpush1.msra.mxu0 0.0
  %1180 = vmatprep.subr.mxu0 0.0
  %1181 = vmatpush1.msra.mxu0 0.0
  %1182 = vmatprep.subr.mxu0 0.0
  %1183 = vmatpush1.msra.mxu0 0.0
  %1184 = vmatprep.subr.mxu0 0.0
  %1185 = vmatpush1.msra.mxu0 0.0
  %1186 = vmatprep.subr.mxu0 0.0
  %1187 = vmatpush1.msra.mxu0 0.0
  %1188 = vmatprep.subr.mxu0 0.0
  %1189 = vmatpush1.msra.mxu0 0.0
  %1190 = vmatprep.subr.mxu0 0.0
  %1191 = vmatpush1.msra.mxu0 %v1162
  %1192 = vmatprep.subr.mxu0 0.0
  %1193 = vmatpush1.msra.mxu0 %v969
  %1194 = vmatprep.subr.mxu0 0.0
  %1195 = vmatpush1.msra.mxu0 %v968
  %1196 = vmatprep.subr.mxu0 0.0
  %1197 = vmatpush2.msra.mxu0 0.0
  %1198 = vmatprep.subr.mxu0 0.0
  %1199 = vmatpush2.msra.mxu0 0.0
  %1200 = vmatprep.subr.mxu0 0.0
  %1201 = vmatpush2.msra.mxu0 0.0
  %1202 = vmatprep.subr.mxu0 0.0
  %1203 = vmatpush2.msra.mxu0 0.0
  %1204 = vmatprep.subr.mxu0 0.0
  %1205 = vmatpush2.msra.mxu0 0.0
  %1206 = vmatprep.subr.mxu0 0.0
  %1207 = vmatpush2.msra.mxu0 0.0
  %1208 = vmatprep.subr.mxu0 0.0
  %1209 = vmatpush2.msra.mxu0 0.0
  %1210 = vmatprep.subr.mxu0 0.0
  %1211 = vmatpush2.msra.mxu0 0.0
  %1212 = vmatprep.subr.mxu0 0.0
  %1213 = vmatpush2.msra.mxu0 0.0
  %1214 = vmatprep.subr.mxu0 0.0
  %1215 = vmatpush2.msra.mxu0 0.0
  %1216 = vmatprep.subr.mxu0 0.0
  %1217 = vmatpush2.msra.mxu0 0.0
  %1218 = vmatprep.subr.mxu0 0.0
  %1219 = vmatpush2.msra.mxu0 0.0
  %1220 = vmatprep.subr.mxu0 0.0
  %1221 = vmatpush2.msra.mxu0 0.0
  %1222 = vmatprep.subr.mxu0 0.0
  %1223 = vmatpush2.msra.mxu0 0.0
  %1224 = vmatprep.subr.mxu0 0.0
  %1225 = vmatpush2.msra.mxu0 0.0
  %1226 = vmatprep.subr.mxu0 0.0
  %1227 = vmatpush2.msra.mxu0 0.0
  %1228 = vmatprep.mubr.f32.mxu0 0.0
  %1229 = vmatmul.mubr.f32.gmra.mxu0 %v978
  %v1230 = vpop.f32.mrf.mxu0
  %v1231 = vadd.f32 %v975, %v1230
  %v1232 = vpop.f32.mrf.mxu0
  %1233 = vmatprep.mubr.f32.mxu0 0.0
  %1234 = vmatmul.mubr.f32.gmra.mxu0 %v981
  %v1235 = vpop.f32.mrf.mxu0
  %v1236 = vadd.f32 %v975, %v1235
  %v1237 = vpop.f32.mrf.mxu0
  %1238 = vmatprep.mubr.f32.mxu0 0.0
  %1239 = vmatmul.mubr.f32.gmra.mxu0 %v984
  %v1240 = vpop.f32.mrf.mxu0
  %v1241 = vadd.f32 %v975, %v1240
  %v1242 = vpop.f32.mrf.mxu0
  %1243 = vmatprep.mubr.f32.mxu0 0.0
  %1244 = vmatmul.mubr.f32.gmra.mxu0 %v987
  %v1245 = vpop.f32.mrf.mxu0
  %v1246 = vadd.f32 %v975, %v1245
  %v1247 = vpop.f32.mrf.mxu0
  %1248 = vmatprep.mubr.f32.mxu0 0.0
  %1249 = vmatmul.mubr.f32.gmra.mxu0 %v990
  %v1250 = vpop.f32.mrf.mxu0
  %v1251 = vadd.f32 %v975, %v1250
  %v1252 = vpop.f32.mrf.mxu0
  %1253 = vmatprep.mubr.f32.mxu0 0.0
  %1254 = vmatmul.mubr.f32.gmra.mxu0 %v993
  %v1255 = vpop.f32.mrf.mxu0
  %v1256 = vadd.f32 %v975, %v1255
  %v1257 = vpop.f32.mrf.mxu0
  %1258 = vmatprep.mubr.f32.mxu0 0.0
  %1259 = vmatmul.mubr.f32.gmra.mxu0 %v996
  %v1260 = vpop.f32.mrf.mxu0
  %v1261 = vadd.f32 %v975, %v1260
  %v1262 = vpop.f32.mrf.mxu0
  %1263 = vmatprep.mubr.f32.mxu0 0.0
  %1264 = vmatmul.mubr.f32.gmra.mxu0 %v999
  %v1265 = vpop.f32.mrf.mxu0
  %v1266 = vadd.f32 %v975, %v1265
  %v1267 = vpop.f32.mrf.mxu0
  %1268 = vmatprep.mubr.f32.mxu0 0.0
  %1269 = vmatmul.mubr.f32.gmra.mxu0 %v1002
  %v1270 = vpop.f32.mrf.mxu0
  %v1271 = vadd.f32 %v975, %v1270
  %v1272 = vpop.f32.mrf.mxu0
  %1273 = vmatprep.mubr.f32.mxu0 0.0
  %1274 = vmatmul.mubr.f32.gmra.mxu0 %v1005
  %v1275 = vpop.f32.mrf.mxu0
  %v1276 = vadd.f32 %v975, %v1275
  %v1277 = vpop.f32.mrf.mxu0
  %1278 = vmatprep.mubr.f32.mxu0 0.0
  %1279 = vmatmul.mubr.f32.gmra.mxu0 %v1008
  %v1280 = vpop.f32.mrf.mxu0
  %v1281 = vadd.f32 %v975, %v1280
  %v1282 = vpop.f32.mrf.mxu0
  %1283 = vmatprep.mubr.f32.mxu0 0.0
  %1284 = vmatmul.mubr.f32.gmra.mxu0 %v1011
  %v1285 = vpop.f32.mrf.mxu0
  %v1286 = vadd.f32 %v975, %v1285
  %v1287 = vpop.f32.mrf.mxu0
  %1288 = vmatprep.mubr.f32.mxu0 0.0
  %1289 = vmatmul.mubr.f32.gmra.mxu0 %v1014
  %v1290 = vpop.f32.mrf.mxu0
  %v1291 = vadd.f32 %v975, %v1290
  %v1292 = vpop.f32.mrf.mxu0
  %1293 = vmatprep.mubr.f32.mxu0 0.0
  %1294 = vmatmul.mubr.f32.gmra.mxu0 %v1017
  %v1295 = vpop.f32.mrf.mxu0
  %v1296 = vadd.f32 %v975, %v1295
  %v1297 = vpop.f32.mrf.mxu0
  %1298 = vmatprep.mubr.f32.mxu0 0.0
  %1299 = vmatmul.mubr.f32.gmra.mxu0 %v1020
  %v1300 = vpop.f32.mrf.mxu0
  %v1301 = vadd.f32 %v975, %v1300
  %v1302 = vpop.f32.mrf.mxu0
  %1303 = vmatprep.mubr.f32.mxu0 0.0
  %1304 = vmatmul.mubr.f32.gmra.mxu0 %v1023
  %v1305 = vpop.f32.mrf.mxu0
  %v1306 = vadd.f32 %v975, %v1305
  %v1307 = vpop.f32.mrf.mxu0
  %1308 = vmatprep.mubr.f32.mxu0 0.0
  %1309 = vmatmul.mubr.f32.gmra.mxu0 %v1026
  %v1310 = vpop.f32.mrf.mxu0
  %v1311 = vadd.f32 %v975, %v1310
  %v1312 = vpop.f32.mrf.mxu0
  %1313 = vmatprep.mubr.f32.mxu0 0.0
  %1314 = vmatmul.mubr.f32.gmra.mxu0 %v1029
  %v1315 = vpop.f32.mrf.mxu0
  %v1316 = vadd.f32 %v975, %v1315
  %v1317 = vpop.f32.mrf.mxu0
  %1318 = vmatprep.mubr.f32.mxu0 0.0
  %1319 = vmatmul.mubr.f32.gmra.mxu0 %v1032
  %v1320 = vpop.f32.mrf.mxu0
  %v1321 = vadd.f32 %v975, %v1320
  %v1322 = vpop.f32.mrf.mxu0
  %1323 = vmatprep.mubr.f32.mxu0 0.0
  %1324 = vmatmul.mubr.f32.gmra.mxu0 %v1035
  %v1325 = vpop.f32.mrf.mxu0
  %v1326 = vadd.f32 %v975, %v1325
  %v1327 = vpop.f32.mrf.mxu0
  %1328 = vmatprep.mubr.f32.mxu0 0.0
  %1329 = vmatmul.mubr.f32.gmra.mxu0 %v1038
  %v1330 = vpop.f32.mrf.mxu0
  %v1331 = vadd.f32 %v975, %v1330
  %v1332 = vpop.f32.mrf.mxu0
  %1333 = vmatprep.mubr.f32.mxu0 0.0
  %1334 = vmatmul.mubr.f32.gmra.mxu0 %v1041
  %v1335 = vpop.f32.mrf.mxu0
  %v1336 = vadd.f32 %v975, %v1335
  %v1337 = vpop.f32.mrf.mxu0
  %1338 = vmatprep.mubr.f32.mxu0 0.0
  %1339 = vmatmul.mubr.f32.gmra.mxu0 %v1044
  %v1340 = vpop.f32.mrf.mxu0
  %v1341 = vadd.f32 %v975, %v1340
  %v1342 = vpop.f32.mrf.mxu0
  %1343 = vmatprep.mubr.f32.mxu0 0.0
  %1344 = vmatmul.mubr.f32.gmra.mxu0 %v1047
  %v1345 = vpop.f32.mrf.mxu0
  %v1346 = vadd.f32 %v975, %v1345
  %v1347 = vpop.f32.mrf.mxu0
  %1348 = vmatprep.mubr.f32.mxu0 0.0
  %1349 = vmatmul.mubr.f32.gmra.mxu0 %v1050
  %v1350 = vpop.f32.mrf.mxu0
  %v1351 = vadd.f32 %v975, %v1350
  %v1352 = vpop.f32.mrf.mxu0
  %1353 = vmatprep.mubr.f32.mxu0 0.0
  %1354 = vmatmul.mubr.f32.gmra.mxu0 %v1053
  %v1355 = vpop.f32.mrf.mxu0
  %v1356 = vadd.f32 %v975, %v1355
  %v1357 = vpop.f32.mrf.mxu0
  %1358 = vmatprep.mubr.f32.mxu0 0.0
  %1359 = vmatmul.mubr.f32.gmra.mxu0 %v1056
  %v1360 = vpop.f32.mrf.mxu0
  %v1361 = vadd.f32 %v975, %v1360
  %v1362 = vpop.f32.mrf.mxu0
  %1363 = vmatprep.mubr.f32.mxu0 0.0
  %1364 = vmatmul.mubr.f32.gmra.mxu0 %v1059
  %v1365 = vpop.f32.mrf.mxu0
  %v1366 = vadd.f32 %v975, %v1365
  %v1367 = vpop.f32.mrf.mxu0
  %1368 = vmatprep.mubr.f32.mxu0 0.0
  %1369 = vmatmul.mubr.f32.gmra.mxu0 %v1062
  %v1370 = vpop.f32.mrf.mxu0
  %v1371 = vadd.f32 %v975, %v1370
  %v1372 = vpop.f32.mrf.mxu0
  %1373 = vmatprep.mubr.f32.mxu0 0.0
  %1374 = vmatmul.mubr.f32.gmra.mxu0 %v1065
  %v1375 = vpop.f32.mrf.mxu0
  %v1376 = vadd.f32 %v975, %v1375
  %v1377 = vpop.f32.mrf.mxu0
  %1378 = vmatprep.mubr.f32.mxu0 0.0
  %1379 = vmatmul.mubr.f32.gmra.mxu0 %v1068
  %v1380 = vpop.f32.mrf.mxu0
  %v1381 = vadd.f32 %v975, %v1380
  %v1382 = vpop.f32.mrf.mxu0
  %1383 = vmatprep.mubr.f32.mxu0 0.0
  %1384 = vmatmul.mubr.f32.gmra.mxu0 %v1071
  %v1385 = vpop.f32.mrf.mxu0
  %v1386 = vadd.f32 %v975, %v1385
  %v1387 = vpop.f32.mrf.mxu0
  %1388 = vmatprep.mubr.f32.mxu0 0.0
  %1389 = vmatmul.mubr.f32.gmra.mxu0 %v1074
  %v1390 = vpop.f32.mrf.mxu0
  %v1391 = vadd.f32 %v975, %v1390
  %v1392 = vpop.f32.mrf.mxu0
  %1393 = vmatprep.mubr.f32.mxu0 0.0
  %1394 = vmatmul.mubr.f32.gmra.mxu0 %v1077
  %v1395 = vpop.f32.mrf.mxu0
  %v1396 = vadd.f32 %v975, %v1395
  %v1397 = vpop.f32.mrf.mxu0
  %1398 = vmatprep.mubr.f32.mxu0 0.0
  %1399 = vmatmul.mubr.f32.gmra.mxu0 %v1080
  %v1400 = vpop.f32.mrf.mxu0
  %v1401 = vadd.f32 %v975, %v1400
  %v1402 = vpop.f32.mrf.mxu0
  %1403 = vmatprep.mubr.f32.mxu0 0.0
  %1404 = vmatmul.mubr.f32.gmra.mxu0 %v1083
  %v1405 = vpop.f32.mrf.mxu0
  %v1406 = vadd.f32 %v975, %v1405
  %v1407 = vpop.f32.mrf.mxu0
  %1408 = vmatprep.mubr.f32.mxu0 0.0
  %1409 = vmatmul.mubr.f32.gmra.mxu0 %v1086
  %v1410 = vpop.f32.mrf.mxu0
  %v1411 = vadd.f32 %v975, %v1410
  %v1412 = vpop.f32.mrf.mxu0
  %1413 = vmatprep.mubr.f32.mxu0 0.0
  %1414 = vmatmul.mubr.f32.gmra.mxu0 %v1089
  %v1415 = vpop.f32.mrf.mxu0
  %v1416 = vadd.f32 %v975, %v1415
  %v1417 = vpop.f32.mrf.mxu0
  %1418 = vmatprep.mubr.f32.mxu0 0.0
  %1419 = vmatmul.mubr.f32.gmra.mxu0 %v1092
  %v1420 = vpop.f32.mrf.mxu0
  %v1421 = vadd.f32 %v975, %v1420
  %v1422 = vpop.f32.mrf.mxu0
  %1423 = vmatprep.mubr.f32.mxu0 0.0
  %1424 = vmatmul.mubr.f32.gmra.mxu0 %v1095
  %v1425 = vpop.f32.mrf.mxu0
  %v1426 = vadd.f32 %v975, %v1425
  %v1427 = vpop.f32.mrf.mxu0
  %1428 = vmatprep.mubr.f32.mxu0 0.0
  %1429 = vmatmul.mubr.f32.gmra.mxu0 %v1098
  %v1430 = vpop.f32.mrf.mxu0
  %v1431 = vadd.f32 %v975, %v1430
  %v1432 = vpop.f32.mrf.mxu0
  %1433 = vmatprep.mubr.f32.mxu0 0.0
  %1434 = vmatmul.mubr.f32.gmra.mxu0 %v1101
  %v1435 = vpop.f32.mrf.mxu0
  %v1436 = vadd.f32 %v975, %v1435
  %v1437 = vpop.f32.mrf.mxu0
  %1438 = vmatprep.mubr.f32.mxu0 0.0
  %1439 = vmatmul.mubr.f32.gmra.mxu0 %v1104
  %v1440 = vpop.f32.mrf.mxu0
  %v1441 = vadd.f32 %v975, %v1440
  %v1442 = vpop.f32.mrf.mxu0
  %1443 = vmatprep.mubr.f32.mxu0 0.0
  %1444 = vmatmul.mubr.f32.gmra.mxu0 %v1107
  %v1445 = vpop.f32.mrf.mxu0
  %v1446 = vadd.f32 %v975, %v1445
  %v1447 = vpop.f32.mrf.mxu0
  %1448 = vmatprep.mubr.f32.mxu0 0.0
  %1449 = vmatmul.mubr.f32.gmra.mxu0 %v1110
  %v1450 = vpop.f32.mrf.mxu0
  %v1451 = vadd.f32 %v975, %v1450
  %v1452 = vpop.f32.mrf.mxu0
  %1453 = vmatprep.mubr.f32.mxu0 0.0
  %1454 = vmatmul.mubr.f32.gmra.mxu0 %v1113
  %v1455 = vpop.f32.mrf.mxu0
  %v1456 = vadd.f32 %v975, %v1455
  %v1457 = vpop.f32.mrf.mxu0
  %1458 = vmatprep.mubr.f32.mxu0 0.0
  %1459 = vmatmul.mubr.f32.gmra.mxu0 %v1116
  %v1460 = vpop.f32.mrf.mxu0
  %v1461 = vadd.f32 %v975, %v1460
  %v1462 = vpop.f32.mrf.mxu0
  %1463 = vmatprep.mubr.f32.mxu0 0.0
  %1464 = vmatmul.mubr.f32.gmra.mxu0 %v1119
  %v1465 = vpop.f32.mrf.mxu0
  %v1466 = vadd.f32 %v975, %v1465
  %v1467 = vpop.f32.mrf.mxu0
  %1468 = vmatprep.mubr.f32.mxu0 0.0
  %1469 = vmatmul.mubr.f32.gmra.mxu0 %v1122
  %v1470 = vpop.f32.mrf.mxu0
  %v1471 = vadd.f32 %v975, %v1470
  %v1472 = vpop.f32.mrf.mxu0
  %1473 = vmatprep.mubr.f32.mxu0 0.0
  %1474 = vmatmul.mubr.f32.gmra.mxu0 %v1125
  %v1475 = vpop.f32.mrf.mxu0
  %v1476 = vadd.f32 %v975, %v1475
  %v1477 = vpop.f32.mrf.mxu0
  %1478 = vmatprep.mubr.f32.mxu0 0.0
  %1479 = vmatmul.mubr.f32.gmra.mxu0 %v1128
  %v1480 = vpop.f32.mrf.mxu0
  %v1481 = vadd.f32 %v975, %v1480
  %v1482 = vpop.f32.mrf.mxu0
  %1483 = vmatprep.mubr.f32.mxu0 0.0
  %1484 = vmatmul.mubr.f32.gmra.mxu0 %v1131
  %v1485 = vpop.f32.mrf.mxu0
  %v1486 = vadd.f32 %v975, %v1485
  %v1487 = vpop.f32.mrf.mxu0
  %1488 = vmatprep.mubr.f32.mxu0 0.0
  %1489 = vmatmul.mubr.f32.gmra.mxu0 %v1134
  %v1490 = vpop.f32.mrf.mxu0
  %v1491 = vadd.f32 %v975, %v1490
  %v1492 = vpop.f32.mrf.mxu0
  %1493 = vmatprep.mubr.f32.mxu0 0.0
  %1494 = vmatmul.mubr.f32.gmra.mxu0 %v1137
  %v1495 = vpop.f32.mrf.mxu0
  %v1496 = vadd.f32 %v975, %v1495
  %v1497 = vpop.f32.mrf.mxu0
  %1498 = vmatprep.mubr.f32.mxu0 0.0
  %1499 = vmatmul.mubr.f32.gmra.mxu0 %v1140
  %v1500 = vpop.f32.mrf.mxu0
  %v1501 = vadd.f32 %v975, %v1500
  %v1502 = vpop.f32.mrf.mxu0
  %1503 = vmatprep.mubr.f32.mxu0 0.0
  %1504 = vmatmul.mubr.f32.gmra.mxu0 %v1143
  %v1505 = vpop.f32.mrf.mxu0
  %v1506 = vadd.f32 %v975, %v1505
  %v1507 = vpop.f32.mrf.mxu0
  %1508 = vmatprep.mubr.f32.mxu0 0.0
  %1509 = vmatmul.mubr.f32.gmra.mxu0 %v1146
  %v1510 = vpop.f32.mrf.mxu0
  %v1511 = vadd.f32 %v975, %v1510
  %v1512 = vpop.f32.mrf.mxu0
  %1513 = vmatprep.mubr.f32.mxu0 0.0
  %1514 = vmatmul.mubr.f32.gmra.mxu0 %v1149
  %v1515 = vpop.f32.mrf.mxu0
  %v1516 = vadd.f32 %v975, %v1515
  %v1517 = vpop.f32.mrf.mxu0
  %1518 = vmatprep.mubr.f32.mxu0 0.0
  %1519 = vmatmul.mubr.f32.gmra.mxu0 %v1152
  %v1520 = vpop.f32.mrf.mxu0
  %v1521 = vadd.f32 %v975, %v1520
  %v1522 = vpop.f32.mrf.mxu0
  %1523 = vmatprep.mubr.f32.mxu0 0.0
  %1524 = vmatmul.mubr.f32.gmra.mxu0 %v1155
  %v1525 = vpop.f32.mrf.mxu0
  %v1526 = vadd.f32 %v975, %v1525
  %v1527 = vpop.f32.mrf.mxu0
  %1528 = vmatprep.mubr.f32.mxu0 0.0
  %1529 = vmatmul.mubr.f32.gmra.mxu0 %v1158
  %v1530 = vpop.f32.mrf.mxu0
  %v1531 = vadd.f32 %v975, %v1530
  %v1532 = vpop.f32.mrf.mxu0
  %1533 = vdwg.mxu0
  %vm1534 = vcmask 130048
  %1535 = vst.msk [vmem:[#allocation2] sm:$0xff] %vm1534, %v1231
  %1536 = vst.msk [vmem:[#allocation2 + $0x8] sm:$0xff] %vm1534, %v1236
  %1537 = vst.msk [vmem:[#allocation2 + $0x10] sm:$0xff] %vm1534, %v1241
  %1538 = vst.msk [vmem:[#allocation2 + $0x18] sm:$0xff] %vm1534, %v1246
  %1539 = vst.msk [vmem:[#allocation2 + $0x20] sm:$0xff] %vm1534, %v1251
  %1540 = vst.msk [vmem:[#allocation2 + $0x28] sm:$0xff] %vm1534, %v1256
  %1541 = vst.msk [vmem:[#allocation2 + $0x30] sm:$0xff] %vm1534, %v1261
  %1542 = vst.msk [vmem:[#allocation2 + $0x38] sm:$0xff] %vm1534, %v1266
  %1543 = vst.msk [vmem:[#allocation2 + $0x40] sm:$0xff] %vm1534, %v1271
  %1544 = vst.msk [vmem:[#allocation2 + $0x48] sm:$0xff] %vm1534, %v1276
  %1545 = vst.msk [vmem:[#allocation2 + $0x50] sm:$0xff] %vm1534, %v1281
  %1546 = vst.msk [vmem:[#allocation2 + $0x58] sm:$0xff] %vm1534, %v1286
  %1547 = vst.msk [vmem:[#allocation2 + $0x60] sm:$0xff] %vm1534, %v1291
  %1548 = vst.msk [vmem:[#allocation2 + $0x68] sm:$0xff] %vm1534, %v1296
  %1549 = vst.msk [vmem:[#allocation2 + $0x70] sm:$0xff] %vm1534, %v1301
  %1550 = vst.msk [vmem:[#allocation2 + $0x78] sm:$0xff] %vm1534, %v1306
  %1551 = vst.msk [vmem:[#allocation2 + $0x80] sm:$0xff] %vm1534, %v1311
  %1552 = vst.msk [vmem:[#allocation2 + $0x88] sm:$0xff] %vm1534, %v1316
  %1553 = vst.msk [vmem:[#allocation2 + $0x90] sm:$0xff] %vm1534, %v1321
  %1554 = vst.msk [vmem:[#allocation2 + $0x98] sm:$0xff] %vm1534, %v1326
  %1555 = vst.msk [vmem:[#allocation2 + $0xa0] sm:$0xff] %vm1534, %v1331
  %1556 = vst.msk [vmem:[#allocation2 + $0xa8] sm:$0xff] %vm1534, %v1336
  %1557 = vst.msk [vmem:[#allocation2 + $0xb0] sm:$0xff] %vm1534, %v1341
  %1558 = vst.msk [vmem:[#allocation2 + $0xb8] sm:$0xff] %vm1534, %v1346
  %1559 = vst.msk [vmem:[#allocation2 + $0xc0] sm:$0xff] %vm1534, %v1351
  %1560 = vst.msk [vmem:[#allocation2 + $0xc8] sm:$0xff] %vm1534, %v1356
  %1561 = vst.msk [vmem:[#allocation2 + $0xd0] sm:$0xff] %vm1534, %v1361
  %1562 = vst.msk [vmem:[#allocation2 + $0xd8] sm:$0xff] %vm1534, %v1366
  %1563 = vst.msk [vmem:[#allocation2 + $0xe0] sm:$0xff] %vm1534, %v1371
  %1564 = vst.msk [vmem:[#allocation2 + $0xe8] sm:$0xff] %vm1534, %v1376
  %1565 = vst.msk [vmem:[#allocation2 + $0xf0] sm:$0xff] %vm1534, %v1381
  %1566 = vst.msk [vmem:[#allocation2 + $0xf8] sm:$0xff] %vm1534, %v1386
  %1567 = vst.msk [vmem:[#allocation2 + $0x100] sm:$0xff] %vm1534, %v1391
  %1568 = vst.msk [vmem:[#allocation2 + $0x108] sm:$0xff] %vm1534, %v1396
  %1569 = vst.msk [vmem:[#allocation2 + $0x110] sm:$0xff] %vm1534, %v1401
  %1570 = vst.msk [vmem:[#allocation2 + $0x118] sm:$0xff] %vm1534, %v1406
  %1571 = vst.msk [vmem:[#allocation2 + $0x120] sm:$0xff] %vm1534, %v1411
  %1572 = vst.msk [vmem:[#allocation2 + $0x128] sm:$0xff] %vm1534, %v1416
  %1573 = vst.msk [vmem:[#allocation2 + $0x130] sm:$0xff] %vm1534, %v1421
  %1574 = vst.msk [vmem:[#allocation2 + $0x138] sm:$0xff] %vm1534, %v1426
  %1575 = vst.msk [vmem:[#allocation2 + $0x140] sm:$0xff] %vm1534, %v1431
  %1576 = vst.msk [vmem:[#allocation2 + $0x148] sm:$0xff] %vm1534, %v1436
  %1577 = vst.msk [vmem:[#allocation2 + $0x150] sm:$0xff] %vm1534, %v1441
  %1578 = vst.msk [vmem:[#allocation2 + $0x158] sm:$0xff] %vm1534, %v1446
  %1579 = vst.msk [vmem:[#allocation2 + $0x160] sm:$0xff] %vm1534, %v1451
  %1580 = vst.msk [vmem:[#allocation2 + $0x168] sm:$0xff] %vm1534, %v1456
  %1581 = vst.msk [vmem:[#allocation2 + $0x170] sm:$0xff] %vm1534, %v1461
  %1582 = vst.msk [vmem:[#allocation2 + $0x178] sm:$0xff] %vm1534, %v1466
  %1583 = vst.msk [vmem:[#allocation2 + $0x180] sm:$0xff] %vm1534, %v1471
  %1584 = vst.msk [vmem:[#allocation2 + $0x188] sm:$0xff] %vm1534, %v1476
  %1585 = vst.msk [vmem:[#allocation2 + $0x190] sm:$0xff] %vm1534, %v1481
  %1586 = vst.msk [vmem:[#allocation2 + $0x198] sm:$0xff] %vm1534, %v1486
  %1587 = vst.msk [vmem:[#allocation2 + $0x1a0] sm:$0xff] %vm1534, %v1491
  %1588 = vst.msk [vmem:[#allocation2 + $0x1a8] sm:$0xff] %vm1534, %v1496
  %1589 = vst.msk [vmem:[#allocation2 + $0x1b0] sm:$0xff] %vm1534, %v1501
  %1590 = vst.msk [vmem:[#allocation2 + $0x1b8] sm:$0xff] %vm1534, %v1506
  %1591 = vst.msk [vmem:[#allocation2 + $0x1c0] sm:$0xff] %vm1534, %v1511
  %1592 = vst.msk [vmem:[#allocation2 + $0x1c8] sm:$0xff] %vm1534, %v1516
  %1593 = vst.msk [vmem:[#allocation2 + $0x1d0] sm:$0xff] %vm1534, %v1521
  %1594 = vst.msk [vmem:[#allocation2 + $0x1d8] sm:$0xff] %vm1534, %v1526
  %1595 = vst.msk [vmem:[#allocation2 + $0x1e0] sm:$0xff] %vm1534, %v1531
  %v1596 = vld [vmem:[%s7 + $0x1] sm:$0x1]
  %v1597 = vld [vmem:[#allocation2] ss:$2 sm:$0xff]
  %s1598 = scalar_lea.vmem [#allocation2], 16
  %v1599 = vld [vmem:[%s1598] ss:$2 sm:$0xff]
  %s1600 = scalar_lea.vmem [#allocation2], 32
  %v1601 = vld [vmem:[%s1600] ss:$2 sm:$0xff]
  %s1602 = scalar_lea.vmem [#allocation2], 48
  %v1603 = vld [vmem:[%s1602] ss:$2 sm:$0xff]
  %s1604 = scalar_lea.vmem [#allocation2], 64
  %v1605 = vld [vmem:[%s1604] ss:$2 sm:$0xff]
  %s1606 = scalar_lea.vmem [#allocation2], 80
  %v1607 = vld [vmem:[%s1606] ss:$2 sm:$0xff]
  %s1608 = scalar_lea.vmem [#allocation2], 96
  %v1609 = vld [vmem:[%s1608] ss:$2 sm:$0xff]
  %s1610 = scalar_lea.vmem [#allocation2], 112
  %v1611 = vld [vmem:[%s1610] ss:$2 sm:$0xff]
  %s1612 = scalar_lea.vmem [#allocation2], 128
  %v1613 = vld [vmem:[%s1612] ss:$2 sm:$0xff]
  %s1614 = scalar_lea.vmem [#allocation2], 144
  %v1615 = vld [vmem:[%s1614] ss:$2 sm:$0xff]
  %s1616 = scalar_lea.vmem [#allocation2], 160
  %v1617 = vld [vmem:[%s1616] ss:$2 sm:$0xff]
  %s1618 = scalar_lea.vmem [#allocation2], 176
  %v1619 = vld [vmem:[%s1618] ss:$2 sm:$0xff]
  %s1620 = scalar_lea.vmem [#allocation2], 192
  %v1621 = vld [vmem:[%s1620] ss:$2 sm:$0xff]
  %s1622 = scalar_lea.vmem [#allocation2], 208
  %v1623 = vld [vmem:[%s1622] ss:$2 sm:$0xff]
  %s1624 = scalar_lea.vmem [#allocation2], 224
  %v1625 = vld [vmem:[%s1624] ss:$2 sm:$0xff]
  %s1626 = scalar_lea.vmem [#allocation2], 240
  %v1627 = vld [vmem:[%s1626] ss:$2 sm:$0xff]
  %s1628 = scalar_lea.vmem [#allocation2], 256
  %v1629 = vld [vmem:[%s1628] ss:$2 sm:$0xff]
  %s1630 = scalar_lea.vmem [#allocation2], 272
  %v1631 = vld [vmem:[%s1630] ss:$2 sm:$0xff]
  %s1632 = scalar_lea.vmem [#allocation2], 288
  %v1633 = vld [vmem:[%s1632] ss:$2 sm:$0xff]
  %s1634 = scalar_lea.vmem [#allocation2], 304
  %v1635 = vld [vmem:[%s1634] ss:$2 sm:$0xff]
  %s1636 = scalar_lea.vmem [#allocation2], 320
  %v1637 = vld [vmem:[%s1636] ss:$2 sm:$0xff]
  %s1638 = scalar_lea.vmem [#allocation2], 336
  %v1639 = vld [vmem:[%s1638] ss:$2 sm:$0xff]
  %s1640 = scalar_lea.vmem [#allocation2], 352
  %v1641 = vld [vmem:[%s1640] ss:$2 sm:$0xff]
  %s1642 = scalar_lea.vmem [#allocation2], 368
  %v1643 = vld [vmem:[%s1642] ss:$2 sm:$0xff]
  %s1644 = scalar_lea.vmem [#allocation2], 384
  %v1645 = vld [vmem:[%s1644] ss:$2 sm:$0xff]
  %s1646 = scalar_lea.vmem [#allocation2], 400
  %v1647 = vld [vmem:[%s1646] ss:$2 sm:$0xff]
  %s1648 = scalar_lea.vmem [#allocation2], 416
  %v1649 = vld [vmem:[%s1648] ss:$2 sm:$0xff]
  %s1650 = scalar_lea.vmem [#allocation2], 432
  %v1651 = vld [vmem:[%s1650] ss:$2 sm:$0xff]
  %s1652 = scalar_lea.vmem [#allocation2], 448
  %v1653 = vld [vmem:[%s1652] ss:$2 sm:$0xff]
  %s1654 = scalar_lea.vmem [#allocation2], 464
  %v1655 = vld [vmem:[%s1654] ss:$2 sm:$0xff]
  %v1656 = vld [vmem:[%s3] sm:$0xff]
  %v1657 = vld [vmem:[%s3 + $0x8] sm:$0xff]
  %s1658 = scalar_lea.vmem [#allocation2], 1
  %v1659 = vld [vmem:[%s1658] ss:$2 sm:$0xff]
  %s1660 = scalar_lea.vmem [#allocation2], 17
  %v1661 = vld [vmem:[%s1660] ss:$2 sm:$0xff]
  %s1662 = scalar_lea.vmem [#allocation2], 33
  %v1663 = vld [vmem:[%s1662] ss:$2 sm:$0xff]
  %s1664 = scalar_lea.vmem [#allocation2], 49
  %v1665 = vld [vmem:[%s1664] ss:$2 sm:$0xff]
  %s1666 = scalar_lea.vmem [#allocation2], 65
  %v1667 = vld [vmem:[%s1666] ss:$2 sm:$0xff]
  %s1668 = scalar_lea.vmem [#allocation2], 81
  %v1669 = vld [vmem:[%s1668] ss:$2 sm:$0xff]
  %s1670 = scalar_lea.vmem [#allocation2], 97
  %v1671 = vld [vmem:[%s1670] ss:$2 sm:$0xff]
  %s1672 = scalar_lea.vmem [#allocation2], 113
  %v1673 = vld [vmem:[%s1672] ss:$2 sm:$0xff]
  %s1674 = scalar_lea.vmem [#allocation2], 129
  %v1675 = vld [vmem:[%s1674] ss:$2 sm:$0xff]
  %s1676 = scalar_lea.vmem [#allocation2], 145
  %v1677 = vld [vmem:[%s1676] ss:$2 sm:$0xff]
  %s1678 = scalar_lea.vmem [#allocation2], 161
  %v1679 = vld [vmem:[%s1678] ss:$2 sm:$0xff]
  %s1680 = scalar_lea.vmem [#allocation2], 177
  %v1681 = vld [vmem:[%s1680] ss:$2 sm:$0xff]
  %s1682 = scalar_lea.vmem [#allocation2], 193
  %v1683 = vld [vmem:[%s1682] ss:$2 sm:$0xff]
  %s1684 = scalar_lea.vmem [#allocation2], 209
  %v1685 = vld [vmem:[%s1684] ss:$2 sm:$0xff]
  %s1686 = scalar_lea.vmem [#allocation2], 225
  %v1687 = vld [vmem:[%s1686] ss:$2 sm:$0xff]
  %s1688 = scalar_lea.vmem [#allocation2], 241
  %v1689 = vld [vmem:[%s1688] ss:$2 sm:$0xff]
  %s1690 = scalar_lea.vmem [#allocation2], 257
  %v1691 = vld [vmem:[%s1690] ss:$2 sm:$0xff]
  %s1692 = scalar_lea.vmem [#allocation2], 273
  %v1693 = vld [vmem:[%s1692] ss:$2 sm:$0xff]
  %s1694 = scalar_lea.vmem [#allocation2], 289
  %v1695 = vld [vmem:[%s1694] ss:$2 sm:$0xff]
  %s1696 = scalar_lea.vmem [#allocation2], 305
  %v1697 = vld [vmem:[%s1696] ss:$2 sm:$0xff]
  %s1698 = scalar_lea.vmem [#allocation2], 321
  %v1699 = vld [vmem:[%s1698] ss:$2 sm:$0xff]
  %s1700 = scalar_lea.vmem [#allocation2], 337
  %v1701 = vld [vmem:[%s1700] ss:$2 sm:$0xff]
  %s1702 = scalar_lea.vmem [#allocation2], 353
  %v1703 = vld [vmem:[%s1702] ss:$2 sm:$0xff]
  %s1704 = scalar_lea.vmem [#allocation2], 369
  %v1705 = vld [vmem:[%s1704] ss:$2 sm:$0xff]
  %s1706 = scalar_lea.vmem [#allocation2], 385
  %v1707 = vld [vmem:[%s1706] ss:$2 sm:$0xff]
  %s1708 = scalar_lea.vmem [#allocation2], 401
  %v1709 = vld [vmem:[%s1708] ss:$2 sm:$0xff]
  %s1710 = scalar_lea.vmem [#allocation2], 417
  %v1711 = vld [vmem:[%s1710] ss:$2 sm:$0xff]
  %s1712 = scalar_lea.vmem [#allocation2], 433
  %v1713 = vld [vmem:[%s1712] ss:$2 sm:$0xff]
  %s1714 = scalar_lea.vmem [#allocation2], 449
  %v1715 = vld [vmem:[%s1714] ss:$2 sm:$0xff]
  %s1716 = scalar_lea.vmem [#allocation2], 465
  %v1717 = vld [vmem:[%s1716] ss:$2 sm:$0xff]
  %s1718 = scalar_lea.vmem %s3, 16
  %v1719 = vld [vmem:[%s1718] sm:$0xff]
  %v1720 = vld [vmem:[%s1718 + $0x8] sm:$0xff]
  %v1722 = vsel %vm1534, %v1659, 0
  %v1725 = vsel %vm1534, %v1661, 0
  %v1728 = vsel %vm1534, %v1663, 0
  %v1731 = vsel %vm1534, %v1665, 0
  %v1734 = vsel %vm1534, %v1667, 0
  %v1737 = vsel %vm1534, %v1669, 0
  %v1740 = vsel %vm1534, %v1671, 0
  %v1743 = vsel %vm1534, %v1673, 0
  %v1746 = vsel %vm1534, %v1675, 0
  %v1749 = vsel %vm1534, %v1677, 0
  %v1752 = vsel %vm1534, %v1679, 0
  %v1755 = vsel %vm1534, %v1681, 0
  %v1758 = vsel %vm1534, %v1683, 0
  %v1761 = vsel %vm1534, %v1685, 0
  %v1764 = vsel %vm1534, %v1687, 0
  %v1767 = vsel %vm1534, %v1689, 0
  %v1770 = vsel %vm1534, %v1691, 0
  %v1773 = vsel %vm1534, %v1693, 0
  %v1776 = vsel %vm1534, %v1695, 0
  %v1779 = vsel %vm1534, %v1697, 0
  %v1782 = vsel %vm1534, %v1699, 0
  %v1785 = vsel %vm1534, %v1701, 0
  %v1788 = vsel %vm1534, %v1703, 0
  %v1791 = vsel %vm1534, %v1705, 0
  %v1794 = vsel %vm1534, %v1707, 0
  %v1797 = vsel %vm1534, %v1709, 0
  %v1800 = vsel %vm1534, %v1711, 0
  %v1803 = vsel %vm1534, %v1713, 0
  %v1806 = vsel %vm1534, %v1715, 0
  %v1809 = vsel %vm1534, %v1717, 0
  %1811 = vmatprep.subr.mxu0 0.0
  %1812 = vmatpush1.msra.mxu0 0.0
  %1813 = vmatprep.subr.mxu0 0.0
  %1814 = vmatpush1.msra.mxu0 0.0
  %1815 = vmatprep.subr.mxu0 0.0
  %1816 = vmatpush1.msra.mxu0 0.0
  %1817 = vmatprep.subr.mxu0 0.0
  %1818 = vmatpush1.msra.mxu0 0.0
  %1819 = vmatprep.subr.mxu0 0.0
  %1820 = vmatpush1.msra.mxu0 0.0
  %1821 = vmatprep.subr.mxu0 0.0
  %1822 = vmatpush1.msra.mxu0 0.0
  %1823 = vmatprep.subr.mxu0 0.0
  %1824 = vmatpush1.msra.mxu0 0.0
  %1825 = vmatprep.subr.mxu0 0.0
  %1826 = vmatpush1.msra.mxu0 0.0
  %1827 = vmatprep.subr.mxu0 0.0
  %1828 = vmatpush1.msra.mxu0 0.0
  %1829 = vmatprep.subr.mxu0 0.0
  %1830 = vmatpush1.msra.mxu0 0.0
  %1831 = vmatprep.subr.mxu0 0.0
  %1832 = vmatpush1.msra.mxu0 0.0
  %1833 = vmatprep.subr.mxu0 0.0
  %1834 = vmatpush1.msra.mxu0 0.0
  %1835 = vmatprep.subr.mxu0 0.0
  %1836 = vmatpush1.msra.mxu0 0.0
  %1837 = vmatprep.subr.mxu0 0.0
  %1838 = vmatpush1.msra.mxu0 0.0
  %1839 = vmatprep.subr.mxu0 0.0
  %1840 = vmatpush1.msra.mxu0 %v1720
  %1841 = vmatprep.subr.mxu0 0.0
  %1842 = vmatpush1.msra.mxu0 %v1719
  %1843 = vmatprep.subr.mxu0 0.0
  %1844 = vmatpush2.msra.mxu0 0.0
  %1845 = vmatprep.subr.mxu0 0.0
  %1846 = vmatpush2.msra.mxu0 0.0
  %1847 = vmatprep.subr.mxu0 0.0
  %1848 = vmatpush2.msra.mxu0 0.0
  %1849 = vmatprep.subr.mxu0 0.0
  %1850 = vmatpush2.msra.mxu0 0.0
  %1851 = vmatprep.subr.mxu0 0.0
  %1852 = vmatpush2.msra.mxu0 0.0
  %1853 = vmatprep.subr.mxu0 0.0
  %1854 = vmatpush2.msra.mxu0 0.0
  %1855 = vmatprep.subr.mxu0 0.0
  %1856 = vmatpush2.msra.mxu0 0.0
  %1857 = vmatprep.subr.mxu0 0.0
  %1858 = vmatpush2.msra.mxu0 0.0
  %1859 = vmatprep.subr.mxu0 0.0
  %1860 = vmatpush2.msra.mxu0 0.0
  %1861 = vmatprep.subr.mxu0 0.0
  %1862 = vmatpush2.msra.mxu0 0.0
  %1863 = vmatprep.subr.mxu0 0.0
  %1864 = vmatpush2.msra.mxu0 0.0
  %1865 = vmatprep.subr.mxu0 0.0
  %1866 = vmatpush2.msra.mxu0 0.0
  %1867 = vmatprep.subr.mxu0 0.0
  %1868 = vmatpush2.msra.mxu0 0.0
  %1869 = vmatprep.subr.mxu0 0.0
  %1870 = vmatpush2.msra.mxu0 0.0
  %1871 = vmatprep.subr.mxu0 0.0
  %1872 = vmatpush2.msra.mxu0 0.0
  %1873 = vmatprep.subr.mxu0 0.0
  %1874 = vmatpush2.msra.mxu0 0.0
  %1875 = vmatprep.mubr.f32.mxu0 0.0
  %1876 = vmatmul.mubr.f32.gmra.mxu0 %v1722
  %v1877 = vpop.f32.mrf.mxu0
  %v1878 = vadd.f32 0.0, %v1877
  %v1879 = vpop.f32.mrf.mxu0
  %1880 = vmatprep.mubr.f32.mxu0 0.0
  %1881 = vmatmul.mubr.f32.gmra.mxu0 %v1725
  %v1882 = vpop.f32.mrf.mxu0
  %v1883 = vadd.f32 0.0, %v1882
  %v1884 = vpop.f32.mrf.mxu0
  %1885 = vmatprep.mubr.f32.mxu0 0.0
  %1886 = vmatmul.mubr.f32.gmra.mxu0 %v1728
  %v1887 = vpop.f32.mrf.mxu0
  %v1888 = vadd.f32 0.0, %v1887
  %v1889 = vpop.f32.mrf.mxu0
  %1890 = vmatprep.mubr.f32.mxu0 0.0
  %1891 = vmatmul.mubr.f32.gmra.mxu0 %v1731
  %v1892 = vpop.f32.mrf.mxu0
  %v1893 = vadd.f32 0.0, %v1892
  %v1894 = vpop.f32.mrf.mxu0
  %1895 = vmatprep.mubr.f32.mxu0 0.0
  %1896 = vmatmul.mubr.f32.gmra.mxu0 %v1734
  %v1897 = vpop.f32.mrf.mxu0
  %v1898 = vadd.f32 0.0, %v1897
  %v1899 = vpop.f32.mrf.mxu0
  %1900 = vmatprep.mubr.f32.mxu0 0.0
  %1901 = vmatmul.mubr.f32.gmra.mxu0 %v1737
  %v1902 = vpop.f32.mrf.mxu0
  %v1903 = vadd.f32 0.0, %v1902
  %v1904 = vpop.f32.mrf.mxu0
  %1905 = vmatprep.mubr.f32.mxu0 0.0
  %1906 = vmatmul.mubr.f32.gmra.mxu0 %v1740
  %v1907 = vpop.f32.mrf.mxu0
  %v1908 = vadd.f32 0.0, %v1907
  %v1909 = vpop.f32.mrf.mxu0
  %1910 = vmatprep.mubr.f32.mxu0 0.0
  %1911 = vmatmul.mubr.f32.gmra.mxu0 %v1743
  %v1912 = vpop.f32.mrf.mxu0
  %v1913 = vadd.f32 0.0, %v1912
  %v1914 = vpop.f32.mrf.mxu0
  %1915 = vmatprep.mubr.f32.mxu0 0.0
  %1916 = vmatmul.mubr.f32.gmra.mxu0 %v1746
  %v1917 = vpop.f32.mrf.mxu0
  %v1918 = vadd.f32 0.0, %v1917
  %v1919 = vpop.f32.mrf.mxu0
  %1920 = vmatprep.mubr.f32.mxu0 0.0
  %1921 = vmatmul.mubr.f32.gmra.mxu0 %v1749
  %v1922 = vpop.f32.mrf.mxu0
  %v1923 = vadd.f32 0.0, %v1922
  %v1924 = vpop.f32.mrf.mxu0
  %1925 = vmatprep.mubr.f32.mxu0 0.0
  %1926 = vmatmul.mubr.f32.gmra.mxu0 %v1752
  %v1927 = vpop.f32.mrf.mxu0
  %v1928 = vadd.f32 0.0, %v1927
  %v1929 = vpop.f32.mrf.mxu0
  %1930 = vmatprep.mubr.f32.mxu0 0.0
  %1931 = vmatmul.mubr.f32.gmra.mxu0 %v1755
  %v1932 = vpop.f32.mrf.mxu0
  %v1933 = vadd.f32 0.0, %v1932
  %v1934 = vpop.f32.mrf.mxu0
  %1935 = vmatprep.mubr.f32.mxu0 0.0
  %1936 = vmatmul.mubr.f32.gmra.mxu0 %v1758
  %v1937 = vpop.f32.mrf.mxu0
  %v1938 = vadd.f32 0.0, %v1937
  %v1939 = vpop.f32.mrf.mxu0
  %1940 = vmatprep.mubr.f32.mxu0 0.0
  %1941 = vmatmul.mubr.f32.gmra.mxu0 %v1761
  %v1942 = vpop.f32.mrf.mxu0
  %v1943 = vadd.f32 0.0, %v1942
  %v1944 = vpop.f32.mrf.mxu0
  %1945 = vmatprep.mubr.f32.mxu0 0.0
  %1946 = vmatmul.mubr.f32.gmra.mxu0 %v1764
  %v1947 = vpop.f32.mrf.mxu0
  %v1948 = vadd.f32 0.0, %v1947
  %v1949 = vpop.f32.mrf.mxu0
  %1950 = vmatprep.mubr.f32.mxu0 0.0
  %1951 = vmatmul.mubr.f32.gmra.mxu0 %v1767
  %v1952 = vpop.f32.mrf.mxu0
  %v1953 = vadd.f32 0.0, %v1952
  %v1954 = vpop.f32.mrf.mxu0
  %1955 = vmatprep.mubr.f32.mxu0 0.0
  %1956 = vmatmul.mubr.f32.gmra.mxu0 %v1770
  %v1957 = vpop.f32.mrf.mxu0
  %v1958 = vadd.f32 0.0, %v1957
  %v1959 = vpop.f32.mrf.mxu0
  %1960 = vmatprep.mubr.f32.mxu0 0.0
  %1961 = vmatmul.mubr.f32.gmra.mxu0 %v1773
  %v1962 = vpop.f32.mrf.mxu0
  %v1963 = vadd.f32 0.0, %v1962
  %v1964 = vpop.f32.mrf.mxu0
  %1965 = vmatprep.mubr.f32.mxu0 0.0
  %1966 = vmatmul.mubr.f32.gmra.mxu0 %v1776
  %v1967 = vpop.f32.mrf.mxu0
  %v1968 = vadd.f32 0.0, %v1967
  %v1969 = vpop.f32.mrf.mxu0
  %1970 = vmatprep.mubr.f32.mxu0 0.0
  %1971 = vmatmul.mubr.f32.gmra.mxu0 %v1779
  %v1972 = vpop.f32.mrf.mxu0
  %v1973 = vadd.f32 0.0, %v1972
  %v1974 = vpop.f32.mrf.mxu0
  %1975 = vmatprep.mubr.f32.mxu0 0.0
  %1976 = vmatmul.mubr.f32.gmra.mxu0 %v1782
  %v1977 = vpop.f32.mrf.mxu0
  %v1978 = vadd.f32 0.0, %v1977
  %v1979 = vpop.f32.mrf.mxu0
  %1980 = vmatprep.mubr.f32.mxu0 0.0
  %1981 = vmatmul.mubr.f32.gmra.mxu0 %v1785
  %v1982 = vpop.f32.mrf.mxu0
  %v1983 = vadd.f32 0.0, %v1982
  %v1984 = vpop.f32.mrf.mxu0
  %1985 = vmatprep.mubr.f32.mxu0 0.0
  %1986 = vmatmul.mubr.f32.gmra.mxu0 %v1788
  %v1987 = vpop.f32.mrf.mxu0
  %v1988 = vadd.f32 0.0, %v1987
  %v1989 = vpop.f32.mrf.mxu0
  %1990 = vmatprep.mubr.f32.mxu0 0.0
  %1991 = vmatmul.mubr.f32.gmra.mxu0 %v1791
  %v1992 = vpop.f32.mrf.mxu0
  %v1993 = vadd.f32 0.0, %v1992
  %v1994 = vpop.f32.mrf.mxu0
  %1995 = vmatprep.mubr.f32.mxu0 0.0
  %1996 = vmatmul.mubr.f32.gmra.mxu0 %v1794
  %v1997 = vpop.f32.mrf.mxu0
  %v1998 = vadd.f32 0.0, %v1997
  %v1999 = vpop.f32.mrf.mxu0
  %2000 = vmatprep.mubr.f32.mxu0 0.0
  %2001 = vmatmul.mubr.f32.gmra.mxu0 %v1797
  %v2002 = vpop.f32.mrf.mxu0
  %v2003 = vadd.f32 0.0, %v2002
  %v2004 = vpop.f32.mrf.mxu0
  %2005 = vmatprep.mubr.f32.mxu0 0.0
  %2006 = vmatmul.mubr.f32.gmra.mxu0 %v1800
  %v2007 = vpop.f32.mrf.mxu0
  %v2008 = vadd.f32 0.0, %v2007
  %v2009 = vpop.f32.mrf.mxu0
  %2010 = vmatprep.mubr.f32.mxu0 0.0
  %2011 = vmatmul.mubr.f32.gmra.mxu0 %v1803
  %v2012 = vpop.f32.mrf.mxu0
  %v2013 = vadd.f32 0.0, %v2012
  %v2014 = vpop.f32.mrf.mxu0
  %2015 = vmatprep.mubr.f32.mxu0 0.0
  %2016 = vmatmul.mubr.f32.gmra.mxu0 %v1806
  %v2017 = vpop.f32.mrf.mxu0
  %v2018 = vadd.f32 0.0, %v2017
  %v2019 = vpop.f32.mrf.mxu0
  %2020 = vmatprep.mubr.f32.mxu0 0.0
  %2021 = vmatmul.mubr.f32.gmra.mxu0 %v1809
  %v2022 = vpop.f32.mrf.mxu0
  %v2023 = vadd.f32 0.0, %v2022
  %v2024 = vpop.f32.mrf.mxu0
  %2025 = vdwg.mxu0
  %v2027 = vsel %vm1534, %v1597, 0
  %v2030 = vsel %vm1534, %v1599, 0
  %v2033 = vsel %vm1534, %v1601, 0
  %v2036 = vsel %vm1534, %v1603, 0
  %v2039 = vsel %vm1534, %v1605, 0
  %v2042 = vsel %vm1534, %v1607, 0
  %v2045 = vsel %vm1534, %v1609, 0
  %v2048 = vsel %vm1534, %v1611, 0
  %v2051 = vsel %vm1534, %v1613, 0
  %v2054 = vsel %vm1534, %v1615, 0
  %v2057 = vsel %vm1534, %v1617, 0
  %v2060 = vsel %vm1534, %v1619, 0
  %v2063 = vsel %vm1534, %v1621, 0
  %v2066 = vsel %vm1534, %v1623, 0
  %v2069 = vsel %vm1534, %v1625, 0
  %v2072 = vsel %vm1534, %v1627, 0
  %v2075 = vsel %vm1534, %v1629, 0
  %v2078 = vsel %vm1534, %v1631, 0
  %v2081 = vsel %vm1534, %v1633, 0
  %v2084 = vsel %vm1534, %v1635, 0
  %v2087 = vsel %vm1534, %v1637, 0
  %v2090 = vsel %vm1534, %v1639, 0
  %v2093 = vsel %vm1534, %v1641, 0
  %v2096 = vsel %vm1534, %v1643, 0
  %v2099 = vsel %vm1534, %v1645, 0
  %v2102 = vsel %vm1534, %v1647, 0
  %v2105 = vsel %vm1534, %v1649, 0
  %v2108 = vsel %vm1534, %v1651, 0
  %v2111 = vsel %vm1534, %v1653, 0
  %v2114 = vsel %vm1534, %v1655, 0
  %2116 = vmatprep.subr.mxu0 0.0
  %2117 = vmatpush1.msra.mxu0 0.0
  %2118 = vmatprep.subr.mxu0 0.0
  %2119 = vmatpush1.msra.mxu0 0.0
  %2120 = vmatprep.subr.mxu0 0.0
  %2121 = vmatpush1.msra.mxu0 0.0
  %2122 = vmatprep.subr.mxu0 0.0
  %2123 = vmatpush1.msra.mxu0 0.0
  %2124 = vmatprep.subr.mxu0 0.0
  %2125 = vmatpush1.msra.mxu0 0.0
  %2126 = vmatprep.subr.mxu0 0.0
  %2127 = vmatpush1.msra.mxu0 0.0
  %2128 = vmatprep.subr.mxu0 0.0
  %2129 = vmatpush1.msra.mxu0 0.0
  %2130 = vmatprep.subr.mxu0 0.0
  %2131 = vmatpush1.msra.mxu0 0.0
  %2132 = vmatprep.subr.mxu0 0.0
  %2133 = vmatpush1.msra.mxu0 0.0
  %2134 = vmatprep.subr.mxu0 0.0
  %2135 = vmatpush1.msra.mxu0 0.0
  %2136 = vmatprep.subr.mxu0 0.0
  %2137 = vmatpush1.msra.mxu0 0.0
  %2138 = vmatprep.subr.mxu0 0.0
  %2139 = vmatpush1.msra.mxu0 0.0
  %2140 = vmatprep.subr.mxu0 0.0
  %2141 = vmatpush1.msra.mxu0 0.0
  %2142 = vmatprep.subr.mxu0 0.0
  %2143 = vmatpush1.msra.mxu0 0.0
  %2144 = vmatprep.subr.mxu0 0.0
  %2145 = vmatpush1.msra.mxu0 %v1657
  %2146 = vmatprep.subr.mxu0 0.0
  %2147 = vmatpush1.msra.mxu0 %v1656
  %2148 = vmatprep.subr.mxu0 0.0
  %2149 = vmatpush2.msra.mxu0 0.0
  %2150 = vmatprep.subr.mxu0 0.0
  %2151 = vmatpush2.msra.mxu0 0.0
  %2152 = vmatprep.subr.mxu0 0.0
  %2153 = vmatpush2.msra.mxu0 0.0
  %2154 = vmatprep.subr.mxu0 0.0
  %2155 = vmatpush2.msra.mxu0 0.0
  %2156 = vmatprep.subr.mxu0 0.0
  %2157 = vmatpush2.msra.mxu0 0.0
  %2158 = vmatprep.subr.mxu0 0.0
  %2159 = vmatpush2.msra.mxu0 0.0
  %2160 = vmatprep.subr.mxu0 0.0
  %2161 = vmatpush2.msra.mxu0 0.0
  %2162 = vmatprep.subr.mxu0 0.0
  %2163 = vmatpush2.msra.mxu0 0.0
  %2164 = vmatprep.subr.mxu0 0.0
  %2165 = vmatpush2.msra.mxu0 0.0
  %2166 = vmatprep.subr.mxu0 0.0
  %2167 = vmatpush2.msra.mxu0 0.0
  %2168 = vmatprep.subr.mxu0 0.0
  %2169 = vmatpush2.msra.mxu0 0.0
  %2170 = vmatprep.subr.mxu0 0.0
  %2171 = vmatpush2.msra.mxu0 0.0
  %2172 = vmatprep.subr.mxu0 0.0
  %2173 = vmatpush2.msra.mxu0 0.0
  %2174 = vmatprep.subr.mxu0 0.0
  %2175 = vmatpush2.msra.mxu0 0.0
  %2176 = vmatprep.subr.mxu0 0.0
  %2177 = vmatpush2.msra.mxu0 0.0
  %2178 = vmatprep.subr.mxu0 0.0
  %2179 = vmatpush2.msra.mxu0 0.0
  %2180 = vmatprep.mubr.f32.mxu0 0.0
  %2181 = vmatmul.mubr.f32.gmra.mxu0 %v2027
  %v2182 = vpop.f32.mrf.mxu0
  %v2183 = vadd.f32 %v1878, %v2182
  %v2184 = vpop.f32.mrf.mxu0
  %2185 = vmatprep.mubr.f32.mxu0 0.0
  %2186 = vmatmul.mubr.f32.gmra.mxu0 %v2030
  %v2187 = vpop.f32.mrf.mxu0
  %v2188 = vadd.f32 %v1883, %v2187
  %v2189 = vpop.f32.mrf.mxu0
  %2190 = vmatprep.mubr.f32.mxu0 0.0
  %2191 = vmatmul.mubr.f32.gmra.mxu0 %v2033
  %v2192 = vpop.f32.mrf.mxu0
  %v2193 = vadd.f32 %v1888, %v2192
  %v2194 = vpop.f32.mrf.mxu0
  %2195 = vmatprep.mubr.f32.mxu0 0.0
  %2196 = vmatmul.mubr.f32.gmra.mxu0 %v2036
  %v2197 = vpop.f32.mrf.mxu0
  %v2198 = vadd.f32 %v1893, %v2197
  %v2199 = vpop.f32.mrf.mxu0
  %2200 = vmatprep.mubr.f32.mxu0 0.0
  %2201 = vmatmul.mubr.f32.gmra.mxu0 %v2039
  %v2202 = vpop.f32.mrf.mxu0
  %v2203 = vadd.f32 %v1898, %v2202
  %v2204 = vpop.f32.mrf.mxu0
  %2205 = vmatprep.mubr.f32.mxu0 0.0
  %2206 = vmatmul.mubr.f32.gmra.mxu0 %v2042
  %v2207 = vpop.f32.mrf.mxu0
  %v2208 = vadd.f32 %v1903, %v2207
  %v2209 = vpop.f32.mrf.mxu0
  %2210 = vmatprep.mubr.f32.mxu0 0.0
  %2211 = vmatmul.mubr.f32.gmra.mxu0 %v2045
  %v2212 = vpop.f32.mrf.mxu0
  %v2213 = vadd.f32 %v1908, %v2212
  %v2214 = vpop.f32.mrf.mxu0
  %2215 = vmatprep.mubr.f32.mxu0 0.0
  %2216 = vmatmul.mubr.f32.gmra.mxu0 %v2048
  %v2217 = vpop.f32.mrf.mxu0
  %v2218 = vadd.f32 %v1913, %v2217
  %v2219 = vpop.f32.mrf.mxu0
  %2220 = vmatprep.mubr.f32.mxu0 0.0
  %2221 = vmatmul.mubr.f32.gmra.mxu0 %v2051
  %v2222 = vpop.f32.mrf.mxu0
  %v2223 = vadd.f32 %v1918, %v2222
  %v2224 = vpop.f32.mrf.mxu0
  %2225 = vmatprep.mubr.f32.mxu0 0.0
  %2226 = vmatmul.mubr.f32.gmra.mxu0 %v2054
  %v2227 = vpop.f32.mrf.mxu0
  %v2228 = vadd.f32 %v1923, %v2227
  %v2229 = vpop.f32.mrf.mxu0
  %2230 = vmatprep.mubr.f32.mxu0 0.0
  %2231 = vmatmul.mubr.f32.gmra.mxu0 %v2057
  %v2232 = vpop.f32.mrf.mxu0
  %v2233 = vadd.f32 %v1928, %v2232
  %v2234 = vpop.f32.mrf.mxu0
  %2235 = vmatprep.mubr.f32.mxu0 0.0
  %2236 = vmatmul.mubr.f32.gmra.mxu0 %v2060
  %v2237 = vpop.f32.mrf.mxu0
  %v2238 = vadd.f32 %v1933, %v2237
  %v2239 = vpop.f32.mrf.mxu0
  %2240 = vmatprep.mubr.f32.mxu0 0.0
  %2241 = vmatmul.mubr.f32.gmra.mxu0 %v2063
  %v2242 = vpop.f32.mrf.mxu0
  %v2243 = vadd.f32 %v1938, %v2242
  %v2244 = vpop.f32.mrf.mxu0
  %2245 = vmatprep.mubr.f32.mxu0 0.0
  %2246 = vmatmul.mubr.f32.gmra.mxu0 %v2066
  %v2247 = vpop.f32.mrf.mxu0
  %v2248 = vadd.f32 %v1943, %v2247
  %v2249 = vpop.f32.mrf.mxu0
  %2250 = vmatprep.mubr.f32.mxu0 0.0
  %2251 = vmatmul.mubr.f32.gmra.mxu0 %v2069
  %v2252 = vpop.f32.mrf.mxu0
  %v2253 = vadd.f32 %v1948, %v2252
  %v2254 = vpop.f32.mrf.mxu0
  %2255 = vmatprep.mubr.f32.mxu0 0.0
  %2256 = vmatmul.mubr.f32.gmra.mxu0 %v2072
  %v2257 = vpop.f32.mrf.mxu0
  %v2258 = vadd.f32 %v1953, %v2257
  %v2259 = vpop.f32.mrf.mxu0
  %2260 = vmatprep.mubr.f32.mxu0 0.0
  %2261 = vmatmul.mubr.f32.gmra.mxu0 %v2075
  %v2262 = vpop.f32.mrf.mxu0
  %v2263 = vadd.f32 %v1958, %v2262
  %v2264 = vpop.f32.mrf.mxu0
  %2265 = vmatprep.mubr.f32.mxu0 0.0
  %2266 = vmatmul.mubr.f32.gmra.mxu0 %v2078
  %v2267 = vpop.f32.mrf.mxu0
  %v2268 = vadd.f32 %v1963, %v2267
  %v2269 = vpop.f32.mrf.mxu0
  %2270 = vmatprep.mubr.f32.mxu0 0.0
  %2271 = vmatmul.mubr.f32.gmra.mxu0 %v2081
  %v2272 = vpop.f32.mrf.mxu0
  %v2273 = vadd.f32 %v1968, %v2272
  %v2274 = vpop.f32.mrf.mxu0
  %2275 = vmatprep.mubr.f32.mxu0 0.0
  %2276 = vmatmul.mubr.f32.gmra.mxu0 %v2084
  %v2277 = vpop.f32.mrf.mxu0
  %v2278 = vadd.f32 %v1973, %v2277
  %v2279 = vpop.f32.mrf.mxu0
  %2280 = vmatprep.mubr.f32.mxu0 0.0
  %2281 = vmatmul.mubr.f32.gmra.mxu0 %v2087
  %v2282 = vpop.f32.mrf.mxu0
  %v2283 = vadd.f32 %v1978, %v2282
  %v2284 = vpop.f32.mrf.mxu0
  %2285 = vmatprep.mubr.f32.mxu0 0.0
  %2286 = vmatmul.mubr.f32.gmra.mxu0 %v2090
  %v2287 = vpop.f32.mrf.mxu0
  %v2288 = vadd.f32 %v1983, %v2287
  %v2289 = vpop.f32.mrf.mxu0
  %2290 = vmatprep.mubr.f32.mxu0 0.0
  %2291 = vmatmul.mubr.f32.gmra.mxu0 %v2093
  %v2292 = vpop.f32.mrf.mxu0
  %v2293 = vadd.f32 %v1988, %v2292
  %v2294 = vpop.f32.mrf.mxu0
  %2295 = vmatprep.mubr.f32.mxu0 0.0
  %2296 = vmatmul.mubr.f32.gmra.mxu0 %v2096
  %v2297 = vpop.f32.mrf.mxu0
  %v2298 = vadd.f32 %v1993, %v2297
  %v2299 = vpop.f32.mrf.mxu0
  %2300 = vmatprep.mubr.f32.mxu0 0.0
  %2301 = vmatmul.mubr.f32.gmra.mxu0 %v2099
  %v2302 = vpop.f32.mrf.mxu0
  %v2303 = vadd.f32 %v1998, %v2302
  %v2304 = vpop.f32.mrf.mxu0
  %2305 = vmatprep.mubr.f32.mxu0 0.0
  %2306 = vmatmul.mubr.f32.gmra.mxu0 %v2102
  %v2307 = vpop.f32.mrf.mxu0
  %v2308 = vadd.f32 %v2003, %v2307
  %v2309 = vpop.f32.mrf.mxu0
  %2310 = vmatprep.mubr.f32.mxu0 0.0
  %2311 = vmatmul.mubr.f32.gmra.mxu0 %v2105
  %v2312 = vpop.f32.mrf.mxu0
  %v2313 = vadd.f32 %v2008, %v2312
  %v2314 = vpop.f32.mrf.mxu0
  %2315 = vmatprep.mubr.f32.mxu0 0.0
  %2316 = vmatmul.mubr.f32.gmra.mxu0 %v2108
  %v2317 = vpop.f32.mrf.mxu0
  %v2318 = vadd.f32 %v2013, %v2317
  %v2319 = vpop.f32.mrf.mxu0
  %2320 = vmatprep.mubr.f32.mxu0 0.0
  %2321 = vmatmul.mubr.f32.gmra.mxu0 %v2111
  %v2322 = vpop.f32.mrf.mxu0
  %v2323 = vadd.f32 %v2018, %v2322
  %v2324 = vpop.f32.mrf.mxu0
  %2325 = vmatprep.mubr.f32.mxu0 0.0
  %2326 = vmatmul.mubr.f32.gmra.mxu0 %v2114
  %v2327 = vpop.f32.mrf.mxu0
  %v2328 = vadd.f32 %v2023, %v2327
  %v2329 = vpop.f32.mrf.mxu0
  %2330 = vdwg.mxu0
  %s2331 = scalar_lea.vmem [#allocation2], 2
  %v2332 = vld [vmem:[%s2331] ss:$2 sm:$0xff]
  %s2333 = scalar_lea.vmem [#allocation2], 18
  %v2334 = vld [vmem:[%s2333] ss:$2 sm:$0xff]
  %s2335 = scalar_lea.vmem [#allocation2], 34
  %v2336 = vld [vmem:[%s2335] ss:$2 sm:$0xff]
  %s2337 = scalar_lea.vmem [#allocation2], 50
  %v2338 = vld [vmem:[%s2337] ss:$2 sm:$0xff]
  %s2339 = scalar_lea.vmem [#allocation2], 66
  %v2340 = vld [vmem:[%s2339] ss:$2 sm:$0xff]
  %s2341 = scalar_lea.vmem [#allocation2], 82
  %v2342 = vld [vmem:[%s2341] ss:$2 sm:$0xff]
  %s2343 = scalar_lea.vmem [#allocation2], 98
  %v2344 = vld [vmem:[%s2343] ss:$2 sm:$0xff]
  %s2345 = scalar_lea.vmem [#allocation2], 114
  %v2346 = vld [vmem:[%s2345] ss:$2 sm:$0xff]
  %s2347 = scalar_lea.vmem [#allocation2], 130
  %v2348 = vld [vmem:[%s2347] ss:$2 sm:$0xff]
  %s2349 = scalar_lea.vmem [#allocation2], 146
  %v2350 = vld [vmem:[%s2349] ss:$2 sm:$0xff]
  %s2351 = scalar_lea.vmem [#allocation2], 162
  %v2352 = vld [vmem:[%s2351] ss:$2 sm:$0xff]
  %s2353 = scalar_lea.vmem [#allocation2], 178
  %v2354 = vld [vmem:[%s2353] ss:$2 sm:$0xff]
  %s2355 = scalar_lea.vmem [#allocation2], 194
  %v2356 = vld [vmem:[%s2355] ss:$2 sm:$0xff]
  %s2357 = scalar_lea.vmem [#allocation2], 210
  %v2358 = vld [vmem:[%s2357] ss:$2 sm:$0xff]
  %s2359 = scalar_lea.vmem [#allocation2], 226
  %v2360 = vld [vmem:[%s2359] ss:$2 sm:$0xff]
  %s2361 = scalar_lea.vmem [#allocation2], 242
  %v2362 = vld [vmem:[%s2361] ss:$2 sm:$0xff]
  %s2363 = scalar_lea.vmem [#allocation2], 258
  %v2364 = vld [vmem:[%s2363] ss:$2 sm:$0xff]
  %s2365 = scalar_lea.vmem [#allocation2], 274
  %v2366 = vld [vmem:[%s2365] ss:$2 sm:$0xff]
  %s2367 = scalar_lea.vmem [#allocation2], 290
  %v2368 = vld [vmem:[%s2367] ss:$2 sm:$0xff]
  %s2369 = scalar_lea.vmem [#allocation2], 306
  %v2370 = vld [vmem:[%s2369] ss:$2 sm:$0xff]
  %s2371 = scalar_lea.vmem [#allocation2], 322
  %v2372 = vld [vmem:[%s2371] ss:$2 sm:$0xff]
  %s2373 = scalar_lea.vmem [#allocation2], 338
  %v2374 = vld [vmem:[%s2373] ss:$2 sm:$0xff]
  %s2375 = scalar_lea.vmem [#allocation2], 354
  %v2376 = vld [vmem:[%s2375] ss:$2 sm:$0xff]
  %s2377 = scalar_lea.vmem [#allocation2], 370
  %v2378 = vld [vmem:[%s2377] ss:$2 sm:$0xff]
  %s2379 = scalar_lea.vmem [#allocation2], 386
  %v2380 = vld [vmem:[%s2379] ss:$2 sm:$0xff]
  %s2381 = scalar_lea.vmem [#allocation2], 402
  %v2382 = vld [vmem:[%s2381] ss:$2 sm:$0xff]
  %s2383 = scalar_lea.vmem [#allocation2], 418
  %v2384 = vld [vmem:[%s2383] ss:$2 sm:$0xff]
  %s2385 = scalar_lea.vmem [#allocation2], 434
  %v2386 = vld [vmem:[%s2385] ss:$2 sm:$0xff]
  %s2387 = scalar_lea.vmem [#allocation2], 450
  %v2388 = vld [vmem:[%s2387] ss:$2 sm:$0xff]
  %s2389 = scalar_lea.vmem [#allocation2], 466
  %v2390 = vld [vmem:[%s2389] ss:$2 sm:$0xff]
  %s2391 = scalar_lea.vmem %s3, 32
  %v2392 = vld [vmem:[%s2391] sm:$0xff]
  %v2393 = vld [vmem:[%s2391 + $0x8] sm:$0xff]
  %v2395 = vsel %vm1534, %v2332, 0
  %v2398 = vsel %vm1534, %v2334, 0
  %v2401 = vsel %vm1534, %v2336, 0
  %v2404 = vsel %vm1534, %v2338, 0
  %v2407 = vsel %vm1534, %v2340, 0
  %v2410 = vsel %vm1534, %v2342, 0
  %v2413 = vsel %vm1534, %v2344, 0
  %v2416 = vsel %vm1534, %v2346, 0
  %v2419 = vsel %vm1534, %v2348, 0
  %v2422 = vsel %vm1534, %v2350, 0
  %v2425 = vsel %vm1534, %v2352, 0
  %v2428 = vsel %vm1534, %v2354, 0
  %v2431 = vsel %vm1534, %v2356, 0
  %v2434 = vsel %vm1534, %v2358, 0
  %v2437 = vsel %vm1534, %v2360, 0
  %v2440 = vsel %vm1534, %v2362, 0
  %v2443 = vsel %vm1534, %v2364, 0
  %v2446 = vsel %vm1534, %v2366, 0
  %v2449 = vsel %vm1534, %v2368, 0
  %v2452 = vsel %vm1534, %v2370, 0
  %v2455 = vsel %vm1534, %v2372, 0
  %v2458 = vsel %vm1534, %v2374, 0
  %v2461 = vsel %vm1534, %v2376, 0
  %v2464 = vsel %vm1534, %v2378, 0
  %v2467 = vsel %vm1534, %v2380, 0
  %v2470 = vsel %vm1534, %v2382, 0
  %v2473 = vsel %vm1534, %v2384, 0
  %v2476 = vsel %vm1534, %v2386, 0
  %v2479 = vsel %vm1534, %v2388, 0
  %v2482 = vsel %vm1534, %v2390, 0
  %2484 = vmatprep.subr.mxu0 0.0
  %2485 = vmatpush1.msra.mxu0 0.0
  %2486 = vmatprep.subr.mxu0 0.0
  %2487 = vmatpush1.msra.mxu0 0.0
  %2488 = vmatprep.subr.mxu0 0.0
  %2489 = vmatpush1.msra.mxu0 0.0
  %2490 = vmatprep.subr.mxu0 0.0
  %2491 = vmatpush1.msra.mxu0 0.0
  %2492 = vmatprep.subr.mxu0 0.0
  %2493 = vmatpush1.msra.mxu0 0.0
  %2494 = vmatprep.subr.mxu0 0.0
  %2495 = vmatpush1.msra.mxu0 0.0
  %2496 = vmatprep.subr.mxu0 0.0
  %2497 = vmatpush1.msra.mxu0 0.0
  %2498 = vmatprep.subr.mxu0 0.0
  %2499 = vmatpush1.msra.mxu0 0.0
  %2500 = vmatprep.subr.mxu0 0.0
  %2501 = vmatpush1.msra.mxu0 0.0
  %2502 = vmatprep.subr.mxu0 0.0
  %2503 = vmatpush1.msra.mxu0 0.0
  %2504 = vmatprep.subr.mxu0 0.0
  %2505 = vmatpush1.msra.mxu0 0.0
  %2506 = vmatprep.subr.mxu0 0.0
  %2507 = vmatpush1.msra.mxu0 0.0
  %2508 = vmatprep.subr.mxu0 0.0
  %2509 = vmatpush1.msra.mxu0 0.0
  %2510 = vmatprep.subr.mxu0 0.0
  %2511 = vmatpush1.msra.mxu0 0.0
  %2512 = vmatprep.subr.mxu0 0.0
  %2513 = vmatpush1.msra.mxu0 %v2393
  %2514 = vmatprep.subr.mxu0 0.0
  %2515 = vmatpush1.msra.mxu0 %v2392
  %2516 = vmatprep.subr.mxu0 0.0
  %2517 = vmatpush2.msra.mxu0 0.0
  %2518 = vmatprep.subr.mxu0 0.0
  %2519 = vmatpush2.msra.mxu0 0.0
  %2520 = vmatprep.subr.mxu0 0.0
  %2521 = vmatpush2.msra.mxu0 0.0
  %2522 = vmatprep.subr.mxu0 0.0
  %2523 = vmatpush2.msra.mxu0 0.0
  %2524 = vmatprep.subr.mxu0 0.0
  %2525 = vmatpush2.msra.mxu0 0.0
  %2526 = vmatprep.subr.mxu0 0.0
  %2527 = vmatpush2.msra.mxu0 0.0
  %2528 = vmatprep.subr.mxu0 0.0
  %2529 = vmatpush2.msra.mxu0 0.0
  %2530 = vmatprep.subr.mxu0 0.0
  %2531 = vmatpush2.msra.mxu0 0.0
  %2532 = vmatprep.subr.mxu0 0.0
  %2533 = vmatpush2.msra.mxu0 0.0
  %2534 = vmatprep.subr.mxu0 0.0
  %2535 = vmatpush2.msra.mxu0 0.0
  %2536 = vmatprep.subr.mxu0 0.0
  %2537 = vmatpush2.msra.mxu0 0.0
  %2538 = vmatprep.subr.mxu0 0.0
  %2539 = vmatpush2.msra.mxu0 0.0
  %2540 = vmatprep.subr.mxu0 0.0
  %2541 = vmatpush2.msra.mxu0 0.0
  %2542 = vmatprep.subr.mxu0 0.0
  %2543 = vmatpush2.msra.mxu0 0.0
  %2544 = vmatprep.subr.mxu0 0.0
  %2545 = vmatpush2.msra.mxu0 0.0
  %2546 = vmatprep.subr.mxu0 0.0
  %2547 = vmatpush2.msra.mxu0 0.0
  %2548 = vmatprep.mubr.f32.mxu0 0.0
  %2549 = vmatmul.mubr.f32.gmra.mxu0 %v2395
  %v2550 = vpop.f32.mrf.mxu0
  %v2551 = vadd.f32 0.0, %v2550
  %v2552 = vpop.f32.mrf.mxu0
  %2553 = vmatprep.mubr.f32.mxu0 0.0
  %2554 = vmatmul.mubr.f32.gmra.mxu0 %v2398
  %v2555 = vpop.f32.mrf.mxu0
  %v2556 = vadd.f32 0.0, %v2555
  %v2557 = vpop.f32.mrf.mxu0
  %2558 = vmatprep.mubr.f32.mxu0 0.0
  %2559 = vmatmul.mubr.f32.gmra.mxu0 %v2401
  %v2560 = vpop.f32.mrf.mxu0
  %v2561 = vadd.f32 0.0, %v2560
  %v2562 = vpop.f32.mrf.mxu0
  %2563 = vmatprep.mubr.f32.mxu0 0.0
  %2564 = vmatmul.mubr.f32.gmra.mxu0 %v2404
  %v2565 = vpop.f32.mrf.mxu0
  %v2566 = vadd.f32 0.0, %v2565
  %v2567 = vpop.f32.mrf.mxu0
  %2568 = vmatprep.mubr.f32.mxu0 0.0
  %2569 = vmatmul.mubr.f32.gmra.mxu0 %v2407
  %v2570 = vpop.f32.mrf.mxu0
  %v2571 = vadd.f32 0.0, %v2570
  %v2572 = vpop.f32.mrf.mxu0
  %2573 = vmatprep.mubr.f32.mxu0 0.0
  %2574 = vmatmul.mubr.f32.gmra.mxu0 %v2410
  %v2575 = vpop.f32.mrf.mxu0
  %v2576 = vadd.f32 0.0, %v2575
  %v2577 = vpop.f32.mrf.mxu0
  %2578 = vmatprep.mubr.f32.mxu0 0.0
  %2579 = vmatmul.mubr.f32.gmra.mxu0 %v2413
  %v2580 = vpop.f32.mrf.mxu0
  %v2581 = vadd.f32 0.0, %v2580
  %v2582 = vpop.f32.mrf.mxu0
  %2583 = vmatprep.mubr.f32.mxu0 0.0
  %2584 = vmatmul.mubr.f32.gmra.mxu0 %v2416
  %v2585 = vpop.f32.mrf.mxu0
  %v2586 = vadd.f32 0.0, %v2585
  %v2587 = vpop.f32.mrf.mxu0
  %2588 = vmatprep.mubr.f32.mxu0 0.0
  %2589 = vmatmul.mubr.f32.gmra.mxu0 %v2419
  %v2590 = vpop.f32.mrf.mxu0
  %v2591 = vadd.f32 0.0, %v2590
  %v2592 = vpop.f32.mrf.mxu0
  %2593 = vmatprep.mubr.f32.mxu0 0.0
  %2594 = vmatmul.mubr.f32.gmra.mxu0 %v2422
  %v2595 = vpop.f32.mrf.mxu0
  %v2596 = vadd.f32 0.0, %v2595
  %v2597 = vpop.f32.mrf.mxu0
  %2598 = vmatprep.mubr.f32.mxu0 0.0
  %2599 = vmatmul.mubr.f32.gmra.mxu0 %v2425
  %v2600 = vpop.f32.mrf.mxu0
  %v2601 = vadd.f32 0.0, %v2600
  %v2602 = vpop.f32.mrf.mxu0
  %2603 = vmatprep.mubr.f32.mxu0 0.0
  %2604 = vmatmul.mubr.f32.gmra.mxu0 %v2428
  %v2605 = vpop.f32.mrf.mxu0
  %v2606 = vadd.f32 0.0, %v2605
  %v2607 = vpop.f32.mrf.mxu0
  %2608 = vmatprep.mubr.f32.mxu0 0.0
  %2609 = vmatmul.mubr.f32.gmra.mxu0 %v2431
  %v2610 = vpop.f32.mrf.mxu0
  %v2611 = vadd.f32 0.0, %v2610
  %v2612 = vpop.f32.mrf.mxu0
  %2613 = vmatprep.mubr.f32.mxu0 0.0
  %2614 = vmatmul.mubr.f32.gmra.mxu0 %v2434
  %v2615 = vpop.f32.mrf.mxu0
  %v2616 = vadd.f32 0.0, %v2615
  %v2617 = vpop.f32.mrf.mxu0
  %2618 = vmatprep.mubr.f32.mxu0 0.0
  %2619 = vmatmul.mubr.f32.gmra.mxu0 %v2437
  %v2620 = vpop.f32.mrf.mxu0
  %v2621 = vadd.f32 0.0, %v2620
  %v2622 = vpop.f32.mrf.mxu0
  %2623 = vmatprep.mubr.f32.mxu0 0.0
  %2624 = vmatmul.mubr.f32.gmra.mxu0 %v2440
  %v2625 = vpop.f32.mrf.mxu0
  %v2626 = vadd.f32 0.0, %v2625
  %v2627 = vpop.f32.mrf.mxu0
  %2628 = vmatprep.mubr.f32.mxu0 0.0
  %2629 = vmatmul.mubr.f32.gmra.mxu0 %v2443
  %v2630 = vpop.f32.mrf.mxu0
  %v2631 = vadd.f32 0.0, %v2630
  %v2632 = vpop.f32.mrf.mxu0
  %2633 = vmatprep.mubr.f32.mxu0 0.0
  %2634 = vmatmul.mubr.f32.gmra.mxu0 %v2446
  %v2635 = vpop.f32.mrf.mxu0
  %v2636 = vadd.f32 0.0, %v2635
  %v2637 = vpop.f32.mrf.mxu0
  %2638 = vmatprep.mubr.f32.mxu0 0.0
  %2639 = vmatmul.mubr.f32.gmra.mxu0 %v2449
  %v2640 = vpop.f32.mrf.mxu0
  %v2641 = vadd.f32 0.0, %v2640
  %v2642 = vpop.f32.mrf.mxu0
  %2643 = vmatprep.mubr.f32.mxu0 0.0
  %2644 = vmatmul.mubr.f32.gmra.mxu0 %v2452
  %v2645 = vpop.f32.mrf.mxu0
  %v2646 = vadd.f32 0.0, %v2645
  %v2647 = vpop.f32.mrf.mxu0
  %2648 = vmatprep.mubr.f32.mxu0 0.0
  %2649 = vmatmul.mubr.f32.gmra.mxu0 %v2455
  %v2650 = vpop.f32.mrf.mxu0
  %v2651 = vadd.f32 0.0, %v2650
  %v2652 = vpop.f32.mrf.mxu0
  %2653 = vmatprep.mubr.f32.mxu0 0.0
  %2654 = vmatmul.mubr.f32.gmra.mxu0 %v2458
  %v2655 = vpop.f32.mrf.mxu0
  %v2656 = vadd.f32 0.0, %v2655
  %v2657 = vpop.f32.mrf.mxu0
  %2658 = vmatprep.mubr.f32.mxu0 0.0
  %2659 = vmatmul.mubr.f32.gmra.mxu0 %v2461
  %v2660 = vpop.f32.mrf.mxu0
  %v2661 = vadd.f32 0.0, %v2660
  %v2662 = vpop.f32.mrf.mxu0
  %2663 = vmatprep.mubr.f32.mxu0 0.0
  %2664 = vmatmul.mubr.f32.gmra.mxu0 %v2464
  %v2665 = vpop.f32.mrf.mxu0
  %v2666 = vadd.f32 0.0, %v2665
  %v2667 = vpop.f32.mrf.mxu0
  %2668 = vmatprep.mubr.f32.mxu0 0.0
  %2669 = vmatmul.mubr.f32.gmra.mxu0 %v2467
  %v2670 = vpop.f32.mrf.mxu0
  %v2671 = vadd.f32 0.0, %v2670
  %v2672 = vpop.f32.mrf.mxu0
  %2673 = vmatprep.mubr.f32.mxu0 0.0
  %2674 = vmatmul.mubr.f32.gmra.mxu0 %v2470
  %v2675 = vpop.f32.mrf.mxu0
  %v2676 = vadd.f32 0.0, %v2675
  %v2677 = vpop.f32.mrf.mxu0
  %2678 = vmatprep.mubr.f32.mxu0 0.0
  %2679 = vmatmul.mubr.f32.gmra.mxu0 %v2473
  %v2680 = vpop.f32.mrf.mxu0
  %v2681 = vadd.f32 0.0, %v2680
  %v2682 = vpop.f32.mrf.mxu0
  %2683 = vmatprep.mubr.f32.mxu0 0.0
  %2684 = vmatmul.mubr.f32.gmra.mxu0 %v2476
  %v2685 = vpop.f32.mrf.mxu0
  %v2686 = vadd.f32 0.0, %v2685
  %v2687 = vpop.f32.mrf.mxu0
  %2688 = vmatprep.mubr.f32.mxu0 0.0
  %2689 = vmatmul.mubr.f32.gmra.mxu0 %v2479
  %v2690 = vpop.f32.mrf.mxu0
  %v2691 = vadd.f32 0.0, %v2690
  %v2692 = vpop.f32.mrf.mxu0
  %2693 = vmatprep.mubr.f32.mxu0 0.0
  %2694 = vmatmul.mubr.f32.gmra.mxu0 %v2482
  %v2695 = vpop.f32.mrf.mxu0
  %v2696 = vadd.f32 0.0, %v2695
  %v2697 = vpop.f32.mrf.mxu0
  %2698 = vdwg.mxu0
  %v2699 = vadd.f32 %v2183, %v2551
  %v2700 = vadd.f32 %v2188, %v2556
  %v2701 = vadd.f32 %v2193, %v2561
  %v2702 = vadd.f32 %v2198, %v2566
  %v2703 = vadd.f32 %v2203, %v2571
  %v2704 = vadd.f32 %v2208, %v2576
  %v2705 = vadd.f32 %v2213, %v2581
  %v2706 = vadd.f32 %v2218, %v2586
  %v2707 = vadd.f32 %v2223, %v2591
  %v2708 = vadd.f32 %v2228, %v2596
  %v2709 = vadd.f32 %v2233, %v2601
  %v2710 = vadd.f32 %v2238, %v2606
  %v2711 = vadd.f32 %v2243, %v2611
  %v2712 = vadd.f32 %v2248, %v2616
  %v2713 = vadd.f32 %v2253, %v2621
  %v2714 = vadd.f32 %v2258, %v2626
  %v2715 = vadd.f32 %v2263, %v2631
  %v2716 = vadd.f32 %v2268, %v2636
  %v2717 = vadd.f32 %v2273, %v2641
  %v2718 = vadd.f32 %v2278, %v2646
  %v2719 = vadd.f32 %v2283, %v2651
  %v2720 = vadd.f32 %v2288, %v2656
  %v2721 = vadd.f32 %v2293, %v2661
  %v2722 = vadd.f32 %v2298, %v2666
  %v2723 = vadd.f32 %v2303, %v2671
  %v2724 = vadd.f32 %v2308, %v2676
  %v2725 = vadd.f32 %v2313, %v2681
  %v2726 = vadd.f32 %v2318, %v2686
  %v2727 = vadd.f32 %v2323, %v2691
  %v2728 = vadd.f32 %v2328, %v2696
  %s2729 = scalar_lea.vmem [#allocation2], 3
  %v2730 = vld [vmem:[%s2729] ss:$2 sm:$0xff]
  %s2731 = scalar_lea.vmem [#allocation2], 19
  %v2732 = vld [vmem:[%s2731] ss:$2 sm:$0xff]
  %s2733 = scalar_lea.vmem [#allocation2], 35
  %v2734 = vld [vmem:[%s2733] ss:$2 sm:$0xff]
  %s2735 = scalar_lea.vmem [#allocation2], 51
  %v2736 = vld [vmem:[%s2735] ss:$2 sm:$0xff]
  %s2737 = scalar_lea.vmem [#allocation2], 67
  %v2738 = vld [vmem:[%s2737] ss:$2 sm:$0xff]
  %s2739 = scalar_lea.vmem [#allocation2], 83
  %v2740 = vld [vmem:[%s2739] ss:$2 sm:$0xff]
  %s2741 = scalar_lea.vmem [#allocation2], 99
  %v2742 = vld [vmem:[%s2741] ss:$2 sm:$0xff]
  %s2743 = scalar_lea.vmem [#allocation2], 115
  %v2744 = vld [vmem:[%s2743] ss:$2 sm:$0xff]
  %s2745 = scalar_lea.vmem [#allocation2], 131
  %v2746 = vld [vmem:[%s2745] ss:$2 sm:$0xff]
  %s2747 = scalar_lea.vmem [#allocation2], 147
  %v2748 = vld [vmem:[%s2747] ss:$2 sm:$0xff]
  %s2749 = scalar_lea.vmem [#allocation2], 163
  %v2750 = vld [vmem:[%s2749] ss:$2 sm:$0xff]
  %s2751 = scalar_lea.vmem [#allocation2], 179
  %v2752 = vld [vmem:[%s2751] ss:$2 sm:$0xff]
  %s2753 = scalar_lea.vmem [#allocation2], 195
  %v2754 = vld [vmem:[%s2753] ss:$2 sm:$0xff]
  %s2755 = scalar_lea.vmem [#allocation2], 211
  %v2756 = vld [vmem:[%s2755] ss:$2 sm:$0xff]
  %s2757 = scalar_lea.vmem [#allocation2], 227
  %v2758 = vld [vmem:[%s2757] ss:$2 sm:$0xff]
  %s2759 = scalar_lea.vmem [#allocation2], 243
  %v2760 = vld [vmem:[%s2759] ss:$2 sm:$0xff]
  %s2761 = scalar_lea.vmem [#allocation2], 259
  %v2762 = vld [vmem:[%s2761] ss:$2 sm:$0xff]
  %s2763 = scalar_lea.vmem [#allocation2], 275
  %v2764 = vld [vmem:[%s2763] ss:$2 sm:$0xff]
  %s2765 = scalar_lea.vmem [#allocation2], 291
  %v2766 = vld [vmem:[%s2765] ss:$2 sm:$0xff]
  %s2767 = scalar_lea.vmem [#allocation2], 307
  %v2768 = vld [vmem:[%s2767] ss:$2 sm:$0xff]
  %s2769 = scalar_lea.vmem [#allocation2], 323
  %v2770 = vld [vmem:[%s2769] ss:$2 sm:$0xff]
  %s2771 = scalar_lea.vmem [#allocation2], 339
  %v2772 = vld [vmem:[%s2771] ss:$2 sm:$0xff]
  %s2773 = scalar_lea.vmem [#allocation2], 355
  %v2774 = vld [vmem:[%s2773] ss:$2 sm:$0xff]
  %s2775 = scalar_lea.vmem [#allocation2], 371
  %v2776 = vld [vmem:[%s2775] ss:$2 sm:$0xff]
  %s2777 = scalar_lea.vmem [#allocation2], 387
  %v2778 = vld [vmem:[%s2777] ss:$2 sm:$0xff]
  %s2779 = scalar_lea.vmem [#allocation2], 403
  %v2780 = vld [vmem:[%s2779] ss:$2 sm:$0xff]
  %s2781 = scalar_lea.vmem [#allocation2], 419
  %v2782 = vld [vmem:[%s2781] ss:$2 sm:$0xff]
  %s2783 = scalar_lea.vmem [#allocation2], 435
  %v2784 = vld [vmem:[%s2783] ss:$2 sm:$0xff]
  %s2785 = scalar_lea.vmem [#allocation2], 451
  %v2786 = vld [vmem:[%s2785] ss:$2 sm:$0xff]
  %s2787 = scalar_lea.vmem [#allocation2], 467
  %v2788 = vld [vmem:[%s2787] ss:$2 sm:$0xff]
  %s2789 = scalar_lea.vmem %s3, 48
  %v2790 = vld [vmem:[%s2789] sm:$0xff]
  %v2791 = vld [vmem:[%s2789 + $0x8] sm:$0xff]
  %v2793 = vsel %vm1534, %v2730, 0
  %v2796 = vsel %vm1534, %v2732, 0
  %v2799 = vsel %vm1534, %v2734, 0
  %v2802 = vsel %vm1534, %v2736, 0
  %v2805 = vsel %vm1534, %v2738, 0
  %v2808 = vsel %vm1534, %v2740, 0
  %v2811 = vsel %vm1534, %v2742, 0
  %v2814 = vsel %vm1534, %v2744, 0
  %v2817 = vsel %vm1534, %v2746, 0
  %v2820 = vsel %vm1534, %v2748, 0
  %v2823 = vsel %vm1534, %v2750, 0
  %v2826 = vsel %vm1534, %v2752, 0
  %v2829 = vsel %vm1534, %v2754, 0
  %v2832 = vsel %vm1534, %v2756, 0
  %v2835 = vsel %vm1534, %v2758, 0
  %v2838 = vsel %vm1534, %v2760, 0
  %v2841 = vsel %vm1534, %v2762, 0
  %v2844 = vsel %vm1534, %v2764, 0
  %v2847 = vsel %vm1534, %v2766, 0
  %v2850 = vsel %vm1534, %v2768, 0
  %v2853 = vsel %vm1534, %v2770, 0
  %v2856 = vsel %vm1534, %v2772, 0
  %v2859 = vsel %vm1534, %v2774, 0
  %v2862 = vsel %vm1534, %v2776, 0
  %v2865 = vsel %vm1534, %v2778, 0
  %v2868 = vsel %vm1534, %v2780, 0
  %v2871 = vsel %vm1534, %v2782, 0
  %v2874 = vsel %vm1534, %v2784, 0
  %v2877 = vsel %vm1534, %v2786, 0
  %v2880 = vsel %vm1534, %v2788, 0
  %2882 = vmatprep.subr.mxu0 0.0
  %2883 = vmatpush1.msra.mxu0 0.0
  %2884 = vmatprep.subr.mxu0 0.0
  %2885 = vmatpush1.msra.mxu0 0.0
  %2886 = vmatprep.subr.mxu0 0.0
  %2887 = vmatpush1.msra.mxu0 0.0
  %2888 = vmatprep.subr.mxu0 0.0
  %2889 = vmatpush1.msra.mxu0 0.0
  %2890 = vmatprep.subr.mxu0 0.0
  %2891 = vmatpush1.msra.mxu0 0.0
  %2892 = vmatprep.subr.mxu0 0.0
  %2893 = vmatpush1.msra.mxu0 0.0
  %2894 = vmatprep.subr.mxu0 0.0
  %2895 = vmatpush1.msra.mxu0 0.0
  %2896 = vmatprep.subr.mxu0 0.0
  %2897 = vmatpush1.msra.mxu0 0.0
  %2898 = vmatprep.subr.mxu0 0.0
  %2899 = vmatpush1.msra.mxu0 0.0
  %2900 = vmatprep.subr.mxu0 0.0
  %2901 = vmatpush1.msra.mxu0 0.0
  %2902 = vmatprep.subr.mxu0 0.0
  %2903 = vmatpush1.msra.mxu0 0.0
  %2904 = vmatprep.subr.mxu0 0.0
  %2905 = vmatpush1.msra.mxu0 0.0
  %2906 = vmatprep.subr.mxu0 0.0
  %2907 = vmatpush1.msra.mxu0 0.0
  %2908 = vmatprep.subr.mxu0 0.0
  %2909 = vmatpush1.msra.mxu0 0.0
  %2910 = vmatprep.subr.mxu0 0.0
  %2911 = vmatpush1.msra.mxu0 %v2791
  %2912 = vmatprep.subr.mxu0 0.0
  %2913 = vmatpush1.msra.mxu0 %v2790
  %2914 = vmatprep.subr.mxu0 0.0
  %2915 = vmatpush2.msra.mxu0 0.0
  %2916 = vmatprep.subr.mxu0 0.0
  %2917 = vmatpush2.msra.mxu0 0.0
  %2918 = vmatprep.subr.mxu0 0.0
  %2919 = vmatpush2.msra.mxu0 0.0
  %2920 = vmatprep.subr.mxu0 0.0
  %2921 = vmatpush2.msra.mxu0 0.0
  %2922 = vmatprep.subr.mxu0 0.0
  %2923 = vmatpush2.msra.mxu0 0.0
  %2924 = vmatprep.subr.mxu0 0.0
  %2925 = vmatpush2.msra.mxu0 0.0
  %2926 = vmatprep.subr.mxu0 0.0
  %2927 = vmatpush2.msra.mxu0 0.0
  %2928 = vmatprep.subr.mxu0 0.0
  %2929 = vmatpush2.msra.mxu0 0.0
  %2930 = vmatprep.subr.mxu0 0.0
  %2931 = vmatpush2.msra.mxu0 0.0
  %2932 = vmatprep.subr.mxu0 0.0
  %2933 = vmatpush2.msra.mxu0 0.0
  %2934 = vmatprep.subr.mxu0 0.0
  %2935 = vmatpush2.msra.mxu0 0.0
  %2936 = vmatprep.subr.mxu0 0.0
  %2937 = vmatpush2.msra.mxu0 0.0
  %2938 = vmatprep.subr.mxu0 0.0
  %2939 = vmatpush2.msra.mxu0 0.0
  %2940 = vmatprep.subr.mxu0 0.0
  %2941 = vmatpush2.msra.mxu0 0.0
  %2942 = vmatprep.subr.mxu0 0.0
  %2943 = vmatpush2.msra.mxu0 0.0
  %2944 = vmatprep.subr.mxu0 0.0
  %2945 = vmatpush2.msra.mxu0 0.0
  %2946 = vmatprep.mubr.f32.mxu0 0.0
  %2947 = vmatmul.mubr.f32.gmra.mxu0 %v2793
  %v2948 = vpop.f32.mrf.mxu0
  %v2949 = vadd.f32 0.0, %v2948
  %v2950 = vpop.f32.mrf.mxu0
  %2951 = vmatprep.mubr.f32.mxu0 0.0
  %2952 = vmatmul.mubr.f32.gmra.mxu0 %v2796
  %v2953 = vpop.f32.mrf.mxu0
  %v2954 = vadd.f32 0.0, %v2953
  %v2955 = vpop.f32.mrf.mxu0
  %2956 = vmatprep.mubr.f32.mxu0 0.0
  %2957 = vmatmul.mubr.f32.gmra.mxu0 %v2799
  %v2958 = vpop.f32.mrf.mxu0
  %v2959 = vadd.f32 0.0, %v2958
  %v2960 = vpop.f32.mrf.mxu0
  %2961 = vmatprep.mubr.f32.mxu0 0.0
  %2962 = vmatmul.mubr.f32.gmra.mxu0 %v2802
  %v2963 = vpop.f32.mrf.mxu0
  %v2964 = vadd.f32 0.0, %v2963
  %v2965 = vpop.f32.mrf.mxu0
  %2966 = vmatprep.mubr.f32.mxu0 0.0
  %2967 = vmatmul.mubr.f32.gmra.mxu0 %v2805
  %v2968 = vpop.f32.mrf.mxu0
  %v2969 = vadd.f32 0.0, %v2968
  %v2970 = vpop.f32.mrf.mxu0
  %2971 = vmatprep.mubr.f32.mxu0 0.0
  %2972 = vmatmul.mubr.f32.gmra.mxu0 %v2808
  %v2973 = vpop.f32.mrf.mxu0
  %v2974 = vadd.f32 0.0, %v2973
  %v2975 = vpop.f32.mrf.mxu0
  %2976 = vmatprep.mubr.f32.mxu0 0.0
  %2977 = vmatmul.mubr.f32.gmra.mxu0 %v2811
  %v2978 = vpop.f32.mrf.mxu0
  %v2979 = vadd.f32 0.0, %v2978
  %v2980 = vpop.f32.mrf.mxu0
  %2981 = vmatprep.mubr.f32.mxu0 0.0
  %2982 = vmatmul.mubr.f32.gmra.mxu0 %v2814
  %v2983 = vpop.f32.mrf.mxu0
  %v2984 = vadd.f32 0.0, %v2983
  %v2985 = vpop.f32.mrf.mxu0
  %2986 = vmatprep.mubr.f32.mxu0 0.0
  %2987 = vmatmul.mubr.f32.gmra.mxu0 %v2817
  %v2988 = vpop.f32.mrf.mxu0
  %v2989 = vadd.f32 0.0, %v2988
  %v2990 = vpop.f32.mrf.mxu0
  %2991 = vmatprep.mubr.f32.mxu0 0.0
  %2992 = vmatmul.mubr.f32.gmra.mxu0 %v2820
  %v2993 = vpop.f32.mrf.mxu0
  %v2994 = vadd.f32 0.0, %v2993
  %v2995 = vpop.f32.mrf.mxu0
  %2996 = vmatprep.mubr.f32.mxu0 0.0
  %2997 = vmatmul.mubr.f32.gmra.mxu0 %v2823
  %v2998 = vpop.f32.mrf.mxu0
  %v2999 = vadd.f32 0.0, %v2998
  %v3000 = vpop.f32.mrf.mxu0
  %3001 = vmatprep.mubr.f32.mxu0 0.0
  %3002 = vmatmul.mubr.f32.gmra.mxu0 %v2826
  %v3003 = vpop.f32.mrf.mxu0
  %v3004 = vadd.f32 0.0, %v3003
  %v3005 = vpop.f32.mrf.mxu0
  %3006 = vmatprep.mubr.f32.mxu0 0.0
  %3007 = vmatmul.mubr.f32.gmra.mxu0 %v2829
  %v3008 = vpop.f32.mrf.mxu0
  %v3009 = vadd.f32 0.0, %v3008
  %v3010 = vpop.f32.mrf.mxu0
  %3011 = vmatprep.mubr.f32.mxu0 0.0
  %3012 = vmatmul.mubr.f32.gmra.mxu0 %v2832
  %v3013 = vpop.f32.mrf.mxu0
  %v3014 = vadd.f32 0.0, %v3013
  %v3015 = vpop.f32.mrf.mxu0
  %3016 = vmatprep.mubr.f32.mxu0 0.0
  %3017 = vmatmul.mubr.f32.gmra.mxu0 %v2835
  %v3018 = vpop.f32.mrf.mxu0
  %v3019 = vadd.f32 0.0, %v3018
  %v3020 = vpop.f32.mrf.mxu0
  %3021 = vmatprep.mubr.f32.mxu0 0.0
  %3022 = vmatmul.mubr.f32.gmra.mxu0 %v2838
  %v3023 = vpop.f32.mrf.mxu0
  %v3024 = vadd.f32 0.0, %v3023
  %v3025 = vpop.f32.mrf.mxu0
  %3026 = vmatprep.mubr.f32.mxu0 0.0
  %3027 = vmatmul.mubr.f32.gmra.mxu0 %v2841
  %v3028 = vpop.f32.mrf.mxu0
  %v3029 = vadd.f32 0.0, %v3028
  %v3030 = vpop.f32.mrf.mxu0
  %3031 = vmatprep.mubr.f32.mxu0 0.0
  %3032 = vmatmul.mubr.f32.gmra.mxu0 %v2844
  %v3033 = vpop.f32.mrf.mxu0
  %v3034 = vadd.f32 0.0, %v3033
  %v3035 = vpop.f32.mrf.mxu0
  %3036 = vmatprep.mubr.f32.mxu0 0.0
  %3037 = vmatmul.mubr.f32.gmra.mxu0 %v2847
  %v3038 = vpop.f32.mrf.mxu0
  %v3039 = vadd.f32 0.0, %v3038
  %v3040 = vpop.f32.mrf.mxu0
  %3041 = vmatprep.mubr.f32.mxu0 0.0
  %3042 = vmatmul.mubr.f32.gmra.mxu0 %v2850
  %v3043 = vpop.f32.mrf.mxu0
  %v3044 = vadd.f32 0.0, %v3043
  %v3045 = vpop.f32.mrf.mxu0
  %3046 = vmatprep.mubr.f32.mxu0 0.0
  %3047 = vmatmul.mubr.f32.gmra.mxu0 %v2853
  %v3048 = vpop.f32.mrf.mxu0
  %v3049 = vadd.f32 0.0, %v3048
  %v3050 = vpop.f32.mrf.mxu0
  %3051 = vmatprep.mubr.f32.mxu0 0.0
  %3052 = vmatmul.mubr.f32.gmra.mxu0 %v2856
  %v3053 = vpop.f32.mrf.mxu0
  %v3054 = vadd.f32 0.0, %v3053
  %v3055 = vpop.f32.mrf.mxu0
  %3056 = vmatprep.mubr.f32.mxu0 0.0
  %3057 = vmatmul.mubr.f32.gmra.mxu0 %v2859
  %v3058 = vpop.f32.mrf.mxu0
  %v3059 = vadd.f32 0.0, %v3058
  %v3060 = vpop.f32.mrf.mxu0
  %3061 = vmatprep.mubr.f32.mxu0 0.0
  %3062 = vmatmul.mubr.f32.gmra.mxu0 %v2862
  %v3063 = vpop.f32.mrf.mxu0
  %v3064 = vadd.f32 0.0, %v3063
  %v3065 = vpop.f32.mrf.mxu0
  %3066 = vmatprep.mubr.f32.mxu0 0.0
  %3067 = vmatmul.mubr.f32.gmra.mxu0 %v2865
  %v3068 = vpop.f32.mrf.mxu0
  %v3069 = vadd.f32 0.0, %v3068
  %v3070 = vpop.f32.mrf.mxu0
  %3071 = vmatprep.mubr.f32.mxu0 0.0
  %3072 = vmatmul.mubr.f32.gmra.mxu0 %v2868
  %v3073 = vpop.f32.mrf.mxu0
  %v3074 = vadd.f32 0.0, %v3073
  %v3075 = vpop.f32.mrf.mxu0
  %3076 = vmatprep.mubr.f32.mxu0 0.0
  %3077 = vmatmul.mubr.f32.gmra.mxu0 %v2871
  %v3078 = vpop.f32.mrf.mxu0
  %v3079 = vadd.f32 0.0, %v3078
  %v3080 = vpop.f32.mrf.mxu0
  %3081 = vmatprep.mubr.f32.mxu0 0.0
  %3082 = vmatmul.mubr.f32.gmra.mxu0 %v2874
  %v3083 = vpop.f32.mrf.mxu0
  %v3084 = vadd.f32 0.0, %v3083
  %v3085 = vpop.f32.mrf.mxu0
  %3086 = vmatprep.mubr.f32.mxu0 0.0
  %3087 = vmatmul.mubr.f32.gmra.mxu0 %v2877
  %v3088 = vpop.f32.mrf.mxu0
  %v3089 = vadd.f32 0.0, %v3088
  %v3090 = vpop.f32.mrf.mxu0
  %3091 = vmatprep.mubr.f32.mxu0 0.0
  %3092 = vmatmul.mubr.f32.gmra.mxu0 %v2880
  %v3093 = vpop.f32.mrf.mxu0
  %v3094 = vadd.f32 0.0, %v3093
  %v3095 = vpop.f32.mrf.mxu0
  %3096 = vdwg.mxu0
  %v3097 = vadd.f32 %v2699, %v2949
  %v3098 = vadd.f32 %v2700, %v2954
  %v3099 = vadd.f32 %v2701, %v2959
  %v3100 = vadd.f32 %v2702, %v2964
  %v3101 = vadd.f32 %v2703, %v2969
  %v3102 = vadd.f32 %v2704, %v2974
  %v3103 = vadd.f32 %v2705, %v2979
  %v3104 = vadd.f32 %v2706, %v2984
  %v3105 = vadd.f32 %v2707, %v2989
  %v3106 = vadd.f32 %v2708, %v2994
  %v3107 = vadd.f32 %v2709, %v2999
  %v3108 = vadd.f32 %v2710, %v3004
  %v3109 = vadd.f32 %v2711, %v3009
  %v3110 = vadd.f32 %v2712, %v3014
  %v3111 = vadd.f32 %v2713, %v3019
  %v3112 = vadd.f32 %v2714, %v3024
  %v3113 = vadd.f32 %v2715, %v3029
  %v3114 = vadd.f32 %v2716, %v3034
  %v3115 = vadd.f32 %v2717, %v3039
  %v3116 = vadd.f32 %v2718, %v3044
  %v3117 = vadd.f32 %v2719, %v3049
  %v3118 = vadd.f32 %v2720, %v3054
  %v3119 = vadd.f32 %v2721, %v3059
  %v3120 = vadd.f32 %v2722, %v3064
  %v3121 = vadd.f32 %v2723, %v3069
  %v3122 = vadd.f32 %v2724, %v3074
  %v3123 = vadd.f32 %v2725, %v3079
  %v3124 = vadd.f32 %v2726, %v3084
  %v3125 = vadd.f32 %v2727, %v3089
  %v3126 = vadd.f32 %v2728, %v3094
  %s3127 = scalar_lea.vmem [#allocation2], 4
  %v3128 = vld [vmem:[%s3127] ss:$2 sm:$0xff]
  %s3129 = scalar_lea.vmem [#allocation2], 20
  %v3130 = vld [vmem:[%s3129] ss:$2 sm:$0xff]
  %s3131 = scalar_lea.vmem [#allocation2], 36
  %v3132 = vld [vmem:[%s3131] ss:$2 sm:$0xff]
  %s3133 = scalar_lea.vmem [#allocation2], 52
  %v3134 = vld [vmem:[%s3133] ss:$2 sm:$0xff]
  %s3135 = scalar_lea.vmem [#allocation2], 68
  %v3136 = vld [vmem:[%s3135] ss:$2 sm:$0xff]
  %s3137 = scalar_lea.vmem [#allocation2], 84
  %v3138 = vld [vmem:[%s3137] ss:$2 sm:$0xff]
  %s3139 = scalar_lea.vmem [#allocation2], 100
  %v3140 = vld [vmem:[%s3139] ss:$2 sm:$0xff]
  %s3141 = scalar_lea.vmem [#allocation2], 116
  %v3142 = vld [vmem:[%s3141] ss:$2 sm:$0xff]
  %s3143 = scalar_lea.vmem [#allocation2], 132
  %v3144 = vld [vmem:[%s3143] ss:$2 sm:$0xff]
  %s3145 = scalar_lea.vmem [#allocation2], 148
  %v3146 = vld [vmem:[%s3145] ss:$2 sm:$0xff]
  %s3147 = scalar_lea.vmem [#allocation2], 164
  %v3148 = vld [vmem:[%s3147] ss:$2 sm:$0xff]
  %s3149 = scalar_lea.vmem [#allocation2], 180
  %v3150 = vld [vmem:[%s3149] ss:$2 sm:$0xff]
  %s3151 = scalar_lea.vmem [#allocation2], 196
  %v3152 = vld [vmem:[%s3151] ss:$2 sm:$0xff]
  %s3153 = scalar_lea.vmem [#allocation2], 212
  %v3154 = vld [vmem:[%s3153] ss:$2 sm:$0xff]
  %s3155 = scalar_lea.vmem [#allocation2], 228
  %v3156 = vld [vmem:[%s3155] ss:$2 sm:$0xff]
  %s3157 = scalar_lea.vmem [#allocation2], 244
  %v3158 = vld [vmem:[%s3157] ss:$2 sm:$0xff]
  %s3159 = scalar_lea.vmem [#allocation2], 260
  %v3160 = vld [vmem:[%s3159] ss:$2 sm:$0xff]
  %s3161 = scalar_lea.vmem [#allocation2], 276
  %v3162 = vld [vmem:[%s3161] ss:$2 sm:$0xff]
  %s3163 = scalar_lea.vmem [#allocation2], 292
  %v3164 = vld [vmem:[%s3163] ss:$2 sm:$0xff]
  %s3165 = scalar_lea.vmem [#allocation2], 308
  %v3166 = vld [vmem:[%s3165] ss:$2 sm:$0xff]
  %s3167 = scalar_lea.vmem [#allocation2], 324
  %v3168 = vld [vmem:[%s3167] ss:$2 sm:$0xff]
  %s3169 = scalar_lea.vmem [#allocation2], 340
  %v3170 = vld [vmem:[%s3169] ss:$2 sm:$0xff]
  %s3171 = scalar_lea.vmem [#allocation2], 356
  %v3172 = vld [vmem:[%s3171] ss:$2 sm:$0xff]
  %s3173 = scalar_lea.vmem [#allocation2], 372
  %v3174 = vld [vmem:[%s3173] ss:$2 sm:$0xff]
  %s3175 = scalar_lea.vmem [#allocation2], 388
  %v3176 = vld [vmem:[%s3175] ss:$2 sm:$0xff]
  %s3177 = scalar_lea.vmem [#allocation2], 404
  %v3178 = vld [vmem:[%s3177] ss:$2 sm:$0xff]
  %s3179 = scalar_lea.vmem [#allocation2], 420
  %v3180 = vld [vmem:[%s3179] ss:$2 sm:$0xff]
  %s3181 = scalar_lea.vmem [#allocation2], 436
  %v3182 = vld [vmem:[%s3181] ss:$2 sm:$0xff]
  %s3183 = scalar_lea.vmem [#allocation2], 452
  %v3184 = vld [vmem:[%s3183] ss:$2 sm:$0xff]
  %s3185 = scalar_lea.vmem [#allocation2], 468
  %v3186 = vld [vmem:[%s3185] ss:$2 sm:$0xff]
  %s3187 = scalar_lea.vmem %s3, 64
  %v3188 = vld [vmem:[%s3187] sm:$0xff]
  %v3189 = vld [vmem:[%s3187 + $0x8] sm:$0xff]
  %v3191 = vsel %vm1534, %v3128, 0
  %v3194 = vsel %vm1534, %v3130, 0
  %v3197 = vsel %vm1534, %v3132, 0
  %v3200 = vsel %vm1534, %v3134, 0
  %v3203 = vsel %vm1534, %v3136, 0
  %v3206 = vsel %vm1534, %v3138, 0
  %v3209 = vsel %vm1534, %v3140, 0
  %v3212 = vsel %vm1534, %v3142, 0
  %v3215 = vsel %vm1534, %v3144, 0
  %v3218 = vsel %vm1534, %v3146, 0
  %v3221 = vsel %vm1534, %v3148, 0
  %v3224 = vsel %vm1534, %v3150, 0
  %v3227 = vsel %vm1534, %v3152, 0
  %v3230 = vsel %vm1534, %v3154, 0
  %v3233 = vsel %vm1534, %v3156, 0
  %v3236 = vsel %vm1534, %v3158, 0
  %v3239 = vsel %vm1534, %v3160, 0
  %v3242 = vsel %vm1534, %v3162, 0
  %v3245 = vsel %vm1534, %v3164, 0
  %v3248 = vsel %vm1534, %v3166, 0
  %v3251 = vsel %vm1534, %v3168, 0
  %v3254 = vsel %vm1534, %v3170, 0
  %v3257 = vsel %vm1534, %v3172, 0
  %v3260 = vsel %vm1534, %v3174, 0
  %v3263 = vsel %vm1534, %v3176, 0
  %v3266 = vsel %vm1534, %v3178, 0
  %v3269 = vsel %vm1534, %v3180, 0
  %v3272 = vsel %vm1534, %v3182, 0
  %v3275 = vsel %vm1534, %v3184, 0
  %v3278 = vsel %vm1534, %v3186, 0
  %3280 = vmatprep.subr.mxu0 0.0
  %3281 = vmatpush1.msra.mxu0 0.0
  %3282 = vmatprep.subr.mxu0 0.0
  %3283 = vmatpush1.msra.mxu0 0.0
  %3284 = vmatprep.subr.mxu0 0.0
  %3285 = vmatpush1.msra.mxu0 0.0
  %3286 = vmatprep.subr.mxu0 0.0
  %3287 = vmatpush1.msra.mxu0 0.0
  %3288 = vmatprep.subr.mxu0 0.0
  %3289 = vmatpush1.msra.mxu0 0.0
  %3290 = vmatprep.subr.mxu0 0.0
  %3291 = vmatpush1.msra.mxu0 0.0
  %3292 = vmatprep.subr.mxu0 0.0
  %3293 = vmatpush1.msra.mxu0 0.0
  %3294 = vmatprep.subr.mxu0 0.0
  %3295 = vmatpush1.msra.mxu0 0.0
  %3296 = vmatprep.subr.mxu0 0.0
  %3297 = vmatpush1.msra.mxu0 0.0
  %3298 = vmatprep.subr.mxu0 0.0
  %3299 = vmatpush1.msra.mxu0 0.0
  %3300 = vmatprep.subr.mxu0 0.0
  %3301 = vmatpush1.msra.mxu0 0.0
  %3302 = vmatprep.subr.mxu0 0.0
  %3303 = vmatpush1.msra.mxu0 0.0
  %3304 = vmatprep.subr.mxu0 0.0
  %3305 = vmatpush1.msra.mxu0 0.0
  %3306 = vmatprep.subr.mxu0 0.0
  %3307 = vmatpush1.msra.mxu0 0.0
  %3308 = vmatprep.subr.mxu0 0.0
  %3309 = vmatpush1.msra.mxu0 %v3189
  %3310 = vmatprep.subr.mxu0 0.0
  %3311 = vmatpush1.msra.mxu0 %v3188
  %3312 = vmatprep.subr.mxu0 0.0
  %3313 = vmatpush2.msra.mxu0 0.0
  %3314 = vmatprep.subr.mxu0 0.0
  %3315 = vmatpush2.msra.mxu0 0.0
  %3316 = vmatprep.subr.mxu0 0.0
  %3317 = vmatpush2.msra.mxu0 0.0
  %3318 = vmatprep.subr.mxu0 0.0
  %3319 = vmatpush2.msra.mxu0 0.0
  %3320 = vmatprep.subr.mxu0 0.0
  %3321 = vmatpush2.msra.mxu0 0.0
  %3322 = vmatprep.subr.mxu0 0.0
  %3323 = vmatpush2.msra.mxu0 0.0
  %3324 = vmatprep.subr.mxu0 0.0
  %3325 = vmatpush2.msra.mxu0 0.0
  %3326 = vmatprep.subr.mxu0 0.0
  %3327 = vmatpush2.msra.mxu0 0.0
  %3328 = vmatprep.subr.mxu0 0.0
  %3329 = vmatpush2.msra.mxu0 0.0
  %3330 = vmatprep.subr.mxu0 0.0
  %3331 = vmatpush2.msra.mxu0 0.0
  %3332 = vmatprep.subr.mxu0 0.0
  %3333 = vmatpush2.msra.mxu0 0.0
  %3334 = vmatprep.subr.mxu0 0.0
  %3335 = vmatpush2.msra.mxu0 0.0
  %3336 = vmatprep.subr.mxu0 0.0
  %3337 = vmatpush2.msra.mxu0 0.0
  %3338 = vmatprep.subr.mxu0 0.0
  %3339 = vmatpush2.msra.mxu0 0.0
  %3340 = vmatprep.subr.mxu0 0.0
  %3341 = vmatpush2.msra.mxu0 0.0
  %3342 = vmatprep.subr.mxu0 0.0
  %3343 = vmatpush2.msra.mxu0 0.0
  %3344 = vmatprep.mubr.f32.mxu0 0.0
  %3345 = vmatmul.mubr.f32.gmra.mxu0 %v3191
  %v3346 = vpop.f32.mrf.mxu0
  %v3347 = vadd.f32 0.0, %v3346
  %v3348 = vpop.f32.mrf.mxu0
  %3349 = vmatprep.mubr.f32.mxu0 0.0
  %3350 = vmatmul.mubr.f32.gmra.mxu0 %v3194
  %v3351 = vpop.f32.mrf.mxu0
  %v3352 = vadd.f32 0.0, %v3351
  %v3353 = vpop.f32.mrf.mxu0
  %3354 = vmatprep.mubr.f32.mxu0 0.0
  %3355 = vmatmul.mubr.f32.gmra.mxu0 %v3197
  %v3356 = vpop.f32.mrf.mxu0
  %v3357 = vadd.f32 0.0, %v3356
  %v3358 = vpop.f32.mrf.mxu0
  %3359 = vmatprep.mubr.f32.mxu0 0.0
  %3360 = vmatmul.mubr.f32.gmra.mxu0 %v3200
  %v3361 = vpop.f32.mrf.mxu0
  %v3362 = vadd.f32 0.0, %v3361
  %v3363 = vpop.f32.mrf.mxu0
  %3364 = vmatprep.mubr.f32.mxu0 0.0
  %3365 = vmatmul.mubr.f32.gmra.mxu0 %v3203
  %v3366 = vpop.f32.mrf.mxu0
  %v3367 = vadd.f32 0.0, %v3366
  %v3368 = vpop.f32.mrf.mxu0
  %3369 = vmatprep.mubr.f32.mxu0 0.0
  %3370 = vmatmul.mubr.f32.gmra.mxu0 %v3206
  %v3371 = vpop.f32.mrf.mxu0
  %v3372 = vadd.f32 0.0, %v3371
  %v3373 = vpop.f32.mrf.mxu0
  %3374 = vmatprep.mubr.f32.mxu0 0.0
  %3375 = vmatmul.mubr.f32.gmra.mxu0 %v3209
  %v3376 = vpop.f32.mrf.mxu0
  %v3377 = vadd.f32 0.0, %v3376
  %v3378 = vpop.f32.mrf.mxu0
  %3379 = vmatprep.mubr.f32.mxu0 0.0
  %3380 = vmatmul.mubr.f32.gmra.mxu0 %v3212
  %v3381 = vpop.f32.mrf.mxu0
  %v3382 = vadd.f32 0.0, %v3381
  %v3383 = vpop.f32.mrf.mxu0
  %3384 = vmatprep.mubr.f32.mxu0 0.0
  %3385 = vmatmul.mubr.f32.gmra.mxu0 %v3215
  %v3386 = vpop.f32.mrf.mxu0
  %v3387 = vadd.f32 0.0, %v3386
  %v3388 = vpop.f32.mrf.mxu0
  %3389 = vmatprep.mubr.f32.mxu0 0.0
  %3390 = vmatmul.mubr.f32.gmra.mxu0 %v3218
  %v3391 = vpop.f32.mrf.mxu0
  %v3392 = vadd.f32 0.0, %v3391
  %v3393 = vpop.f32.mrf.mxu0
  %3394 = vmatprep.mubr.f32.mxu0 0.0
  %3395 = vmatmul.mubr.f32.gmra.mxu0 %v3221
  %v3396 = vpop.f32.mrf.mxu0
  %v3397 = vadd.f32 0.0, %v3396
  %v3398 = vpop.f32.mrf.mxu0
  %3399 = vmatprep.mubr.f32.mxu0 0.0
  %3400 = vmatmul.mubr.f32.gmra.mxu0 %v3224
  %v3401 = vpop.f32.mrf.mxu0
  %v3402 = vadd.f32 0.0, %v3401
  %v3403 = vpop.f32.mrf.mxu0
  %3404 = vmatprep.mubr.f32.mxu0 0.0
  %3405 = vmatmul.mubr.f32.gmra.mxu0 %v3227
  %v3406 = vpop.f32.mrf.mxu0
  %v3407 = vadd.f32 0.0, %v3406
  %v3408 = vpop.f32.mrf.mxu0
  %3409 = vmatprep.mubr.f32.mxu0 0.0
  %3410 = vmatmul.mubr.f32.gmra.mxu0 %v3230
  %v3411 = vpop.f32.mrf.mxu0
  %v3412 = vadd.f32 0.0, %v3411
  %v3413 = vpop.f32.mrf.mxu0
  %3414 = vmatprep.mubr.f32.mxu0 0.0
  %3415 = vmatmul.mubr.f32.gmra.mxu0 %v3233
  %v3416 = vpop.f32.mrf.mxu0
  %v3417 = vadd.f32 0.0, %v3416
  %v3418 = vpop.f32.mrf.mxu0
  %3419 = vmatprep.mubr.f32.mxu0 0.0
  %3420 = vmatmul.mubr.f32.gmra.mxu0 %v3236
  %v3421 = vpop.f32.mrf.mxu0
  %v3422 = vadd.f32 0.0, %v3421
  %v3423 = vpop.f32.mrf.mxu0
  %3424 = vmatprep.mubr.f32.mxu0 0.0
  %3425 = vmatmul.mubr.f32.gmra.mxu0 %v3239
  %v3426 = vpop.f32.mrf.mxu0
  %v3427 = vadd.f32 0.0, %v3426
  %v3428 = vpop.f32.mrf.mxu0
  %3429 = vmatprep.mubr.f32.mxu0 0.0
  %3430 = vmatmul.mubr.f32.gmra.mxu0 %v3242
  %v3431 = vpop.f32.mrf.mxu0
  %v3432 = vadd.f32 0.0, %v3431
  %v3433 = vpop.f32.mrf.mxu0
  %3434 = vmatprep.mubr.f32.mxu0 0.0
  %3435 = vmatmul.mubr.f32.gmra.mxu0 %v3245
  %v3436 = vpop.f32.mrf.mxu0
  %v3437 = vadd.f32 0.0, %v3436
  %v3438 = vpop.f32.mrf.mxu0
  %3439 = vmatprep.mubr.f32.mxu0 0.0
  %3440 = vmatmul.mubr.f32.gmra.mxu0 %v3248
  %v3441 = vpop.f32.mrf.mxu0
  %v3442 = vadd.f32 0.0, %v3441
  %v3443 = vpop.f32.mrf.mxu0
  %3444 = vmatprep.mubr.f32.mxu0 0.0
  %3445 = vmatmul.mubr.f32.gmra.mxu0 %v3251
  %v3446 = vpop.f32.mrf.mxu0
  %v3447 = vadd.f32 0.0, %v3446
  %v3448 = vpop.f32.mrf.mxu0
  %3449 = vmatprep.mubr.f32.mxu0 0.0
  %3450 = vmatmul.mubr.f32.gmra.mxu0 %v3254
  %v3451 = vpop.f32.mrf.mxu0
  %v3452 = vadd.f32 0.0, %v3451
  %v3453 = vpop.f32.mrf.mxu0
  %3454 = vmatprep.mubr.f32.mxu0 0.0
  %3455 = vmatmul.mubr.f32.gmra.mxu0 %v3257
  %v3456 = vpop.f32.mrf.mxu0
  %v3457 = vadd.f32 0.0, %v3456
  %v3458 = vpop.f32.mrf.mxu0
  %3459 = vmatprep.mubr.f32.mxu0 0.0
  %3460 = vmatmul.mubr.f32.gmra.mxu0 %v3260
  %v3461 = vpop.f32.mrf.mxu0
  %v3462 = vadd.f32 0.0, %v3461
  %v3463 = vpop.f32.mrf.mxu0
  %3464 = vmatprep.mubr.f32.mxu0 0.0
  %3465 = vmatmul.mubr.f32.gmra.mxu0 %v3263
  %v3466 = vpop.f32.mrf.mxu0
  %v3467 = vadd.f32 0.0, %v3466
  %v3468 = vpop.f32.mrf.mxu0
  %3469 = vmatprep.mubr.f32.mxu0 0.0
  %3470 = vmatmul.mubr.f32.gmra.mxu0 %v3266
  %v3471 = vpop.f32.mrf.mxu0
  %v3472 = vadd.f32 0.0, %v3471
  %v3473 = vpop.f32.mrf.mxu0
  %3474 = vmatprep.mubr.f32.mxu0 0.0
  %3475 = vmatmul.mubr.f32.gmra.mxu0 %v3269
  %v3476 = vpop.f32.mrf.mxu0
  %v3477 = vadd.f32 0.0, %v3476
  %v3478 = vpop.f32.mrf.mxu0
  %3479 = vmatprep.mubr.f32.mxu0 0.0
  %3480 = vmatmul.mubr.f32.gmra.mxu0 %v3272
  %v3481 = vpop.f32.mrf.mxu0
  %v3482 = vadd.f32 0.0, %v3481
  %v3483 = vpop.f32.mrf.mxu0
  %3484 = vmatprep.mubr.f32.mxu0 0.0
  %3485 = vmatmul.mubr.f32.gmra.mxu0 %v3275
  %v3486 = vpop.f32.mrf.mxu0
  %v3487 = vadd.f32 0.0, %v3486
  %v3488 = vpop.f32.mrf.mxu0
  %3489 = vmatprep.mubr.f32.mxu0 0.0
  %3490 = vmatmul.mubr.f32.gmra.mxu0 %v3278
  %v3491 = vpop.f32.mrf.mxu0
  %v3492 = vadd.f32 0.0, %v3491
  %v3493 = vpop.f32.mrf.mxu0
  %3494 = vdwg.mxu0
  %v3495 = vadd.f32 %v3097, %v3347
  %v3496 = vadd.f32 %v3098, %v3352
  %v3497 = vadd.f32 %v3099, %v3357
  %v3498 = vadd.f32 %v3100, %v3362
  %v3499 = vadd.f32 %v3101, %v3367
  %v3500 = vadd.f32 %v3102, %v3372
  %v3501 = vadd.f32 %v3103, %v3377
  %v3502 = vadd.f32 %v3104, %v3382
  %v3503 = vadd.f32 %v3105, %v3387
  %v3504 = vadd.f32 %v3106, %v3392
  %v3505 = vadd.f32 %v3107, %v3397
  %v3506 = vadd.f32 %v3108, %v3402
  %v3507 = vadd.f32 %v3109, %v3407
  %v3508 = vadd.f32 %v3110, %v3412
  %v3509 = vadd.f32 %v3111, %v3417
  %v3510 = vadd.f32 %v3112, %v3422
  %v3511 = vadd.f32 %v3113, %v3427
  %v3512 = vadd.f32 %v3114, %v3432
  %v3513 = vadd.f32 %v3115, %v3437
  %v3514 = vadd.f32 %v3116, %v3442
  %v3515 = vadd.f32 %v3117, %v3447
  %v3516 = vadd.f32 %v3118, %v3452
  %v3517 = vadd.f32 %v3119, %v3457
  %v3518 = vadd.f32 %v3120, %v3462
  %v3519 = vadd.f32 %v3121, %v3467
  %v3520 = vadd.f32 %v3122, %v3472
  %v3521 = vadd.f32 %v3123, %v3477
  %v3522 = vadd.f32 %v3124, %v3482
  %v3523 = vadd.f32 %v3125, %v3487
  %v3524 = vadd.f32 %v3126, %v3492
  %s3525 = scalar_lea.vmem [#allocation2], 5
  %v3526 = vld [vmem:[%s3525] ss:$2 sm:$0xff]
  %s3527 = scalar_lea.vmem [#allocation2], 21
  %v3528 = vld [vmem:[%s3527] ss:$2 sm:$0xff]
  %s3529 = scalar_lea.vmem [#allocation2], 37
  %v3530 = vld [vmem:[%s3529] ss:$2 sm:$0xff]
  %s3531 = scalar_lea.vmem [#allocation2], 53
  %v3532 = vld [vmem:[%s3531] ss:$2 sm:$0xff]
  %s3533 = scalar_lea.vmem [#allocation2], 69
  %v3534 = vld [vmem:[%s3533] ss:$2 sm:$0xff]
  %s3535 = scalar_lea.vmem [#allocation2], 85
  %v3536 = vld [vmem:[%s3535] ss:$2 sm:$0xff]
  %s3537 = scalar_lea.vmem [#allocation2], 101
  %v3538 = vld [vmem:[%s3537] ss:$2 sm:$0xff]
  %s3539 = scalar_lea.vmem [#allocation2], 117
  %v3540 = vld [vmem:[%s3539] ss:$2 sm:$0xff]
  %s3541 = scalar_lea.vmem [#allocation2], 133
  %v3542 = vld [vmem:[%s3541] ss:$2 sm:$0xff]
  %s3543 = scalar_lea.vmem [#allocation2], 149
  %v3544 = vld [vmem:[%s3543] ss:$2 sm:$0xff]
  %s3545 = scalar_lea.vmem [#allocation2], 165
  %v3546 = vld [vmem:[%s3545] ss:$2 sm:$0xff]
  %s3547 = scalar_lea.vmem [#allocation2], 181
  %v3548 = vld [vmem:[%s3547] ss:$2 sm:$0xff]
  %s3549 = scalar_lea.vmem [#allocation2], 197
  %v3550 = vld [vmem:[%s3549] ss:$2 sm:$0xff]
  %s3551 = scalar_lea.vmem [#allocation2], 213
  %v3552 = vld [vmem:[%s3551] ss:$2 sm:$0xff]
  %s3553 = scalar_lea.vmem [#allocation2], 229
  %v3554 = vld [vmem:[%s3553] ss:$2 sm:$0xff]
  %s3555 = scalar_lea.vmem [#allocation2], 245
  %v3556 = vld [vmem:[%s3555] ss:$2 sm:$0xff]
  %s3557 = scalar_lea.vmem [#allocation2], 261
  %v3558 = vld [vmem:[%s3557] ss:$2 sm:$0xff]
  %s3559 = scalar_lea.vmem [#allocation2], 277
  %v3560 = vld [vmem:[%s3559] ss:$2 sm:$0xff]
  %s3561 = scalar_lea.vmem [#allocation2], 293
  %v3562 = vld [vmem:[%s3561] ss:$2 sm:$0xff]
  %s3563 = scalar_lea.vmem [#allocation2], 309
  %v3564 = vld [vmem:[%s3563] ss:$2 sm:$0xff]
  %s3565 = scalar_lea.vmem [#allocation2], 325
  %v3566 = vld [vmem:[%s3565] ss:$2 sm:$0xff]
  %s3567 = scalar_lea.vmem [#allocation2], 341
  %v3568 = vld [vmem:[%s3567] ss:$2 sm:$0xff]
  %s3569 = scalar_lea.vmem [#allocation2], 357
  %v3570 = vld [vmem:[%s3569] ss:$2 sm:$0xff]
  %s3571 = scalar_lea.vmem [#allocation2], 373
  %v3572 = vld [vmem:[%s3571] ss:$2 sm:$0xff]
  %s3573 = scalar_lea.vmem [#allocation2], 389
  %v3574 = vld [vmem:[%s3573] ss:$2 sm:$0xff]
  %s3575 = scalar_lea.vmem [#allocation2], 405
  %v3576 = vld [vmem:[%s3575] ss:$2 sm:$0xff]
  %s3577 = scalar_lea.vmem [#allocation2], 421
  %v3578 = vld [vmem:[%s3577] ss:$2 sm:$0xff]
  %s3579 = scalar_lea.vmem [#allocation2], 437
  %v3580 = vld [vmem:[%s3579] ss:$2 sm:$0xff]
  %s3581 = scalar_lea.vmem [#allocation2], 453
  %v3582 = vld [vmem:[%s3581] ss:$2 sm:$0xff]
  %s3583 = scalar_lea.vmem [#allocation2], 469
  %v3584 = vld [vmem:[%s3583] ss:$2 sm:$0xff]
  %s3585 = scalar_lea.vmem %s3, 80
  %v3586 = vld [vmem:[%s3585] sm:$0xff]
  %v3587 = vld [vmem:[%s3585 + $0x8] sm:$0xff]
  %v3589 = vsel %vm1534, %v3526, 0
  %v3592 = vsel %vm1534, %v3528, 0
  %v3595 = vsel %vm1534, %v3530, 0
  %v3598 = vsel %vm1534, %v3532, 0
  %v3601 = vsel %vm1534, %v3534, 0
  %v3604 = vsel %vm1534, %v3536, 0
  %v3607 = vsel %vm1534, %v3538, 0
  %v3610 = vsel %vm1534, %v3540, 0
  %v3613 = vsel %vm1534, %v3542, 0
  %v3616 = vsel %vm1534, %v3544, 0
  %v3619 = vsel %vm1534, %v3546, 0
  %v3622 = vsel %vm1534, %v3548, 0
  %v3625 = vsel %vm1534, %v3550, 0
  %v3628 = vsel %vm1534, %v3552, 0
  %v3631 = vsel %vm1534, %v3554, 0
  %v3634 = vsel %vm1534, %v3556, 0
  %v3637 = vsel %vm1534, %v3558, 0
  %v3640 = vsel %vm1534, %v3560, 0
  %v3643 = vsel %vm1534, %v3562, 0
  %v3646 = vsel %vm1534, %v3564, 0
  %v3649 = vsel %vm1534, %v3566, 0
  %v3652 = vsel %vm1534, %v3568, 0
  %v3655 = vsel %vm1534, %v3570, 0
  %v3658 = vsel %vm1534, %v3572, 0
  %v3661 = vsel %vm1534, %v3574, 0
  %v3664 = vsel %vm1534, %v3576, 0
  %v3667 = vsel %vm1534, %v3578, 0
  %v3670 = vsel %vm1534, %v3580, 0
  %v3673 = vsel %vm1534, %v3582, 0
  %v3676 = vsel %vm1534, %v3584, 0
  %3678 = vmatprep.subr.mxu0 0.0
  %3679 = vmatpush1.msra.mxu0 0.0
  %3680 = vmatprep.subr.mxu0 0.0
  %3681 = vmatpush1.msra.mxu0 0.0
  %3682 = vmatprep.subr.mxu0 0.0
  %3683 = vmatpush1.msra.mxu0 0.0
  %3684 = vmatprep.subr.mxu0 0.0
  %3685 = vmatpush1.msra.mxu0 0.0
  %3686 = vmatprep.subr.mxu0 0.0
  %3687 = vmatpush1.msra.mxu0 0.0
  %3688 = vmatprep.subr.mxu0 0.0
  %3689 = vmatpush1.msra.mxu0 0.0
  %3690 = vmatprep.subr.mxu0 0.0
  %3691 = vmatpush1.msra.mxu0 0.0
  %3692 = vmatprep.subr.mxu0 0.0
  %3693 = vmatpush1.msra.mxu0 0.0
  %3694 = vmatprep.subr.mxu0 0.0
  %3695 = vmatpush1.msra.mxu0 0.0
  %3696 = vmatprep.subr.mxu0 0.0
  %3697 = vmatpush1.msra.mxu0 0.0
  %3698 = vmatprep.subr.mxu0 0.0
  %3699 = vmatpush1.msra.mxu0 0.0
  %3700 = vmatprep.subr.mxu0 0.0
  %3701 = vmatpush1.msra.mxu0 0.0
  %3702 = vmatprep.subr.mxu0 0.0
  %3703 = vmatpush1.msra.mxu0 0.0
  %3704 = vmatprep.subr.mxu0 0.0
  %3705 = vmatpush1.msra.mxu0 0.0
  %3706 = vmatprep.subr.mxu0 0.0
  %3707 = vmatpush1.msra.mxu0 %v3587
  %3708 = vmatprep.subr.mxu0 0.0
  %3709 = vmatpush1.msra.mxu0 %v3586
  %3710 = vmatprep.subr.mxu0 0.0
  %3711 = vmatpush2.msra.mxu0 0.0
  %3712 = vmatprep.subr.mxu0 0.0
  %3713 = vmatpush2.msra.mxu0 0.0
  %3714 = vmatprep.subr.mxu0 0.0
  %3715 = vmatpush2.msra.mxu0 0.0
  %3716 = vmatprep.subr.mxu0 0.0
  %3717 = vmatpush2.msra.mxu0 0.0
  %3718 = vmatprep.subr.mxu0 0.0
  %3719 = vmatpush2.msra.mxu0 0.0
  %3720 = vmatprep.subr.mxu0 0.0
  %3721 = vmatpush2.msra.mxu0 0.0
  %3722 = vmatprep.subr.mxu0 0.0
  %3723 = vmatpush2.msra.mxu0 0.0
  %3724 = vmatprep.subr.mxu0 0.0
  %3725 = vmatpush2.msra.mxu0 0.0
  %3726 = vmatprep.subr.mxu0 0.0
  %3727 = vmatpush2.msra.mxu0 0.0
  %3728 = vmatprep.subr.mxu0 0.0
  %3729 = vmatpush2.msra.mxu0 0.0
  %3730 = vmatprep.subr.mxu0 0.0
  %3731 = vmatpush2.msra.mxu0 0.0
  %3732 = vmatprep.subr.mxu0 0.0
  %3733 = vmatpush2.msra.mxu0 0.0
  %3734 = vmatprep.subr.mxu0 0.0
  %3735 = vmatpush2.msra.mxu0 0.0
  %3736 = vmatprep.subr.mxu0 0.0
  %3737 = vmatpush2.msra.mxu0 0.0
  %3738 = vmatprep.subr.mxu0 0.0
  %3739 = vmatpush2.msra.mxu0 0.0
  %3740 = vmatprep.subr.mxu0 0.0
  %3741 = vmatpush2.msra.mxu0 0.0
  %3742 = vmatprep.mubr.f32.mxu0 0.0
  %3743 = vmatmul.mubr.f32.gmra.mxu0 %v3589
  %v3744 = vpop.f32.mrf.mxu0
  %v3745 = vadd.f32 0.0, %v3744
  %v3746 = vpop.f32.mrf.mxu0
  %3747 = vmatprep.mubr.f32.mxu0 0.0
  %3748 = vmatmul.mubr.f32.gmra.mxu0 %v3592
  %v3749 = vpop.f32.mrf.mxu0
  %v3750 = vadd.f32 0.0, %v3749
  %v3751 = vpop.f32.mrf.mxu0
  %3752 = vmatprep.mubr.f32.mxu0 0.0
  %3753 = vmatmul.mubr.f32.gmra.mxu0 %v3595
  %v3754 = vpop.f32.mrf.mxu0
  %v3755 = vadd.f32 0.0, %v3754
  %v3756 = vpop.f32.mrf.mxu0
  %3757 = vmatprep.mubr.f32.mxu0 0.0
  %3758 = vmatmul.mubr.f32.gmra.mxu0 %v3598
  %v3759 = vpop.f32.mrf.mxu0
  %v3760 = vadd.f32 0.0, %v3759
  %v3761 = vpop.f32.mrf.mxu0
  %3762 = vmatprep.mubr.f32.mxu0 0.0
  %3763 = vmatmul.mubr.f32.gmra.mxu0 %v3601
  %v3764 = vpop.f32.mrf.mxu0
  %v3765 = vadd.f32 0.0, %v3764
  %v3766 = vpop.f32.mrf.mxu0
  %3767 = vmatprep.mubr.f32.mxu0 0.0
  %3768 = vmatmul.mubr.f32.gmra.mxu0 %v3604
  %v3769 = vpop.f32.mrf.mxu0
  %v3770 = vadd.f32 0.0, %v3769
  %v3771 = vpop.f32.mrf.mxu0
  %3772 = vmatprep.mubr.f32.mxu0 0.0
  %3773 = vmatmul.mubr.f32.gmra.mxu0 %v3607
  %v3774 = vpop.f32.mrf.mxu0
  %v3775 = vadd.f32 0.0, %v3774
  %v3776 = vpop.f32.mrf.mxu0
  %3777 = vmatprep.mubr.f32.mxu0 0.0
  %3778 = vmatmul.mubr.f32.gmra.mxu0 %v3610
  %v3779 = vpop.f32.mrf.mxu0
  %v3780 = vadd.f32 0.0, %v3779
  %v3781 = vpop.f32.mrf.mxu0
  %3782 = vmatprep.mubr.f32.mxu0 0.0
  %3783 = vmatmul.mubr.f32.gmra.mxu0 %v3613
  %v3784 = vpop.f32.mrf.mxu0
  %v3785 = vadd.f32 0.0, %v3784
  %v3786 = vpop.f32.mrf.mxu0
  %3787 = vmatprep.mubr.f32.mxu0 0.0
  %3788 = vmatmul.mubr.f32.gmra.mxu0 %v3616
  %v3789 = vpop.f32.mrf.mxu0
  %v3790 = vadd.f32 0.0, %v3789
  %v3791 = vpop.f32.mrf.mxu0
  %3792 = vmatprep.mubr.f32.mxu0 0.0
  %3793 = vmatmul.mubr.f32.gmra.mxu0 %v3619
  %v3794 = vpop.f32.mrf.mxu0
  %v3795 = vadd.f32 0.0, %v3794
  %v3796 = vpop.f32.mrf.mxu0
  %3797 = vmatprep.mubr.f32.mxu0 0.0
  %3798 = vmatmul.mubr.f32.gmra.mxu0 %v3622
  %v3799 = vpop.f32.mrf.mxu0
  %v3800 = vadd.f32 0.0, %v3799
  %v3801 = vpop.f32.mrf.mxu0
  %3802 = vmatprep.mubr.f32.mxu0 0.0
  %3803 = vmatmul.mubr.f32.gmra.mxu0 %v3625
  %v3804 = vpop.f32.mrf.mxu0
  %v3805 = vadd.f32 0.0, %v3804
  %v3806 = vpop.f32.mrf.mxu0
  %3807 = vmatprep.mubr.f32.mxu0 0.0
  %3808 = vmatmul.mubr.f32.gmra.mxu0 %v3628
  %v3809 = vpop.f32.mrf.mxu0
  %v3810 = vadd.f32 0.0, %v3809
  %v3811 = vpop.f32.mrf.mxu0
  %3812 = vmatprep.mubr.f32.mxu0 0.0
  %3813 = vmatmul.mubr.f32.gmra.mxu0 %v3631
  %v3814 = vpop.f32.mrf.mxu0
  %v3815 = vadd.f32 0.0, %v3814
  %v3816 = vpop.f32.mrf.mxu0
  %3817 = vmatprep.mubr.f32.mxu0 0.0
  %3818 = vmatmul.mubr.f32.gmra.mxu0 %v3634
  %v3819 = vpop.f32.mrf.mxu0
  %v3820 = vadd.f32 0.0, %v3819
  %v3821 = vpop.f32.mrf.mxu0
  %3822 = vmatprep.mubr.f32.mxu0 0.0
  %3823 = vmatmul.mubr.f32.gmra.mxu0 %v3637
  %v3824 = vpop.f32.mrf.mxu0
  %v3825 = vadd.f32 0.0, %v3824
  %v3826 = vpop.f32.mrf.mxu0
  %3827 = vmatprep.mubr.f32.mxu0 0.0
  %3828 = vmatmul.mubr.f32.gmra.mxu0 %v3640
  %v3829 = vpop.f32.mrf.mxu0
  %v3830 = vadd.f32 0.0, %v3829
  %v3831 = vpop.f32.mrf.mxu0
  %3832 = vmatprep.mubr.f32.mxu0 0.0
  %3833 = vmatmul.mubr.f32.gmra.mxu0 %v3643
  %v3834 = vpop.f32.mrf.mxu0
  %v3835 = vadd.f32 0.0, %v3834
  %v3836 = vpop.f32.mrf.mxu0
  %3837 = vmatprep.mubr.f32.mxu0 0.0
  %3838 = vmatmul.mubr.f32.gmra.mxu0 %v3646
  %v3839 = vpop.f32.mrf.mxu0
  %v3840 = vadd.f32 0.0, %v3839
  %v3841 = vpop.f32.mrf.mxu0
  %3842 = vmatprep.mubr.f32.mxu0 0.0
  %3843 = vmatmul.mubr.f32.gmra.mxu0 %v3649
  %v3844 = vpop.f32.mrf.mxu0
  %v3845 = vadd.f32 0.0, %v3844
  %v3846 = vpop.f32.mrf.mxu0
  %3847 = vmatprep.mubr.f32.mxu0 0.0
  %3848 = vmatmul.mubr.f32.gmra.mxu0 %v3652
  %v3849 = vpop.f32.mrf.mxu0
  %v3850 = vadd.f32 0.0, %v3849
  %v3851 = vpop.f32.mrf.mxu0
  %3852 = vmatprep.mubr.f32.mxu0 0.0
  %3853 = vmatmul.mubr.f32.gmra.mxu0 %v3655
  %v3854 = vpop.f32.mrf.mxu0
  %v3855 = vadd.f32 0.0, %v3854
  %v3856 = vpop.f32.mrf.mxu0
  %3857 = vmatprep.mubr.f32.mxu0 0.0
  %3858 = vmatmul.mubr.f32.gmra.mxu0 %v3658
  %v3859 = vpop.f32.mrf.mxu0
  %v3860 = vadd.f32 0.0, %v3859
  %v3861 = vpop.f32.mrf.mxu0
  %3862 = vmatprep.mubr.f32.mxu0 0.0
  %3863 = vmatmul.mubr.f32.gmra.mxu0 %v3661
  %v3864 = vpop.f32.mrf.mxu0
  %v3865 = vadd.f32 0.0, %v3864
  %v3866 = vpop.f32.mrf.mxu0
  %3867 = vmatprep.mubr.f32.mxu0 0.0
  %3868 = vmatmul.mubr.f32.gmra.mxu0 %v3664
  %v3869 = vpop.f32.mrf.mxu0
  %v3870 = vadd.f32 0.0, %v3869
  %v3871 = vpop.f32.mrf.mxu0
  %3872 = vmatprep.mubr.f32.mxu0 0.0
  %3873 = vmatmul.mubr.f32.gmra.mxu0 %v3667
  %v3874 = vpop.f32.mrf.mxu0
  %v3875 = vadd.f32 0.0, %v3874
  %v3876 = vpop.f32.mrf.mxu0
  %3877 = vmatprep.mubr.f32.mxu0 0.0
  %3878 = vmatmul.mubr.f32.gmra.mxu0 %v3670
  %v3879 = vpop.f32.mrf.mxu0
  %v3880 = vadd.f32 0.0, %v3879
  %v3881 = vpop.f32.mrf.mxu0
  %3882 = vmatprep.mubr.f32.mxu0 0.0
  %3883 = vmatmul.mubr.f32.gmra.mxu0 %v3673
  %v3884 = vpop.f32.mrf.mxu0
  %v3885 = vadd.f32 0.0, %v3884
  %v3886 = vpop.f32.mrf.mxu0
  %3887 = vmatprep.mubr.f32.mxu0 0.0
  %3888 = vmatmul.mubr.f32.gmra.mxu0 %v3676
  %v3889 = vpop.f32.mrf.mxu0
  %v3890 = vadd.f32 0.0, %v3889
  %v3891 = vpop.f32.mrf.mxu0
  %3892 = vdwg.mxu0
  %v3893 = vadd.f32 %v3495, %v3745
  %v3894 = vadd.f32 %v3496, %v3750
  %v3895 = vadd.f32 %v3497, %v3755
  %v3896 = vadd.f32 %v3498, %v3760
  %v3897 = vadd.f32 %v3499, %v3765
  %v3898 = vadd.f32 %v3500, %v3770
  %v3899 = vadd.f32 %v3501, %v3775
  %v3900 = vadd.f32 %v3502, %v3780
  %v3901 = vadd.f32 %v3503, %v3785
  %v3902 = vadd.f32 %v3504, %v3790
  %v3903 = vadd.f32 %v3505, %v3795
  %v3904 = vadd.f32 %v3506, %v3800
  %v3905 = vadd.f32 %v3507, %v3805
  %v3906 = vadd.f32 %v3508, %v3810
  %v3907 = vadd.f32 %v3509, %v3815
  %v3908 = vadd.f32 %v3510, %v3820
  %v3909 = vadd.f32 %v3511, %v3825
  %v3910 = vadd.f32 %v3512, %v3830
  %v3911 = vadd.f32 %v3513, %v3835
  %v3912 = vadd.f32 %v3514, %v3840
  %v3913 = vadd.f32 %v3515, %v3845
  %v3914 = vadd.f32 %v3516, %v3850
  %v3915 = vadd.f32 %v3517, %v3855
  %v3916 = vadd.f32 %v3518, %v3860
  %v3917 = vadd.f32 %v3519, %v3865
  %v3918 = vadd.f32 %v3520, %v3870
  %v3919 = vadd.f32 %v3521, %v3875
  %v3920 = vadd.f32 %v3522, %v3880
  %v3921 = vadd.f32 %v3523, %v3885
  %v3922 = vadd.f32 %v3524, %v3890
  %v3923 = vlaneseq
  %v3924 = vshrl.u32 %v3923, 7
  %v3925 = vsub.s32 0, %v3924
  %v3926 = vrot.slane %v1596, %v3925
  %v3927 = vadd.f32 %v3893, %v3926
  %v3928 = vadd.f32 %v3894, %v3926
  %v3929 = vadd.f32 %v3895, %v3926
  %v3930 = vadd.f32 %v3896, %v3926
  %v3931 = vadd.f32 %v3897, %v3926
  %v3932 = vadd.f32 %v3898, %v3926
  %v3933 = vadd.f32 %v3899, %v3926
  %v3934 = vadd.f32 %v3900, %v3926
  %v3935 = vadd.f32 %v3901, %v3926
  %v3936 = vadd.f32 %v3902, %v3926
  %v3937 = vadd.f32 %v3903, %v3926
  %v3938 = vadd.f32 %v3904, %v3926
  %v3939 = vadd.f32 %v3905, %v3926
  %v3940 = vadd.f32 %v3906, %v3926
  %v3941 = vadd.f32 %v3907, %v3926
  %v3942 = vadd.f32 %v3908, %v3926
  %v3943 = vadd.f32 %v3909, %v3926
  %v3944 = vadd.f32 %v3910, %v3926
  %v3945 = vadd.f32 %v3911, %v3926
  %v3946 = vadd.f32 %v3912, %v3926
  %v3947 = vadd.f32 %v3913, %v3926
  %v3948 = vadd.f32 %v3914, %v3926
  %v3949 = vadd.f32 %v3915, %v3926
  %v3950 = vadd.f32 %v3916, %v3926
  %v3951 = vadd.f32 %v3917, %v3926
  %v3952 = vadd.f32 %v3918, %v3926
  %v3953 = vadd.f32 %v3919, %v3926
  %v3954 = vadd.f32 %v3920, %v3926
  %v3955 = vadd.f32 %v3921, %v3926
  %v3956 = vadd.f32 %v3922, %v3926
  %3957 = vst.msk [vmem:[#allocation3] sm:$0xff] %vm903, %v3927
  %3958 = vst.msk [vmem:[#allocation3 + $0x8] sm:$0xff] %vm903, %v3928
  %3959 = vst.msk [vmem:[#allocation3 + $0x10] sm:$0xff] %vm903, %v3929
  %3960 = vst.msk [vmem:[#allocation3 + $0x18] sm:$0xff] %vm903, %v3930
  %3961 = vst.msk [vmem:[#allocation3 + $0x20] sm:$0xff] %vm903, %v3931
  %3962 = vst.msk [vmem:[#allocation3 + $0x28] sm:$0xff] %vm903, %v3932
  %3963 = vst.msk [vmem:[#allocation3 + $0x30] sm:$0xff] %vm903, %v3933
  %3964 = vst.msk [vmem:[#allocation3 + $0x38] sm:$0xff] %vm903, %v3934
  %3965 = vst.msk [vmem:[#allocation3 + $0x40] sm:$0xff] %vm903, %v3935
  %3966 = vst.msk [vmem:[#allocation3 + $0x48] sm:$0xff] %vm903, %v3936
  %3967 = vst.msk [vmem:[#allocation3 + $0x50] sm:$0xff] %vm903, %v3937
  %3968 = vst.msk [vmem:[#allocation3 + $0x58] sm:$0xff] %vm903, %v3938
  %3969 = vst.msk [vmem:[#allocation3 + $0x60] sm:$0xff] %vm903, %v3939
  %3970 = vst.msk [vmem:[#allocation3 + $0x68] sm:$0xff] %vm903, %v3940
  %3971 = vst.msk [vmem:[#allocation3 + $0x70] sm:$0xff] %vm903, %v3941
  %3972 = vst.msk [vmem:[#allocation3 + $0x78] sm:$0xff] %vm903, %v3942
  %3973 = vst.msk [vmem:[#allocation3 + $0x80] sm:$0xff] %vm903, %v3943
  %3974 = vst.msk [vmem:[#allocation3 + $0x88] sm:$0xff] %vm903, %v3944
  %3975 = vst.msk [vmem:[#allocation3 + $0x90] sm:$0xff] %vm903, %v3945
  %3976 = vst.msk [vmem:[#allocation3 + $0x98] sm:$0xff] %vm903, %v3946
  %3977 = vst.msk [vmem:[#allocation3 + $0xa0] sm:$0xff] %vm903, %v3947
  %3978 = vst.msk [vmem:[#allocation3 + $0xa8] sm:$0xff] %vm903, %v3948
  %3979 = vst.msk [vmem:[#allocation3 + $0xb0] sm:$0xff] %vm903, %v3949
  %3980 = vst.msk [vmem:[#allocation3 + $0xb8] sm:$0xff] %vm903, %v3950
  %3981 = vst.msk [vmem:[#allocation3 + $0xc0] sm:$0xff] %vm903, %v3951
  %3982 = vst.msk [vmem:[#allocation3 + $0xc8] sm:$0xff] %vm903, %v3952
  %3983 = vst.msk [vmem:[#allocation3 + $0xd0] sm:$0xff] %vm903, %v3953
  %3984 = vst.msk [vmem:[#allocation3 + $0xd8] sm:$0xff] %vm903, %v3954
  %3985 = vst.msk [vmem:[#allocation3 + $0xe0] sm:$0xff] %vm903, %v3955
  %3986 = vst.msk [vmem:[#allocation3 + $0xe8] sm:$0xff] %vm903, %v3956
  %v3987 = vld [vmem:[%s7 + $0x2] sm:$0x1]
  %v3988 = vld [vmem:[#allocation3] ss:$2 sm:$0xff]
  %s3989 = scalar_lea.vmem [#allocation3], 16
  %v3990 = vld [vmem:[%s3989] ss:$2 sm:$0xff]
  %s3991 = scalar_lea.vmem [#allocation3], 32
  %v3992 = vld [vmem:[%s3991] ss:$2 sm:$0xff]
  %s3993 = scalar_lea.vmem [#allocation3], 48
  %v3994 = vld [vmem:[%s3993] ss:$2 sm:$0xff]
  %s3995 = scalar_lea.vmem [#allocation3], 64
  %v3996 = vld [vmem:[%s3995] ss:$2 sm:$0xff]
  %s3997 = scalar_lea.vmem [#allocation3], 80
  %v3998 = vld [vmem:[%s3997] ss:$2 sm:$0xff]
  %s3999 = scalar_lea.vmem [#allocation3], 96
  %v4000 = vld [vmem:[%s3999] ss:$2 sm:$0xff]
  %s4001 = scalar_lea.vmem [#allocation3], 112
  %v4002 = vld [vmem:[%s4001] ss:$2 sm:$0xff]
  %s4003 = scalar_lea.vmem [#allocation3], 128
  %v4004 = vld [vmem:[%s4003] ss:$2 sm:$0xff]
  %s4005 = scalar_lea.vmem [#allocation3], 144
  %v4006 = vld [vmem:[%s4005] ss:$2 sm:$0xff]
  %s4007 = scalar_lea.vmem [#allocation3], 160
  %v4008 = vld [vmem:[%s4007] ss:$2 sm:$0xff]
  %s4009 = scalar_lea.vmem [#allocation3], 176
  %v4010 = vld [vmem:[%s4009] ss:$2 sm:$0xff]
  %s4011 = scalar_lea.vmem [#allocation3], 192
  %v4012 = vld [vmem:[%s4011] ss:$2 sm:$0xff]
  %s4013 = scalar_lea.vmem [#allocation3], 208
  %v4014 = vld [vmem:[%s4013] ss:$2 sm:$0xff]
  %s4015 = scalar_lea.vmem [#allocation3], 224
  %v4016 = vld [vmem:[%s4015] ss:$2 sm:$0xff]
  %v4017 = vld [vmem:[%s4] sm:$0xff]
  %v4018 = vld [vmem:[%s4 + $0x8] sm:$0xff]
  %v4019 = vld [vmem:[%s4 + $0x10] sm:$0xff]
  %v4020 = vld [vmem:[%s4 + $0x18] sm:$0xff]
  %s4021 = scalar_lea.vmem [#allocation3], 1
  %v4022 = vld [vmem:[%s4021] ss:$2 sm:$0xff]
  %s4023 = scalar_lea.vmem [#allocation3], 17
  %v4024 = vld [vmem:[%s4023] ss:$2 sm:$0xff]
  %s4025 = scalar_lea.vmem [#allocation3], 33
  %v4026 = vld [vmem:[%s4025] ss:$2 sm:$0xff]
  %s4027 = scalar_lea.vmem [#allocation3], 49
  %v4028 = vld [vmem:[%s4027] ss:$2 sm:$0xff]
  %s4029 = scalar_lea.vmem [#allocation3], 65
  %v4030 = vld [vmem:[%s4029] ss:$2 sm:$0xff]
  %s4031 = scalar_lea.vmem [#allocation3], 81
  %v4032 = vld [vmem:[%s4031] ss:$2 sm:$0xff]
  %s4033 = scalar_lea.vmem [#allocation3], 97
  %v4034 = vld [vmem:[%s4033] ss:$2 sm:$0xff]
  %s4035 = scalar_lea.vmem [#allocation3], 113
  %v4036 = vld [vmem:[%s4035] ss:$2 sm:$0xff]
  %s4037 = scalar_lea.vmem [#allocation3], 129
  %v4038 = vld [vmem:[%s4037] ss:$2 sm:$0xff]
  %s4039 = scalar_lea.vmem [#allocation3], 145
  %v4040 = vld [vmem:[%s4039] ss:$2 sm:$0xff]
  %s4041 = scalar_lea.vmem [#allocation3], 161
  %v4042 = vld [vmem:[%s4041] ss:$2 sm:$0xff]
  %s4043 = scalar_lea.vmem [#allocation3], 177
  %v4044 = vld [vmem:[%s4043] ss:$2 sm:$0xff]
  %s4045 = scalar_lea.vmem [#allocation3], 193
  %v4046 = vld [vmem:[%s4045] ss:$2 sm:$0xff]
  %s4047 = scalar_lea.vmem [#allocation3], 209
  %v4048 = vld [vmem:[%s4047] ss:$2 sm:$0xff]
  %s4049 = scalar_lea.vmem [#allocation3], 225
  %v4050 = vld [vmem:[%s4049] ss:$2 sm:$0xff]
  %s4051 = scalar_lea.vmem %s4, 32
  %v4052 = vld [vmem:[%s4051] sm:$0xff]
  %v4053 = vld [vmem:[%s4051 + $0x8] sm:$0xff]
  %v4054 = vld [vmem:[%s4051 + $0x10] sm:$0xff]
  %v4055 = vld [vmem:[%s4051 + $0x18] sm:$0xff]
  %v4057 = vsel %vm903, %v4022, 0
  %v4060 = vsel %vm903, %v4024, 0
  %v4063 = vsel %vm903, %v4026, 0
  %v4066 = vsel %vm903, %v4028, 0
  %v4069 = vsel %vm903, %v4030, 0
  %v4072 = vsel %vm903, %v4032, 0
  %v4075 = vsel %vm903, %v4034, 0
  %v4078 = vsel %vm903, %v4036, 0
  %v4081 = vsel %vm903, %v4038, 0
  %v4084 = vsel %vm903, %v4040, 0
  %v4087 = vsel %vm903, %v4042, 0
  %v4090 = vsel %vm903, %v4044, 0
  %v4093 = vsel %vm903, %v4046, 0
  %v4096 = vsel %vm903, %v4048, 0
  %v4099 = vsel %vm903, %v4050, 0
  %4101 = vmatprep.subr.mxu0 0.0
  %4102 = vmatpush1.msra.mxu0 0.0
  %4103 = vmatprep.subr.mxu0 0.0
  %4104 = vmatpush1.msra.mxu0 0.0
  %4105 = vmatprep.subr.mxu0 0.0
  %4106 = vmatpush1.msra.mxu0 0.0
  %4107 = vmatprep.subr.mxu0 0.0
  %4108 = vmatpush1.msra.mxu0 0.0
  %4109 = vmatprep.subr.mxu0 0.0
  %4110 = vmatpush1.msra.mxu0 0.0
  %4111 = vmatprep.subr.mxu0 0.0
  %4112 = vmatpush1.msra.mxu0 0.0
  %4113 = vmatprep.subr.mxu0 0.0
  %4114 = vmatpush1.msra.mxu0 0.0
  %4115 = vmatprep.subr.mxu0 0.0
  %4116 = vmatpush1.msra.mxu0 0.0
  %4117 = vmatprep.subr.mxu0 0.0
  %4118 = vmatpush1.msra.mxu0 0.0
  %4119 = vmatprep.subr.mxu0 0.0
  %4120 = vmatpush1.msra.mxu0 0.0
  %4121 = vmatprep.subr.mxu0 0.0
  %4122 = vmatpush1.msra.mxu0 0.0
  %4123 = vmatprep.subr.mxu0 0.0
  %4124 = vmatpush1.msra.mxu0 0.0
  %4125 = vmatprep.subr.mxu0 0.0
  %4126 = vmatpush1.msra.mxu0 %v4055
  %4127 = vmatprep.subr.mxu0 0.0
  %4128 = vmatpush1.msra.mxu0 %v4054
  %4129 = vmatprep.subr.mxu0 0.0
  %4130 = vmatpush1.msra.mxu0 %v4053
  %4131 = vmatprep.subr.mxu0 0.0
  %4132 = vmatpush1.msra.mxu0 %v4052
  %4133 = vmatprep.subr.mxu0 0.0
  %4134 = vmatpush2.msra.mxu0 0.0
  %4135 = vmatprep.subr.mxu0 0.0
  %4136 = vmatpush2.msra.mxu0 0.0
  %4137 = vmatprep.subr.mxu0 0.0
  %4138 = vmatpush2.msra.mxu0 0.0
  %4139 = vmatprep.subr.mxu0 0.0
  %4140 = vmatpush2.msra.mxu0 0.0
  %4141 = vmatprep.subr.mxu0 0.0
  %4142 = vmatpush2.msra.mxu0 0.0
  %4143 = vmatprep.subr.mxu0 0.0
  %4144 = vmatpush2.msra.mxu0 0.0
  %4145 = vmatprep.subr.mxu0 0.0
  %4146 = vmatpush2.msra.mxu0 0.0
  %4147 = vmatprep.subr.mxu0 0.0
  %4148 = vmatpush2.msra.mxu0 0.0
  %4149 = vmatprep.subr.mxu0 0.0
  %4150 = vmatpush2.msra.mxu0 0.0
  %4151 = vmatprep.subr.mxu0 0.0
  %4152 = vmatpush2.msra.mxu0 0.0
  %4153 = vmatprep.subr.mxu0 0.0
  %4154 = vmatpush2.msra.mxu0 0.0
  %4155 = vmatprep.subr.mxu0 0.0
  %4156 = vmatpush2.msra.mxu0 0.0
  %4157 = vmatprep.subr.mxu0 0.0
  %4158 = vmatpush2.msra.mxu0 0.0
  %4159 = vmatprep.subr.mxu0 0.0
  %4160 = vmatpush2.msra.mxu0 0.0
  %4161 = vmatprep.subr.mxu0 0.0
  %4162 = vmatpush2.msra.mxu0 0.0
  %4163 = vmatprep.subr.mxu0 0.0
  %4164 = vmatpush2.msra.mxu0 0.0
  %4165 = vmatprep.mubr.f32.mxu0 0.0
  %4166 = vmatmul.mubr.f32.gmra.mxu0 %v4057
  %v4167 = vpop.f32.mrf.mxu0
  %v4168 = vadd.f32 0.0, %v4167
  %v4169 = vpop.f32.mrf.mxu0
  %4170 = vmatprep.mubr.f32.mxu0 0.0
  %4171 = vmatmul.mubr.f32.gmra.mxu0 %v4060
  %v4172 = vpop.f32.mrf.mxu0
  %v4173 = vadd.f32 0.0, %v4172
  %v4174 = vpop.f32.mrf.mxu0
  %4175 = vmatprep.mubr.f32.mxu0 0.0
  %4176 = vmatmul.mubr.f32.gmra.mxu0 %v4063
  %v4177 = vpop.f32.mrf.mxu0
  %v4178 = vadd.f32 0.0, %v4177
  %v4179 = vpop.f32.mrf.mxu0
  %4180 = vmatprep.mubr.f32.mxu0 0.0
  %4181 = vmatmul.mubr.f32.gmra.mxu0 %v4066
  %v4182 = vpop.f32.mrf.mxu0
  %v4183 = vadd.f32 0.0, %v4182
  %v4184 = vpop.f32.mrf.mxu0
  %4185 = vmatprep.mubr.f32.mxu0 0.0
  %4186 = vmatmul.mubr.f32.gmra.mxu0 %v4069
  %v4187 = vpop.f32.mrf.mxu0
  %v4188 = vadd.f32 0.0, %v4187
  %v4189 = vpop.f32.mrf.mxu0
  %4190 = vmatprep.mubr.f32.mxu0 0.0
  %4191 = vmatmul.mubr.f32.gmra.mxu0 %v4072
  %v4192 = vpop.f32.mrf.mxu0
  %v4193 = vadd.f32 0.0, %v4192
  %v4194 = vpop.f32.mrf.mxu0
  %4195 = vmatprep.mubr.f32.mxu0 0.0
  %4196 = vmatmul.mubr.f32.gmra.mxu0 %v4075
  %v4197 = vpop.f32.mrf.mxu0
  %v4198 = vadd.f32 0.0, %v4197
  %v4199 = vpop.f32.mrf.mxu0
  %4200 = vmatprep.mubr.f32.mxu0 0.0
  %4201 = vmatmul.mubr.f32.gmra.mxu0 %v4078
  %v4202 = vpop.f32.mrf.mxu0
  %v4203 = vadd.f32 0.0, %v4202
  %v4204 = vpop.f32.mrf.mxu0
  %4205 = vmatprep.mubr.f32.mxu0 0.0
  %4206 = vmatmul.mubr.f32.gmra.mxu0 %v4081
  %v4207 = vpop.f32.mrf.mxu0
  %v4208 = vadd.f32 0.0, %v4207
  %v4209 = vpop.f32.mrf.mxu0
  %4210 = vmatprep.mubr.f32.mxu0 0.0
  %4211 = vmatmul.mubr.f32.gmra.mxu0 %v4084
  %v4212 = vpop.f32.mrf.mxu0
  %v4213 = vadd.f32 0.0, %v4212
  %v4214 = vpop.f32.mrf.mxu0
  %4215 = vmatprep.mubr.f32.mxu0 0.0
  %4216 = vmatmul.mubr.f32.gmra.mxu0 %v4087
  %v4217 = vpop.f32.mrf.mxu0
  %v4218 = vadd.f32 0.0, %v4217
  %v4219 = vpop.f32.mrf.mxu0
  %4220 = vmatprep.mubr.f32.mxu0 0.0
  %4221 = vmatmul.mubr.f32.gmra.mxu0 %v4090
  %v4222 = vpop.f32.mrf.mxu0
  %v4223 = vadd.f32 0.0, %v4222
  %v4224 = vpop.f32.mrf.mxu0
  %4225 = vmatprep.mubr.f32.mxu0 0.0
  %4226 = vmatmul.mubr.f32.gmra.mxu0 %v4093
  %v4227 = vpop.f32.mrf.mxu0
  %v4228 = vadd.f32 0.0, %v4227
  %v4229 = vpop.f32.mrf.mxu0
  %4230 = vmatprep.mubr.f32.mxu0 0.0
  %4231 = vmatmul.mubr.f32.gmra.mxu0 %v4096
  %v4232 = vpop.f32.mrf.mxu0
  %v4233 = vadd.f32 0.0, %v4232
  %v4234 = vpop.f32.mrf.mxu0
  %4235 = vmatprep.mubr.f32.mxu0 0.0
  %4236 = vmatmul.mubr.f32.gmra.mxu0 %v4099
  %v4237 = vpop.f32.mrf.mxu0
  %v4238 = vadd.f32 0.0, %v4237
  %v4239 = vpop.f32.mrf.mxu0
  %4240 = vdwg.mxu0
  %v4242 = vsel %vm903, %v3988, 0
  %v4245 = vsel %vm903, %v3990, 0
  %v4248 = vsel %vm903, %v3992, 0
  %v4251 = vsel %vm903, %v3994, 0
  %v4254 = vsel %vm903, %v3996, 0
  %v4257 = vsel %vm903, %v3998, 0
  %v4260 = vsel %vm903, %v4000, 0
  %v4263 = vsel %vm903, %v4002, 0
  %v4266 = vsel %vm903, %v4004, 0
  %v4269 = vsel %vm903, %v4006, 0
  %v4272 = vsel %vm903, %v4008, 0
  %v4275 = vsel %vm903, %v4010, 0
  %v4278 = vsel %vm903, %v4012, 0
  %v4281 = vsel %vm903, %v4014, 0
  %v4284 = vsel %vm903, %v4016, 0
  %4286 = vmatprep.subr.mxu0 0.0
  %4287 = vmatpush1.msra.mxu0 0.0
  %4288 = vmatprep.subr.mxu0 0.0
  %4289 = vmatpush1.msra.mxu0 0.0
  %4290 = vmatprep.subr.mxu0 0.0
  %4291 = vmatpush1.msra.mxu0 0.0
  %4292 = vmatprep.subr.mxu0 0.0
  %4293 = vmatpush1.msra.mxu0 0.0
  %4294 = vmatprep.subr.mxu0 0.0
  %4295 = vmatpush1.msra.mxu0 0.0
  %4296 = vmatprep.subr.mxu0 0.0
  %4297 = vmatpush1.msra.mxu0 0.0
  %4298 = vmatprep.subr.mxu0 0.0
  %4299 = vmatpush1.msra.mxu0 0.0
  %4300 = vmatprep.subr.mxu0 0.0
  %4301 = vmatpush1.msra.mxu0 0.0
  %4302 = vmatprep.subr.mxu0 0.0
  %4303 = vmatpush1.msra.mxu0 0.0
  %4304 = vmatprep.subr.mxu0 0.0
  %4305 = vmatpush1.msra.mxu0 0.0
  %4306 = vmatprep.subr.mxu0 0.0
  %4307 = vmatpush1.msra.mxu0 0.0
  %4308 = vmatprep.subr.mxu0 0.0
  %4309 = vmatpush1.msra.mxu0 0.0
  %4310 = vmatprep.subr.mxu0 0.0
  %4311 = vmatpush1.msra.mxu0 %v4020
  %4312 = vmatprep.subr.mxu0 0.0
  %4313 = vmatpush1.msra.mxu0 %v4019
  %4314 = vmatprep.subr.mxu0 0.0
  %4315 = vmatpush1.msra.mxu0 %v4018
  %4316 = vmatprep.subr.mxu0 0.0
  %4317 = vmatpush1.msra.mxu0 %v4017
  %4318 = vmatprep.subr.mxu0 0.0
  %4319 = vmatpush2.msra.mxu0 0.0
  %4320 = vmatprep.subr.mxu0 0.0
  %4321 = vmatpush2.msra.mxu0 0.0
  %4322 = vmatprep.subr.mxu0 0.0
  %4323 = vmatpush2.msra.mxu0 0.0
  %4324 = vmatprep.subr.mxu0 0.0
  %4325 = vmatpush2.msra.mxu0 0.0
  %4326 = vmatprep.subr.mxu0 0.0
  %4327 = vmatpush2.msra.mxu0 0.0
  %4328 = vmatprep.subr.mxu0 0.0
  %4329 = vmatpush2.msra.mxu0 0.0
  %4330 = vmatprep.subr.mxu0 0.0
  %4331 = vmatpush2.msra.mxu0 0.0
  %4332 = vmatprep.subr.mxu0 0.0
  %4333 = vmatpush2.msra.mxu0 0.0
  %4334 = vmatprep.subr.mxu0 0.0
  %4335 = vmatpush2.msra.mxu0 0.0
  %4336 = vmatprep.subr.mxu0 0.0
  %4337 = vmatpush2.msra.mxu0 0.0
  %4338 = vmatprep.subr.mxu0 0.0
  %4339 = vmatpush2.msra.mxu0 0.0
  %4340 = vmatprep.subr.mxu0 0.0
  %4341 = vmatpush2.msra.mxu0 0.0
  %4342 = vmatprep.subr.mxu0 0.0
  %4343 = vmatpush2.msra.mxu0 0.0
  %4344 = vmatprep.subr.mxu0 0.0
  %4345 = vmatpush2.msra.mxu0 0.0
  %4346 = vmatprep.subr.mxu0 0.0
  %4347 = vmatpush2.msra.mxu0 0.0
  %4348 = vmatprep.subr.mxu0 0.0
  %4349 = vmatpush2.msra.mxu0 0.0
  %4350 = vmatprep.mubr.f32.mxu0 0.0
  %4351 = vmatmul.mubr.f32.gmra.mxu0 %v4242
  %v4352 = vpop.f32.mrf.mxu0
  %v4353 = vadd.f32 %v4168, %v4352
  %v4354 = vpop.f32.mrf.mxu0
  %4355 = vmatprep.mubr.f32.mxu0 0.0
  %4356 = vmatmul.mubr.f32.gmra.mxu0 %v4245
  %v4357 = vpop.f32.mrf.mxu0
  %v4358 = vadd.f32 %v4173, %v4357
  %v4359 = vpop.f32.mrf.mxu0
  %4360 = vmatprep.mubr.f32.mxu0 0.0
  %4361 = vmatmul.mubr.f32.gmra.mxu0 %v4248
  %v4362 = vpop.f32.mrf.mxu0
  %v4363 = vadd.f32 %v4178, %v4362
  %v4364 = vpop.f32.mrf.mxu0
  %4365 = vmatprep.mubr.f32.mxu0 0.0
  %4366 = vmatmul.mubr.f32.gmra.mxu0 %v4251
  %v4367 = vpop.f32.mrf.mxu0
  %v4368 = vadd.f32 %v4183, %v4367
  %v4369 = vpop.f32.mrf.mxu0
  %4370 = vmatprep.mubr.f32.mxu0 0.0
  %4371 = vmatmul.mubr.f32.gmra.mxu0 %v4254
  %v4372 = vpop.f32.mrf.mxu0
  %v4373 = vadd.f32 %v4188, %v4372
  %v4374 = vpop.f32.mrf.mxu0
  %4375 = vmatprep.mubr.f32.mxu0 0.0
  %4376 = vmatmul.mubr.f32.gmra.mxu0 %v4257
  %v4377 = vpop.f32.mrf.mxu0
  %v4378 = vadd.f32 %v4193, %v4377
  %v4379 = vpop.f32.mrf.mxu0
  %4380 = vmatprep.mubr.f32.mxu0 0.0
  %4381 = vmatmul.mubr.f32.gmra.mxu0 %v4260
  %v4382 = vpop.f32.mrf.mxu0
  %v4383 = vadd.f32 %v4198, %v4382
  %v4384 = vpop.f32.mrf.mxu0
  %4385 = vmatprep.mubr.f32.mxu0 0.0
  %4386 = vmatmul.mubr.f32.gmra.mxu0 %v4263
  %v4387 = vpop.f32.mrf.mxu0
  %v4388 = vadd.f32 %v4203, %v4387
  %v4389 = vpop.f32.mrf.mxu0
  %4390 = vmatprep.mubr.f32.mxu0 0.0
  %4391 = vmatmul.mubr.f32.gmra.mxu0 %v4266
  %v4392 = vpop.f32.mrf.mxu0
  %v4393 = vadd.f32 %v4208, %v4392
  %v4394 = vpop.f32.mrf.mxu0
  %4395 = vmatprep.mubr.f32.mxu0 0.0
  %4396 = vmatmul.mubr.f32.gmra.mxu0 %v4269
  %v4397 = vpop.f32.mrf.mxu0
  %v4398 = vadd.f32 %v4213, %v4397
  %v4399 = vpop.f32.mrf.mxu0
  %4400 = vmatprep.mubr.f32.mxu0 0.0
  %4401 = vmatmul.mubr.f32.gmra.mxu0 %v4272
  %v4402 = vpop.f32.mrf.mxu0
  %v4403 = vadd.f32 %v4218, %v4402
  %v4404 = vpop.f32.mrf.mxu0
  %4405 = vmatprep.mubr.f32.mxu0 0.0
  %4406 = vmatmul.mubr.f32.gmra.mxu0 %v4275
  %v4407 = vpop.f32.mrf.mxu0
  %v4408 = vadd.f32 %v4223, %v4407
  %v4409 = vpop.f32.mrf.mxu0
  %4410 = vmatprep.mubr.f32.mxu0 0.0
  %4411 = vmatmul.mubr.f32.gmra.mxu0 %v4278
  %v4412 = vpop.f32.mrf.mxu0
  %v4413 = vadd.f32 %v4228, %v4412
  %v4414 = vpop.f32.mrf.mxu0
  %4415 = vmatprep.mubr.f32.mxu0 0.0
  %4416 = vmatmul.mubr.f32.gmra.mxu0 %v4281
  %v4417 = vpop.f32.mrf.mxu0
  %v4418 = vadd.f32 %v4233, %v4417
  %v4419 = vpop.f32.mrf.mxu0
  %4420 = vmatprep.mubr.f32.mxu0 0.0
  %4421 = vmatmul.mubr.f32.gmra.mxu0 %v4284
  %v4422 = vpop.f32.mrf.mxu0
  %v4423 = vadd.f32 %v4238, %v4422
  %v4424 = vpop.f32.mrf.mxu0
  %4425 = vdwg.mxu0
  %s4426 = scalar_lea.vmem [#allocation3], 2
  %v4427 = vld [vmem:[%s4426] ss:$2 sm:$0xff]
  %s4428 = scalar_lea.vmem [#allocation3], 18
  %v4429 = vld [vmem:[%s4428] ss:$2 sm:$0xff]
  %s4430 = scalar_lea.vmem [#allocation3], 34
  %v4431 = vld [vmem:[%s4430] ss:$2 sm:$0xff]
  %s4432 = scalar_lea.vmem [#allocation3], 50
  %v4433 = vld [vmem:[%s4432] ss:$2 sm:$0xff]
  %s4434 = scalar_lea.vmem [#allocation3], 66
  %v4435 = vld [vmem:[%s4434] ss:$2 sm:$0xff]
  %s4436 = scalar_lea.vmem [#allocation3], 82
  %v4437 = vld [vmem:[%s4436] ss:$2 sm:$0xff]
  %s4438 = scalar_lea.vmem [#allocation3], 98
  %v4439 = vld [vmem:[%s4438] ss:$2 sm:$0xff]
  %s4440 = scalar_lea.vmem [#allocation3], 114
  %v4441 = vld [vmem:[%s4440] ss:$2 sm:$0xff]
  %s4442 = scalar_lea.vmem [#allocation3], 130
  %v4443 = vld [vmem:[%s4442] ss:$2 sm:$0xff]
  %s4444 = scalar_lea.vmem [#allocation3], 146
  %v4445 = vld [vmem:[%s4444] ss:$2 sm:$0xff]
  %s4446 = scalar_lea.vmem [#allocation3], 162
  %v4447 = vld [vmem:[%s4446] ss:$2 sm:$0xff]
  %s4448 = scalar_lea.vmem [#allocation3], 178
  %v4449 = vld [vmem:[%s4448] ss:$2 sm:$0xff]
  %s4450 = scalar_lea.vmem [#allocation3], 194
  %v4451 = vld [vmem:[%s4450] ss:$2 sm:$0xff]
  %s4452 = scalar_lea.vmem [#allocation3], 210
  %v4453 = vld [vmem:[%s4452] ss:$2 sm:$0xff]
  %s4454 = scalar_lea.vmem [#allocation3], 226
  %v4455 = vld [vmem:[%s4454] ss:$2 sm:$0xff]
  %s4456 = scalar_lea.vmem %s4, 64
  %v4457 = vld [vmem:[%s4456] sm:$0xff]
  %v4458 = vld [vmem:[%s4456 + $0x8] sm:$0xff]
  %v4459 = vld [vmem:[%s4456 + $0x10] sm:$0xff]
  %v4460 = vld [vmem:[%s4456 + $0x18] sm:$0xff]
  %v4462 = vsel %vm903, %v4427, 0
  %v4465 = vsel %vm903, %v4429, 0
  %v4468 = vsel %vm903, %v4431, 0
  %v4471 = vsel %vm903, %v4433, 0
  %v4474 = vsel %vm903, %v4435, 0
  %v4477 = vsel %vm903, %v4437, 0
  %v4480 = vsel %vm903, %v4439, 0
  %v4483 = vsel %vm903, %v4441, 0
  %v4486 = vsel %vm903, %v4443, 0
  %v4489 = vsel %vm903, %v4445, 0
  %v4492 = vsel %vm903, %v4447, 0
  %v4495 = vsel %vm903, %v4449, 0
  %v4498 = vsel %vm903, %v4451, 0
  %v4501 = vsel %vm903, %v4453, 0
  %v4504 = vsel %vm903, %v4455, 0
  %4506 = vmatprep.subr.mxu0 0.0
  %4507 = vmatpush1.msra.mxu0 0.0
  %4508 = vmatprep.subr.mxu0 0.0
  %4509 = vmatpush1.msra.mxu0 0.0
  %4510 = vmatprep.subr.mxu0 0.0
  %4511 = vmatpush1.msra.mxu0 0.0
  %4512 = vmatprep.subr.mxu0 0.0
  %4513 = vmatpush1.msra.mxu0 0.0
  %4514 = vmatprep.subr.mxu0 0.0
  %4515 = vmatpush1.msra.mxu0 0.0
  %4516 = vmatprep.subr.mxu0 0.0
  %4517 = vmatpush1.msra.mxu0 0.0
  %4518 = vmatprep.subr.mxu0 0.0
  %4519 = vmatpush1.msra.mxu0 0.0
  %4520 = vmatprep.subr.mxu0 0.0
  %4521 = vmatpush1.msra.mxu0 0.0
  %4522 = vmatprep.subr.mxu0 0.0
  %4523 = vmatpush1.msra.mxu0 0.0
  %4524 = vmatprep.subr.mxu0 0.0
  %4525 = vmatpush1.msra.mxu0 0.0
  %4526 = vmatprep.subr.mxu0 0.0
  %4527 = vmatpush1.msra.mxu0 0.0
  %4528 = vmatprep.subr.mxu0 0.0
  %4529 = vmatpush1.msra.mxu0 0.0
  %4530 = vmatprep.subr.mxu0 0.0
  %4531 = vmatpush1.msra.mxu0 %v4460
  %4532 = vmatprep.subr.mxu0 0.0
  %4533 = vmatpush1.msra.mxu0 %v4459
  %4534 = vmatprep.subr.mxu0 0.0
  %4535 = vmatpush1.msra.mxu0 %v4458
  %4536 = vmatprep.subr.mxu0 0.0
  %4537 = vmatpush1.msra.mxu0 %v4457
  %4538 = vmatprep.subr.mxu0 0.0
  %4539 = vmatpush2.msra.mxu0 0.0
  %4540 = vmatprep.subr.mxu0 0.0
  %4541 = vmatpush2.msra.mxu0 0.0
  %4542 = vmatprep.subr.mxu0 0.0
  %4543 = vmatpush2.msra.mxu0 0.0
  %4544 = vmatprep.subr.mxu0 0.0
  %4545 = vmatpush2.msra.mxu0 0.0
  %4546 = vmatprep.subr.mxu0 0.0
  %4547 = vmatpush2.msra.mxu0 0.0
  %4548 = vmatprep.subr.mxu0 0.0
  %4549 = vmatpush2.msra.mxu0 0.0
  %4550 = vmatprep.subr.mxu0 0.0
  %4551 = vmatpush2.msra.mxu0 0.0
  %4552 = vmatprep.subr.mxu0 0.0
  %4553 = vmatpush2.msra.mxu0 0.0
  %4554 = vmatprep.subr.mxu0 0.0
  %4555 = vmatpush2.msra.mxu0 0.0
  %4556 = vmatprep.subr.mxu0 0.0
  %4557 = vmatpush2.msra.mxu0 0.0
  %4558 = vmatprep.subr.mxu0 0.0
  %4559 = vmatpush2.msra.mxu0 0.0
  %4560 = vmatprep.subr.mxu0 0.0
  %4561 = vmatpush2.msra.mxu0 0.0
  %4562 = vmatprep.subr.mxu0 0.0
  %4563 = vmatpush2.msra.mxu0 0.0
  %4564 = vmatprep.subr.mxu0 0.0
  %4565 = vmatpush2.msra.mxu0 0.0
  %4566 = vmatprep.subr.mxu0 0.0
  %4567 = vmatpush2.msra.mxu0 0.0
  %4568 = vmatprep.subr.mxu0 0.0
  %4569 = vmatpush2.msra.mxu0 0.0
  %4570 = vmatprep.mubr.f32.mxu0 0.0
  %4571 = vmatmul.mubr.f32.gmra.mxu0 %v4462
  %v4572 = vpop.f32.mrf.mxu0
  %v4573 = vadd.f32 0.0, %v4572
  %v4574 = vpop.f32.mrf.mxu0
  %4575 = vmatprep.mubr.f32.mxu0 0.0
  %4576 = vmatmul.mubr.f32.gmra.mxu0 %v4465
  %v4577 = vpop.f32.mrf.mxu0
  %v4578 = vadd.f32 0.0, %v4577
  %v4579 = vpop.f32.mrf.mxu0
  %4580 = vmatprep.mubr.f32.mxu0 0.0
  %4581 = vmatmul.mubr.f32.gmra.mxu0 %v4468
  %v4582 = vpop.f32.mrf.mxu0
  %v4583 = vadd.f32 0.0, %v4582
  %v4584 = vpop.f32.mrf.mxu0
  %4585 = vmatprep.mubr.f32.mxu0 0.0
  %4586 = vmatmul.mubr.f32.gmra.mxu0 %v4471
  %v4587 = vpop.f32.mrf.mxu0
  %v4588 = vadd.f32 0.0, %v4587
  %v4589 = vpop.f32.mrf.mxu0
  %4590 = vmatprep.mubr.f32.mxu0 0.0
  %4591 = vmatmul.mubr.f32.gmra.mxu0 %v4474
  %v4592 = vpop.f32.mrf.mxu0
  %v4593 = vadd.f32 0.0, %v4592
  %v4594 = vpop.f32.mrf.mxu0
  %4595 = vmatprep.mubr.f32.mxu0 0.0
  %4596 = vmatmul.mubr.f32.gmra.mxu0 %v4477
  %v4597 = vpop.f32.mrf.mxu0
  %v4598 = vadd.f32 0.0, %v4597
  %v4599 = vpop.f32.mrf.mxu0
  %4600 = vmatprep.mubr.f32.mxu0 0.0
  %4601 = vmatmul.mubr.f32.gmra.mxu0 %v4480
  %v4602 = vpop.f32.mrf.mxu0
  %v4603 = vadd.f32 0.0, %v4602
  %v4604 = vpop.f32.mrf.mxu0
  %4605 = vmatprep.mubr.f32.mxu0 0.0
  %4606 = vmatmul.mubr.f32.gmra.mxu0 %v4483
  %v4607 = vpop.f32.mrf.mxu0
  %v4608 = vadd.f32 0.0, %v4607
  %v4609 = vpop.f32.mrf.mxu0
  %4610 = vmatprep.mubr.f32.mxu0 0.0
  %4611 = vmatmul.mubr.f32.gmra.mxu0 %v4486
  %v4612 = vpop.f32.mrf.mxu0
  %v4613 = vadd.f32 0.0, %v4612
  %v4614 = vpop.f32.mrf.mxu0
  %4615 = vmatprep.mubr.f32.mxu0 0.0
  %4616 = vmatmul.mubr.f32.gmra.mxu0 %v4489
  %v4617 = vpop.f32.mrf.mxu0
  %v4618 = vadd.f32 0.0, %v4617
  %v4619 = vpop.f32.mrf.mxu0
  %4620 = vmatprep.mubr.f32.mxu0 0.0
  %4621 = vmatmul.mubr.f32.gmra.mxu0 %v4492
  %v4622 = vpop.f32.mrf.mxu0
  %v4623 = vadd.f32 0.0, %v4622
  %v4624 = vpop.f32.mrf.mxu0
  %4625 = vmatprep.mubr.f32.mxu0 0.0
  %4626 = vmatmul.mubr.f32.gmra.mxu0 %v4495
  %v4627 = vpop.f32.mrf.mxu0
  %v4628 = vadd.f32 0.0, %v4627
  %v4629 = vpop.f32.mrf.mxu0
  %4630 = vmatprep.mubr.f32.mxu0 0.0
  %4631 = vmatmul.mubr.f32.gmra.mxu0 %v4498
  %v4632 = vpop.f32.mrf.mxu0
  %v4633 = vadd.f32 0.0, %v4632
  %v4634 = vpop.f32.mrf.mxu0
  %4635 = vmatprep.mubr.f32.mxu0 0.0
  %4636 = vmatmul.mubr.f32.gmra.mxu0 %v4501
  %v4637 = vpop.f32.mrf.mxu0
  %v4638 = vadd.f32 0.0, %v4637
  %v4639 = vpop.f32.mrf.mxu0
  %4640 = vmatprep.mubr.f32.mxu0 0.0
  %4641 = vmatmul.mubr.f32.gmra.mxu0 %v4504
  %v4642 = vpop.f32.mrf.mxu0
  %v4643 = vadd.f32 0.0, %v4642
  %v4644 = vpop.f32.mrf.mxu0
  %4645 = vdwg.mxu0
  %v4646 = vadd.f32 %v4353, %v4573
  %v4647 = vadd.f32 %v4358, %v4578
  %v4648 = vadd.f32 %v4363, %v4583
  %v4649 = vadd.f32 %v4368, %v4588
  %v4650 = vadd.f32 %v4373, %v4593
  %v4651 = vadd.f32 %v4378, %v4598
  %v4652 = vadd.f32 %v4383, %v4603
  %v4653 = vadd.f32 %v4388, %v4608
  %v4654 = vadd.f32 %v4393, %v4613
  %v4655 = vadd.f32 %v4398, %v4618
  %v4656 = vadd.f32 %v4403, %v4623
  %v4657 = vadd.f32 %v4408, %v4628
  %v4658 = vadd.f32 %v4413, %v4633
  %v4659 = vadd.f32 %v4418, %v4638
  %v4660 = vadd.f32 %v4423, %v4643
  %s4661 = scalar_lea.vmem [#allocation3], 3
  %v4662 = vld [vmem:[%s4661] ss:$2 sm:$0xff]
  %s4663 = scalar_lea.vmem [#allocation3], 19
  %v4664 = vld [vmem:[%s4663] ss:$2 sm:$0xff]
  %s4665 = scalar_lea.vmem [#allocation3], 35
  %v4666 = vld [vmem:[%s4665] ss:$2 sm:$0xff]
  %s4667 = scalar_lea.vmem [#allocation3], 51
  %v4668 = vld [vmem:[%s4667] ss:$2 sm:$0xff]
  %s4669 = scalar_lea.vmem [#allocation3], 67
  %v4670 = vld [vmem:[%s4669] ss:$2 sm:$0xff]
  %s4671 = scalar_lea.vmem [#allocation3], 83
  %v4672 = vld [vmem:[%s4671] ss:$2 sm:$0xff]
  %s4673 = scalar_lea.vmem [#allocation3], 99
  %v4674 = vld [vmem:[%s4673] ss:$2 sm:$0xff]
  %s4675 = scalar_lea.vmem [#allocation3], 115
  %v4676 = vld [vmem:[%s4675] ss:$2 sm:$0xff]
  %s4677 = scalar_lea.vmem [#allocation3], 131
  %v4678 = vld [vmem:[%s4677] ss:$2 sm:$0xff]
  %s4679 = scalar_lea.vmem [#allocation3], 147
  %v4680 = vld [vmem:[%s4679] ss:$2 sm:$0xff]
  %s4681 = scalar_lea.vmem [#allocation3], 163
  %v4682 = vld [vmem:[%s4681] ss:$2 sm:$0xff]
  %s4683 = scalar_lea.vmem [#allocation3], 179
  %v4684 = vld [vmem:[%s4683] ss:$2 sm:$0xff]
  %s4685 = scalar_lea.vmem [#allocation3], 195
  %v4686 = vld [vmem:[%s4685] ss:$2 sm:$0xff]
  %s4687 = scalar_lea.vmem [#allocation3], 211
  %v4688 = vld [vmem:[%s4687] ss:$2 sm:$0xff]
  %s4689 = scalar_lea.vmem [#allocation3], 227
  %v4690 = vld [vmem:[%s4689] ss:$2 sm:$0xff]
  %s4691 = scalar_lea.vmem %s4, 96
  %v4692 = vld [vmem:[%s4691] sm:$0xff]
  %v4693 = vld [vmem:[%s4691 + $0x8] sm:$0xff]
  %v4694 = vld [vmem:[%s4691 + $0x10] sm:$0xff]
  %v4695 = vld [vmem:[%s4691 + $0x18] sm:$0xff]
  %v4697 = vsel %vm903, %v4662, 0
  %v4700 = vsel %vm903, %v4664, 0
  %v4703 = vsel %vm903, %v4666, 0
  %v4706 = vsel %vm903, %v4668, 0
  %v4709 = vsel %vm903, %v4670, 0
  %v4712 = vsel %vm903, %v4672, 0
  %v4715 = vsel %vm903, %v4674, 0
  %v4718 = vsel %vm903, %v4676, 0
  %v4721 = vsel %vm903, %v4678, 0
  %v4724 = vsel %vm903, %v4680, 0
  %v4727 = vsel %vm903, %v4682, 0
  %v4730 = vsel %vm903, %v4684, 0
  %v4733 = vsel %vm903, %v4686, 0
  %v4736 = vsel %vm903, %v4688, 0
  %v4739 = vsel %vm903, %v4690, 0
  %4741 = vmatprep.subr.mxu0 0.0
  %4742 = vmatpush1.msra.mxu0 0.0
  %4743 = vmatprep.subr.mxu0 0.0
  %4744 = vmatpush1.msra.mxu0 0.0
  %4745 = vmatprep.subr.mxu0 0.0
  %4746 = vmatpush1.msra.mxu0 0.0
  %4747 = vmatprep.subr.mxu0 0.0
  %4748 = vmatpush1.msra.mxu0 0.0
  %4749 = vmatprep.subr.mxu0 0.0
  %4750 = vmatpush1.msra.mxu0 0.0
  %4751 = vmatprep.subr.mxu0 0.0
  %4752 = vmatpush1.msra.mxu0 0.0
  %4753 = vmatprep.subr.mxu0 0.0
  %4754 = vmatpush1.msra.mxu0 0.0
  %4755 = vmatprep.subr.mxu0 0.0
  %4756 = vmatpush1.msra.mxu0 0.0
  %4757 = vmatprep.subr.mxu0 0.0
  %4758 = vmatpush1.msra.mxu0 0.0
  %4759 = vmatprep.subr.mxu0 0.0
  %4760 = vmatpush1.msra.mxu0 0.0
  %4761 = vmatprep.subr.mxu0 0.0
  %4762 = vmatpush1.msra.mxu0 0.0
  %4763 = vmatprep.subr.mxu0 0.0
  %4764 = vmatpush1.msra.mxu0 0.0
  %4765 = vmatprep.subr.mxu0 0.0
  %4766 = vmatpush1.msra.mxu0 %v4695
  %4767 = vmatprep.subr.mxu0 0.0
  %4768 = vmatpush1.msra.mxu0 %v4694
  %4769 = vmatprep.subr.mxu0 0.0
  %4770 = vmatpush1.msra.mxu0 %v4693
  %4771 = vmatprep.subr.mxu0 0.0
  %4772 = vmatpush1.msra.mxu0 %v4692
  %4773 = vmatprep.subr.mxu0 0.0
  %4774 = vmatpush2.msra.mxu0 0.0
  %4775 = vmatprep.subr.mxu0 0.0
  %4776 = vmatpush2.msra.mxu0 0.0
  %4777 = vmatprep.subr.mxu0 0.0
  %4778 = vmatpush2.msra.mxu0 0.0
  %4779 = vmatprep.subr.mxu0 0.0
  %4780 = vmatpush2.msra.mxu0 0.0
  %4781 = vmatprep.subr.mxu0 0.0
  %4782 = vmatpush2.msra.mxu0 0.0
  %4783 = vmatprep.subr.mxu0 0.0
  %4784 = vmatpush2.msra.mxu0 0.0
  %4785 = vmatprep.subr.mxu0 0.0
  %4786 = vmatpush2.msra.mxu0 0.0
  %4787 = vmatprep.subr.mxu0 0.0
  %4788 = vmatpush2.msra.mxu0 0.0
  %4789 = vmatprep.subr.mxu0 0.0
  %4790 = vmatpush2.msra.mxu0 0.0
  %4791 = vmatprep.subr.mxu0 0.0
  %4792 = vmatpush2.msra.mxu0 0.0
  %4793 = vmatprep.subr.mxu0 0.0
  %4794 = vmatpush2.msra.mxu0 0.0
  %4795 = vmatprep.subr.mxu0 0.0
  %4796 = vmatpush2.msra.mxu0 0.0
  %4797 = vmatprep.subr.mxu0 0.0
  %4798 = vmatpush2.msra.mxu0 0.0
  %4799 = vmatprep.subr.mxu0 0.0
  %4800 = vmatpush2.msra.mxu0 0.0
  %4801 = vmatprep.subr.mxu0 0.0
  %4802 = vmatpush2.msra.mxu0 0.0
  %4803 = vmatprep.subr.mxu0 0.0
  %4804 = vmatpush2.msra.mxu0 0.0
  %4805 = vmatprep.mubr.f32.mxu0 0.0
  %4806 = vmatmul.mubr.f32.gmra.mxu0 %v4697
  %v4807 = vpop.f32.mrf.mxu0
  %v4808 = vadd.f32 0.0, %v4807
  %v4809 = vpop.f32.mrf.mxu0
  %4810 = vmatprep.mubr.f32.mxu0 0.0
  %4811 = vmatmul.mubr.f32.gmra.mxu0 %v4700
  %v4812 = vpop.f32.mrf.mxu0
  %v4813 = vadd.f32 0.0, %v4812
  %v4814 = vpop.f32.mrf.mxu0
  %4815 = vmatprep.mubr.f32.mxu0 0.0
  %4816 = vmatmul.mubr.f32.gmra.mxu0 %v4703
  %v4817 = vpop.f32.mrf.mxu0
  %v4818 = vadd.f32 0.0, %v4817
  %v4819 = vpop.f32.mrf.mxu0
  %4820 = vmatprep.mubr.f32.mxu0 0.0
  %4821 = vmatmul.mubr.f32.gmra.mxu0 %v4706
  %v4822 = vpop.f32.mrf.mxu0
  %v4823 = vadd.f32 0.0, %v4822
  %v4824 = vpop.f32.mrf.mxu0
  %4825 = vmatprep.mubr.f32.mxu0 0.0
  %4826 = vmatmul.mubr.f32.gmra.mxu0 %v4709
  %v4827 = vpop.f32.mrf.mxu0
  %v4828 = vadd.f32 0.0, %v4827
  %v4829 = vpop.f32.mrf.mxu0
  %4830 = vmatprep.mubr.f32.mxu0 0.0
  %4831 = vmatmul.mubr.f32.gmra.mxu0 %v4712
  %v4832 = vpop.f32.mrf.mxu0
  %v4833 = vadd.f32 0.0, %v4832
  %v4834 = vpop.f32.mrf.mxu0
  %4835 = vmatprep.mubr.f32.mxu0 0.0
  %4836 = vmatmul.mubr.f32.gmra.mxu0 %v4715
  %v4837 = vpop.f32.mrf.mxu0
  %v4838 = vadd.f32 0.0, %v4837
  %v4839 = vpop.f32.mrf.mxu0
  %4840 = vmatprep.mubr.f32.mxu0 0.0
  %4841 = vmatmul.mubr.f32.gmra.mxu0 %v4718
  %v4842 = vpop.f32.mrf.mxu0
  %v4843 = vadd.f32 0.0, %v4842
  %v4844 = vpop.f32.mrf.mxu0
  %4845 = vmatprep.mubr.f32.mxu0 0.0
  %4846 = vmatmul.mubr.f32.gmra.mxu0 %v4721
  %v4847 = vpop.f32.mrf.mxu0
  %v4848 = vadd.f32 0.0, %v4847
  %v4849 = vpop.f32.mrf.mxu0
  %4850 = vmatprep.mubr.f32.mxu0 0.0
  %4851 = vmatmul.mubr.f32.gmra.mxu0 %v4724
  %v4852 = vpop.f32.mrf.mxu0
  %v4853 = vadd.f32 0.0, %v4852
  %v4854 = vpop.f32.mrf.mxu0
  %4855 = vmatprep.mubr.f32.mxu0 0.0
  %4856 = vmatmul.mubr.f32.gmra.mxu0 %v4727
  %v4857 = vpop.f32.mrf.mxu0
  %v4858 = vadd.f32 0.0, %v4857
  %v4859 = vpop.f32.mrf.mxu0
  %4860 = vmatprep.mubr.f32.mxu0 0.0
  %4861 = vmatmul.mubr.f32.gmra.mxu0 %v4730
  %v4862 = vpop.f32.mrf.mxu0
  %v4863 = vadd.f32 0.0, %v4862
  %v4864 = vpop.f32.mrf.mxu0
  %4865 = vmatprep.mubr.f32.mxu0 0.0
  %4866 = vmatmul.mubr.f32.gmra.mxu0 %v4733
  %v4867 = vpop.f32.mrf.mxu0
  %v4868 = vadd.f32 0.0, %v4867
  %v4869 = vpop.f32.mrf.mxu0
  %4870 = vmatprep.mubr.f32.mxu0 0.0
  %4871 = vmatmul.mubr.f32.gmra.mxu0 %v4736
  %v4872 = vpop.f32.mrf.mxu0
  %v4873 = vadd.f32 0.0, %v4872
  %v4874 = vpop.f32.mrf.mxu0
  %4875 = vmatprep.mubr.f32.mxu0 0.0
  %4876 = vmatmul.mubr.f32.gmra.mxu0 %v4739
  %v4877 = vpop.f32.mrf.mxu0
  %v4878 = vadd.f32 0.0, %v4877
  %v4879 = vpop.f32.mrf.mxu0
  %4880 = vdwg.mxu0
  %v4881 = vadd.f32 %v4646, %v4808
  %v4882 = vadd.f32 %v4647, %v4813
  %v4883 = vadd.f32 %v4648, %v4818
  %v4884 = vadd.f32 %v4649, %v4823
  %v4885 = vadd.f32 %v4650, %v4828
  %v4886 = vadd.f32 %v4651, %v4833
  %v4887 = vadd.f32 %v4652, %v4838
  %v4888 = vadd.f32 %v4653, %v4843
  %v4889 = vadd.f32 %v4654, %v4848
  %v4890 = vadd.f32 %v4655, %v4853
  %v4891 = vadd.f32 %v4656, %v4858
  %v4892 = vadd.f32 %v4657, %v4863
  %v4893 = vadd.f32 %v4658, %v4868
  %v4894 = vadd.f32 %v4659, %v4873
  %v4895 = vadd.f32 %v4660, %v4878
  %s4896 = scalar_lea.vmem [#allocation3], 4
  %v4897 = vld [vmem:[%s4896] ss:$2 sm:$0xff]
  %s4898 = scalar_lea.vmem [#allocation3], 20
  %v4899 = vld [vmem:[%s4898] ss:$2 sm:$0xff]
  %s4900 = scalar_lea.vmem [#allocation3], 36
  %v4901 = vld [vmem:[%s4900] ss:$2 sm:$0xff]
  %s4902 = scalar_lea.vmem [#allocation3], 52
  %v4903 = vld [vmem:[%s4902] ss:$2 sm:$0xff]
  %s4904 = scalar_lea.vmem [#allocation3], 68
  %v4905 = vld [vmem:[%s4904] ss:$2 sm:$0xff]
  %s4906 = scalar_lea.vmem [#allocation3], 84
  %v4907 = vld [vmem:[%s4906] ss:$2 sm:$0xff]
  %s4908 = scalar_lea.vmem [#allocation3], 100
  %v4909 = vld [vmem:[%s4908] ss:$2 sm:$0xff]
  %s4910 = scalar_lea.vmem [#allocation3], 116
  %v4911 = vld [vmem:[%s4910] ss:$2 sm:$0xff]
  %s4912 = scalar_lea.vmem [#allocation3], 132
  %v4913 = vld [vmem:[%s4912] ss:$2 sm:$0xff]
  %s4914 = scalar_lea.vmem [#allocation3], 148
  %v4915 = vld [vmem:[%s4914] ss:$2 sm:$0xff]
  %s4916 = scalar_lea.vmem [#allocation3], 164
  %v4917 = vld [vmem:[%s4916] ss:$2 sm:$0xff]
  %s4918 = scalar_lea.vmem [#allocation3], 180
  %v4919 = vld [vmem:[%s4918] ss:$2 sm:$0xff]
  %s4920 = scalar_lea.vmem [#allocation3], 196
  %v4921 = vld [vmem:[%s4920] ss:$2 sm:$0xff]
  %s4922 = scalar_lea.vmem [#allocation3], 212
  %v4923 = vld [vmem:[%s4922] ss:$2 sm:$0xff]
  %s4924 = scalar_lea.vmem [#allocation3], 228
  %v4925 = vld [vmem:[%s4924] ss:$2 sm:$0xff]
  %s4926 = scalar_lea.vmem %s4, 128
  %v4927 = vld [vmem:[%s4926] sm:$0xff]
  %v4928 = vld [vmem:[%s4926 + $0x8] sm:$0xff]
  %v4929 = vld [vmem:[%s4926 + $0x10] sm:$0xff]
  %v4930 = vld [vmem:[%s4926 + $0x18] sm:$0xff]
  %v4932 = vsel %vm903, %v4897, 0
  %v4935 = vsel %vm903, %v4899, 0
  %v4938 = vsel %vm903, %v4901, 0
  %v4941 = vsel %vm903, %v4903, 0
  %v4944 = vsel %vm903, %v4905, 0
  %v4947 = vsel %vm903, %v4907, 0
  %v4950 = vsel %vm903, %v4909, 0
  %v4953 = vsel %vm903, %v4911, 0
  %v4956 = vsel %vm903, %v4913, 0
  %v4959 = vsel %vm903, %v4915, 0
  %v4962 = vsel %vm903, %v4917, 0
  %v4965 = vsel %vm903, %v4919, 0
  %v4968 = vsel %vm903, %v4921, 0
  %v4971 = vsel %vm903, %v4923, 0
  %v4974 = vsel %vm903, %v4925, 0
  %4976 = vmatprep.subr.mxu0 0.0
  %4977 = vmatpush1.msra.mxu0 0.0
  %4978 = vmatprep.subr.mxu0 0.0
  %4979 = vmatpush1.msra.mxu0 0.0
  %4980 = vmatprep.subr.mxu0 0.0
  %4981 = vmatpush1.msra.mxu0 0.0
  %4982 = vmatprep.subr.mxu0 0.0
  %4983 = vmatpush1.msra.mxu0 0.0
  %4984 = vmatprep.subr.mxu0 0.0
  %4985 = vmatpush1.msra.mxu0 0.0
  %4986 = vmatprep.subr.mxu0 0.0
  %4987 = vmatpush1.msra.mxu0 0.0
  %4988 = vmatprep.subr.mxu0 0.0
  %4989 = vmatpush1.msra.mxu0 0.0
  %4990 = vmatprep.subr.mxu0 0.0
  %4991 = vmatpush1.msra.mxu0 0.0
  %4992 = vmatprep.subr.mxu0 0.0
  %4993 = vmatpush1.msra.mxu0 0.0
  %4994 = vmatprep.subr.mxu0 0.0
  %4995 = vmatpush1.msra.mxu0 0.0
  %4996 = vmatprep.subr.mxu0 0.0
  %4997 = vmatpush1.msra.mxu0 0.0
  %4998 = vmatprep.subr.mxu0 0.0
  %4999 = vmatpush1.msra.mxu0 0.0
  %5000 = vmatprep.subr.mxu0 0.0
  %5001 = vmatpush1.msra.mxu0 %v4930
  %5002 = vmatprep.subr.mxu0 0.0
  %5003 = vmatpush1.msra.mxu0 %v4929
  %5004 = vmatprep.subr.mxu0 0.0
  %5005 = vmatpush1.msra.mxu0 %v4928
  %5006 = vmatprep.subr.mxu0 0.0
  %5007 = vmatpush1.msra.mxu0 %v4927
  %5008 = vmatprep.subr.mxu0 0.0
  %5009 = vmatpush2.msra.mxu0 0.0
  %5010 = vmatprep.subr.mxu0 0.0
  %5011 = vmatpush2.msra.mxu0 0.0
  %5012 = vmatprep.subr.mxu0 0.0
  %5013 = vmatpush2.msra.mxu0 0.0
  %5014 = vmatprep.subr.mxu0 0.0
  %5015 = vmatpush2.msra.mxu0 0.0
  %5016 = vmatprep.subr.mxu0 0.0
  %5017 = vmatpush2.msra.mxu0 0.0
  %5018 = vmatprep.subr.mxu0 0.0
  %5019 = vmatpush2.msra.mxu0 0.0
  %5020 = vmatprep.subr.mxu0 0.0
  %5021 = vmatpush2.msra.mxu0 0.0
  %5022 = vmatprep.subr.mxu0 0.0
  %5023 = vmatpush2.msra.mxu0 0.0
  %5024 = vmatprep.subr.mxu0 0.0
  %5025 = vmatpush2.msra.mxu0 0.0
  %5026 = vmatprep.subr.mxu0 0.0
  %5027 = vmatpush2.msra.mxu0 0.0
  %5028 = vmatprep.subr.mxu0 0.0
  %5029 = vmatpush2.msra.mxu0 0.0
  %5030 = vmatprep.subr.mxu0 0.0
  %5031 = vmatpush2.msra.mxu0 0.0
  %5032 = vmatprep.subr.mxu0 0.0
  %5033 = vmatpush2.msra.mxu0 0.0
  %5034 = vmatprep.subr.mxu0 0.0
  %5035 = vmatpush2.msra.mxu0 0.0
  %5036 = vmatprep.subr.mxu0 0.0
  %5037 = vmatpush2.msra.mxu0 0.0
  %5038 = vmatprep.subr.mxu0 0.0
  %5039 = vmatpush2.msra.mxu0 0.0
  %5040 = vmatprep.mubr.f32.mxu0 0.0
  %5041 = vmatmul.mubr.f32.gmra.mxu0 %v4932
  %v5042 = vpop.f32.mrf.mxu0
  %v5043 = vadd.f32 0.0, %v5042
  %v5044 = vpop.f32.mrf.mxu0
  %5045 = vmatprep.mubr.f32.mxu0 0.0
  %5046 = vmatmul.mubr.f32.gmra.mxu0 %v4935
  %v5047 = vpop.f32.mrf.mxu0
  %v5048 = vadd.f32 0.0, %v5047
  %v5049 = vpop.f32.mrf.mxu0
  %5050 = vmatprep.mubr.f32.mxu0 0.0
  %5051 = vmatmul.mubr.f32.gmra.mxu0 %v4938
  %v5052 = vpop.f32.mrf.mxu0
  %v5053 = vadd.f32 0.0, %v5052
  %v5054 = vpop.f32.mrf.mxu0
  %5055 = vmatprep.mubr.f32.mxu0 0.0
  %5056 = vmatmul.mubr.f32.gmra.mxu0 %v4941
  %v5057 = vpop.f32.mrf.mxu0
  %v5058 = vadd.f32 0.0, %v5057
  %v5059 = vpop.f32.mrf.mxu0
  %5060 = vmatprep.mubr.f32.mxu0 0.0
  %5061 = vmatmul.mubr.f32.gmra.mxu0 %v4944
  %v5062 = vpop.f32.mrf.mxu0
  %v5063 = vadd.f32 0.0, %v5062
  %v5064 = vpop.f32.mrf.mxu0
  %5065 = vmatprep.mubr.f32.mxu0 0.0
  %5066 = vmatmul.mubr.f32.gmra.mxu0 %v4947
  %v5067 = vpop.f32.mrf.mxu0
  %v5068 = vadd.f32 0.0, %v5067
  %v5069 = vpop.f32.mrf.mxu0
  %5070 = vmatprep.mubr.f32.mxu0 0.0
  %5071 = vmatmul.mubr.f32.gmra.mxu0 %v4950
  %v5072 = vpop.f32.mrf.mxu0
  %v5073 = vadd.f32 0.0, %v5072
  %v5074 = vpop.f32.mrf.mxu0
  %5075 = vmatprep.mubr.f32.mxu0 0.0
  %5076 = vmatmul.mubr.f32.gmra.mxu0 %v4953
  %v5077 = vpop.f32.mrf.mxu0
  %v5078 = vadd.f32 0.0, %v5077
  %v5079 = vpop.f32.mrf.mxu0
  %5080 = vmatprep.mubr.f32.mxu0 0.0
  %5081 = vmatmul.mubr.f32.gmra.mxu0 %v4956
  %v5082 = vpop.f32.mrf.mxu0
  %v5083 = vadd.f32 0.0, %v5082
  %v5084 = vpop.f32.mrf.mxu0
  %5085 = vmatprep.mubr.f32.mxu0 0.0
  %5086 = vmatmul.mubr.f32.gmra.mxu0 %v4959
  %v5087 = vpop.f32.mrf.mxu0
  %v5088 = vadd.f32 0.0, %v5087
  %v5089 = vpop.f32.mrf.mxu0
  %5090 = vmatprep.mubr.f32.mxu0 0.0
  %5091 = vmatmul.mubr.f32.gmra.mxu0 %v4962
  %v5092 = vpop.f32.mrf.mxu0
  %v5093 = vadd.f32 0.0, %v5092
  %v5094 = vpop.f32.mrf.mxu0
  %5095 = vmatprep.mubr.f32.mxu0 0.0
  %5096 = vmatmul.mubr.f32.gmra.mxu0 %v4965
  %v5097 = vpop.f32.mrf.mxu0
  %v5098 = vadd.f32 0.0, %v5097
  %v5099 = vpop.f32.mrf.mxu0
  %5100 = vmatprep.mubr.f32.mxu0 0.0
  %5101 = vmatmul.mubr.f32.gmra.mxu0 %v4968
  %v5102 = vpop.f32.mrf.mxu0
  %v5103 = vadd.f32 0.0, %v5102
  %v5104 = vpop.f32.mrf.mxu0
  %5105 = vmatprep.mubr.f32.mxu0 0.0
  %5106 = vmatmul.mubr.f32.gmra.mxu0 %v4971
  %v5107 = vpop.f32.mrf.mxu0
  %v5108 = vadd.f32 0.0, %v5107
  %v5109 = vpop.f32.mrf.mxu0
  %5110 = vmatprep.mubr.f32.mxu0 0.0
  %5111 = vmatmul.mubr.f32.gmra.mxu0 %v4974
  %v5112 = vpop.f32.mrf.mxu0
  %v5113 = vadd.f32 0.0, %v5112
  %v5114 = vpop.f32.mrf.mxu0
  %5115 = vdwg.mxu0
  %v5116 = vadd.f32 %v4881, %v5043
  %v5117 = vadd.f32 %v4882, %v5048
  %v5118 = vadd.f32 %v4883, %v5053
  %v5119 = vadd.f32 %v4884, %v5058
  %v5120 = vadd.f32 %v4885, %v5063
  %v5121 = vadd.f32 %v4886, %v5068
  %v5122 = vadd.f32 %v4887, %v5073
  %v5123 = vadd.f32 %v4888, %v5078
  %v5124 = vadd.f32 %v4889, %v5083
  %v5125 = vadd.f32 %v4890, %v5088
  %v5126 = vadd.f32 %v4891, %v5093
  %v5127 = vadd.f32 %v4892, %v5098
  %v5128 = vadd.f32 %v4893, %v5103
  %v5129 = vadd.f32 %v4894, %v5108
  %v5130 = vadd.f32 %v4895, %v5113
  %s5131 = scalar_lea.vmem [#allocation3], 5
  %v5132 = vld [vmem:[%s5131] ss:$2 sm:$0xff]
  %s5133 = scalar_lea.vmem [#allocation3], 21
  %v5134 = vld [vmem:[%s5133] ss:$2 sm:$0xff]
  %s5135 = scalar_lea.vmem [#allocation3], 37
  %v5136 = vld [vmem:[%s5135] ss:$2 sm:$0xff]
  %s5137 = scalar_lea.vmem [#allocation3], 53
  %v5138 = vld [vmem:[%s5137] ss:$2 sm:$0xff]
  %s5139 = scalar_lea.vmem [#allocation3], 69
  %v5140 = vld [vmem:[%s5139] ss:$2 sm:$0xff]
  %s5141 = scalar_lea.vmem [#allocation3], 85
  %v5142 = vld [vmem:[%s5141] ss:$2 sm:$0xff]
  %s5143 = scalar_lea.vmem [#allocation3], 101
  %v5144 = vld [vmem:[%s5143] ss:$2 sm:$0xff]
  %s5145 = scalar_lea.vmem [#allocation3], 117
  %v5146 = vld [vmem:[%s5145] ss:$2 sm:$0xff]
  %s5147 = scalar_lea.vmem [#allocation3], 133
  %v5148 = vld [vmem:[%s5147] ss:$2 sm:$0xff]
  %s5149 = scalar_lea.vmem [#allocation3], 149
  %v5150 = vld [vmem:[%s5149] ss:$2 sm:$0xff]
  %s5151 = scalar_lea.vmem [#allocation3], 165
  %v5152 = vld [vmem:[%s5151] ss:$2 sm:$0xff]
  %s5153 = scalar_lea.vmem [#allocation3], 181
  %v5154 = vld [vmem:[%s5153] ss:$2 sm:$0xff]
  %s5155 = scalar_lea.vmem [#allocation3], 197
  %v5156 = vld [vmem:[%s5155] ss:$2 sm:$0xff]
  %s5157 = scalar_lea.vmem [#allocation3], 213
  %v5158 = vld [vmem:[%s5157] ss:$2 sm:$0xff]
  %s5159 = scalar_lea.vmem [#allocation3], 229
  %v5160 = vld [vmem:[%s5159] ss:$2 sm:$0xff]
  %s5161 = scalar_lea.vmem %s4, 160
  %v5162 = vld [vmem:[%s5161] sm:$0xff]
  %v5163 = vld [vmem:[%s5161 + $0x8] sm:$0xff]
  %v5164 = vld [vmem:[%s5161 + $0x10] sm:$0xff]
  %v5165 = vld [vmem:[%s5161 + $0x18] sm:$0xff]
  %v5167 = vsel %vm903, %v5132, 0
  %v5170 = vsel %vm903, %v5134, 0
  %v5173 = vsel %vm903, %v5136, 0
  %v5176 = vsel %vm903, %v5138, 0
  %v5179 = vsel %vm903, %v5140, 0
  %v5182 = vsel %vm903, %v5142, 0
  %v5185 = vsel %vm903, %v5144, 0
  %v5188 = vsel %vm903, %v5146, 0
  %v5191 = vsel %vm903, %v5148, 0
  %v5194 = vsel %vm903, %v5150, 0
  %v5197 = vsel %vm903, %v5152, 0
  %v5200 = vsel %vm903, %v5154, 0
  %v5203 = vsel %vm903, %v5156, 0
  %v5206 = vsel %vm903, %v5158, 0
  %v5209 = vsel %vm903, %v5160, 0
  %5211 = vmatprep.subr.mxu0 0.0
  %5212 = vmatpush1.msra.mxu0 0.0
  %5213 = vmatprep.subr.mxu0 0.0
  %5214 = vmatpush1.msra.mxu0 0.0
  %5215 = vmatprep.subr.mxu0 0.0
  %5216 = vmatpush1.msra.mxu0 0.0
  %5217 = vmatprep.subr.mxu0 0.0
  %5218 = vmatpush1.msra.mxu0 0.0
  %5219 = vmatprep.subr.mxu0 0.0
  %5220 = vmatpush1.msra.mxu0 0.0
  %5221 = vmatprep.subr.mxu0 0.0
  %5222 = vmatpush1.msra.mxu0 0.0
  %5223 = vmatprep.subr.mxu0 0.0
  %5224 = vmatpush1.msra.mxu0 0.0
  %5225 = vmatprep.subr.mxu0 0.0
  %5226 = vmatpush1.msra.mxu0 0.0
  %5227 = vmatprep.subr.mxu0 0.0
  %5228 = vmatpush1.msra.mxu0 0.0
  %5229 = vmatprep.subr.mxu0 0.0
  %5230 = vmatpush1.msra.mxu0 0.0
  %5231 = vmatprep.subr.mxu0 0.0
  %5232 = vmatpush1.msra.mxu0 0.0
  %5233 = vmatprep.subr.mxu0 0.0
  %5234 = vmatpush1.msra.mxu0 0.0
  %5235 = vmatprep.subr.mxu0 0.0
  %5236 = vmatpush1.msra.mxu0 %v5165
  %5237 = vmatprep.subr.mxu0 0.0
  %5238 = vmatpush1.msra.mxu0 %v5164
  %5239 = vmatprep.subr.mxu0 0.0
  %5240 = vmatpush1.msra.mxu0 %v5163
  %5241 = vmatprep.subr.mxu0 0.0
  %5242 = vmatpush1.msra.mxu0 %v5162
  %5243 = vmatprep.subr.mxu0 0.0
  %5244 = vmatpush2.msra.mxu0 0.0
  %5245 = vmatprep.subr.mxu0 0.0
  %5246 = vmatpush2.msra.mxu0 0.0
  %5247 = vmatprep.subr.mxu0 0.0
  %5248 = vmatpush2.msra.mxu0 0.0
  %5249 = vmatprep.subr.mxu0 0.0
  %5250 = vmatpush2.msra.mxu0 0.0
  %5251 = vmatprep.subr.mxu0 0.0
  %5252 = vmatpush2.msra.mxu0 0.0
  %5253 = vmatprep.subr.mxu0 0.0
  %5254 = vmatpush2.msra.mxu0 0.0
  %5255 = vmatprep.subr.mxu0 0.0
  %5256 = vmatpush2.msra.mxu0 0.0
  %5257 = vmatprep.subr.mxu0 0.0
  %5258 = vmatpush2.msra.mxu0 0.0
  %5259 = vmatprep.subr.mxu0 0.0
  %5260 = vmatpush2.msra.mxu0 0.0
  %5261 = vmatprep.subr.mxu0 0.0
  %5262 = vmatpush2.msra.mxu0 0.0
  %5263 = vmatprep.subr.mxu0 0.0
  %5264 = vmatpush2.msra.mxu0 0.0
  %5265 = vmatprep.subr.mxu0 0.0
  %5266 = vmatpush2.msra.mxu0 0.0
  %5267 = vmatprep.subr.mxu0 0.0
  %5268 = vmatpush2.msra.mxu0 0.0
  %5269 = vmatprep.subr.mxu0 0.0
  %5270 = vmatpush2.msra.mxu0 0.0
  %5271 = vmatprep.subr.mxu0 0.0
  %5272 = vmatpush2.msra.mxu0 0.0
  %5273 = vmatprep.subr.mxu0 0.0
  %5274 = vmatpush2.msra.mxu0 0.0
  %5275 = vmatprep.mubr.f32.mxu0 0.0
  %5276 = vmatmul.mubr.f32.gmra.mxu0 %v5167
  %v5277 = vpop.f32.mrf.mxu0
  %v5278 = vadd.f32 0.0, %v5277
  %v5279 = vpop.f32.mrf.mxu0
  %5280 = vmatprep.mubr.f32.mxu0 0.0
  %5281 = vmatmul.mubr.f32.gmra.mxu0 %v5170
  %v5282 = vpop.f32.mrf.mxu0
  %v5283 = vadd.f32 0.0, %v5282
  %v5284 = vpop.f32.mrf.mxu0
  %5285 = vmatprep.mubr.f32.mxu0 0.0
  %5286 = vmatmul.mubr.f32.gmra.mxu0 %v5173
  %v5287 = vpop.f32.mrf.mxu0
  %v5288 = vadd.f32 0.0, %v5287
  %v5289 = vpop.f32.mrf.mxu0
  %5290 = vmatprep.mubr.f32.mxu0 0.0
  %5291 = vmatmul.mubr.f32.gmra.mxu0 %v5176
  %v5292 = vpop.f32.mrf.mxu0
  %v5293 = vadd.f32 0.0, %v5292
  %v5294 = vpop.f32.mrf.mxu0
  %5295 = vmatprep.mubr.f32.mxu0 0.0
  %5296 = vmatmul.mubr.f32.gmra.mxu0 %v5179
  %v5297 = vpop.f32.mrf.mxu0
  %v5298 = vadd.f32 0.0, %v5297
  %v5299 = vpop.f32.mrf.mxu0
  %5300 = vmatprep.mubr.f32.mxu0 0.0
  %5301 = vmatmul.mubr.f32.gmra.mxu0 %v5182
  %v5302 = vpop.f32.mrf.mxu0
  %v5303 = vadd.f32 0.0, %v5302
  %v5304 = vpop.f32.mrf.mxu0
  %5305 = vmatprep.mubr.f32.mxu0 0.0
  %5306 = vmatmul.mubr.f32.gmra.mxu0 %v5185
  %v5307 = vpop.f32.mrf.mxu0
  %v5308 = vadd.f32 0.0, %v5307
  %v5309 = vpop.f32.mrf.mxu0
  %5310 = vmatprep.mubr.f32.mxu0 0.0
  %5311 = vmatmul.mubr.f32.gmra.mxu0 %v5188
  %v5312 = vpop.f32.mrf.mxu0
  %v5313 = vadd.f32 0.0, %v5312
  %v5314 = vpop.f32.mrf.mxu0
  %5315 = vmatprep.mubr.f32.mxu0 0.0
  %5316 = vmatmul.mubr.f32.gmra.mxu0 %v5191
  %v5317 = vpop.f32.mrf.mxu0
  %v5318 = vadd.f32 0.0, %v5317
  %v5319 = vpop.f32.mrf.mxu0
  %5320 = vmatprep.mubr.f32.mxu0 0.0
  %5321 = vmatmul.mubr.f32.gmra.mxu0 %v5194
  %v5322 = vpop.f32.mrf.mxu0
  %v5323 = vadd.f32 0.0, %v5322
  %v5324 = vpop.f32.mrf.mxu0
  %5325 = vmatprep.mubr.f32.mxu0 0.0
  %5326 = vmatmul.mubr.f32.gmra.mxu0 %v5197
  %v5327 = vpop.f32.mrf.mxu0
  %v5328 = vadd.f32 0.0, %v5327
  %v5329 = vpop.f32.mrf.mxu0
  %5330 = vmatprep.mubr.f32.mxu0 0.0
  %5331 = vmatmul.mubr.f32.gmra.mxu0 %v5200
  %v5332 = vpop.f32.mrf.mxu0
  %v5333 = vadd.f32 0.0, %v5332
  %v5334 = vpop.f32.mrf.mxu0
  %5335 = vmatprep.mubr.f32.mxu0 0.0
  %5336 = vmatmul.mubr.f32.gmra.mxu0 %v5203
  %v5337 = vpop.f32.mrf.mxu0
  %v5338 = vadd.f32 0.0, %v5337
  %v5339 = vpop.f32.mrf.mxu0
  %5340 = vmatprep.mubr.f32.mxu0 0.0
  %5341 = vmatmul.mubr.f32.gmra.mxu0 %v5206
  %v5342 = vpop.f32.mrf.mxu0
  %v5343 = vadd.f32 0.0, %v5342
  %v5344 = vpop.f32.mrf.mxu0
  %5345 = vmatprep.mubr.f32.mxu0 0.0
  %5346 = vmatmul.mubr.f32.gmra.mxu0 %v5209
  %v5347 = vpop.f32.mrf.mxu0
  %v5348 = vadd.f32 0.0, %v5347
  %v5349 = vpop.f32.mrf.mxu0
  %5350 = vdwg.mxu0
  %v5351 = vadd.f32 %v5116, %v5278
  %v5352 = vadd.f32 %v5117, %v5283
  %v5353 = vadd.f32 %v5118, %v5288
  %v5354 = vadd.f32 %v5119, %v5293
  %v5355 = vadd.f32 %v5120, %v5298
  %v5356 = vadd.f32 %v5121, %v5303
  %v5357 = vadd.f32 %v5122, %v5308
  %v5358 = vadd.f32 %v5123, %v5313
  %v5359 = vadd.f32 %v5124, %v5318
  %v5360 = vadd.f32 %v5125, %v5323
  %v5361 = vadd.f32 %v5126, %v5328
  %v5362 = vadd.f32 %v5127, %v5333
  %v5363 = vadd.f32 %v5128, %v5338
  %v5364 = vadd.f32 %v5129, %v5343
  %v5365 = vadd.f32 %v5130, %v5348
  %v5366 = vlaneseq
  %v5367 = vshrl.u32 %v5366, 7
  %v5368 = vsub.s32 0, %v5367
  %v5369 = vrot.slane %v3987, %v5368
  %v5370 = vadd.f32 %v5351, %v5369
  %v5371 = vadd.f32 %v5352, %v5369
  %v5372 = vadd.f32 %v5353, %v5369
  %v5373 = vadd.f32 %v5354, %v5369
  %v5374 = vadd.f32 %v5355, %v5369
  %v5375 = vadd.f32 %v5356, %v5369
  %v5376 = vadd.f32 %v5357, %v5369
  %v5377 = vadd.f32 %v5358, %v5369
  %v5378 = vadd.f32 %v5359, %v5369
  %v5379 = vadd.f32 %v5360, %v5369
  %v5380 = vadd.f32 %v5361, %v5369
  %v5381 = vadd.f32 %v5362, %v5369
  %v5382 = vadd.f32 %v5363, %v5369
  %v5383 = vadd.f32 %v5364, %v5369
  %v5384 = vadd.f32 %v5365, %v5369
  %5385 = vst.msk [vmem:[#allocation4] sm:$0xff] %vm905, %v5370
  %5386 = vst.msk [vmem:[#allocation4 + $0x8] sm:$0xff] %vm905, %v5371
  %5387 = vst.msk [vmem:[#allocation4 + $0x10] sm:$0xff] %vm905, %v5372
  %5388 = vst.msk [vmem:[#allocation4 + $0x18] sm:$0xff] %vm905, %v5373
  %5389 = vst.msk [vmem:[#allocation4 + $0x20] sm:$0xff] %vm905, %v5374
  %5390 = vst.msk [vmem:[#allocation4 + $0x28] sm:$0xff] %vm905, %v5375
  %5391 = vst.msk [vmem:[#allocation4 + $0x30] sm:$0xff] %vm905, %v5376
  %5392 = vst.msk [vmem:[#allocation4 + $0x38] sm:$0xff] %vm905, %v5377
  %5393 = vst.msk [vmem:[#allocation4 + $0x40] sm:$0xff] %vm905, %v5378
  %5394 = vst.msk [vmem:[#allocation4 + $0x48] sm:$0xff] %vm905, %v5379
  %5395 = vst.msk [vmem:[#allocation4 + $0x50] sm:$0xff] %vm905, %v5380
  %5396 = vst.msk [vmem:[#allocation4 + $0x58] sm:$0xff] %vm905, %v5381
  %5397 = vst.msk [vmem:[#allocation4 + $0x60] sm:$0xff] %vm905, %v5382
  %5398 = vst.msk [vmem:[#allocation4 + $0x68] sm:$0xff] %vm905, %v5383
  %5399 = vst.msk [vmem:[#allocation4 + $0x70] sm:$0xff] %vm905, %v5384
  %v5400 = vld [vmem:[%s7 + $0x3] sm:$0x1]
  %v5401 = vld [vmem:[#allocation4] ss:$2 sm:$0xff]
  %s5402 = scalar_lea.vmem [#allocation4], 16
  %v5403 = vld [vmem:[%s5402] ss:$2 sm:$0xff]
  %s5404 = scalar_lea.vmem [#allocation4], 32
  %v5405 = vld [vmem:[%s5404] ss:$2 sm:$0xff]
  %s5406 = scalar_lea.vmem [#allocation4], 48
  %v5407 = vld [vmem:[%s5406] ss:$2 sm:$0xff]
  %s5408 = scalar_lea.vmem [#allocation4], 64
  %v5409 = vld [vmem:[%s5408] ss:$2 sm:$0xff]
  %s5410 = scalar_lea.vmem [#allocation4], 80
  %v5411 = vld [vmem:[%s5410] ss:$2 sm:$0xff]
  %s5412 = scalar_lea.vmem [#allocation4], 96
  %v5413 = vld [vmem:[%s5412] ss:$2 sm:$0xff]
  %s5414 = scalar_lea.vmem [#allocation4], 112
  %v5415 = vld [vmem:[%s5414] ss:$2 sm:$0xf]
  %v5416 = vld [vmem:[%s5] sm:$0xff]
  %v5417 = vld [vmem:[%s5 + $0x8] sm:$0xff]
  %v5418 = vld [vmem:[%s5 + $0x10] sm:$0xff]
  %v5419 = vld [vmem:[%s5 + $0x18] sm:$0xff]
  %v5420 = vld [vmem:[%s5 + $0x20] sm:$0xff]
  %v5421 = vld [vmem:[%s5 + $0x28] sm:$0xff]
  %v5422 = vld [vmem:[%s5 + $0x30] sm:$0xff]
  %v5423 = vld [vmem:[%s5 + $0x38] sm:$0xff]
  %s5424 = scalar_lea.vmem [#allocation4], 1
  %v5425 = vld [vmem:[%s5424] ss:$2 sm:$0xff]
  %s5426 = scalar_lea.vmem [#allocation4], 17
  %v5427 = vld [vmem:[%s5426] ss:$2 sm:$0xff]
  %s5428 = scalar_lea.vmem [#allocation4], 33
  %v5429 = vld [vmem:[%s5428] ss:$2 sm:$0xff]
  %s5430 = scalar_lea.vmem [#allocation4], 49
  %v5431 = vld [vmem:[%s5430] ss:$2 sm:$0xff]
  %s5432 = scalar_lea.vmem [#allocation4], 65
  %v5433 = vld [vmem:[%s5432] ss:$2 sm:$0xff]
  %s5434 = scalar_lea.vmem [#allocation4], 81
  %v5435 = vld [vmem:[%s5434] ss:$2 sm:$0xff]
  %s5436 = scalar_lea.vmem [#allocation4], 97
  %v5437 = vld [vmem:[%s5436] ss:$2 sm:$0xff]
  %s5438 = scalar_lea.vmem [#allocation4], 113
  %v5439 = vld [vmem:[%s5438] ss:$2 sm:$0xf]
  %s5440 = scalar_lea.vmem %s5, 64
  %v5441 = vld [vmem:[%s5440] sm:$0xff]
  %v5442 = vld [vmem:[%s5440 + $0x8] sm:$0xff]
  %v5443 = vld [vmem:[%s5440 + $0x10] sm:$0xff]
  %v5444 = vld [vmem:[%s5440 + $0x18] sm:$0xff]
  %v5445 = vld [vmem:[%s5440 + $0x20] sm:$0xff]
  %v5446 = vld [vmem:[%s5440 + $0x28] sm:$0xff]
  %v5447 = vld [vmem:[%s5440 + $0x30] sm:$0xff]
  %v5448 = vld [vmem:[%s5440 + $0x38] sm:$0xff]
  %v5450 = vsel %vm905, %v5425, 0
  %v5453 = vsel %vm905, %v5427, 0
  %v5456 = vsel %vm905, %v5429, 0
  %v5459 = vsel %vm905, %v5431, 0
  %v5462 = vsel %vm905, %v5433, 0
  %v5465 = vsel %vm905, %v5435, 0
  %v5468 = vsel %vm905, %v5437, 0
  %v5471 = vsel %vm905, %v5439, 0
  %5473 = vmatprep.subr.mxu0 0.0
  %5474 = vmatpush1.msra.mxu0 0.0
  %5475 = vmatprep.subr.mxu0 0.0
  %5476 = vmatpush1.msra.mxu0 0.0
  %5477 = vmatprep.subr.mxu0 0.0
  %5478 = vmatpush1.msra.mxu0 0.0
  %5479 = vmatprep.subr.mxu0 0.0
  %5480 = vmatpush1.msra.mxu0 0.0
  %5481 = vmatprep.subr.mxu0 0.0
  %5482 = vmatpush1.msra.mxu0 0.0
  %5483 = vmatprep.subr.mxu0 0.0
  %5484 = vmatpush1.msra.mxu0 0.0
  %5485 = vmatprep.subr.mxu0 0.0
  %5486 = vmatpush1.msra.mxu0 0.0
  %5487 = vmatprep.subr.mxu0 0.0
  %5488 = vmatpush1.msra.mxu0 0.0
  %5489 = vmatprep.subr.mxu0 0.0
  %5490 = vmatpush1.msra.mxu0 %v5448
  %5491 = vmatprep.subr.mxu0 0.0
  %5492 = vmatpush1.msra.mxu0 %v5447
  %5493 = vmatprep.subr.mxu0 0.0
  %5494 = vmatpush1.msra.mxu0 %v5446
  %5495 = vmatprep.subr.mxu0 0.0
  %5496 = vmatpush1.msra.mxu0 %v5445
  %5497 = vmatprep.subr.mxu0 0.0
  %5498 = vmatpush1.msra.mxu0 %v5444
  %5499 = vmatprep.subr.mxu0 0.0
  %5500 = vmatpush1.msra.mxu0 %v5443
  %5501 = vmatprep.subr.mxu0 0.0
  %5502 = vmatpush1.msra.mxu0 %v5442
  %5503 = vmatprep.subr.mxu0 0.0
  %5504 = vmatpush1.msra.mxu0 %v5441
  %5505 = vmatprep.subr.mxu0 0.0
  %5506 = vmatpush2.msra.mxu0 0.0
  %5507 = vmatprep.subr.mxu0 0.0
  %5508 = vmatpush2.msra.mxu0 0.0
  %5509 = vmatprep.subr.mxu0 0.0
  %5510 = vmatpush2.msra.mxu0 0.0
  %5511 = vmatprep.subr.mxu0 0.0
  %5512 = vmatpush2.msra.mxu0 0.0
  %5513 = vmatprep.subr.mxu0 0.0
  %5514 = vmatpush2.msra.mxu0 0.0
  %5515 = vmatprep.subr.mxu0 0.0
  %5516 = vmatpush2.msra.mxu0 0.0
  %5517 = vmatprep.subr.mxu0 0.0
  %5518 = vmatpush2.msra.mxu0 0.0
  %5519 = vmatprep.subr.mxu0 0.0
  %5520 = vmatpush2.msra.mxu0 0.0
  %5521 = vmatprep.subr.mxu0 0.0
  %5522 = vmatpush2.msra.mxu0 0.0
  %5523 = vmatprep.subr.mxu0 0.0
  %5524 = vmatpush2.msra.mxu0 0.0
  %5525 = vmatprep.subr.mxu0 0.0
  %5526 = vmatpush2.msra.mxu0 0.0
  %5527 = vmatprep.subr.mxu0 0.0
  %5528 = vmatpush2.msra.mxu0 0.0
  %5529 = vmatprep.subr.mxu0 0.0
  %5530 = vmatpush2.msra.mxu0 0.0
  %5531 = vmatprep.subr.mxu0 0.0
  %5532 = vmatpush2.msra.mxu0 0.0
  %5533 = vmatprep.subr.mxu0 0.0
  %5534 = vmatpush2.msra.mxu0 0.0
  %5535 = vmatprep.subr.mxu0 0.0
  %5536 = vmatpush2.msra.mxu0 0.0
  %5537 = vmatprep.mubr.f32.mxu0 0.0
  %5538 = vmatmul.mubr.f32.gmra.mxu0 %v5450
  %v5539 = vpop.f32.mrf.mxu0
  %v5540 = vadd.f32 0.0, %v5539
  %v5541 = vpop.f32.mrf.mxu0
  %5542 = vmatprep.mubr.f32.mxu0 0.0
  %5543 = vmatmul.mubr.f32.gmra.mxu0 %v5453
  %v5544 = vpop.f32.mrf.mxu0
  %v5545 = vadd.f32 0.0, %v5544
  %v5546 = vpop.f32.mrf.mxu0
  %5547 = vmatprep.mubr.f32.mxu0 0.0
  %5548 = vmatmul.mubr.f32.gmra.mxu0 %v5456
  %v5549 = vpop.f32.mrf.mxu0
  %v5550 = vadd.f32 0.0, %v5549
  %v5551 = vpop.f32.mrf.mxu0
  %5552 = vmatprep.mubr.f32.mxu0 0.0
  %5553 = vmatmul.mubr.f32.gmra.mxu0 %v5459
  %v5554 = vpop.f32.mrf.mxu0
  %v5555 = vadd.f32 0.0, %v5554
  %v5556 = vpop.f32.mrf.mxu0
  %5557 = vmatprep.mubr.f32.mxu0 0.0
  %5558 = vmatmul.mubr.f32.gmra.mxu0 %v5462
  %v5559 = vpop.f32.mrf.mxu0
  %v5560 = vadd.f32 0.0, %v5559
  %v5561 = vpop.f32.mrf.mxu0
  %5562 = vmatprep.mubr.f32.mxu0 0.0
  %5563 = vmatmul.mubr.f32.gmra.mxu0 %v5465
  %v5564 = vpop.f32.mrf.mxu0
  %v5565 = vadd.f32 0.0, %v5564
  %v5566 = vpop.f32.mrf.mxu0
  %5567 = vmatprep.mubr.f32.mxu0 0.0
  %5568 = vmatmul.mubr.f32.gmra.mxu0 %v5468
  %v5569 = vpop.f32.mrf.mxu0
  %v5570 = vadd.f32 0.0, %v5569
  %v5571 = vpop.f32.mrf.mxu0
  %5572 = vmatprep.mubr.f32.mxu0 0.0
  %5573 = vmatmul.mubr.f32.gmra.mxu0 %v5471
  %v5574 = vpop.f32.mrf.mxu0
  %v5575 = vadd.f32 0.0, %v5574
  %v5576 = vpop.f32.mrf.mxu0
  %5577 = vdwg.mxu0
  %v5579 = vsel %vm905, %v5401, 0
  %v5582 = vsel %vm905, %v5403, 0
  %v5585 = vsel %vm905, %v5405, 0
  %v5588 = vsel %vm905, %v5407, 0
  %v5591 = vsel %vm905, %v5409, 0
  %v5594 = vsel %vm905, %v5411, 0
  %v5597 = vsel %vm905, %v5413, 0
  %v5600 = vsel %vm905, %v5415, 0
  %5602 = vmatprep.subr.mxu0 0.0
  %5603 = vmatpush1.msra.mxu0 0.0
  %5604 = vmatprep.subr.mxu0 0.0
  %5605 = vmatpush1.msra.mxu0 0.0
  %5606 = vmatprep.subr.mxu0 0.0
  %5607 = vmatpush1.msra.mxu0 0.0
  %5608 = vmatprep.subr.mxu0 0.0
  %5609 = vmatpush1.msra.mxu0 0.0
  %5610 = vmatprep.subr.mxu0 0.0
  %5611 = vmatpush1.msra.mxu0 0.0
  %5612 = vmatprep.subr.mxu0 0.0
  %5613 = vmatpush1.msra.mxu0 0.0
  %5614 = vmatprep.subr.mxu0 0.0
  %5615 = vmatpush1.msra.mxu0 0.0
  %5616 = vmatprep.subr.mxu0 0.0
  %5617 = vmatpush1.msra.mxu0 0.0
  %5618 = vmatprep.subr.mxu0 0.0
  %5619 = vmatpush1.msra.mxu0 %v5423
  %5620 = vmatprep.subr.mxu0 0.0
  %5621 = vmatpush1.msra.mxu0 %v5422
  %5622 = vmatprep.subr.mxu0 0.0
  %5623 = vmatpush1.msra.mxu0 %v5421
  %5624 = vmatprep.subr.mxu0 0.0
  %5625 = vmatpush1.msra.mxu0 %v5420
  %5626 = vmatprep.subr.mxu0 0.0
  %5627 = vmatpush1.msra.mxu0 %v5419
  %5628 = vmatprep.subr.mxu0 0.0
  %5629 = vmatpush1.msra.mxu0 %v5418
  %5630 = vmatprep.subr.mxu0 0.0
  %5631 = vmatpush1.msra.mxu0 %v5417
  %5632 = vmatprep.subr.mxu0 0.0
  %5633 = vmatpush1.msra.mxu0 %v5416
  %5634 = vmatprep.subr.mxu0 0.0
  %5635 = vmatpush2.msra.mxu0 0.0
  %5636 = vmatprep.subr.mxu0 0.0
  %5637 = vmatpush2.msra.mxu0 0.0
  %5638 = vmatprep.subr.mxu0 0.0
  %5639 = vmatpush2.msra.mxu0 0.0
  %5640 = vmatprep.subr.mxu0 0.0
  %5641 = vmatpush2.msra.mxu0 0.0
  %5642 = vmatprep.subr.mxu0 0.0
  %5643 = vmatpush2.msra.mxu0 0.0
  %5644 = vmatprep.subr.mxu0 0.0
  %5645 = vmatpush2.msra.mxu0 0.0
  %5646 = vmatprep.subr.mxu0 0.0
  %5647 = vmatpush2.msra.mxu0 0.0
  %5648 = vmatprep.subr.mxu0 0.0
  %5649 = vmatpush2.msra.mxu0 0.0
  %5650 = vmatprep.subr.mxu0 0.0
  %5651 = vmatpush2.msra.mxu0 0.0
  %5652 = vmatprep.subr.mxu0 0.0
  %5653 = vmatpush2.msra.mxu0 0.0
  %5654 = vmatprep.subr.mxu0 0.0
  %5655 = vmatpush2.msra.mxu0 0.0
  %5656 = vmatprep.subr.mxu0 0.0
  %5657 = vmatpush2.msra.mxu0 0.0
  %5658 = vmatprep.subr.mxu0 0.0
  %5659 = vmatpush2.msra.mxu0 0.0
  %5660 = vmatprep.subr.mxu0 0.0
  %5661 = vmatpush2.msra.mxu0 0.0
  %5662 = vmatprep.subr.mxu0 0.0
  %5663 = vmatpush2.msra.mxu0 0.0
  %5664 = vmatprep.subr.mxu0 0.0
  %5665 = vmatpush2.msra.mxu0 0.0
  %5666 = vmatprep.mubr.f32.mxu0 0.0
  %5667 = vmatmul.mubr.f32.gmra.mxu0 %v5579
  %v5668 = vpop.f32.mrf.mxu0
  %v5669 = vadd.f32 %v5540, %v5668
  %v5670 = vpop.f32.mrf.mxu0
  %5671 = vmatprep.mubr.f32.mxu0 0.0
  %5672 = vmatmul.mubr.f32.gmra.mxu0 %v5582
  %v5673 = vpop.f32.mrf.mxu0
  %v5674 = vadd.f32 %v5545, %v5673
  %v5675 = vpop.f32.mrf.mxu0
  %5676 = vmatprep.mubr.f32.mxu0 0.0
  %5677 = vmatmul.mubr.f32.gmra.mxu0 %v5585
  %v5678 = vpop.f32.mrf.mxu0
  %v5679 = vadd.f32 %v5550, %v5678
  %v5680 = vpop.f32.mrf.mxu0
  %5681 = vmatprep.mubr.f32.mxu0 0.0
  %5682 = vmatmul.mubr.f32.gmra.mxu0 %v5588
  %v5683 = vpop.f32.mrf.mxu0
  %v5684 = vadd.f32 %v5555, %v5683
  %v5685 = vpop.f32.mrf.mxu0
  %5686 = vmatprep.mubr.f32.mxu0 0.0
  %5687 = vmatmul.mubr.f32.gmra.mxu0 %v5591
  %v5688 = vpop.f32.mrf.mxu0
  %v5689 = vadd.f32 %v5560, %v5688
  %v5690 = vpop.f32.mrf.mxu0
  %5691 = vmatprep.mubr.f32.mxu0 0.0
  %5692 = vmatmul.mubr.f32.gmra.mxu0 %v5594
  %v5693 = vpop.f32.mrf.mxu0
  %v5694 = vadd.f32 %v5565, %v5693
  %v5695 = vpop.f32.mrf.mxu0
  %5696 = vmatprep.mubr.f32.mxu0 0.0
  %5697 = vmatmul.mubr.f32.gmra.mxu0 %v5597
  %v5698 = vpop.f32.mrf.mxu0
  %v5699 = vadd.f32 %v5570, %v5698
  %v5700 = vpop.f32.mrf.mxu0
  %5701 = vmatprep.mubr.f32.mxu0 0.0
  %5702 = vmatmul.mubr.f32.gmra.mxu0 %v5600
  %v5703 = vpop.f32.mrf.mxu0
  %v5704 = vadd.f32 %v5575, %v5703
  %v5705 = vpop.f32.mrf.mxu0
  %5706 = vdwg.mxu0
  %s5707 = scalar_lea.vmem [#allocation4], 2
  %v5708 = vld [vmem:[%s5707] ss:$2 sm:$0xff]
  %s5709 = scalar_lea.vmem [#allocation4], 18
  %v5710 = vld [vmem:[%s5709] ss:$2 sm:$0xff]
  %s5711 = scalar_lea.vmem [#allocation4], 34
  %v5712 = vld [vmem:[%s5711] ss:$2 sm:$0xff]
  %s5713 = scalar_lea.vmem [#allocation4], 50
  %v5714 = vld [vmem:[%s5713] ss:$2 sm:$0xff]
  %s5715 = scalar_lea.vmem [#allocation4], 66
  %v5716 = vld [vmem:[%s5715] ss:$2 sm:$0xff]
  %s5717 = scalar_lea.vmem [#allocation4], 82
  %v5718 = vld [vmem:[%s5717] ss:$2 sm:$0xff]
  %s5719 = scalar_lea.vmem [#allocation4], 98
  %v5720 = vld [vmem:[%s5719] ss:$2 sm:$0xff]
  %s5721 = scalar_lea.vmem [#allocation4], 114
  %v5722 = vld [vmem:[%s5721] ss:$2 sm:$0xf]
  %s5723 = scalar_lea.vmem %s5, 128
  %v5724 = vld [vmem:[%s5723] sm:$0xff]
  %v5725 = vld [vmem:[%s5723 + $0x8] sm:$0xff]
  %v5726 = vld [vmem:[%s5723 + $0x10] sm:$0xff]
  %v5727 = vld [vmem:[%s5723 + $0x18] sm:$0xff]
  %v5728 = vld [vmem:[%s5723 + $0x20] sm:$0xff]
  %v5729 = vld [vmem:[%s5723 + $0x28] sm:$0xff]
  %v5730 = vld [vmem:[%s5723 + $0x30] sm:$0xff]
  %v5731 = vld [vmem:[%s5723 + $0x38] sm:$0xff]
  %v5733 = vsel %vm905, %v5708, 0
  %v5736 = vsel %vm905, %v5710, 0
  %v5739 = vsel %vm905, %v5712, 0
  %v5742 = vsel %vm905, %v5714, 0
  %v5745 = vsel %vm905, %v5716, 0
  %v5748 = vsel %vm905, %v5718, 0
  %v5751 = vsel %vm905, %v5720, 0
  %v5754 = vsel %vm905, %v5722, 0
  %5756 = vmatprep.subr.mxu0 0.0
  %5757 = vmatpush1.msra.mxu0 0.0
  %5758 = vmatprep.subr.mxu0 0.0
  %5759 = vmatpush1.msra.mxu0 0.0
  %5760 = vmatprep.subr.mxu0 0.0
  %5761 = vmatpush1.msra.mxu0 0.0
  %5762 = vmatprep.subr.mxu0 0.0
  %5763 = vmatpush1.msra.mxu0 0.0
  %5764 = vmatprep.subr.mxu0 0.0
  %5765 = vmatpush1.msra.mxu0 0.0
  %5766 = vmatprep.subr.mxu0 0.0
  %5767 = vmatpush1.msra.mxu0 0.0
  %5768 = vmatprep.subr.mxu0 0.0
  %5769 = vmatpush1.msra.mxu0 0.0
  %5770 = vmatprep.subr.mxu0 0.0
  %5771 = vmatpush1.msra.mxu0 0.0
  %5772 = vmatprep.subr.mxu0 0.0
  %5773 = vmatpush1.msra.mxu0 %v5731
  %5774 = vmatprep.subr.mxu0 0.0
  %5775 = vmatpush1.msra.mxu0 %v5730
  %5776 = vmatprep.subr.mxu0 0.0
  %5777 = vmatpush1.msra.mxu0 %v5729
  %5778 = vmatprep.subr.mxu0 0.0
  %5779 = vmatpush1.msra.mxu0 %v5728
  %5780 = vmatprep.subr.mxu0 0.0
  %5781 = vmatpush1.msra.mxu0 %v5727
  %5782 = vmatprep.subr.mxu0 0.0
  %5783 = vmatpush1.msra.mxu0 %v5726
  %5784 = vmatprep.subr.mxu0 0.0
  %5785 = vmatpush1.msra.mxu0 %v5725
  %5786 = vmatprep.subr.mxu0 0.0
  %5787 = vmatpush1.msra.mxu0 %v5724
  %5788 = vmatprep.subr.mxu0 0.0
  %5789 = vmatpush2.msra.mxu0 0.0
  %5790 = vmatprep.subr.mxu0 0.0
  %5791 = vmatpush2.msra.mxu0 0.0
  %5792 = vmatprep.subr.mxu0 0.0
  %5793 = vmatpush2.msra.mxu0 0.0
  %5794 = vmatprep.subr.mxu0 0.0
  %5795 = vmatpush2.msra.mxu0 0.0
  %5796 = vmatprep.subr.mxu0 0.0
  %5797 = vmatpush2.msra.mxu0 0.0
  %5798 = vmatprep.subr.mxu0 0.0
  %5799 = vmatpush2.msra.mxu0 0.0
  %5800 = vmatprep.subr.mxu0 0.0
  %5801 = vmatpush2.msra.mxu0 0.0
  %5802 = vmatprep.subr.mxu0 0.0
  %5803 = vmatpush2.msra.mxu0 0.0
  %5804 = vmatprep.subr.mxu0 0.0
  %5805 = vmatpush2.msra.mxu0 0.0
  %5806 = vmatprep.subr.mxu0 0.0
  %5807 = vmatpush2.msra.mxu0 0.0
  %5808 = vmatprep.subr.mxu0 0.0
  %5809 = vmatpush2.msra.mxu0 0.0
  %5810 = vmatprep.subr.mxu0 0.0
  %5811 = vmatpush2.msra.mxu0 0.0
  %5812 = vmatprep.subr.mxu0 0.0
  %5813 = vmatpush2.msra.mxu0 0.0
  %5814 = vmatprep.subr.mxu0 0.0
  %5815 = vmatpush2.msra.mxu0 0.0
  %5816 = vmatprep.subr.mxu0 0.0
  %5817 = vmatpush2.msra.mxu0 0.0
  %5818 = vmatprep.subr.mxu0 0.0
  %5819 = vmatpush2.msra.mxu0 0.0
  %5820 = vmatprep.mubr.f32.mxu0 0.0
  %5821 = vmatmul.mubr.f32.gmra.mxu0 %v5733
  %v5822 = vpop.f32.mrf.mxu0
  %v5823 = vadd.f32 0.0, %v5822
  %v5824 = vpop.f32.mrf.mxu0
  %5825 = vmatprep.mubr.f32.mxu0 0.0
  %5826 = vmatmul.mubr.f32.gmra.mxu0 %v5736
  %v5827 = vpop.f32.mrf.mxu0
  %v5828 = vadd.f32 0.0, %v5827
  %v5829 = vpop.f32.mrf.mxu0
  %5830 = vmatprep.mubr.f32.mxu0 0.0
  %5831 = vmatmul.mubr.f32.gmra.mxu0 %v5739
  %v5832 = vpop.f32.mrf.mxu0
  %v5833 = vadd.f32 0.0, %v5832
  %v5834 = vpop.f32.mrf.mxu0
  %5835 = vmatprep.mubr.f32.mxu0 0.0
  %5836 = vmatmul.mubr.f32.gmra.mxu0 %v5742
  %v5837 = vpop.f32.mrf.mxu0
  %v5838 = vadd.f32 0.0, %v5837
  %v5839 = vpop.f32.mrf.mxu0
  %5840 = vmatprep.mubr.f32.mxu0 0.0
  %5841 = vmatmul.mubr.f32.gmra.mxu0 %v5745
  %v5842 = vpop.f32.mrf.mxu0
  %v5843 = vadd.f32 0.0, %v5842
  %v5844 = vpop.f32.mrf.mxu0
  %5845 = vmatprep.mubr.f32.mxu0 0.0
  %5846 = vmatmul.mubr.f32.gmra.mxu0 %v5748
  %v5847 = vpop.f32.mrf.mxu0
  %v5848 = vadd.f32 0.0, %v5847
  %v5849 = vpop.f32.mrf.mxu0
  %5850 = vmatprep.mubr.f32.mxu0 0.0
  %5851 = vmatmul.mubr.f32.gmra.mxu0 %v5751
  %v5852 = vpop.f32.mrf.mxu0
  %v5853 = vadd.f32 0.0, %v5852
  %v5854 = vpop.f32.mrf.mxu0
  %5855 = vmatprep.mubr.f32.mxu0 0.0
  %5856 = vmatmul.mubr.f32.gmra.mxu0 %v5754
  %v5857 = vpop.f32.mrf.mxu0
  %v5858 = vadd.f32 0.0, %v5857
  %v5859 = vpop.f32.mrf.mxu0
  %5860 = vdwg.mxu0
  %v5861 = vadd.f32 %v5669, %v5823
  %v5862 = vadd.f32 %v5674, %v5828
  %v5863 = vadd.f32 %v5679, %v5833
  %v5864 = vadd.f32 %v5684, %v5838
  %v5865 = vadd.f32 %v5689, %v5843
  %v5866 = vadd.f32 %v5694, %v5848
  %v5867 = vadd.f32 %v5699, %v5853
  %v5868 = vadd.f32 %v5704, %v5858
  %s5869 = scalar_lea.vmem [#allocation4], 3
  %v5870 = vld [vmem:[%s5869] ss:$2 sm:$0xff]
  %s5871 = scalar_lea.vmem [#allocation4], 19
  %v5872 = vld [vmem:[%s5871] ss:$2 sm:$0xff]
  %s5873 = scalar_lea.vmem [#allocation4], 35
  %v5874 = vld [vmem:[%s5873] ss:$2 sm:$0xff]
  %s5875 = scalar_lea.vmem [#allocation4], 51
  %v5876 = vld [vmem:[%s5875] ss:$2 sm:$0xff]
  %s5877 = scalar_lea.vmem [#allocation4], 67
  %v5878 = vld [vmem:[%s5877] ss:$2 sm:$0xff]
  %s5879 = scalar_lea.vmem [#allocation4], 83
  %v5880 = vld [vmem:[%s5879] ss:$2 sm:$0xff]
  %s5881 = scalar_lea.vmem [#allocation4], 99
  %v5882 = vld [vmem:[%s5881] ss:$2 sm:$0xff]
  %s5883 = scalar_lea.vmem [#allocation4], 115
  %v5884 = vld [vmem:[%s5883] ss:$2 sm:$0xf]
  %s5885 = scalar_lea.vmem %s5, 192
  %v5886 = vld [vmem:[%s5885] sm:$0xff]
  %v5887 = vld [vmem:[%s5885 + $0x8] sm:$0xff]
  %v5888 = vld [vmem:[%s5885 + $0x10] sm:$0xff]
  %v5889 = vld [vmem:[%s5885 + $0x18] sm:$0xff]
  %v5890 = vld [vmem:[%s5885 + $0x20] sm:$0xff]
  %v5891 = vld [vmem:[%s5885 + $0x28] sm:$0xff]
  %v5892 = vld [vmem:[%s5885 + $0x30] sm:$0xff]
  %v5893 = vld [vmem:[%s5885 + $0x38] sm:$0xff]
  %v5895 = vsel %vm905, %v5870, 0
  %v5898 = vsel %vm905, %v5872, 0
  %v5901 = vsel %vm905, %v5874, 0
  %v5904 = vsel %vm905, %v5876, 0
  %v5907 = vsel %vm905, %v5878, 0
  %v5910 = vsel %vm905, %v5880, 0
  %v5913 = vsel %vm905, %v5882, 0
  %v5916 = vsel %vm905, %v5884, 0
  %5918 = vmatprep.subr.mxu0 0.0
  %5919 = vmatpush1.msra.mxu0 0.0
  %5920 = vmatprep.subr.mxu0 0.0
  %5921 = vmatpush1.msra.mxu0 0.0
  %5922 = vmatprep.subr.mxu0 0.0
  %5923 = vmatpush1.msra.mxu0 0.0
  %5924 = vmatprep.subr.mxu0 0.0
  %5925 = vmatpush1.msra.mxu0 0.0
  %5926 = vmatprep.subr.mxu0 0.0
  %5927 = vmatpush1.msra.mxu0 0.0
  %5928 = vmatprep.subr.mxu0 0.0
  %5929 = vmatpush1.msra.mxu0 0.0
  %5930 = vmatprep.subr.mxu0 0.0
  %5931 = vmatpush1.msra.mxu0 0.0
  %5932 = vmatprep.subr.mxu0 0.0
  %5933 = vmatpush1.msra.mxu0 0.0
  %5934 = vmatprep.subr.mxu0 0.0
  %5935 = vmatpush1.msra.mxu0 %v5893
  %5936 = vmatprep.subr.mxu0 0.0
  %5937 = vmatpush1.msra.mxu0 %v5892
  %5938 = vmatprep.subr.mxu0 0.0
  %5939 = vmatpush1.msra.mxu0 %v5891
  %5940 = vmatprep.subr.mxu0 0.0
  %5941 = vmatpush1.msra.mxu0 %v5890
  %5942 = vmatprep.subr.mxu0 0.0
  %5943 = vmatpush1.msra.mxu0 %v5889
  %5944 = vmatprep.subr.mxu0 0.0
  %5945 = vmatpush1.msra.mxu0 %v5888
  %5946 = vmatprep.subr.mxu0 0.0
  %5947 = vmatpush1.msra.mxu0 %v5887
  %5948 = vmatprep.subr.mxu0 0.0
  %5949 = vmatpush1.msra.mxu0 %v5886
  %5950 = vmatprep.subr.mxu0 0.0
  %5951 = vmatpush2.msra.mxu0 0.0
  %5952 = vmatprep.subr.mxu0 0.0
  %5953 = vmatpush2.msra.mxu0 0.0
  %5954 = vmatprep.subr.mxu0 0.0
  %5955 = vmatpush2.msra.mxu0 0.0
  %5956 = vmatprep.subr.mxu0 0.0
  %5957 = vmatpush2.msra.mxu0 0.0
  %5958 = vmatprep.subr.mxu0 0.0
  %5959 = vmatpush2.msra.mxu0 0.0
  %5960 = vmatprep.subr.mxu0 0.0
  %5961 = vmatpush2.msra.mxu0 0.0
  %5962 = vmatprep.subr.mxu0 0.0
  %5963 = vmatpush2.msra.mxu0 0.0
  %5964 = vmatprep.subr.mxu0 0.0
  %5965 = vmatpush2.msra.mxu0 0.0
  %5966 = vmatprep.subr.mxu0 0.0
  %5967 = vmatpush2.msra.mxu0 0.0
  %5968 = vmatprep.subr.mxu0 0.0
  %5969 = vmatpush2.msra.mxu0 0.0
  %5970 = vmatprep.subr.mxu0 0.0
  %5971 = vmatpush2.msra.mxu0 0.0
  %5972 = vmatprep.subr.mxu0 0.0
  %5973 = vmatpush2.msra.mxu0 0.0
  %5974 = vmatprep.subr.mxu0 0.0
  %5975 = vmatpush2.msra.mxu0 0.0
  %5976 = vmatprep.subr.mxu0 0.0
  %5977 = vmatpush2.msra.mxu0 0.0
  %5978 = vmatprep.subr.mxu0 0.0
  %5979 = vmatpush2.msra.mxu0 0.0
  %5980 = vmatprep.subr.mxu0 0.0
  %5981 = vmatpush2.msra.mxu0 0.0
  %5982 = vmatprep.mubr.f32.mxu0 0.0
  %5983 = vmatmul.mubr.f32.gmra.mxu0 %v5895
  %v5984 = vpop.f32.mrf.mxu0
  %v5985 = vadd.f32 0.0, %v5984
  %v5986 = vpop.f32.mrf.mxu0
  %5987 = vmatprep.mubr.f32.mxu0 0.0
  %5988 = vmatmul.mubr.f32.gmra.mxu0 %v5898
  %v5989 = vpop.f32.mrf.mxu0
  %v5990 = vadd.f32 0.0, %v5989
  %v5991 = vpop.f32.mrf.mxu0
  %5992 = vmatprep.mubr.f32.mxu0 0.0
  %5993 = vmatmul.mubr.f32.gmra.mxu0 %v5901
  %v5994 = vpop.f32.mrf.mxu0
  %v5995 = vadd.f32 0.0, %v5994
  %v5996 = vpop.f32.mrf.mxu0
  %5997 = vmatprep.mubr.f32.mxu0 0.0
  %5998 = vmatmul.mubr.f32.gmra.mxu0 %v5904
  %v5999 = vpop.f32.mrf.mxu0
  %v6000 = vadd.f32 0.0, %v5999
  %v6001 = vpop.f32.mrf.mxu0
  %6002 = vmatprep.mubr.f32.mxu0 0.0
  %6003 = vmatmul.mubr.f32.gmra.mxu0 %v5907
  %v6004 = vpop.f32.mrf.mxu0
  %v6005 = vadd.f32 0.0, %v6004
  %v6006 = vpop.f32.mrf.mxu0
  %6007 = vmatprep.mubr.f32.mxu0 0.0
  %6008 = vmatmul.mubr.f32.gmra.mxu0 %v5910
  %v6009 = vpop.f32.mrf.mxu0
  %v6010 = vadd.f32 0.0, %v6009
  %v6011 = vpop.f32.mrf.mxu0
  %6012 = vmatprep.mubr.f32.mxu0 0.0
  %6013 = vmatmul.mubr.f32.gmra.mxu0 %v5913
  %v6014 = vpop.f32.mrf.mxu0
  %v6015 = vadd.f32 0.0, %v6014
  %v6016 = vpop.f32.mrf.mxu0
  %6017 = vmatprep.mubr.f32.mxu0 0.0
  %6018 = vmatmul.mubr.f32.gmra.mxu0 %v5916
  %v6019 = vpop.f32.mrf.mxu0
  %v6020 = vadd.f32 0.0, %v6019
  %v6021 = vpop.f32.mrf.mxu0
  %6022 = vdwg.mxu0
  %v6023 = vadd.f32 %v5861, %v5985
  %v6024 = vadd.f32 %v5862, %v5990
  %v6025 = vadd.f32 %v5863, %v5995
  %v6026 = vadd.f32 %v5864, %v6000
  %v6027 = vadd.f32 %v5865, %v6005
  %v6028 = vadd.f32 %v5866, %v6010
  %v6029 = vadd.f32 %v5867, %v6015
  %v6030 = vadd.f32 %v5868, %v6020
  %s6031 = scalar_lea.vmem [#allocation4], 4
  %v6032 = vld [vmem:[%s6031] ss:$2 sm:$0xff]
  %s6033 = scalar_lea.vmem [#allocation4], 20
  %v6034 = vld [vmem:[%s6033] ss:$2 sm:$0xff]
  %s6035 = scalar_lea.vmem [#allocation4], 36
  %v6036 = vld [vmem:[%s6035] ss:$2 sm:$0xff]
  %s6037 = scalar_lea.vmem [#allocation4], 52
  %v6038 = vld [vmem:[%s6037] ss:$2 sm:$0xff]
  %s6039 = scalar_lea.vmem [#allocation4], 68
  %v6040 = vld [vmem:[%s6039] ss:$2 sm:$0xff]
  %s6041 = scalar_lea.vmem [#allocation4], 84
  %v6042 = vld [vmem:[%s6041] ss:$2 sm:$0xff]
  %s6043 = scalar_lea.vmem [#allocation4], 100
  %v6044 = vld [vmem:[%s6043] ss:$2 sm:$0xff]
  %s6045 = scalar_lea.vmem [#allocation4], 116
  %v6046 = vld [vmem:[%s6045] ss:$2 sm:$0xf]
  %s6047 = scalar_lea.vmem %s5, 256
  %v6048 = vld [vmem:[%s6047] sm:$0xff]
  %v6049 = vld [vmem:[%s6047 + $0x8] sm:$0xff]
  %v6050 = vld [vmem:[%s6047 + $0x10] sm:$0xff]
  %v6051 = vld [vmem:[%s6047 + $0x18] sm:$0xff]
  %v6052 = vld [vmem:[%s6047 + $0x20] sm:$0xff]
  %v6053 = vld [vmem:[%s6047 + $0x28] sm:$0xff]
  %v6054 = vld [vmem:[%s6047 + $0x30] sm:$0xff]
  %v6055 = vld [vmem:[%s6047 + $0x38] sm:$0xff]
  %v6057 = vsel %vm905, %v6032, 0
  %v6060 = vsel %vm905, %v6034, 0
  %v6063 = vsel %vm905, %v6036, 0
  %v6066 = vsel %vm905, %v6038, 0
  %v6069 = vsel %vm905, %v6040, 0
  %v6072 = vsel %vm905, %v6042, 0
  %v6075 = vsel %vm905, %v6044, 0
  %v6078 = vsel %vm905, %v6046, 0
  %6080 = vmatprep.subr.mxu0 0.0
  %6081 = vmatpush1.msra.mxu0 0.0
  %6082 = vmatprep.subr.mxu0 0.0
  %6083 = vmatpush1.msra.mxu0 0.0
  %6084 = vmatprep.subr.mxu0 0.0
  %6085 = vmatpush1.msra.mxu0 0.0
  %6086 = vmatprep.subr.mxu0 0.0
  %6087 = vmatpush1.msra.mxu0 0.0
  %6088 = vmatprep.subr.mxu0 0.0
  %6089 = vmatpush1.msra.mxu0 0.0
  %6090 = vmatprep.subr.mxu0 0.0
  %6091 = vmatpush1.msra.mxu0 0.0
  %6092 = vmatprep.subr.mxu0 0.0
  %6093 = vmatpush1.msra.mxu0 0.0
  %6094 = vmatprep.subr.mxu0 0.0
  %6095 = vmatpush1.msra.mxu0 0.0
  %6096 = vmatprep.subr.mxu0 0.0
  %6097 = vmatpush1.msra.mxu0 %v6055
  %6098 = vmatprep.subr.mxu0 0.0
  %6099 = vmatpush1.msra.mxu0 %v6054
  %6100 = vmatprep.subr.mxu0 0.0
  %6101 = vmatpush1.msra.mxu0 %v6053
  %6102 = vmatprep.subr.mxu0 0.0
  %6103 = vmatpush1.msra.mxu0 %v6052
  %6104 = vmatprep.subr.mxu0 0.0
  %6105 = vmatpush1.msra.mxu0 %v6051
  %6106 = vmatprep.subr.mxu0 0.0
  %6107 = vmatpush1.msra.mxu0 %v6050
  %6108 = vmatprep.subr.mxu0 0.0
  %6109 = vmatpush1.msra.mxu0 %v6049
  %6110 = vmatprep.subr.mxu0 0.0
  %6111 = vmatpush1.msra.mxu0 %v6048
  %6112 = vmatprep.subr.mxu0 0.0
  %6113 = vmatpush2.msra.mxu0 0.0
  %6114 = vmatprep.subr.mxu0 0.0
  %6115 = vmatpush2.msra.mxu0 0.0
  %6116 = vmatprep.subr.mxu0 0.0
  %6117 = vmatpush2.msra.mxu0 0.0
  %6118 = vmatprep.subr.mxu0 0.0
  %6119 = vmatpush2.msra.mxu0 0.0
  %6120 = vmatprep.subr.mxu0 0.0
  %6121 = vmatpush2.msra.mxu0 0.0
  %6122 = vmatprep.subr.mxu0 0.0
  %6123 = vmatpush2.msra.mxu0 0.0
  %6124 = vmatprep.subr.mxu0 0.0
  %6125 = vmatpush2.msra.mxu0 0.0
  %6126 = vmatprep.subr.mxu0 0.0
  %6127 = vmatpush2.msra.mxu0 0.0
  %6128 = vmatprep.subr.mxu0 0.0
  %6129 = vmatpush2.msra.mxu0 0.0
  %6130 = vmatprep.subr.mxu0 0.0
  %6131 = vmatpush2.msra.mxu0 0.0
  %6132 = vmatprep.subr.mxu0 0.0
  %6133 = vmatpush2.msra.mxu0 0.0
  %6134 = vmatprep.subr.mxu0 0.0
  %6135 = vmatpush2.msra.mxu0 0.0
  %6136 = vmatprep.subr.mxu0 0.0
  %6137 = vmatpush2.msra.mxu0 0.0
  %6138 = vmatprep.subr.mxu0 0.0
  %6139 = vmatpush2.msra.mxu0 0.0
  %6140 = vmatprep.subr.mxu0 0.0
  %6141 = vmatpush2.msra.mxu0 0.0
  %6142 = vmatprep.subr.mxu0 0.0
  %6143 = vmatpush2.msra.mxu0 0.0
  %6144 = vmatprep.mubr.f32.mxu0 0.0
  %6145 = vmatmul.mubr.f32.gmra.mxu0 %v6057
  %v6146 = vpop.f32.mrf.mxu0
  %v6147 = vadd.f32 0.0, %v6146
  %v6148 = vpop.f32.mrf.mxu0
  %6149 = vmatprep.mubr.f32.mxu0 0.0
  %6150 = vmatmul.mubr.f32.gmra.mxu0 %v6060
  %v6151 = vpop.f32.mrf.mxu0
  %v6152 = vadd.f32 0.0, %v6151
  %v6153 = vpop.f32.mrf.mxu0
  %6154 = vmatprep.mubr.f32.mxu0 0.0
  %6155 = vmatmul.mubr.f32.gmra.mxu0 %v6063
  %v6156 = vpop.f32.mrf.mxu0
  %v6157 = vadd.f32 0.0, %v6156
  %v6158 = vpop.f32.mrf.mxu0
  %6159 = vmatprep.mubr.f32.mxu0 0.0
  %6160 = vmatmul.mubr.f32.gmra.mxu0 %v6066
  %v6161 = vpop.f32.mrf.mxu0
  %v6162 = vadd.f32 0.0, %v6161
  %v6163 = vpop.f32.mrf.mxu0
  %6164 = vmatprep.mubr.f32.mxu0 0.0
  %6165 = vmatmul.mubr.f32.gmra.mxu0 %v6069
  %v6166 = vpop.f32.mrf.mxu0
  %v6167 = vadd.f32 0.0, %v6166
  %v6168 = vpop.f32.mrf.mxu0
  %6169 = vmatprep.mubr.f32.mxu0 0.0
  %6170 = vmatmul.mubr.f32.gmra.mxu0 %v6072
  %v6171 = vpop.f32.mrf.mxu0
  %v6172 = vadd.f32 0.0, %v6171
  %v6173 = vpop.f32.mrf.mxu0
  %6174 = vmatprep.mubr.f32.mxu0 0.0
  %6175 = vmatmul.mubr.f32.gmra.mxu0 %v6075
  %v6176 = vpop.f32.mrf.mxu0
  %v6177 = vadd.f32 0.0, %v6176
  %v6178 = vpop.f32.mrf.mxu0
  %6179 = vmatprep.mubr.f32.mxu0 0.0
  %6180 = vmatmul.mubr.f32.gmra.mxu0 %v6078
  %v6181 = vpop.f32.mrf.mxu0
  %v6182 = vadd.f32 0.0, %v6181
  %v6183 = vpop.f32.mrf.mxu0
  %6184 = vdwg.mxu0
  %v6185 = vadd.f32 %v6023, %v6147
  %v6186 = vadd.f32 %v6024, %v6152
  %v6187 = vadd.f32 %v6025, %v6157
  %v6188 = vadd.f32 %v6026, %v6162
  %v6189 = vadd.f32 %v6027, %v6167
  %v6190 = vadd.f32 %v6028, %v6172
  %v6191 = vadd.f32 %v6029, %v6177
  %v6192 = vadd.f32 %v6030, %v6182
  %s6193 = scalar_lea.vmem [#allocation4], 5
  %v6194 = vld [vmem:[%s6193] ss:$2 sm:$0xff]
  %s6195 = scalar_lea.vmem [#allocation4], 21
  %v6196 = vld [vmem:[%s6195] ss:$2 sm:$0xff]
  %s6197 = scalar_lea.vmem [#allocation4], 37
  %v6198 = vld [vmem:[%s6197] ss:$2 sm:$0xff]
  %s6199 = scalar_lea.vmem [#allocation4], 53
  %v6200 = vld [vmem:[%s6199] ss:$2 sm:$0xff]
  %s6201 = scalar_lea.vmem [#allocation4], 69
  %v6202 = vld [vmem:[%s6201] ss:$2 sm:$0xff]
  %s6203 = scalar_lea.vmem [#allocation4], 85
  %v6204 = vld [vmem:[%s6203] ss:$2 sm:$0xff]
  %s6205 = scalar_lea.vmem [#allocation4], 101
  %v6206 = vld [vmem:[%s6205] ss:$2 sm:$0xff]
  %s6207 = scalar_lea.vmem [#allocation4], 117
  %v6208 = vld [vmem:[%s6207] ss:$2 sm:$0xf]
  %s6209 = scalar_lea.vmem %s5, 320
  %v6210 = vld [vmem:[%s6209] sm:$0xff]
  %v6211 = vld [vmem:[%s6209 + $0x8] sm:$0xff]
  %v6212 = vld [vmem:[%s6209 + $0x10] sm:$0xff]
  %v6213 = vld [vmem:[%s6209 + $0x18] sm:$0xff]
  %v6214 = vld [vmem:[%s6209 + $0x20] sm:$0xff]
  %v6215 = vld [vmem:[%s6209 + $0x28] sm:$0xff]
  %v6216 = vld [vmem:[%s6209 + $0x30] sm:$0xff]
  %v6217 = vld [vmem:[%s6209 + $0x38] sm:$0xff]
  %v6219 = vsel %vm905, %v6194, 0
  %v6222 = vsel %vm905, %v6196, 0
  %v6225 = vsel %vm905, %v6198, 0
  %v6228 = vsel %vm905, %v6200, 0
  %v6231 = vsel %vm905, %v6202, 0
  %v6234 = vsel %vm905, %v6204, 0
  %v6237 = vsel %vm905, %v6206, 0
  %v6240 = vsel %vm905, %v6208, 0
  %6242 = vmatprep.subr.mxu0 0.0
  %6243 = vmatpush1.msra.mxu0 0.0
  %6244 = vmatprep.subr.mxu0 0.0
  %6245 = vmatpush1.msra.mxu0 0.0
  %6246 = vmatprep.subr.mxu0 0.0
  %6247 = vmatpush1.msra.mxu0 0.0
  %6248 = vmatprep.subr.mxu0 0.0
  %6249 = vmatpush1.msra.mxu0 0.0
  %6250 = vmatprep.subr.mxu0 0.0
  %6251 = vmatpush1.msra.mxu0 0.0
  %6252 = vmatprep.subr.mxu0 0.0
  %6253 = vmatpush1.msra.mxu0 0.0
  %6254 = vmatprep.subr.mxu0 0.0
  %6255 = vmatpush1.msra.mxu0 0.0
  %6256 = vmatprep.subr.mxu0 0.0
  %6257 = vmatpush1.msra.mxu0 0.0
  %6258 = vmatprep.subr.mxu0 0.0
  %6259 = vmatpush1.msra.mxu0 %v6217
  %6260 = vmatprep.subr.mxu0 0.0
  %6261 = vmatpush1.msra.mxu0 %v6216
  %6262 = vmatprep.subr.mxu0 0.0
  %6263 = vmatpush1.msra.mxu0 %v6215
  %6264 = vmatprep.subr.mxu0 0.0
  %6265 = vmatpush1.msra.mxu0 %v6214
  %6266 = vmatprep.subr.mxu0 0.0
  %6267 = vmatpush1.msra.mxu0 %v6213
  %6268 = vmatprep.subr.mxu0 0.0
  %6269 = vmatpush1.msra.mxu0 %v6212
  %6270 = vmatprep.subr.mxu0 0.0
  %6271 = vmatpush1.msra.mxu0 %v6211
  %6272 = vmatprep.subr.mxu0 0.0
  %6273 = vmatpush1.msra.mxu0 %v6210
  %6274 = vmatprep.subr.mxu0 0.0
  %6275 = vmatpush2.msra.mxu0 0.0
  %6276 = vmatprep.subr.mxu0 0.0
  %6277 = vmatpush2.msra.mxu0 0.0
  %6278 = vmatprep.subr.mxu0 0.0
  %6279 = vmatpush2.msra.mxu0 0.0
  %6280 = vmatprep.subr.mxu0 0.0
  %6281 = vmatpush2.msra.mxu0 0.0
  %6282 = vmatprep.subr.mxu0 0.0
  %6283 = vmatpush2.msra.mxu0 0.0
  %6284 = vmatprep.subr.mxu0 0.0
  %6285 = vmatpush2.msra.mxu0 0.0
  %6286 = vmatprep.subr.mxu0 0.0
  %6287 = vmatpush2.msra.mxu0 0.0
  %6288 = vmatprep.subr.mxu0 0.0
  %6289 = vmatpush2.msra.mxu0 0.0
  %6290 = vmatprep.subr.mxu0 0.0
  %6291 = vmatpush2.msra.mxu0 0.0
  %6292 = vmatprep.subr.mxu0 0.0
  %6293 = vmatpush2.msra.mxu0 0.0
  %6294 = vmatprep.subr.mxu0 0.0
  %6295 = vmatpush2.msra.mxu0 0.0
  %6296 = vmatprep.subr.mxu0 0.0
  %6297 = vmatpush2.msra.mxu0 0.0
  %6298 = vmatprep.subr.mxu0 0.0
  %6299 = vmatpush2.msra.mxu0 0.0
  %6300 = vmatprep.subr.mxu0 0.0
  %6301 = vmatpush2.msra.mxu0 0.0
  %6302 = vmatprep.subr.mxu0 0.0
  %6303 = vmatpush2.msra.mxu0 0.0
  %6304 = vmatprep.subr.mxu0 0.0
  %6305 = vmatpush2.msra.mxu0 0.0
  %6306 = vmatprep.mubr.f32.mxu0 0.0
  %6307 = vmatmul.mubr.f32.gmra.mxu0 %v6219
  %v6308 = vpop.f32.mrf.mxu0
  %v6309 = vadd.f32 0.0, %v6308
  %v6310 = vpop.f32.mrf.mxu0
  %6311 = vmatprep.mubr.f32.mxu0 0.0
  %6312 = vmatmul.mubr.f32.gmra.mxu0 %v6222
  %v6313 = vpop.f32.mrf.mxu0
  %v6314 = vadd.f32 0.0, %v6313
  %v6315 = vpop.f32.mrf.mxu0
  %6316 = vmatprep.mubr.f32.mxu0 0.0
  %6317 = vmatmul.mubr.f32.gmra.mxu0 %v6225
  %v6318 = vpop.f32.mrf.mxu0
  %v6319 = vadd.f32 0.0, %v6318
  %v6320 = vpop.f32.mrf.mxu0
  %6321 = vmatprep.mubr.f32.mxu0 0.0
  %6322 = vmatmul.mubr.f32.gmra.mxu0 %v6228
  %v6323 = vpop.f32.mrf.mxu0
  %v6324 = vadd.f32 0.0, %v6323
  %v6325 = vpop.f32.mrf.mxu0
  %6326 = vmatprep.mubr.f32.mxu0 0.0
  %6327 = vmatmul.mubr.f32.gmra.mxu0 %v6231
  %v6328 = vpop.f32.mrf.mxu0
  %v6329 = vadd.f32 0.0, %v6328
  %v6330 = vpop.f32.mrf.mxu0
  %6331 = vmatprep.mubr.f32.mxu0 0.0
  %6332 = vmatmul.mubr.f32.gmra.mxu0 %v6234
  %v6333 = vpop.f32.mrf.mxu0
  %v6334 = vadd.f32 0.0, %v6333
  %v6335 = vpop.f32.mrf.mxu0
  %6336 = vmatprep.mubr.f32.mxu0 0.0
  %6337 = vmatmul.mubr.f32.gmra.mxu0 %v6237
  %v6338 = vpop.f32.mrf.mxu0
  %v6339 = vadd.f32 0.0, %v6338
  %v6340 = vpop.f32.mrf.mxu0
  %6341 = vmatprep.mubr.f32.mxu0 0.0
  %6342 = vmatmul.mubr.f32.gmra.mxu0 %v6240
  %v6343 = vpop.f32.mrf.mxu0
  %v6344 = vadd.f32 0.0, %v6343
  %v6345 = vpop.f32.mrf.mxu0
  %6346 = vdwg.mxu0
  %v6347 = vadd.f32 %v6185, %v6309
  %v6348 = vadd.f32 %v6186, %v6314
  %v6349 = vadd.f32 %v6187, %v6319
  %v6350 = vadd.f32 %v6188, %v6324
  %v6351 = vadd.f32 %v6189, %v6329
  %v6352 = vadd.f32 %v6190, %v6334
  %v6353 = vadd.f32 %v6191, %v6339
  %v6354 = vadd.f32 %v6192, %v6344
  %v6355 = vlaneseq
  %v6356 = vshrl.u32 %v6355, 7
  %v6357 = vsub.s32 0, %v6356
  %v6358 = vrot.slane %v5400, %v6357
  %v6359 = vadd.f32 %v6347, %v6358
  %v6360 = vadd.f32 %v6348, %v6358
  %v6361 = vadd.f32 %v6349, %v6358
  %v6362 = vadd.f32 %v6350, %v6358
  %v6363 = vadd.f32 %v6351, %v6358
  %v6364 = vadd.f32 %v6352, %v6358
  %v6365 = vadd.f32 %v6353, %v6358
  %v6366 = vadd.f32 %v6354, %v6358
  %6367 = vst [vmem:[#allocation5] sm:$0xff] %v6359
  %6368 = vst [vmem:[#allocation5 + $0x8] sm:$0xff] %v6360
  %6369 = vst [vmem:[#allocation5 + $0x10] sm:$0xff] %v6361
  %6370 = vst [vmem:[#allocation5 + $0x18] sm:$0xff] %v6362
  %6371 = vst [vmem:[#allocation5 + $0x20] sm:$0xff] %v6363
  %6372 = vst [vmem:[#allocation5 + $0x28] sm:$0xff] %v6364
  %6373 = vst [vmem:[#allocation5 + $0x30] sm:$0xff] %v6365
  %6374 = vst [vmem:[#allocation5 + $0x38] sm:$0xf] %v6366
  %s6375 = smul.u32 26, 128
  %s6376 = smul.u32 %s6375, 1
  %s6377 = sshll.u32 %s6376, 4
  %6378 = dma.done [#allocation7], %s6377
  %v6379 = vld [vmem:[#allocation5] ss:$30 sm:$0x3]
  %v6380 = vld [vmem:[#allocation6] sm:$0xff]
  %v6381 = vld [vmem:[#allocation6 + $0x8] sm:$0xff]
  %v6382 = vld [vmem:[#allocation6 + $0x10] sm:$0xff]
  %v6383 = vld [vmem:[#allocation6 + $0x18] sm:$0xff]
  %v6384 = vld [vmem:[#allocation6 + $0x20] sm:$0xff]
  %v6385 = vld [vmem:[#allocation6 + $0x28] sm:$0xff]
  %v6386 = vld [vmem:[#allocation6 + $0x30] sm:$0xff]
  %v6387 = vld [vmem:[#allocation6 + $0x38] sm:$0xff]
  %v6388 = vld [vmem:[#allocation6 + $0x40] sm:$0xff]
  %v6389 = vld [vmem:[#allocation6 + $0x48] sm:$0xff]
  %v6390 = vld [vmem:[#allocation6 + $0x50] sm:$0xff]
  %v6391 = vld [vmem:[#allocation6 + $0x58] sm:$0xff]
  %v6392 = vld [vmem:[#allocation6 + $0x60] sm:$0xff]
  %v6393 = vld [vmem:[#allocation6 + $0x68] sm:$0xff]
  %v6394 = vld [vmem:[#allocation6 + $0x70] sm:$0xff]
  %v6395 = vld [vmem:[#allocation6 + $0x78] sm:$0xff]
  %s6396 = scalar_lea.vmem [#allocation5], 1
  %v6397 = vld [vmem:[%s6396] ss:$30 sm:$0x3]
  %s6398 = scalar_lea.vmem [#allocation6], 128
  %v6399 = vld [vmem:[%s6398] sm:$0xff]
  %v6400 = vld [vmem:[%s6398 + $0x8] sm:$0xff]
  %v6401 = vld [vmem:[%s6398 + $0x10] sm:$0xff]
  %v6402 = vld [vmem:[%s6398 + $0x18] sm:$0xff]
  %v6403 = vld [vmem:[%s6398 + $0x20] sm:$0xff]
  %v6404 = vld [vmem:[%s6398 + $0x28] sm:$0xff]
  %v6405 = vld [vmem:[%s6398 + $0x30] sm:$0xff]
  %v6406 = vld [vmem:[%s6398 + $0x38] sm:$0xff]
  %v6407 = vld [vmem:[%s6398 + $0x40] sm:$0xff]
  %v6408 = vld [vmem:[%s6398 + $0x48] sm:$0xff]
  %v6409 = vld [vmem:[%s6398 + $0x50] sm:$0xff]
  %v6410 = vld [vmem:[%s6398 + $0x58] sm:$0xff]
  %v6411 = vld [vmem:[%s6398 + $0x60] sm:$0xff]
  %v6412 = vld [vmem:[%s6398 + $0x68] sm:$0xff]
  %v6413 = vld [vmem:[%s6398 + $0x70] sm:$0xff]
  %v6414 = vld [vmem:[%s6398 + $0x78] sm:$0xff]
  %6415 = vmatprep.subr.mxu0 0.0
  %6416 = vmatpush1.msra.mxu0 %v6414
  %6417 = vmatprep.subr.mxu0 0.0
  %6418 = vmatpush1.msra.mxu0 %v6413
  %6419 = vmatprep.subr.mxu0 0.0
  %6420 = vmatpush1.msra.mxu0 %v6412
  %6421 = vmatprep.subr.mxu0 0.0
  %6422 = vmatpush1.msra.mxu0 %v6411
  %6423 = vmatprep.subr.mxu0 0.0
  %6424 = vmatpush1.msra.mxu0 %v6410
  %6425 = vmatprep.subr.mxu0 0.0
  %6426 = vmatpush1.msra.mxu0 %v6409
  %6427 = vmatprep.subr.mxu0 0.0
  %6428 = vmatpush1.msra.mxu0 %v6408
  %6429 = vmatprep.subr.mxu0 0.0
  %6430 = vmatpush1.msra.mxu0 %v6407
  %6431 = vmatprep.subr.mxu0 0.0
  %6432 = vmatpush1.msra.mxu0 %v6406
  %6433 = vmatprep.subr.mxu0 0.0
  %6434 = vmatpush1.msra.mxu0 %v6405
  %6435 = vmatprep.subr.mxu0 0.0
  %6436 = vmatpush1.msra.mxu0 %v6404
  %6437 = vmatprep.subr.mxu0 0.0
  %6438 = vmatpush1.msra.mxu0 %v6403
  %6439 = vmatprep.subr.mxu0 0.0
  %6440 = vmatpush1.msra.mxu0 %v6402
  %6441 = vmatprep.subr.mxu0 0.0
  %6442 = vmatpush1.msra.mxu0 %v6401
  %6443 = vmatprep.subr.mxu0 0.0
  %6444 = vmatpush1.msra.mxu0 %v6400
  %6445 = vmatprep.subr.mxu0 0.0
  %6446 = vmatpush1.msra.mxu0 %v6399
  %6447 = vmatprep.subr.mxu0 0.0
  %6448 = vmatpush2.msra.mxu0 0.0
  %6449 = vmatprep.subr.mxu0 0.0
  %6450 = vmatpush2.msra.mxu0 0.0
  %6451 = vmatprep.subr.mxu0 0.0
  %6452 = vmatpush2.msra.mxu0 0.0
  %6453 = vmatprep.subr.mxu0 0.0
  %6454 = vmatpush2.msra.mxu0 0.0
  %6455 = vmatprep.subr.mxu0 0.0
  %6456 = vmatpush2.msra.mxu0 0.0
  %6457 = vmatprep.subr.mxu0 0.0
  %6458 = vmatpush2.msra.mxu0 0.0
  %6459 = vmatprep.subr.mxu0 0.0
  %6460 = vmatpush2.msra.mxu0 0.0
  %6461 = vmatprep.subr.mxu0 0.0
  %6462 = vmatpush2.msra.mxu0 0.0
  %6463 = vmatprep.subr.mxu0 0.0
  %6464 = vmatpush2.msra.mxu0 0.0
  %6465 = vmatprep.subr.mxu0 0.0
  %6466 = vmatpush2.msra.mxu0 0.0
  %6467 = vmatprep.subr.mxu0 0.0
  %6468 = vmatpush2.msra.mxu0 0.0
  %6469 = vmatprep.subr.mxu0 0.0
  %6470 = vmatpush2.msra.mxu0 0.0
  %6471 = vmatprep.subr.mxu0 0.0
  %6472 = vmatpush2.msra.mxu0 0.0
  %6473 = vmatprep.subr.mxu0 0.0
  %6474 = vmatpush2.msra.mxu0 0.0
  %6475 = vmatprep.subr.mxu0 0.0
  %6476 = vmatpush2.msra.mxu0 0.0
  %6477 = vmatprep.subr.mxu0 0.0
  %6478 = vmatpush2.msra.mxu0 0.0
  %6479 = vmatprep.mubr.f32.mxu0 0.0
  %6480 = vmatmul.mubr.f32.gmra.mxu0 %v6397
  %v6481 = vpop.f32.mrf.mxu0
  %v6482 = vadd.f32 0.0, %v6481
  %v6483 = vpop.f32.mrf.mxu0
  %6484 = vdwg.mxu0
  %6485 = vmatprep.subr.mxu0 0.0
  %6486 = vmatpush1.msra.mxu0 %v6395
  %6487 = vmatprep.subr.mxu0 0.0
  %6488 = vmatpush1.msra.mxu0 %v6394
  %6489 = vmatprep.subr.mxu0 0.0
  %6490 = vmatpush1.msra.mxu0 %v6393
  %6491 = vmatprep.subr.mxu0 0.0
  %6492 = vmatpush1.msra.mxu0 %v6392
  %6493 = vmatprep.subr.mxu0 0.0
  %6494 = vmatpush1.msra.mxu0 %v6391
  %6495 = vmatprep.subr.mxu0 0.0
  %6496 = vmatpush1.msra.mxu0 %v6390
  %6497 = vmatprep.subr.mxu0 0.0
  %6498 = vmatpush1.msra.mxu0 %v6389
  %6499 = vmatprep.subr.mxu0 0.0
  %6500 = vmatpush1.msra.mxu0 %v6388
  %6501 = vmatprep.subr.mxu0 0.0
  %6502 = vmatpush1.msra.mxu0 %v6387
  %6503 = vmatprep.subr.mxu0 0.0
  %6504 = vmatpush1.msra.mxu0 %v6386
  %6505 = vmatprep.subr.mxu0 0.0
  %6506 = vmatpush1.msra.mxu0 %v6385
  %6507 = vmatprep.subr.mxu0 0.0
  %6508 = vmatpush1.msra.mxu0 %v6384
  %6509 = vmatprep.subr.mxu0 0.0
  %6510 = vmatpush1.msra.mxu0 %v6383
  %6511 = vmatprep.subr.mxu0 0.0
  %6512 = vmatpush1.msra.mxu0 %v6382
  %6513 = vmatprep.subr.mxu0 0.0
  %6514 = vmatpush1.msra.mxu0 %v6381
  %6515 = vmatprep.subr.mxu0 0.0
  %6516 = vmatpush1.msra.mxu0 %v6380
  %6517 = vmatprep.subr.mxu0 0.0
  %6518 = vmatpush2.msra.mxu0 0.0
  %6519 = vmatprep.subr.mxu0 0.0
  %6520 = vmatpush2.msra.mxu0 0.0
  %6521 = vmatprep.subr.mxu0 0.0
  %6522 = vmatpush2.msra.mxu0 0.0
  %6523 = vmatprep.subr.mxu0 0.0
  %6524 = vmatpush2.msra.mxu0 0.0
  %6525 = vmatprep.subr.mxu0 0.0
  %6526 = vmatpush2.msra.mxu0 0.0
  %6527 = vmatprep.subr.mxu0 0.0
  %6528 = vmatpush2.msra.mxu0 0.0
  %6529 = vmatprep.subr.mxu0 0.0
  %6530 = vmatpush2.msra.mxu0 0.0
  %6531 = vmatprep.subr.mxu0 0.0
  %6532 = vmatpush2.msra.mxu0 0.0
  %6533 = vmatprep.subr.mxu0 0.0
  %6534 = vmatpush2.msra.mxu0 0.0
  %6535 = vmatprep.subr.mxu0 0.0
  %6536 = vmatpush2.msra.mxu0 0.0
  %6537 = vmatprep.subr.mxu0 0.0
  %6538 = vmatpush2.msra.mxu0 0.0
  %6539 = vmatprep.subr.mxu0 0.0
  %6540 = vmatpush2.msra.mxu0 0.0
  %6541 = vmatprep.subr.mxu0 0.0
  %6542 = vmatpush2.msra.mxu0 0.0
  %6543 = vmatprep.subr.mxu0 0.0
  %6544 = vmatpush2.msra.mxu0 0.0
  %6545 = vmatprep.subr.mxu0 0.0
  %6546 = vmatpush2.msra.mxu0 0.0
  %6547 = vmatprep.subr.mxu0 0.0
  %6548 = vmatpush2.msra.mxu0 0.0
  %6549 = vmatprep.mubr.f32.mxu0 0.0
  %6550 = vmatmul.mubr.f32.gmra.mxu0 %v6379
  %v6551 = vpop.f32.mrf.mxu0
  %v6552 = vadd.f32 %v6482, %v6551
  %v6553 = vpop.f32.mrf.mxu0
  %6554 = vdwg.mxu0
  %s6555 = scalar_lea.vmem [#allocation5], 2
  %v6556 = vld [vmem:[%s6555] ss:$30 sm:$0x3]
  %s6557 = scalar_lea.vmem [#allocation6], 256
  %v6558 = vld [vmem:[%s6557] sm:$0xff]
  %v6559 = vld [vmem:[%s6557 + $0x8] sm:$0xff]
  %v6560 = vld [vmem:[%s6557 + $0x10] sm:$0xff]
  %v6561 = vld [vmem:[%s6557 + $0x18] sm:$0xff]
  %v6562 = vld [vmem:[%s6557 + $0x20] sm:$0xff]
  %v6563 = vld [vmem:[%s6557 + $0x28] sm:$0xff]
  %v6564 = vld [vmem:[%s6557 + $0x30] sm:$0xff]
  %v6565 = vld [vmem:[%s6557 + $0x38] sm:$0xff]
  %v6566 = vld [vmem:[%s6557 + $0x40] sm:$0xff]
  %v6567 = vld [vmem:[%s6557 + $0x48] sm:$0xff]
  %v6568 = vld [vmem:[%s6557 + $0x50] sm:$0xff]
  %v6569 = vld [vmem:[%s6557 + $0x58] sm:$0xff]
  %v6570 = vld [vmem:[%s6557 + $0x60] sm:$0xff]
  %v6571 = vld [vmem:[%s6557 + $0x68] sm:$0xff]
  %v6572 = vld [vmem:[%s6557 + $0x70] sm:$0xff]
  %v6573 = vld [vmem:[%s6557 + $0x78] sm:$0xff]
  %6574 = vmatprep.subr.mxu0 0.0
  %6575 = vmatpush1.msra.mxu0 %v6573
  %6576 = vmatprep.subr.mxu0 0.0
  %6577 = vmatpush1.msra.mxu0 %v6572
  %6578 = vmatprep.subr.mxu0 0.0
  %6579 = vmatpush1.msra.mxu0 %v6571
  %6580 = vmatprep.subr.mxu0 0.0
  %6581 = vmatpush1.msra.mxu0 %v6570
  %6582 = vmatprep.subr.mxu0 0.0
  %6583 = vmatpush1.msra.mxu0 %v6569
  %6584 = vmatprep.subr.mxu0 0.0
  %6585 = vmatpush1.msra.mxu0 %v6568
  %6586 = vmatprep.subr.mxu0 0.0
  %6587 = vmatpush1.msra.mxu0 %v6567
  %6588 = vmatprep.subr.mxu0 0.0
  %6589 = vmatpush1.msra.mxu0 %v6566
  %6590 = vmatprep.subr.mxu0 0.0
  %6591 = vmatpush1.msra.mxu0 %v6565
  %6592 = vmatprep.subr.mxu0 0.0
  %6593 = vmatpush1.msra.mxu0 %v6564
  %6594 = vmatprep.subr.mxu0 0.0
  %6595 = vmatpush1.msra.mxu0 %v6563
  %6596 = vmatprep.subr.mxu0 0.0
  %6597 = vmatpush1.msra.mxu0 %v6562
  %6598 = vmatprep.subr.mxu0 0.0
  %6599 = vmatpush1.msra.mxu0 %v6561
  %6600 = vmatprep.subr.mxu0 0.0
  %6601 = vmatpush1.msra.mxu0 %v6560
  %6602 = vmatprep.subr.mxu0 0.0
  %6603 = vmatpush1.msra.mxu0 %v6559
  %6604 = vmatprep.subr.mxu0 0.0
  %6605 = vmatpush1.msra.mxu0 %v6558
  %6606 = vmatprep.subr.mxu0 0.0
  %6607 = vmatpush2.msra.mxu0 0.0
  %6608 = vmatprep.subr.mxu0 0.0
  %6609 = vmatpush2.msra.mxu0 0.0
  %6610 = vmatprep.subr.mxu0 0.0
  %6611 = vmatpush2.msra.mxu0 0.0
  %6612 = vmatprep.subr.mxu0 0.0
  %6613 = vmatpush2.msra.mxu0 0.0
  %6614 = vmatprep.subr.mxu0 0.0
  %6615 = vmatpush2.msra.mxu0 0.0
  %6616 = vmatprep.subr.mxu0 0.0
  %6617 = vmatpush2.msra.mxu0 0.0
  %6618 = vmatprep.subr.mxu0 0.0
  %6619 = vmatpush2.msra.mxu0 0.0
  %6620 = vmatprep.subr.mxu0 0.0
  %6621 = vmatpush2.msra.mxu0 0.0
  %6622 = vmatprep.subr.mxu0 0.0
  %6623 = vmatpush2.msra.mxu0 0.0
  %6624 = vmatprep.subr.mxu0 0.0
  %6625 = vmatpush2.msra.mxu0 0.0
  %6626 = vmatprep.subr.mxu0 0.0
  %6627 = vmatpush2.msra.mxu0 0.0
  %6628 = vmatprep.subr.mxu0 0.0
  %6629 = vmatpush2.msra.mxu0 0.0
  %6630 = vmatprep.subr.mxu0 0.0
  %6631 = vmatpush2.msra.mxu0 0.0
  %6632 = vmatprep.subr.mxu0 0.0
  %6633 = vmatpush2.msra.mxu0 0.0
  %6634 = vmatprep.subr.mxu0 0.0
  %6635 = vmatpush2.msra.mxu0 0.0
  %6636 = vmatprep.subr.mxu0 0.0
  %6637 = vmatpush2.msra.mxu0 0.0
  %6638 = vmatprep.mubr.f32.mxu0 0.0
  %6639 = vmatmul.mubr.f32.gmra.mxu0 %v6556
  %v6640 = vpop.f32.mrf.mxu0
  %v6641 = vadd.f32 0.0, %v6640
  %v6642 = vpop.f32.mrf.mxu0
  %6643 = vdwg.mxu0
  %v6644 = vadd.f32 %v6552, %v6641
  %s6645 = scalar_lea.vmem [#allocation5], 3
  %v6646 = vld [vmem:[%s6645] ss:$30 sm:$0x3]
  %s6647 = scalar_lea.vmem [#allocation6], 384
  %v6648 = vld [vmem:[%s6647] sm:$0xff]
  %v6649 = vld [vmem:[%s6647 + $0x8] sm:$0xff]
  %v6650 = vld [vmem:[%s6647 + $0x10] sm:$0xff]
  %v6651 = vld [vmem:[%s6647 + $0x18] sm:$0xff]
  %v6652 = vld [vmem:[%s6647 + $0x20] sm:$0xff]
  %v6653 = vld [vmem:[%s6647 + $0x28] sm:$0xff]
  %v6654 = vld [vmem:[%s6647 + $0x30] sm:$0xff]
  %v6655 = vld [vmem:[%s6647 + $0x38] sm:$0xff]
  %v6656 = vld [vmem:[%s6647 + $0x40] sm:$0xff]
  %v6657 = vld [vmem:[%s6647 + $0x48] sm:$0xff]
  %v6658 = vld [vmem:[%s6647 + $0x50] sm:$0xff]
  %v6659 = vld [vmem:[%s6647 + $0x58] sm:$0xff]
  %v6660 = vld [vmem:[%s6647 + $0x60] sm:$0xff]
  %v6661 = vld [vmem:[%s6647 + $0x68] sm:$0xff]
  %v6662 = vld [vmem:[%s6647 + $0x70] sm:$0xff]
  %v6663 = vld [vmem:[%s6647 + $0x78] sm:$0xff]
  %6664 = vmatprep.subr.mxu0 0.0
  %6665 = vmatpush1.msra.mxu0 %v6663
  %6666 = vmatprep.subr.mxu0 0.0
  %6667 = vmatpush1.msra.mxu0 %v6662
  %6668 = vmatprep.subr.mxu0 0.0
  %6669 = vmatpush1.msra.mxu0 %v6661
  %6670 = vmatprep.subr.mxu0 0.0
  %6671 = vmatpush1.msra.mxu0 %v6660
  %6672 = vmatprep.subr.mxu0 0.0
  %6673 = vmatpush1.msra.mxu0 %v6659
  %6674 = vmatprep.subr.mxu0 0.0
  %6675 = vmatpush1.msra.mxu0 %v6658
  %6676 = vmatprep.subr.mxu0 0.0
  %6677 = vmatpush1.msra.mxu0 %v6657
  %6678 = vmatprep.subr.mxu0 0.0
  %6679 = vmatpush1.msra.mxu0 %v6656
  %6680 = vmatprep.subr.mxu0 0.0
  %6681 = vmatpush1.msra.mxu0 %v6655
  %6682 = vmatprep.subr.mxu0 0.0
  %6683 = vmatpush1.msra.mxu0 %v6654
  %6684 = vmatprep.subr.mxu0 0.0
  %6685 = vmatpush1.msra.mxu0 %v6653
  %6686 = vmatprep.subr.mxu0 0.0
  %6687 = vmatpush1.msra.mxu0 %v6652
  %6688 = vmatprep.subr.mxu0 0.0
  %6689 = vmatpush1.msra.mxu0 %v6651
  %6690 = vmatprep.subr.mxu0 0.0
  %6691 = vmatpush1.msra.mxu0 %v6650
  %6692 = vmatprep.subr.mxu0 0.0
  %6693 = vmatpush1.msra.mxu0 %v6649
  %6694 = vmatprep.subr.mxu0 0.0
  %6695 = vmatpush1.msra.mxu0 %v6648
  %6696 = vmatprep.subr.mxu0 0.0
  %6697 = vmatpush2.msra.mxu0 0.0
  %6698 = vmatprep.subr.mxu0 0.0
  %6699 = vmatpush2.msra.mxu0 0.0
  %6700 = vmatprep.subr.mxu0 0.0
  %6701 = vmatpush2.msra.mxu0 0.0
  %6702 = vmatprep.subr.mxu0 0.0
  %6703 = vmatpush2.msra.mxu0 0.0
  %6704 = vmatprep.subr.mxu0 0.0
  %6705 = vmatpush2.msra.mxu0 0.0
  %6706 = vmatprep.subr.mxu0 0.0
  %6707 = vmatpush2.msra.mxu0 0.0
  %6708 = vmatprep.subr.mxu0 0.0
  %6709 = vmatpush2.msra.mxu0 0.0
  %6710 = vmatprep.subr.mxu0 0.0
  %6711 = vmatpush2.msra.mxu0 0.0
  %6712 = vmatprep.subr.mxu0 0.0
  %6713 = vmatpush2.msra.mxu0 0.0
  %6714 = vmatprep.subr.mxu0 0.0
  %6715 = vmatpush2.msra.mxu0 0.0
  %6716 = vmatprep.subr.mxu0 0.0
  %6717 = vmatpush2.msra.mxu0 0.0
  %6718 = vmatprep.subr.mxu0 0.0
  %6719 = vmatpush2.msra.mxu0 0.0
  %6720 = vmatprep.subr.mxu0 0.0
  %6721 = vmatpush2.msra.mxu0 0.0
  %6722 = vmatprep.subr.mxu0 0.0
  %6723 = vmatpush2.msra.mxu0 0.0
  %6724 = vmatprep.subr.mxu0 0.0
  %6725 = vmatpush2.msra.mxu0 0.0
  %6726 = vmatprep.subr.mxu0 0.0
  %6727 = vmatpush2.msra.mxu0 0.0
  %6728 = vmatprep.mubr.f32.mxu0 0.0
  %6729 = vmatmul.mubr.f32.gmra.mxu0 %v6646
  %v6730 = vpop.f32.mrf.mxu0
  %v6731 = vadd.f32 0.0, %v6730
  %v6732 = vpop.f32.mrf.mxu0
  %6733 = vdwg.mxu0
  %v6734 = vadd.f32 %v6644, %v6731
  %s6735 = scalar_lea.vmem [#allocation5], 4
  %v6736 = vld [vmem:[%s6735] ss:$30 sm:$0x3]
  %s6737 = scalar_lea.vmem [#allocation6], 512
  %v6738 = vld [vmem:[%s6737] sm:$0xff]
  %v6739 = vld [vmem:[%s6737 + $0x8] sm:$0xff]
  %v6740 = vld [vmem:[%s6737 + $0x10] sm:$0xff]
  %v6741 = vld [vmem:[%s6737 + $0x18] sm:$0xff]
  %v6742 = vld [vmem:[%s6737 + $0x20] sm:$0xff]
  %v6743 = vld [vmem:[%s6737 + $0x28] sm:$0xff]
  %v6744 = vld [vmem:[%s6737 + $0x30] sm:$0xff]
  %v6745 = vld [vmem:[%s6737 + $0x38] sm:$0xff]
  %v6746 = vld [vmem:[%s6737 + $0x40] sm:$0xff]
  %v6747 = vld [vmem:[%s6737 + $0x48] sm:$0xff]
  %v6748 = vld [vmem:[%s6737 + $0x50] sm:$0xff]
  %v6749 = vld [vmem:[%s6737 + $0x58] sm:$0xff]
  %v6750 = vld [vmem:[%s6737 + $0x60] sm:$0xff]
  %v6751 = vld [vmem:[%s6737 + $0x68] sm:$0xff]
  %v6752 = vld [vmem:[%s6737 + $0x70] sm:$0xff]
  %v6753 = vld [vmem:[%s6737 + $0x78] sm:$0xff]
  %6754 = vmatprep.subr.mxu0 0.0
  %6755 = vmatpush1.msra.mxu0 %v6753
  %6756 = vmatprep.subr.mxu0 0.0
  %6757 = vmatpush1.msra.mxu0 %v6752
  %6758 = vmatprep.subr.mxu0 0.0
  %6759 = vmatpush1.msra.mxu0 %v6751
  %6760 = vmatprep.subr.mxu0 0.0
  %6761 = vmatpush1.msra.mxu0 %v6750
  %6762 = vmatprep.subr.mxu0 0.0
  %6763 = vmatpush1.msra.mxu0 %v6749
  %6764 = vmatprep.subr.mxu0 0.0
  %6765 = vmatpush1.msra.mxu0 %v6748
  %6766 = vmatprep.subr.mxu0 0.0
  %6767 = vmatpush1.msra.mxu0 %v6747
  %6768 = vmatprep.subr.mxu0 0.0
  %6769 = vmatpush1.msra.mxu0 %v6746
  %6770 = vmatprep.subr.mxu0 0.0
  %6771 = vmatpush1.msra.mxu0 %v6745
  %6772 = vmatprep.subr.mxu0 0.0
  %6773 = vmatpush1.msra.mxu0 %v6744
  %6774 = vmatprep.subr.mxu0 0.0
  %6775 = vmatpush1.msra.mxu0 %v6743
  %6776 = vmatprep.subr.mxu0 0.0
  %6777 = vmatpush1.msra.mxu0 %v6742
  %6778 = vmatprep.subr.mxu0 0.0
  %6779 = vmatpush1.msra.mxu0 %v6741
  %6780 = vmatprep.subr.mxu0 0.0
  %6781 = vmatpush1.msra.mxu0 %v6740
  %6782 = vmatprep.subr.mxu0 0.0
  %6783 = vmatpush1.msra.mxu0 %v6739
  %6784 = vmatprep.subr.mxu0 0.0
  %6785 = vmatpush1.msra.mxu0 %v6738
  %6786 = vmatprep.subr.mxu0 0.0
  %6787 = vmatpush2.msra.mxu0 0.0
  %6788 = vmatprep.subr.mxu0 0.0
  %6789 = vmatpush2.msra.mxu0 0.0
  %6790 = vmatprep.subr.mxu0 0.0
  %6791 = vmatpush2.msra.mxu0 0.0
  %6792 = vmatprep.subr.mxu0 0.0
  %6793 = vmatpush2.msra.mxu0 0.0
  %6794 = vmatprep.subr.mxu0 0.0
  %6795 = vmatpush2.msra.mxu0 0.0
  %6796 = vmatprep.subr.mxu0 0.0
  %6797 = vmatpush2.msra.mxu0 0.0
  %6798 = vmatprep.subr.mxu0 0.0
  %6799 = vmatpush2.msra.mxu0 0.0
  %6800 = vmatprep.subr.mxu0 0.0
  %6801 = vmatpush2.msra.mxu0 0.0
  %6802 = vmatprep.subr.mxu0 0.0
  %6803 = vmatpush2.msra.mxu0 0.0
  %6804 = vmatprep.subr.mxu0 0.0
  %6805 = vmatpush2.msra.mxu0 0.0
  %6806 = vmatprep.subr.mxu0 0.0
  %6807 = vmatpush2.msra.mxu0 0.0
  %6808 = vmatprep.subr.mxu0 0.0
  %6809 = vmatpush2.msra.mxu0 0.0
  %6810 = vmatprep.subr.mxu0 0.0
  %6811 = vmatpush2.msra.mxu0 0.0
  %6812 = vmatprep.subr.mxu0 0.0
  %6813 = vmatpush2.msra.mxu0 0.0
  %6814 = vmatprep.subr.mxu0 0.0
  %6815 = vmatpush2.msra.mxu0 0.0
  %6816 = vmatprep.subr.mxu0 0.0
  %6817 = vmatpush2.msra.mxu0 0.0
  %6818 = vmatprep.mubr.f32.mxu0 0.0
  %6819 = vmatmul.mubr.f32.gmra.mxu0 %v6736
  %v6820 = vpop.f32.mrf.mxu0
  %v6821 = vadd.f32 0.0, %v6820
  %v6822 = vpop.f32.mrf.mxu0
  %6823 = vdwg.mxu0
  %v6824 = vadd.f32 %v6734, %v6821
  %s6825 = scalar_lea.vmem [#allocation5], 5
  %v6826 = vld [vmem:[%s6825] ss:$30 sm:$0x3]
  %s6827 = scalar_lea.vmem [#allocation6], 640
  %v6828 = vld [vmem:[%s6827] sm:$0xff]
  %v6829 = vld [vmem:[%s6827 + $0x8] sm:$0xff]
  %v6830 = vld [vmem:[%s6827 + $0x10] sm:$0xff]
  %v6831 = vld [vmem:[%s6827 + $0x18] sm:$0xff]
  %v6832 = vld [vmem:[%s6827 + $0x20] sm:$0xff]
  %v6833 = vld [vmem:[%s6827 + $0x28] sm:$0xff]
  %v6834 = vld [vmem:[%s6827 + $0x30] sm:$0xff]
  %v6835 = vld [vmem:[%s6827 + $0x38] sm:$0xff]
  %v6836 = vld [vmem:[%s6827 + $0x40] sm:$0xff]
  %v6837 = vld [vmem:[%s6827 + $0x48] sm:$0xff]
  %v6838 = vld [vmem:[%s6827 + $0x50] sm:$0xff]
  %v6839 = vld [vmem:[%s6827 + $0x58] sm:$0xff]
  %v6840 = vld [vmem:[%s6827 + $0x60] sm:$0xff]
  %v6841 = vld [vmem:[%s6827 + $0x68] sm:$0xff]
  %v6842 = vld [vmem:[%s6827 + $0x70] sm:$0xff]
  %v6843 = vld [vmem:[%s6827 + $0x78] sm:$0xff]
  %6844 = vmatprep.subr.mxu0 0.0
  %6845 = vmatpush1.msra.mxu0 %v6843
  %6846 = vmatprep.subr.mxu0 0.0
  %6847 = vmatpush1.msra.mxu0 %v6842
  %6848 = vmatprep.subr.mxu0 0.0
  %6849 = vmatpush1.msra.mxu0 %v6841
  %6850 = vmatprep.subr.mxu0 0.0
  %6851 = vmatpush1.msra.mxu0 %v6840
  %6852 = vmatprep.subr.mxu0 0.0
  %6853 = vmatpush1.msra.mxu0 %v6839
  %6854 = vmatprep.subr.mxu0 0.0
  %6855 = vmatpush1.msra.mxu0 %v6838
  %6856 = vmatprep.subr.mxu0 0.0
  %6857 = vmatpush1.msra.mxu0 %v6837
  %6858 = vmatprep.subr.mxu0 0.0
  %6859 = vmatpush1.msra.mxu0 %v6836
  %6860 = vmatprep.subr.mxu0 0.0
  %6861 = vmatpush1.msra.mxu0 %v6835
  %6862 = vmatprep.subr.mxu0 0.0
  %6863 = vmatpush1.msra.mxu0 %v6834
  %6864 = vmatprep.subr.mxu0 0.0
  %6865 = vmatpush1.msra.mxu0 %v6833
  %6866 = vmatprep.subr.mxu0 0.0
  %6867 = vmatpush1.msra.mxu0 %v6832
  %6868 = vmatprep.subr.mxu0 0.0
  %6869 = vmatpush1.msra.mxu0 %v6831
  %6870 = vmatprep.subr.mxu0 0.0
  %6871 = vmatpush1.msra.mxu0 %v6830
  %6872 = vmatprep.subr.mxu0 0.0
  %6873 = vmatpush1.msra.mxu0 %v6829
  %6874 = vmatprep.subr.mxu0 0.0
  %6875 = vmatpush1.msra.mxu0 %v6828
  %6876 = vmatprep.subr.mxu0 0.0
  %6877 = vmatpush2.msra.mxu0 0.0
  %6878 = vmatprep.subr.mxu0 0.0
  %6879 = vmatpush2.msra.mxu0 0.0
  %6880 = vmatprep.subr.mxu0 0.0
  %6881 = vmatpush2.msra.mxu0 0.0
  %6882 = vmatprep.subr.mxu0 0.0
  %6883 = vmatpush2.msra.mxu0 0.0
  %6884 = vmatprep.subr.mxu0 0.0
  %6885 = vmatpush2.msra.mxu0 0.0
  %6886 = vmatprep.subr.mxu0 0.0
  %6887 = vmatpush2.msra.mxu0 0.0
  %6888 = vmatprep.subr.mxu0 0.0
  %6889 = vmatpush2.msra.mxu0 0.0
  %6890 = vmatprep.subr.mxu0 0.0
  %6891 = vmatpush2.msra.mxu0 0.0
  %6892 = vmatprep.subr.mxu0 0.0
  %6893 = vmatpush2.msra.mxu0 0.0
  %6894 = vmatprep.subr.mxu0 0.0
  %6895 = vmatpush2.msra.mxu0 0.0
  %6896 = vmatprep.subr.mxu0 0.0
  %6897 = vmatpush2.msra.mxu0 0.0
  %6898 = vmatprep.subr.mxu0 0.0
  %6899 = vmatpush2.msra.mxu0 0.0
  %6900 = vmatprep.subr.mxu0 0.0
  %6901 = vmatpush2.msra.mxu0 0.0
  %6902 = vmatprep.subr.mxu0 0.0
  %6903 = vmatpush2.msra.mxu0 0.0
  %6904 = vmatprep.subr.mxu0 0.0
  %6905 = vmatpush2.msra.mxu0 0.0
  %6906 = vmatprep.subr.mxu0 0.0
  %6907 = vmatpush2.msra.mxu0 0.0
  %6908 = vmatprep.mubr.f32.mxu0 0.0
  %6909 = vmatmul.mubr.f32.gmra.mxu0 %v6826
  %v6910 = vpop.f32.mrf.mxu0
  %v6911 = vadd.f32 0.0, %v6910
  %v6912 = vpop.f32.mrf.mxu0
  %6913 = vdwg.mxu0
  %v6914 = vadd.f32 %v6824, %v6911
  %s6915 = scalar_lea.vmem [#allocation5], 6
  %v6916 = vld [vmem:[%s6915] ss:$30 sm:$0x3]
  %s6917 = scalar_lea.vmem [#allocation6], 768
  %v6918 = vld [vmem:[%s6917] sm:$0xff]
  %v6919 = vld [vmem:[%s6917 + $0x8] sm:$0xff]
  %v6920 = vld [vmem:[%s6917 + $0x10] sm:$0xff]
  %v6921 = vld [vmem:[%s6917 + $0x18] sm:$0xff]
  %v6922 = vld [vmem:[%s6917 + $0x20] sm:$0xff]
  %v6923 = vld [vmem:[%s6917 + $0x28] sm:$0xff]
  %v6924 = vld [vmem:[%s6917 + $0x30] sm:$0xff]
  %v6925 = vld [vmem:[%s6917 + $0x38] sm:$0xff]
  %v6926 = vld [vmem:[%s6917 + $0x40] sm:$0xff]
  %v6927 = vld [vmem:[%s6917 + $0x48] sm:$0xff]
  %v6928 = vld [vmem:[%s6917 + $0x50] sm:$0xff]
  %v6929 = vld [vmem:[%s6917 + $0x58] sm:$0xff]
  %v6930 = vld [vmem:[%s6917 + $0x60] sm:$0xff]
  %v6931 = vld [vmem:[%s6917 + $0x68] sm:$0xff]
  %v6932 = vld [vmem:[%s6917 + $0x70] sm:$0xff]
  %v6933 = vld [vmem:[%s6917 + $0x78] sm:$0xff]
  %6934 = vmatprep.subr.mxu0 0.0
  %6935 = vmatpush1.msra.mxu0 %v6933
  %6936 = vmatprep.subr.mxu0 0.0
  %6937 = vmatpush1.msra.mxu0 %v6932
  %6938 = vmatprep.subr.mxu0 0.0
  %6939 = vmatpush1.msra.mxu0 %v6931
  %6940 = vmatprep.subr.mxu0 0.0
  %6941 = vmatpush1.msra.mxu0 %v6930
  %6942 = vmatprep.subr.mxu0 0.0
  %6943 = vmatpush1.msra.mxu0 %v6929
  %6944 = vmatprep.subr.mxu0 0.0
  %6945 = vmatpush1.msra.mxu0 %v6928
  %6946 = vmatprep.subr.mxu0 0.0
  %6947 = vmatpush1.msra.mxu0 %v6927
  %6948 = vmatprep.subr.mxu0 0.0
  %6949 = vmatpush1.msra.mxu0 %v6926
  %6950 = vmatprep.subr.mxu0 0.0
  %6951 = vmatpush1.msra.mxu0 %v6925
  %6952 = vmatprep.subr.mxu0 0.0
  %6953 = vmatpush1.msra.mxu0 %v6924
  %6954 = vmatprep.subr.mxu0 0.0
  %6955 = vmatpush1.msra.mxu0 %v6923
  %6956 = vmatprep.subr.mxu0 0.0
  %6957 = vmatpush1.msra.mxu0 %v6922
  %6958 = vmatprep.subr.mxu0 0.0
  %6959 = vmatpush1.msra.mxu0 %v6921
  %6960 = vmatprep.subr.mxu0 0.0
  %6961 = vmatpush1.msra.mxu0 %v6920
  %6962 = vmatprep.subr.mxu0 0.0
  %6963 = vmatpush1.msra.mxu0 %v6919
  %6964 = vmatprep.subr.mxu0 0.0
  %6965 = vmatpush1.msra.mxu0 %v6918
  %6966 = vmatprep.subr.mxu0 0.0
  %6967 = vmatpush2.msra.mxu0 0.0
  %6968 = vmatprep.subr.mxu0 0.0
  %6969 = vmatpush2.msra.mxu0 0.0
  %6970 = vmatprep.subr.mxu0 0.0
  %6971 = vmatpush2.msra.mxu0 0.0
  %6972 = vmatprep.subr.mxu0 0.0
  %6973 = vmatpush2.msra.mxu0 0.0
  %6974 = vmatprep.subr.mxu0 0.0
  %6975 = vmatpush2.msra.mxu0 0.0
  %6976 = vmatprep.subr.mxu0 0.0
  %6977 = vmatpush2.msra.mxu0 0.0
  %6978 = vmatprep.subr.mxu0 0.0
  %6979 = vmatpush2.msra.mxu0 0.0
  %6980 = vmatprep.subr.mxu0 0.0
  %6981 = vmatpush2.msra.mxu0 0.0
  %6982 = vmatprep.subr.mxu0 0.0
  %6983 = vmatpush2.msra.mxu0 0.0
  %6984 = vmatprep.subr.mxu0 0.0
  %6985 = vmatpush2.msra.mxu0 0.0
  %6986 = vmatprep.subr.mxu0 0.0
  %6987 = vmatpush2.msra.mxu0 0.0
  %6988 = vmatprep.subr.mxu0 0.0
  %6989 = vmatpush2.msra.mxu0 0.0
  %6990 = vmatprep.subr.mxu0 0.0
  %6991 = vmatpush2.msra.mxu0 0.0
  %6992 = vmatprep.subr.mxu0 0.0
  %6993 = vmatpush2.msra.mxu0 0.0
  %6994 = vmatprep.subr.mxu0 0.0
  %6995 = vmatpush2.msra.mxu0 0.0
  %6996 = vmatprep.subr.mxu0 0.0
  %6997 = vmatpush2.msra.mxu0 0.0
  %6998 = vmatprep.mubr.f32.mxu0 0.0
  %6999 = vmatmul.mubr.f32.gmra.mxu0 %v6916
  %v7000 = vpop.f32.mrf.mxu0
  %v7001 = vadd.f32 0.0, %v7000
  %v7002 = vpop.f32.mrf.mxu0
  %7003 = vdwg.mxu0
  %v7004 = vadd.f32 %v6914, %v7001
  %s7005 = scalar_lea.vmem [#allocation5], 7
  %v7006 = vld [vmem:[%s7005] ss:$30 sm:$0x3]
  %s7007 = scalar_lea.vmem [#allocation6], 896
  %v7008 = vld [vmem:[%s7007] sm:$0xff]
  %v7009 = vld [vmem:[%s7007 + $0x8] sm:$0xff]
  %v7010 = vld [vmem:[%s7007 + $0x10] sm:$0xff]
  %v7011 = vld [vmem:[%s7007 + $0x18] sm:$0xff]
  %v7012 = vld [vmem:[%s7007 + $0x20] sm:$0xff]
  %v7013 = vld [vmem:[%s7007 + $0x28] sm:$0xff]
  %v7014 = vld [vmem:[%s7007 + $0x30] sm:$0xff]
  %v7015 = vld [vmem:[%s7007 + $0x38] sm:$0xff]
  %v7016 = vld [vmem:[%s7007 + $0x40] sm:$0xff]
  %v7017 = vld [vmem:[%s7007 + $0x48] sm:$0xff]
  %v7018 = vld [vmem:[%s7007 + $0x50] sm:$0xff]
  %v7019 = vld [vmem:[%s7007 + $0x58] sm:$0xff]
  %v7020 = vld [vmem:[%s7007 + $0x60] sm:$0xff]
  %v7021 = vld [vmem:[%s7007 + $0x68] sm:$0xff]
  %v7022 = vld [vmem:[%s7007 + $0x70] sm:$0xff]
  %v7023 = vld [vmem:[%s7007 + $0x78] sm:$0xff]
  %7024 = vmatprep.subr.mxu0 0.0
  %7025 = vmatpush1.msra.mxu0 %v7023
  %7026 = vmatprep.subr.mxu0 0.0
  %7027 = vmatpush1.msra.mxu0 %v7022
  %7028 = vmatprep.subr.mxu0 0.0
  %7029 = vmatpush1.msra.mxu0 %v7021
  %7030 = vmatprep.subr.mxu0 0.0
  %7031 = vmatpush1.msra.mxu0 %v7020
  %7032 = vmatprep.subr.mxu0 0.0
  %7033 = vmatpush1.msra.mxu0 %v7019
  %7034 = vmatprep.subr.mxu0 0.0
  %7035 = vmatpush1.msra.mxu0 %v7018
  %7036 = vmatprep.subr.mxu0 0.0
  %7037 = vmatpush1.msra.mxu0 %v7017
  %7038 = vmatprep.subr.mxu0 0.0
  %7039 = vmatpush1.msra.mxu0 %v7016
  %7040 = vmatprep.subr.mxu0 0.0
  %7041 = vmatpush1.msra.mxu0 %v7015
  %7042 = vmatprep.subr.mxu0 0.0
  %7043 = vmatpush1.msra.mxu0 %v7014
  %7044 = vmatprep.subr.mxu0 0.0
  %7045 = vmatpush1.msra.mxu0 %v7013
  %7046 = vmatprep.subr.mxu0 0.0
  %7047 = vmatpush1.msra.mxu0 %v7012
  %7048 = vmatprep.subr.mxu0 0.0
  %7049 = vmatpush1.msra.mxu0 %v7011
  %7050 = vmatprep.subr.mxu0 0.0
  %7051 = vmatpush1.msra.mxu0 %v7010
  %7052 = vmatprep.subr.mxu0 0.0
  %7053 = vmatpush1.msra.mxu0 %v7009
  %7054 = vmatprep.subr.mxu0 0.0
  %7055 = vmatpush1.msra.mxu0 %v7008
  %7056 = vmatprep.subr.mxu0 0.0
  %7057 = vmatpush2.msra.mxu0 0.0
  %7058 = vmatprep.subr.mxu0 0.0
  %7059 = vmatpush2.msra.mxu0 0.0
  %7060 = vmatprep.subr.mxu0 0.0
  %7061 = vmatpush2.msra.mxu0 0.0
  %7062 = vmatprep.subr.mxu0 0.0
  %7063 = vmatpush2.msra.mxu0 0.0
  %7064 = vmatprep.subr.mxu0 0.0
  %7065 = vmatpush2.msra.mxu0 0.0
  %7066 = vmatprep.subr.mxu0 0.0
  %7067 = vmatpush2.msra.mxu0 0.0
  %7068 = vmatprep.subr.mxu0 0.0
  %7069 = vmatpush2.msra.mxu0 0.0
  %7070 = vmatprep.subr.mxu0 0.0
  %7071 = vmatpush2.msra.mxu0 0.0
  %7072 = vmatprep.subr.mxu0 0.0
  %7073 = vmatpush2.msra.mxu0 0.0
  %7074 = vmatprep.subr.mxu0 0.0
  %7075 = vmatpush2.msra.mxu0 0.0
  %7076 = vmatprep.subr.mxu0 0.0
  %7077 = vmatpush2.msra.mxu0 0.0
  %7078 = vmatprep.subr.mxu0 0.0
  %7079 = vmatpush2.msra.mxu0 0.0
  %7080 = vmatprep.subr.mxu0 0.0
  %7081 = vmatpush2.msra.mxu0 0.0
  %7082 = vmatprep.subr.mxu0 0.0
  %7083 = vmatpush2.msra.mxu0 0.0
  %7084 = vmatprep.subr.mxu0 0.0
  %7085 = vmatpush2.msra.mxu0 0.0
  %7086 = vmatprep.subr.mxu0 0.0
  %7087 = vmatpush2.msra.mxu0 0.0
  %7088 = vmatprep.mubr.f32.mxu0 0.0
  %7089 = vmatmul.mubr.f32.gmra.mxu0 %v7006
  %v7090 = vpop.f32.mrf.mxu0
  %v7091 = vadd.f32 0.0, %v7090
  %v7092 = vpop.f32.mrf.mxu0
  %7093 = vdwg.mxu0
  %v7094 = vadd.f32 %v7004, %v7091
  %s7095 = scalar_lea.vmem [#allocation5], 8
  %v7096 = vld [vmem:[%s7095] ss:$30 sm:$0x3]
  %s7097 = scalar_lea.vmem [#allocation6], 1024
  %v7098 = vld [vmem:[%s7097] sm:$0xff]
  %v7099 = vld [vmem:[%s7097 + $0x8] sm:$0xff]
  %v7100 = vld [vmem:[%s7097 + $0x10] sm:$0xff]
  %v7101 = vld [vmem:[%s7097 + $0x18] sm:$0xff]
  %v7102 = vld [vmem:[%s7097 + $0x20] sm:$0xff]
  %v7103 = vld [vmem:[%s7097 + $0x28] sm:$0xff]
  %v7104 = vld [vmem:[%s7097 + $0x30] sm:$0xff]
  %v7105 = vld [vmem:[%s7097 + $0x38] sm:$0xff]
  %v7106 = vld [vmem:[%s7097 + $0x40] sm:$0xff]
  %v7107 = vld [vmem:[%s7097 + $0x48] sm:$0xff]
  %v7108 = vld [vmem:[%s7097 + $0x50] sm:$0xff]
  %v7109 = vld [vmem:[%s7097 + $0x58] sm:$0xff]
  %v7110 = vld [vmem:[%s7097 + $0x60] sm:$0xff]
  %v7111 = vld [vmem:[%s7097 + $0x68] sm:$0xff]
  %v7112 = vld [vmem:[%s7097 + $0x70] sm:$0xff]
  %v7113 = vld [vmem:[%s7097 + $0x78] sm:$0xff]
  %7114 = vmatprep.subr.mxu0 0.0
  %7115 = vmatpush1.msra.mxu0 %v7113
  %7116 = vmatprep.subr.mxu0 0.0
  %7117 = vmatpush1.msra.mxu0 %v7112
  %7118 = vmatprep.subr.mxu0 0.0
  %7119 = vmatpush1.msra.mxu0 %v7111
  %7120 = vmatprep.subr.mxu0 0.0
  %7121 = vmatpush1.msra.mxu0 %v7110
  %7122 = vmatprep.subr.mxu0 0.0
  %7123 = vmatpush1.msra.mxu0 %v7109
  %7124 = vmatprep.subr.mxu0 0.0
  %7125 = vmatpush1.msra.mxu0 %v7108
  %7126 = vmatprep.subr.mxu0 0.0
  %7127 = vmatpush1.msra.mxu0 %v7107
  %7128 = vmatprep.subr.mxu0 0.0
  %7129 = vmatpush1.msra.mxu0 %v7106
  %7130 = vmatprep.subr.mxu0 0.0
  %7131 = vmatpush1.msra.mxu0 %v7105
  %7132 = vmatprep.subr.mxu0 0.0
  %7133 = vmatpush1.msra.mxu0 %v7104
  %7134 = vmatprep.subr.mxu0 0.0
  %7135 = vmatpush1.msra.mxu0 %v7103
  %7136 = vmatprep.subr.mxu0 0.0
  %7137 = vmatpush1.msra.mxu0 %v7102
  %7138 = vmatprep.subr.mxu0 0.0
  %7139 = vmatpush1.msra.mxu0 %v7101
  %7140 = vmatprep.subr.mxu0 0.0
  %7141 = vmatpush1.msra.mxu0 %v7100
  %7142 = vmatprep.subr.mxu0 0.0
  %7143 = vmatpush1.msra.mxu0 %v7099
  %7144 = vmatprep.subr.mxu0 0.0
  %7145 = vmatpush1.msra.mxu0 %v7098
  %7146 = vmatprep.subr.mxu0 0.0
  %7147 = vmatpush2.msra.mxu0 0.0
  %7148 = vmatprep.subr.mxu0 0.0
  %7149 = vmatpush2.msra.mxu0 0.0
  %7150 = vmatprep.subr.mxu0 0.0
  %7151 = vmatpush2.msra.mxu0 0.0
  %7152 = vmatprep.subr.mxu0 0.0
  %7153 = vmatpush2.msra.mxu0 0.0
  %7154 = vmatprep.subr.mxu0 0.0
  %7155 = vmatpush2.msra.mxu0 0.0
  %7156 = vmatprep.subr.mxu0 0.0
  %7157 = vmatpush2.msra.mxu0 0.0
  %7158 = vmatprep.subr.mxu0 0.0
  %7159 = vmatpush2.msra.mxu0 0.0
  %7160 = vmatprep.subr.mxu0 0.0
  %7161 = vmatpush2.msra.mxu0 0.0
  %7162 = vmatprep.subr.mxu0 0.0
  %7163 = vmatpush2.msra.mxu0 0.0
  %7164 = vmatprep.subr.mxu0 0.0
  %7165 = vmatpush2.msra.mxu0 0.0
  %7166 = vmatprep.subr.mxu0 0.0
  %7167 = vmatpush2.msra.mxu0 0.0
  %7168 = vmatprep.subr.mxu0 0.0
  %7169 = vmatpush2.msra.mxu0 0.0
  %7170 = vmatprep.subr.mxu0 0.0
  %7171 = vmatpush2.msra.mxu0 0.0
  %7172 = vmatprep.subr.mxu0 0.0
  %7173 = vmatpush2.msra.mxu0 0.0
  %7174 = vmatprep.subr.mxu0 0.0
  %7175 = vmatpush2.msra.mxu0 0.0
  %7176 = vmatprep.subr.mxu0 0.0
  %7177 = vmatpush2.msra.mxu0 0.0
  %7178 = vmatprep.mubr.f32.mxu0 0.0
  %7179 = vmatmul.mubr.f32.gmra.mxu0 %v7096
  %v7180 = vpop.f32.mrf.mxu0
  %v7181 = vadd.f32 0.0, %v7180
  %v7182 = vpop.f32.mrf.mxu0
  %7183 = vdwg.mxu0
  %v7184 = vadd.f32 %v7094, %v7181
  %s7185 = scalar_lea.vmem [#allocation5], 9
  %v7186 = vld [vmem:[%s7185] ss:$30 sm:$0x3]
  %s7187 = scalar_lea.vmem [#allocation6], 1152
  %v7188 = vld [vmem:[%s7187] sm:$0xff]
  %v7189 = vld [vmem:[%s7187 + $0x8] sm:$0xff]
  %v7190 = vld [vmem:[%s7187 + $0x10] sm:$0xff]
  %v7191 = vld [vmem:[%s7187 + $0x18] sm:$0xff]
  %v7192 = vld [vmem:[%s7187 + $0x20] sm:$0xff]
  %v7193 = vld [vmem:[%s7187 + $0x28] sm:$0xff]
  %v7194 = vld [vmem:[%s7187 + $0x30] sm:$0xff]
  %v7195 = vld [vmem:[%s7187 + $0x38] sm:$0xff]
  %v7196 = vld [vmem:[%s7187 + $0x40] sm:$0xff]
  %v7197 = vld [vmem:[%s7187 + $0x48] sm:$0xff]
  %v7198 = vld [vmem:[%s7187 + $0x50] sm:$0xff]
  %v7199 = vld [vmem:[%s7187 + $0x58] sm:$0xff]
  %v7200 = vld [vmem:[%s7187 + $0x60] sm:$0xff]
  %v7201 = vld [vmem:[%s7187 + $0x68] sm:$0xff]
  %v7202 = vld [vmem:[%s7187 + $0x70] sm:$0xff]
  %v7203 = vld [vmem:[%s7187 + $0x78] sm:$0xff]
  %7204 = vmatprep.subr.mxu0 0.0
  %7205 = vmatpush1.msra.mxu0 %v7203
  %7206 = vmatprep.subr.mxu0 0.0
  %7207 = vmatpush1.msra.mxu0 %v7202
  %7208 = vmatprep.subr.mxu0 0.0
  %7209 = vmatpush1.msra.mxu0 %v7201
  %7210 = vmatprep.subr.mxu0 0.0
  %7211 = vmatpush1.msra.mxu0 %v7200
  %7212 = vmatprep.subr.mxu0 0.0
  %7213 = vmatpush1.msra.mxu0 %v7199
  %7214 = vmatprep.subr.mxu0 0.0
  %7215 = vmatpush1.msra.mxu0 %v7198
  %7216 = vmatprep.subr.mxu0 0.0
  %7217 = vmatpush1.msra.mxu0 %v7197
  %7218 = vmatprep.subr.mxu0 0.0
  %7219 = vmatpush1.msra.mxu0 %v7196
  %7220 = vmatprep.subr.mxu0 0.0
  %7221 = vmatpush1.msra.mxu0 %v7195
  %7222 = vmatprep.subr.mxu0 0.0
  %7223 = vmatpush1.msra.mxu0 %v7194
  %7224 = vmatprep.subr.mxu0 0.0
  %7225 = vmatpush1.msra.mxu0 %v7193
  %7226 = vmatprep.subr.mxu0 0.0
  %7227 = vmatpush1.msra.mxu0 %v7192
  %7228 = vmatprep.subr.mxu0 0.0
  %7229 = vmatpush1.msra.mxu0 %v7191
  %7230 = vmatprep.subr.mxu0 0.0
  %7231 = vmatpush1.msra.mxu0 %v7190
  %7232 = vmatprep.subr.mxu0 0.0
  %7233 = vmatpush1.msra.mxu0 %v7189
  %7234 = vmatprep.subr.mxu0 0.0
  %7235 = vmatpush1.msra.mxu0 %v7188
  %7236 = vmatprep.subr.mxu0 0.0
  %7237 = vmatpush2.msra.mxu0 0.0
  %7238 = vmatprep.subr.mxu0 0.0
  %7239 = vmatpush2.msra.mxu0 0.0
  %7240 = vmatprep.subr.mxu0 0.0
  %7241 = vmatpush2.msra.mxu0 0.0
  %7242 = vmatprep.subr.mxu0 0.0
  %7243 = vmatpush2.msra.mxu0 0.0
  %7244 = vmatprep.subr.mxu0 0.0
  %7245 = vmatpush2.msra.mxu0 0.0
  %7246 = vmatprep.subr.mxu0 0.0
  %7247 = vmatpush2.msra.mxu0 0.0
  %7248 = vmatprep.subr.mxu0 0.0
  %7249 = vmatpush2.msra.mxu0 0.0
  %7250 = vmatprep.subr.mxu0 0.0
  %7251 = vmatpush2.msra.mxu0 0.0
  %7252 = vmatprep.subr.mxu0 0.0
  %7253 = vmatpush2.msra.mxu0 0.0
  %7254 = vmatprep.subr.mxu0 0.0
  %7255 = vmatpush2.msra.mxu0 0.0
  %7256 = vmatprep.subr.mxu0 0.0
  %7257 = vmatpush2.msra.mxu0 0.0
  %7258 = vmatprep.subr.mxu0 0.0
  %7259 = vmatpush2.msra.mxu0 0.0
  %7260 = vmatprep.subr.mxu0 0.0
  %7261 = vmatpush2.msra.mxu0 0.0
  %7262 = vmatprep.subr.mxu0 0.0
  %7263 = vmatpush2.msra.mxu0 0.0
  %7264 = vmatprep.subr.mxu0 0.0
  %7265 = vmatpush2.msra.mxu0 0.0
  %7266 = vmatprep.subr.mxu0 0.0
  %7267 = vmatpush2.msra.mxu0 0.0
  %7268 = vmatprep.mubr.f32.mxu0 0.0
  %7269 = vmatmul.mubr.f32.gmra.mxu0 %v7186
  %v7270 = vpop.f32.mrf.mxu0
  %v7271 = vadd.f32 0.0, %v7270
  %v7272 = vpop.f32.mrf.mxu0
  %7273 = vdwg.mxu0
  %v7274 = vadd.f32 %v7184, %v7271
  %s7275 = scalar_lea.vmem [#allocation5], 10
  %v7276 = vld [vmem:[%s7275] ss:$30 sm:$0x3]
  %s7277 = scalar_lea.vmem [#allocation6], 1280
  %v7278 = vld [vmem:[%s7277] sm:$0xff]
  %v7279 = vld [vmem:[%s7277 + $0x8] sm:$0xff]
  %v7280 = vld [vmem:[%s7277 + $0x10] sm:$0xff]
  %v7281 = vld [vmem:[%s7277 + $0x18] sm:$0xff]
  %v7282 = vld [vmem:[%s7277 + $0x20] sm:$0xff]
  %v7283 = vld [vmem:[%s7277 + $0x28] sm:$0xff]
  %v7284 = vld [vmem:[%s7277 + $0x30] sm:$0xff]
  %v7285 = vld [vmem:[%s7277 + $0x38] sm:$0xff]
  %v7286 = vld [vmem:[%s7277 + $0x40] sm:$0xff]
  %v7287 = vld [vmem:[%s7277 + $0x48] sm:$0xff]
  %v7288 = vld [vmem:[%s7277 + $0x50] sm:$0xff]
  %v7289 = vld [vmem:[%s7277 + $0x58] sm:$0xff]
  %v7290 = vld [vmem:[%s7277 + $0x60] sm:$0xff]
  %v7291 = vld [vmem:[%s7277 + $0x68] sm:$0xff]
  %v7292 = vld [vmem:[%s7277 + $0x70] sm:$0xff]
  %v7293 = vld [vmem:[%s7277 + $0x78] sm:$0xff]
  %7294 = vmatprep.subr.mxu0 0.0
  %7295 = vmatpush1.msra.mxu0 %v7293
  %7296 = vmatprep.subr.mxu0 0.0
  %7297 = vmatpush1.msra.mxu0 %v7292
  %7298 = vmatprep.subr.mxu0 0.0
  %7299 = vmatpush1.msra.mxu0 %v7291
  %7300 = vmatprep.subr.mxu0 0.0
  %7301 = vmatpush1.msra.mxu0 %v7290
  %7302 = vmatprep.subr.mxu0 0.0
  %7303 = vmatpush1.msra.mxu0 %v7289
  %7304 = vmatprep.subr.mxu0 0.0
  %7305 = vmatpush1.msra.mxu0 %v7288
  %7306 = vmatprep.subr.mxu0 0.0
  %7307 = vmatpush1.msra.mxu0 %v7287
  %7308 = vmatprep.subr.mxu0 0.0
  %7309 = vmatpush1.msra.mxu0 %v7286
  %7310 = vmatprep.subr.mxu0 0.0
  %7311 = vmatpush1.msra.mxu0 %v7285
  %7312 = vmatprep.subr.mxu0 0.0
  %7313 = vmatpush1.msra.mxu0 %v7284
  %7314 = vmatprep.subr.mxu0 0.0
  %7315 = vmatpush1.msra.mxu0 %v7283
  %7316 = vmatprep.subr.mxu0 0.0
  %7317 = vmatpush1.msra.mxu0 %v7282
  %7318 = vmatprep.subr.mxu0 0.0
  %7319 = vmatpush1.msra.mxu0 %v7281
  %7320 = vmatprep.subr.mxu0 0.0
  %7321 = vmatpush1.msra.mxu0 %v7280
  %7322 = vmatprep.subr.mxu0 0.0
  %7323 = vmatpush1.msra.mxu0 %v7279
  %7324 = vmatprep.subr.mxu0 0.0
  %7325 = vmatpush1.msra.mxu0 %v7278
  %7326 = vmatprep.subr.mxu0 0.0
  %7327 = vmatpush2.msra.mxu0 0.0
  %7328 = vmatprep.subr.mxu0 0.0
  %7329 = vmatpush2.msra.mxu0 0.0
  %7330 = vmatprep.subr.mxu0 0.0
  %7331 = vmatpush2.msra.mxu0 0.0
  %7332 = vmatprep.subr.mxu0 0.0
  %7333 = vmatpush2.msra.mxu0 0.0
  %7334 = vmatprep.subr.mxu0 0.0
  %7335 = vmatpush2.msra.mxu0 0.0
  %7336 = vmatprep.subr.mxu0 0.0
  %7337 = vmatpush2.msra.mxu0 0.0
  %7338 = vmatprep.subr.mxu0 0.0
  %7339 = vmatpush2.msra.mxu0 0.0
  %7340 = vmatprep.subr.mxu0 0.0
  %7341 = vmatpush2.msra.mxu0 0.0
  %7342 = vmatprep.subr.mxu0 0.0
  %7343 = vmatpush2.msra.mxu0 0.0
  %7344 = vmatprep.subr.mxu0 0.0
  %7345 = vmatpush2.msra.mxu0 0.0
  %7346 = vmatprep.subr.mxu0 0.0
  %7347 = vmatpush2.msra.mxu0 0.0
  %7348 = vmatprep.subr.mxu0 0.0
  %7349 = vmatpush2.msra.mxu0 0.0
  %7350 = vmatprep.subr.mxu0 0.0
  %7351 = vmatpush2.msra.mxu0 0.0
  %7352 = vmatprep.subr.mxu0 0.0
  %7353 = vmatpush2.msra.mxu0 0.0
  %7354 = vmatprep.subr.mxu0 0.0
  %7355 = vmatpush2.msra.mxu0 0.0
  %7356 = vmatprep.subr.mxu0 0.0
  %7357 = vmatpush2.msra.mxu0 0.0
  %7358 = vmatprep.mubr.f32.mxu0 0.0
  %7359 = vmatmul.mubr.f32.gmra.mxu0 %v7276
  %v7360 = vpop.f32.mrf.mxu0
  %v7361 = vadd.f32 0.0, %v7360
  %v7362 = vpop.f32.mrf.mxu0
  %7363 = vdwg.mxu0
  %v7364 = vadd.f32 %v7274, %v7361
  %s7365 = scalar_lea.vmem [#allocation5], 11
  %v7366 = vld [vmem:[%s7365] ss:$30 sm:$0x3]
  %s7367 = scalar_lea.vmem [#allocation6], 1408
  %v7368 = vld [vmem:[%s7367] sm:$0xff]
  %v7369 = vld [vmem:[%s7367 + $0x8] sm:$0xff]
  %v7370 = vld [vmem:[%s7367 + $0x10] sm:$0xff]
  %v7371 = vld [vmem:[%s7367 + $0x18] sm:$0xff]
  %v7372 = vld [vmem:[%s7367 + $0x20] sm:$0xff]
  %v7373 = vld [vmem:[%s7367 + $0x28] sm:$0xff]
  %v7374 = vld [vmem:[%s7367 + $0x30] sm:$0xff]
  %v7375 = vld [vmem:[%s7367 + $0x38] sm:$0xff]
  %v7376 = vld [vmem:[%s7367 + $0x40] sm:$0xff]
  %v7377 = vld [vmem:[%s7367 + $0x48] sm:$0xff]
  %v7378 = vld [vmem:[%s7367 + $0x50] sm:$0xff]
  %v7379 = vld [vmem:[%s7367 + $0x58] sm:$0xff]
  %v7380 = vld [vmem:[%s7367 + $0x60] sm:$0xff]
  %v7381 = vld [vmem:[%s7367 + $0x68] sm:$0xff]
  %v7382 = vld [vmem:[%s7367 + $0x70] sm:$0xff]
  %v7383 = vld [vmem:[%s7367 + $0x78] sm:$0xff]
  %7384 = vmatprep.subr.mxu0 0.0
  %7385 = vmatpush1.msra.mxu0 %v7383
  %7386 = vmatprep.subr.mxu0 0.0
  %7387 = vmatpush1.msra.mxu0 %v7382
  %7388 = vmatprep.subr.mxu0 0.0
  %7389 = vmatpush1.msra.mxu0 %v7381
  %7390 = vmatprep.subr.mxu0 0.0
  %7391 = vmatpush1.msra.mxu0 %v7380
  %7392 = vmatprep.subr.mxu0 0.0
  %7393 = vmatpush1.msra.mxu0 %v7379
  %7394 = vmatprep.subr.mxu0 0.0
  %7395 = vmatpush1.msra.mxu0 %v7378
  %7396 = vmatprep.subr.mxu0 0.0
  %7397 = vmatpush1.msra.mxu0 %v7377
  %7398 = vmatprep.subr.mxu0 0.0
  %7399 = vmatpush1.msra.mxu0 %v7376
  %7400 = vmatprep.subr.mxu0 0.0
  %7401 = vmatpush1.msra.mxu0 %v7375
  %7402 = vmatprep.subr.mxu0 0.0
  %7403 = vmatpush1.msra.mxu0 %v7374
  %7404 = vmatprep.subr.mxu0 0.0
  %7405 = vmatpush1.msra.mxu0 %v7373
  %7406 = vmatprep.subr.mxu0 0.0
  %7407 = vmatpush1.msra.mxu0 %v7372
  %7408 = vmatprep.subr.mxu0 0.0
  %7409 = vmatpush1.msra.mxu0 %v7371
  %7410 = vmatprep.subr.mxu0 0.0
  %7411 = vmatpush1.msra.mxu0 %v7370
  %7412 = vmatprep.subr.mxu0 0.0
  %7413 = vmatpush1.msra.mxu0 %v7369
  %7414 = vmatprep.subr.mxu0 0.0
  %7415 = vmatpush1.msra.mxu0 %v7368
  %7416 = vmatprep.subr.mxu0 0.0
  %7417 = vmatpush2.msra.mxu0 0.0
  %7418 = vmatprep.subr.mxu0 0.0
  %7419 = vmatpush2.msra.mxu0 0.0
  %7420 = vmatprep.subr.mxu0 0.0
  %7421 = vmatpush2.msra.mxu0 0.0
  %7422 = vmatprep.subr.mxu0 0.0
  %7423 = vmatpush2.msra.mxu0 0.0
  %7424 = vmatprep.subr.mxu0 0.0
  %7425 = vmatpush2.msra.mxu0 0.0
  %7426 = vmatprep.subr.mxu0 0.0
  %7427 = vmatpush2.msra.mxu0 0.0
  %7428 = vmatprep.subr.mxu0 0.0
  %7429 = vmatpush2.msra.mxu0 0.0
  %7430 = vmatprep.subr.mxu0 0.0
  %7431 = vmatpush2.msra.mxu0 0.0
  %7432 = vmatprep.subr.mxu0 0.0
  %7433 = vmatpush2.msra.mxu0 0.0
  %7434 = vmatprep.subr.mxu0 0.0
  %7435 = vmatpush2.msra.mxu0 0.0
  %7436 = vmatprep.subr.mxu0 0.0
  %7437 = vmatpush2.msra.mxu0 0.0
  %7438 = vmatprep.subr.mxu0 0.0
  %7439 = vmatpush2.msra.mxu0 0.0
  %7440 = vmatprep.subr.mxu0 0.0
  %7441 = vmatpush2.msra.mxu0 0.0
  %7442 = vmatprep.subr.mxu0 0.0
  %7443 = vmatpush2.msra.mxu0 0.0
  %7444 = vmatprep.subr.mxu0 0.0
  %7445 = vmatpush2.msra.mxu0 0.0
  %7446 = vmatprep.subr.mxu0 0.0
  %7447 = vmatpush2.msra.mxu0 0.0
  %7448 = vmatprep.mubr.f32.mxu0 0.0
  %7449 = vmatmul.mubr.f32.gmra.mxu0 %v7366
  %v7450 = vpop.f32.mrf.mxu0
  %v7451 = vadd.f32 0.0, %v7450
  %v7452 = vpop.f32.mrf.mxu0
  %7453 = vdwg.mxu0
  %v7454 = vadd.f32 %v7364, %v7451
  %s7455 = scalar_lea.vmem [#allocation5], 12
  %v7456 = vld [vmem:[%s7455] ss:$30 sm:$0x3]
  %s7457 = scalar_lea.vmem [#allocation6], 1536
  %v7458 = vld [vmem:[%s7457] sm:$0xff]
  %v7459 = vld [vmem:[%s7457 + $0x8] sm:$0xff]
  %v7460 = vld [vmem:[%s7457 + $0x10] sm:$0xff]
  %v7461 = vld [vmem:[%s7457 + $0x18] sm:$0xff]
  %v7462 = vld [vmem:[%s7457 + $0x20] sm:$0xff]
  %v7463 = vld [vmem:[%s7457 + $0x28] sm:$0xff]
  %v7464 = vld [vmem:[%s7457 + $0x30] sm:$0xff]
  %v7465 = vld [vmem:[%s7457 + $0x38] sm:$0xff]
  %v7466 = vld [vmem:[%s7457 + $0x40] sm:$0xff]
  %v7467 = vld [vmem:[%s7457 + $0x48] sm:$0xff]
  %v7468 = vld [vmem:[%s7457 + $0x50] sm:$0xff]
  %v7469 = vld [vmem:[%s7457 + $0x58] sm:$0xff]
  %v7470 = vld [vmem:[%s7457 + $0x60] sm:$0xff]
  %v7471 = vld [vmem:[%s7457 + $0x68] sm:$0xff]
  %v7472 = vld [vmem:[%s7457 + $0x70] sm:$0xff]
  %v7473 = vld [vmem:[%s7457 + $0x78] sm:$0xff]
  %7474 = vmatprep.subr.mxu0 0.0
  %7475 = vmatpush1.msra.mxu0 %v7473
  %7476 = vmatprep.subr.mxu0 0.0
  %7477 = vmatpush1.msra.mxu0 %v7472
  %7478 = vmatprep.subr.mxu0 0.0
  %7479 = vmatpush1.msra.mxu0 %v7471
  %7480 = vmatprep.subr.mxu0 0.0
  %7481 = vmatpush1.msra.mxu0 %v7470
  %7482 = vmatprep.subr.mxu0 0.0
  %7483 = vmatpush1.msra.mxu0 %v7469
  %7484 = vmatprep.subr.mxu0 0.0
  %7485 = vmatpush1.msra.mxu0 %v7468
  %7486 = vmatprep.subr.mxu0 0.0
  %7487 = vmatpush1.msra.mxu0 %v7467
  %7488 = vmatprep.subr.mxu0 0.0
  %7489 = vmatpush1.msra.mxu0 %v7466
  %7490 = vmatprep.subr.mxu0 0.0
  %7491 = vmatpush1.msra.mxu0 %v7465
  %7492 = vmatprep.subr.mxu0 0.0
  %7493 = vmatpush1.msra.mxu0 %v7464
  %7494 = vmatprep.subr.mxu0 0.0
  %7495 = vmatpush1.msra.mxu0 %v7463
  %7496 = vmatprep.subr.mxu0 0.0
  %7497 = vmatpush1.msra.mxu0 %v7462
  %7498 = vmatprep.subr.mxu0 0.0
  %7499 = vmatpush1.msra.mxu0 %v7461
  %7500 = vmatprep.subr.mxu0 0.0
  %7501 = vmatpush1.msra.mxu0 %v7460
  %7502 = vmatprep.subr.mxu0 0.0
  %7503 = vmatpush1.msra.mxu0 %v7459
  %7504 = vmatprep.subr.mxu0 0.0
  %7505 = vmatpush1.msra.mxu0 %v7458
  %7506 = vmatprep.subr.mxu0 0.0
  %7507 = vmatpush2.msra.mxu0 0.0
  %7508 = vmatprep.subr.mxu0 0.0
  %7509 = vmatpush2.msra.mxu0 0.0
  %7510 = vmatprep.subr.mxu0 0.0
  %7511 = vmatpush2.msra.mxu0 0.0
  %7512 = vmatprep.subr.mxu0 0.0
  %7513 = vmatpush2.msra.mxu0 0.0
  %7514 = vmatprep.subr.mxu0 0.0
  %7515 = vmatpush2.msra.mxu0 0.0
  %7516 = vmatprep.subr.mxu0 0.0
  %7517 = vmatpush2.msra.mxu0 0.0
  %7518 = vmatprep.subr.mxu0 0.0
  %7519 = vmatpush2.msra.mxu0 0.0
  %7520 = vmatprep.subr.mxu0 0.0
  %7521 = vmatpush2.msra.mxu0 0.0
  %7522 = vmatprep.subr.mxu0 0.0
  %7523 = vmatpush2.msra.mxu0 0.0
  %7524 = vmatprep.subr.mxu0 0.0
  %7525 = vmatpush2.msra.mxu0 0.0
  %7526 = vmatprep.subr.mxu0 0.0
  %7527 = vmatpush2.msra.mxu0 0.0
  %7528 = vmatprep.subr.mxu0 0.0
  %7529 = vmatpush2.msra.mxu0 0.0
  %7530 = vmatprep.subr.mxu0 0.0
  %7531 = vmatpush2.msra.mxu0 0.0
  %7532 = vmatprep.subr.mxu0 0.0
  %7533 = vmatpush2.msra.mxu0 0.0
  %7534 = vmatprep.subr.mxu0 0.0
  %7535 = vmatpush2.msra.mxu0 0.0
  %7536 = vmatprep.subr.mxu0 0.0
  %7537 = vmatpush2.msra.mxu0 0.0
  %7538 = vmatprep.mubr.f32.mxu0 0.0
  %7539 = vmatmul.mubr.f32.gmra.mxu0 %v7456
  %v7540 = vpop.f32.mrf.mxu0
  %v7541 = vadd.f32 0.0, %v7540
  %v7542 = vpop.f32.mrf.mxu0
  %7543 = vdwg.mxu0
  %v7544 = vadd.f32 %v7454, %v7541
  %s7545 = scalar_lea.vmem [#allocation5], 13
  %v7546 = vld [vmem:[%s7545] ss:$30 sm:$0x3]
  %s7547 = scalar_lea.vmem [#allocation6], 1664
  %v7548 = vld [vmem:[%s7547] sm:$0xff]
  %v7549 = vld [vmem:[%s7547 + $0x8] sm:$0xff]
  %v7550 = vld [vmem:[%s7547 + $0x10] sm:$0xff]
  %v7551 = vld [vmem:[%s7547 + $0x18] sm:$0xff]
  %v7552 = vld [vmem:[%s7547 + $0x20] sm:$0xff]
  %v7553 = vld [vmem:[%s7547 + $0x28] sm:$0xff]
  %v7554 = vld [vmem:[%s7547 + $0x30] sm:$0xff]
  %v7555 = vld [vmem:[%s7547 + $0x38] sm:$0xff]
  %v7556 = vld [vmem:[%s7547 + $0x40] sm:$0xff]
  %v7557 = vld [vmem:[%s7547 + $0x48] sm:$0xff]
  %v7558 = vld [vmem:[%s7547 + $0x50] sm:$0xff]
  %v7559 = vld [vmem:[%s7547 + $0x58] sm:$0xff]
  %v7560 = vld [vmem:[%s7547 + $0x60] sm:$0xff]
  %v7561 = vld [vmem:[%s7547 + $0x68] sm:$0xff]
  %v7562 = vld [vmem:[%s7547 + $0x70] sm:$0xff]
  %v7563 = vld [vmem:[%s7547 + $0x78] sm:$0xff]
  %7564 = vmatprep.subr.mxu0 0.0
  %7565 = vmatpush1.msra.mxu0 %v7563
  %7566 = vmatprep.subr.mxu0 0.0
  %7567 = vmatpush1.msra.mxu0 %v7562
  %7568 = vmatprep.subr.mxu0 0.0
  %7569 = vmatpush1.msra.mxu0 %v7561
  %7570 = vmatprep.subr.mxu0 0.0
  %7571 = vmatpush1.msra.mxu0 %v7560
  %7572 = vmatprep.subr.mxu0 0.0
  %7573 = vmatpush1.msra.mxu0 %v7559
  %7574 = vmatprep.subr.mxu0 0.0
  %7575 = vmatpush1.msra.mxu0 %v7558
  %7576 = vmatprep.subr.mxu0 0.0
  %7577 = vmatpush1.msra.mxu0 %v7557
  %7578 = vmatprep.subr.mxu0 0.0
  %7579 = vmatpush1.msra.mxu0 %v7556
  %7580 = vmatprep.subr.mxu0 0.0
  %7581 = vmatpush1.msra.mxu0 %v7555
  %7582 = vmatprep.subr.mxu0 0.0
  %7583 = vmatpush1.msra.mxu0 %v7554
  %7584 = vmatprep.subr.mxu0 0.0
  %7585 = vmatpush1.msra.mxu0 %v7553
  %7586 = vmatprep.subr.mxu0 0.0
  %7587 = vmatpush1.msra.mxu0 %v7552
  %7588 = vmatprep.subr.mxu0 0.0
  %7589 = vmatpush1.msra.mxu0 %v7551
  %7590 = vmatprep.subr.mxu0 0.0
  %7591 = vmatpush1.msra.mxu0 %v7550
  %7592 = vmatprep.subr.mxu0 0.0
  %7593 = vmatpush1.msra.mxu0 %v7549
  %7594 = vmatprep.subr.mxu0 0.0
  %7595 = vmatpush1.msra.mxu0 %v7548
  %7596 = vmatprep.subr.mxu0 0.0
  %7597 = vmatpush2.msra.mxu0 0.0
  %7598 = vmatprep.subr.mxu0 0.0
  %7599 = vmatpush2.msra.mxu0 0.0
  %7600 = vmatprep.subr.mxu0 0.0
  %7601 = vmatpush2.msra.mxu0 0.0
  %7602 = vmatprep.subr.mxu0 0.0
  %7603 = vmatpush2.msra.mxu0 0.0
  %7604 = vmatprep.subr.mxu0 0.0
  %7605 = vmatpush2.msra.mxu0 0.0
  %7606 = vmatprep.subr.mxu0 0.0
  %7607 = vmatpush2.msra.mxu0 0.0
  %7608 = vmatprep.subr.mxu0 0.0
  %7609 = vmatpush2.msra.mxu0 0.0
  %7610 = vmatprep.subr.mxu0 0.0
  %7611 = vmatpush2.msra.mxu0 0.0
  %7612 = vmatprep.subr.mxu0 0.0
  %7613 = vmatpush2.msra.mxu0 0.0
  %7614 = vmatprep.subr.mxu0 0.0
  %7615 = vmatpush2.msra.mxu0 0.0
  %7616 = vmatprep.subr.mxu0 0.0
  %7617 = vmatpush2.msra.mxu0 0.0
  %7618 = vmatprep.subr.mxu0 0.0
  %7619 = vmatpush2.msra.mxu0 0.0
  %7620 = vmatprep.subr.mxu0 0.0
  %7621 = vmatpush2.msra.mxu0 0.0
  %7622 = vmatprep.subr.mxu0 0.0
  %7623 = vmatpush2.msra.mxu0 0.0
  %7624 = vmatprep.subr.mxu0 0.0
  %7625 = vmatpush2.msra.mxu0 0.0
  %7626 = vmatprep.subr.mxu0 0.0
  %7627 = vmatpush2.msra.mxu0 0.0
  %7628 = vmatprep.mubr.f32.mxu0 0.0
  %7629 = vmatmul.mubr.f32.gmra.mxu0 %v7546
  %v7630 = vpop.f32.mrf.mxu0
  %v7631 = vadd.f32 0.0, %v7630
  %v7632 = vpop.f32.mrf.mxu0
  %7633 = vdwg.mxu0
  %v7634 = vadd.f32 %v7544, %v7631
  %s7635 = scalar_lea.vmem [#allocation5], 14
  %v7636 = vld [vmem:[%s7635] ss:$30 sm:$0x3]
  %s7637 = scalar_lea.vmem [#allocation6], 1792
  %v7638 = vld [vmem:[%s7637] sm:$0xff]
  %v7639 = vld [vmem:[%s7637 + $0x8] sm:$0xff]
  %v7640 = vld [vmem:[%s7637 + $0x10] sm:$0xff]
  %v7641 = vld [vmem:[%s7637 + $0x18] sm:$0xff]
  %v7642 = vld [vmem:[%s7637 + $0x20] sm:$0xff]
  %v7643 = vld [vmem:[%s7637 + $0x28] sm:$0xff]
  %v7644 = vld [vmem:[%s7637 + $0x30] sm:$0xff]
  %v7645 = vld [vmem:[%s7637 + $0x38] sm:$0xff]
  %v7646 = vld [vmem:[%s7637 + $0x40] sm:$0xff]
  %v7647 = vld [vmem:[%s7637 + $0x48] sm:$0xff]
  %v7648 = vld [vmem:[%s7637 + $0x50] sm:$0xff]
  %v7649 = vld [vmem:[%s7637 + $0x58] sm:$0xff]
  %v7650 = vld [vmem:[%s7637 + $0x60] sm:$0xff]
  %v7651 = vld [vmem:[%s7637 + $0x68] sm:$0xff]
  %v7652 = vld [vmem:[%s7637 + $0x70] sm:$0xff]
  %v7653 = vld [vmem:[%s7637 + $0x78] sm:$0xff]
  %7654 = vmatprep.subr.mxu0 0.0
  %7655 = vmatpush1.msra.mxu0 %v7653
  %7656 = vmatprep.subr.mxu0 0.0
  %7657 = vmatpush1.msra.mxu0 %v7652
  %7658 = vmatprep.subr.mxu0 0.0
  %7659 = vmatpush1.msra.mxu0 %v7651
  %7660 = vmatprep.subr.mxu0 0.0
  %7661 = vmatpush1.msra.mxu0 %v7650
  %7662 = vmatprep.subr.mxu0 0.0
  %7663 = vmatpush1.msra.mxu0 %v7649
  %7664 = vmatprep.subr.mxu0 0.0
  %7665 = vmatpush1.msra.mxu0 %v7648
  %7666 = vmatprep.subr.mxu0 0.0
  %7667 = vmatpush1.msra.mxu0 %v7647
  %7668 = vmatprep.subr.mxu0 0.0
  %7669 = vmatpush1.msra.mxu0 %v7646
  %7670 = vmatprep.subr.mxu0 0.0
  %7671 = vmatpush1.msra.mxu0 %v7645
  %7672 = vmatprep.subr.mxu0 0.0
  %7673 = vmatpush1.msra.mxu0 %v7644
  %7674 = vmatprep.subr.mxu0 0.0
  %7675 = vmatpush1.msra.mxu0 %v7643
  %7676 = vmatprep.subr.mxu0 0.0
  %7677 = vmatpush1.msra.mxu0 %v7642
  %7678 = vmatprep.subr.mxu0 0.0
  %7679 = vmatpush1.msra.mxu0 %v7641
  %7680 = vmatprep.subr.mxu0 0.0
  %7681 = vmatpush1.msra.mxu0 %v7640
  %7682 = vmatprep.subr.mxu0 0.0
  %7683 = vmatpush1.msra.mxu0 %v7639
  %7684 = vmatprep.subr.mxu0 0.0
  %7685 = vmatpush1.msra.mxu0 %v7638
  %7686 = vmatprep.subr.mxu0 0.0
  %7687 = vmatpush2.msra.mxu0 0.0
  %7688 = vmatprep.subr.mxu0 0.0
  %7689 = vmatpush2.msra.mxu0 0.0
  %7690 = vmatprep.subr.mxu0 0.0
  %7691 = vmatpush2.msra.mxu0 0.0
  %7692 = vmatprep.subr.mxu0 0.0
  %7693 = vmatpush2.msra.mxu0 0.0
  %7694 = vmatprep.subr.mxu0 0.0
  %7695 = vmatpush2.msra.mxu0 0.0
  %7696 = vmatprep.subr.mxu0 0.0
  %7697 = vmatpush2.msra.mxu0 0.0
  %7698 = vmatprep.subr.mxu0 0.0
  %7699 = vmatpush2.msra.mxu0 0.0
  %7700 = vmatprep.subr.mxu0 0.0
  %7701 = vmatpush2.msra.mxu0 0.0
  %7702 = vmatprep.subr.mxu0 0.0
  %7703 = vmatpush2.msra.mxu0 0.0
  %7704 = vmatprep.subr.mxu0 0.0
  %7705 = vmatpush2.msra.mxu0 0.0
  %7706 = vmatprep.subr.mxu0 0.0
  %7707 = vmatpush2.msra.mxu0 0.0
  %7708 = vmatprep.subr.mxu0 0.0
  %7709 = vmatpush2.msra.mxu0 0.0
  %7710 = vmatprep.subr.mxu0 0.0
  %7711 = vmatpush2.msra.mxu0 0.0
  %7712 = vmatprep.subr.mxu0 0.0
  %7713 = vmatpush2.msra.mxu0 0.0
  %7714 = vmatprep.subr.mxu0 0.0
  %7715 = vmatpush2.msra.mxu0 0.0
  %7716 = vmatprep.subr.mxu0 0.0
  %7717 = vmatpush2.msra.mxu0 0.0
  %7718 = vmatprep.mubr.f32.mxu0 0.0
  %7719 = vmatmul.mubr.f32.gmra.mxu0 %v7636
  %v7720 = vpop.f32.mrf.mxu0
  %v7721 = vadd.f32 0.0, %v7720
  %v7722 = vpop.f32.mrf.mxu0
  %7723 = vdwg.mxu0
  %v7724 = vadd.f32 %v7634, %v7721
  %s7725 = scalar_lea.vmem [#allocation5], 15
  %v7726 = vld [vmem:[%s7725] ss:$30 sm:$0x3]
  %s7727 = scalar_lea.vmem [#allocation6], 1920
  %v7728 = vld [vmem:[%s7727] sm:$0xff]
  %v7729 = vld [vmem:[%s7727 + $0x8] sm:$0xff]
  %v7730 = vld [vmem:[%s7727 + $0x10] sm:$0xff]
  %v7731 = vld [vmem:[%s7727 + $0x18] sm:$0xff]
  %v7732 = vld [vmem:[%s7727 + $0x20] sm:$0xff]
  %v7733 = vld [vmem:[%s7727 + $0x28] sm:$0xff]
  %v7734 = vld [vmem:[%s7727 + $0x30] sm:$0xff]
  %v7735 = vld [vmem:[%s7727 + $0x38] sm:$0xff]
  %v7736 = vld [vmem:[%s7727 + $0x40] sm:$0xff]
  %v7737 = vld [vmem:[%s7727 + $0x48] sm:$0xff]
  %v7738 = vld [vmem:[%s7727 + $0x50] sm:$0xff]
  %v7739 = vld [vmem:[%s7727 + $0x58] sm:$0xff]
  %v7740 = vld [vmem:[%s7727 + $0x60] sm:$0xff]
  %v7741 = vld [vmem:[%s7727 + $0x68] sm:$0xff]
  %v7742 = vld [vmem:[%s7727 + $0x70] sm:$0xff]
  %v7743 = vld [vmem:[%s7727 + $0x78] sm:$0xff]
  %7744 = vmatprep.subr.mxu0 0.0
  %7745 = vmatpush1.msra.mxu0 %v7743
  %7746 = vmatprep.subr.mxu0 0.0
  %7747 = vmatpush1.msra.mxu0 %v7742
  %7748 = vmatprep.subr.mxu0 0.0
  %7749 = vmatpush1.msra.mxu0 %v7741
  %7750 = vmatprep.subr.mxu0 0.0
  %7751 = vmatpush1.msra.mxu0 %v7740
  %7752 = vmatprep.subr.mxu0 0.0
  %7753 = vmatpush1.msra.mxu0 %v7739
  %7754 = vmatprep.subr.mxu0 0.0
  %7755 = vmatpush1.msra.mxu0 %v7738
  %7756 = vmatprep.subr.mxu0 0.0
  %7757 = vmatpush1.msra.mxu0 %v7737
  %7758 = vmatprep.subr.mxu0 0.0
  %7759 = vmatpush1.msra.mxu0 %v7736
  %7760 = vmatprep.subr.mxu0 0.0
  %7761 = vmatpush1.msra.mxu0 %v7735
  %7762 = vmatprep.subr.mxu0 0.0
  %7763 = vmatpush1.msra.mxu0 %v7734
  %7764 = vmatprep.subr.mxu0 0.0
  %7765 = vmatpush1.msra.mxu0 %v7733
  %7766 = vmatprep.subr.mxu0 0.0
  %7767 = vmatpush1.msra.mxu0 %v7732
  %7768 = vmatprep.subr.mxu0 0.0
  %7769 = vmatpush1.msra.mxu0 %v7731
  %7770 = vmatprep.subr.mxu0 0.0
  %7771 = vmatpush1.msra.mxu0 %v7730
  %7772 = vmatprep.subr.mxu0 0.0
  %7773 = vmatpush1.msra.mxu0 %v7729
  %7774 = vmatprep.subr.mxu0 0.0
  %7775 = vmatpush1.msra.mxu0 %v7728
  %7776 = vmatprep.subr.mxu0 0.0
  %7777 = vmatpush2.msra.mxu0 0.0
  %7778 = vmatprep.subr.mxu0 0.0
  %7779 = vmatpush2.msra.mxu0 0.0
  %7780 = vmatprep.subr.mxu0 0.0
  %7781 = vmatpush2.msra.mxu0 0.0
  %7782 = vmatprep.subr.mxu0 0.0
  %7783 = vmatpush2.msra.mxu0 0.0
  %7784 = vmatprep.subr.mxu0 0.0
  %7785 = vmatpush2.msra.mxu0 0.0
  %7786 = vmatprep.subr.mxu0 0.0
  %7787 = vmatpush2.msra.mxu0 0.0
  %7788 = vmatprep.subr.mxu0 0.0
  %7789 = vmatpush2.msra.mxu0 0.0
  %7790 = vmatprep.subr.mxu0 0.0
  %7791 = vmatpush2.msra.mxu0 0.0
  %7792 = vmatprep.subr.mxu0 0.0
  %7793 = vmatpush2.msra.mxu0 0.0
  %7794 = vmatprep.subr.mxu0 0.0
  %7795 = vmatpush2.msra.mxu0 0.0
  %7796 = vmatprep.subr.mxu0 0.0
  %7797 = vmatpush2.msra.mxu0 0.0
  %7798 = vmatprep.subr.mxu0 0.0
  %7799 = vmatpush2.msra.mxu0 0.0
  %7800 = vmatprep.subr.mxu0 0.0
  %7801 = vmatpush2.msra.mxu0 0.0
  %7802 = vmatprep.subr.mxu0 0.0
  %7803 = vmatpush2.msra.mxu0 0.0
  %7804 = vmatprep.subr.mxu0 0.0
  %7805 = vmatpush2.msra.mxu0 0.0
  %7806 = vmatprep.subr.mxu0 0.0
  %7807 = vmatpush2.msra.mxu0 0.0
  %7808 = vmatprep.mubr.f32.mxu0 0.0
  %7809 = vmatmul.mubr.f32.gmra.mxu0 %v7726
  %v7810 = vpop.f32.mrf.mxu0
  %v7811 = vadd.f32 0.0, %v7810
  %v7812 = vpop.f32.mrf.mxu0
  %7813 = vdwg.mxu0
  %v7814 = vadd.f32 %v7724, %v7811
  %s7815 = scalar_lea.vmem [#allocation5], 16
  %v7816 = vld [vmem:[%s7815] ss:$30 sm:$0x3]
  %s7817 = scalar_lea.vmem [#allocation6], 2048
  %v7818 = vld [vmem:[%s7817] sm:$0xff]
  %v7819 = vld [vmem:[%s7817 + $0x8] sm:$0xff]
  %v7820 = vld [vmem:[%s7817 + $0x10] sm:$0xff]
  %v7821 = vld [vmem:[%s7817 + $0x18] sm:$0xff]
  %v7822 = vld [vmem:[%s7817 + $0x20] sm:$0xff]
  %v7823 = vld [vmem:[%s7817 + $0x28] sm:$0xff]
  %v7824 = vld [vmem:[%s7817 + $0x30] sm:$0xff]
  %v7825 = vld [vmem:[%s7817 + $0x38] sm:$0xff]
  %v7826 = vld [vmem:[%s7817 + $0x40] sm:$0xff]
  %v7827 = vld [vmem:[%s7817 + $0x48] sm:$0xff]
  %v7828 = vld [vmem:[%s7817 + $0x50] sm:$0xff]
  %v7829 = vld [vmem:[%s7817 + $0x58] sm:$0xff]
  %v7830 = vld [vmem:[%s7817 + $0x60] sm:$0xff]
  %v7831 = vld [vmem:[%s7817 + $0x68] sm:$0xff]
  %v7832 = vld [vmem:[%s7817 + $0x70] sm:$0xff]
  %v7833 = vld [vmem:[%s7817 + $0x78] sm:$0xff]
  %7834 = vmatprep.subr.mxu0 0.0
  %7835 = vmatpush1.msra.mxu0 %v7833
  %7836 = vmatprep.subr.mxu0 0.0
  %7837 = vmatpush1.msra.mxu0 %v7832
  %7838 = vmatprep.subr.mxu0 0.0
  %7839 = vmatpush1.msra.mxu0 %v7831
  %7840 = vmatprep.subr.mxu0 0.0
  %7841 = vmatpush1.msra.mxu0 %v7830
  %7842 = vmatprep.subr.mxu0 0.0
  %7843 = vmatpush1.msra.mxu0 %v7829
  %7844 = vmatprep.subr.mxu0 0.0
  %7845 = vmatpush1.msra.mxu0 %v7828
  %7846 = vmatprep.subr.mxu0 0.0
  %7847 = vmatpush1.msra.mxu0 %v7827
  %7848 = vmatprep.subr.mxu0 0.0
  %7849 = vmatpush1.msra.mxu0 %v7826
  %7850 = vmatprep.subr.mxu0 0.0
  %7851 = vmatpush1.msra.mxu0 %v7825
  %7852 = vmatprep.subr.mxu0 0.0
  %7853 = vmatpush1.msra.mxu0 %v7824
  %7854 = vmatprep.subr.mxu0 0.0
  %7855 = vmatpush1.msra.mxu0 %v7823
  %7856 = vmatprep.subr.mxu0 0.0
  %7857 = vmatpush1.msra.mxu0 %v7822
  %7858 = vmatprep.subr.mxu0 0.0
  %7859 = vmatpush1.msra.mxu0 %v7821
  %7860 = vmatprep.subr.mxu0 0.0
  %7861 = vmatpush1.msra.mxu0 %v7820
  %7862 = vmatprep.subr.mxu0 0.0
  %7863 = vmatpush1.msra.mxu0 %v7819
  %7864 = vmatprep.subr.mxu0 0.0
  %7865 = vmatpush1.msra.mxu0 %v7818
  %7866 = vmatprep.subr.mxu0 0.0
  %7867 = vmatpush2.msra.mxu0 0.0
  %7868 = vmatprep.subr.mxu0 0.0
  %7869 = vmatpush2.msra.mxu0 0.0
  %7870 = vmatprep.subr.mxu0 0.0
  %7871 = vmatpush2.msra.mxu0 0.0
  %7872 = vmatprep.subr.mxu0 0.0
  %7873 = vmatpush2.msra.mxu0 0.0
  %7874 = vmatprep.subr.mxu0 0.0
  %7875 = vmatpush2.msra.mxu0 0.0
  %7876 = vmatprep.subr.mxu0 0.0
  %7877 = vmatpush2.msra.mxu0 0.0
  %7878 = vmatprep.subr.mxu0 0.0
  %7879 = vmatpush2.msra.mxu0 0.0
  %7880 = vmatprep.subr.mxu0 0.0
  %7881 = vmatpush2.msra.mxu0 0.0
  %7882 = vmatprep.subr.mxu0 0.0
  %7883 = vmatpush2.msra.mxu0 0.0
  %7884 = vmatprep.subr.mxu0 0.0
  %7885 = vmatpush2.msra.mxu0 0.0
  %7886 = vmatprep.subr.mxu0 0.0
  %7887 = vmatpush2.msra.mxu0 0.0
  %7888 = vmatprep.subr.mxu0 0.0
  %7889 = vmatpush2.msra.mxu0 0.0
  %7890 = vmatprep.subr.mxu0 0.0
  %7891 = vmatpush2.msra.mxu0 0.0
  %7892 = vmatprep.subr.mxu0 0.0
  %7893 = vmatpush2.msra.mxu0 0.0
  %7894 = vmatprep.subr.mxu0 0.0
  %7895 = vmatpush2.msra.mxu0 0.0
  %7896 = vmatprep.subr.mxu0 0.0
  %7897 = vmatpush2.msra.mxu0 0.0
  %7898 = vmatprep.mubr.f32.mxu0 0.0
  %7899 = vmatmul.mubr.f32.gmra.mxu0 %v7816
  %v7900 = vpop.f32.mrf.mxu0
  %v7901 = vadd.f32 0.0, %v7900
  %v7902 = vpop.f32.mrf.mxu0
  %7903 = vdwg.mxu0
  %v7904 = vadd.f32 %v7814, %v7901
  %s7905 = scalar_lea.vmem [#allocation5], 17
  %v7906 = vld [vmem:[%s7905] ss:$30 sm:$0x3]
  %s7907 = scalar_lea.vmem [#allocation6], 2176
  %v7908 = vld [vmem:[%s7907] sm:$0xff]
  %v7909 = vld [vmem:[%s7907 + $0x8] sm:$0xff]
  %v7910 = vld [vmem:[%s7907 + $0x10] sm:$0xff]
  %v7911 = vld [vmem:[%s7907 + $0x18] sm:$0xff]
  %v7912 = vld [vmem:[%s7907 + $0x20] sm:$0xff]
  %v7913 = vld [vmem:[%s7907 + $0x28] sm:$0xff]
  %v7914 = vld [vmem:[%s7907 + $0x30] sm:$0xff]
  %v7915 = vld [vmem:[%s7907 + $0x38] sm:$0xff]
  %v7916 = vld [vmem:[%s7907 + $0x40] sm:$0xff]
  %v7917 = vld [vmem:[%s7907 + $0x48] sm:$0xff]
  %v7918 = vld [vmem:[%s7907 + $0x50] sm:$0xff]
  %v7919 = vld [vmem:[%s7907 + $0x58] sm:$0xff]
  %v7920 = vld [vmem:[%s7907 + $0x60] sm:$0xff]
  %v7921 = vld [vmem:[%s7907 + $0x68] sm:$0xff]
  %v7922 = vld [vmem:[%s7907 + $0x70] sm:$0xff]
  %v7923 = vld [vmem:[%s7907 + $0x78] sm:$0xff]
  %7924 = vmatprep.subr.mxu0 0.0
  %7925 = vmatpush1.msra.mxu0 %v7923
  %7926 = vmatprep.subr.mxu0 0.0
  %7927 = vmatpush1.msra.mxu0 %v7922
  %7928 = vmatprep.subr.mxu0 0.0
  %7929 = vmatpush1.msra.mxu0 %v7921
  %7930 = vmatprep.subr.mxu0 0.0
  %7931 = vmatpush1.msra.mxu0 %v7920
  %7932 = vmatprep.subr.mxu0 0.0
  %7933 = vmatpush1.msra.mxu0 %v7919
  %7934 = vmatprep.subr.mxu0 0.0
  %7935 = vmatpush1.msra.mxu0 %v7918
  %7936 = vmatprep.subr.mxu0 0.0
  %7937 = vmatpush1.msra.mxu0 %v7917
  %7938 = vmatprep.subr.mxu0 0.0
  %7939 = vmatpush1.msra.mxu0 %v7916
  %7940 = vmatprep.subr.mxu0 0.0
  %7941 = vmatpush1.msra.mxu0 %v7915
  %7942 = vmatprep.subr.mxu0 0.0
  %7943 = vmatpush1.msra.mxu0 %v7914
  %7944 = vmatprep.subr.mxu0 0.0
  %7945 = vmatpush1.msra.mxu0 %v7913
  %7946 = vmatprep.subr.mxu0 0.0
  %7947 = vmatpush1.msra.mxu0 %v7912
  %7948 = vmatprep.subr.mxu0 0.0
  %7949 = vmatpush1.msra.mxu0 %v7911
  %7950 = vmatprep.subr.mxu0 0.0
  %7951 = vmatpush1.msra.mxu0 %v7910
  %7952 = vmatprep.subr.mxu0 0.0
  %7953 = vmatpush1.msra.mxu0 %v7909
  %7954 = vmatprep.subr.mxu0 0.0
  %7955 = vmatpush1.msra.mxu0 %v7908
  %7956 = vmatprep.subr.mxu0 0.0
  %7957 = vmatpush2.msra.mxu0 0.0
  %7958 = vmatprep.subr.mxu0 0.0
  %7959 = vmatpush2.msra.mxu0 0.0
  %7960 = vmatprep.subr.mxu0 0.0
  %7961 = vmatpush2.msra.mxu0 0.0
  %7962 = vmatprep.subr.mxu0 0.0
  %7963 = vmatpush2.msra.mxu0 0.0
  %7964 = vmatprep.subr.mxu0 0.0
  %7965 = vmatpush2.msra.mxu0 0.0
  %7966 = vmatprep.subr.mxu0 0.0
  %7967 = vmatpush2.msra.mxu0 0.0
  %7968 = vmatprep.subr.mxu0 0.0
  %7969 = vmatpush2.msra.mxu0 0.0
  %7970 = vmatprep.subr.mxu0 0.0
  %7971 = vmatpush2.msra.mxu0 0.0
  %7972 = vmatprep.subr.mxu0 0.0
  %7973 = vmatpush2.msra.mxu0 0.0
  %7974 = vmatprep.subr.mxu0 0.0
  %7975 = vmatpush2.msra.mxu0 0.0
  %7976 = vmatprep.subr.mxu0 0.0
  %7977 = vmatpush2.msra.mxu0 0.0
  %7978 = vmatprep.subr.mxu0 0.0
  %7979 = vmatpush2.msra.mxu0 0.0
  %7980 = vmatprep.subr.mxu0 0.0
  %7981 = vmatpush2.msra.mxu0 0.0
  %7982 = vmatprep.subr.mxu0 0.0
  %7983 = vmatpush2.msra.mxu0 0.0
  %7984 = vmatprep.subr.mxu0 0.0
  %7985 = vmatpush2.msra.mxu0 0.0
  %7986 = vmatprep.subr.mxu0 0.0
  %7987 = vmatpush2.msra.mxu0 0.0
  %7988 = vmatprep.mubr.f32.mxu0 0.0
  %7989 = vmatmul.mubr.f32.gmra.mxu0 %v7906
  %v7990 = vpop.f32.mrf.mxu0
  %v7991 = vadd.f32 0.0, %v7990
  %v7992 = vpop.f32.mrf.mxu0
  %7993 = vdwg.mxu0
  %v7994 = vadd.f32 %v7904, %v7991
  %s7995 = scalar_lea.vmem [#allocation5], 18
  %v7996 = vld [vmem:[%s7995] ss:$30 sm:$0x3]
  %s7997 = scalar_lea.vmem [#allocation6], 2304
  %v7998 = vld [vmem:[%s7997] sm:$0xff]
  %v7999 = vld [vmem:[%s7997 + $0x8] sm:$0xff]
  %v8000 = vld [vmem:[%s7997 + $0x10] sm:$0xff]
  %v8001 = vld [vmem:[%s7997 + $0x18] sm:$0xff]
  %v8002 = vld [vmem:[%s7997 + $0x20] sm:$0xff]
  %v8003 = vld [vmem:[%s7997 + $0x28] sm:$0xff]
  %v8004 = vld [vmem:[%s7997 + $0x30] sm:$0xff]
  %v8005 = vld [vmem:[%s7997 + $0x38] sm:$0xff]
  %v8006 = vld [vmem:[%s7997 + $0x40] sm:$0xff]
  %v8007 = vld [vmem:[%s7997 + $0x48] sm:$0xff]
  %v8008 = vld [vmem:[%s7997 + $0x50] sm:$0xff]
  %v8009 = vld [vmem:[%s7997 + $0x58] sm:$0xff]
  %v8010 = vld [vmem:[%s7997 + $0x60] sm:$0xff]
  %v8011 = vld [vmem:[%s7997 + $0x68] sm:$0xff]
  %v8012 = vld [vmem:[%s7997 + $0x70] sm:$0xff]
  %v8013 = vld [vmem:[%s7997 + $0x78] sm:$0xff]
  %8014 = vmatprep.subr.mxu0 0.0
  %8015 = vmatpush1.msra.mxu0 %v8013
  %8016 = vmatprep.subr.mxu0 0.0
  %8017 = vmatpush1.msra.mxu0 %v8012
  %8018 = vmatprep.subr.mxu0 0.0
  %8019 = vmatpush1.msra.mxu0 %v8011
  %8020 = vmatprep.subr.mxu0 0.0
  %8021 = vmatpush1.msra.mxu0 %v8010
  %8022 = vmatprep.subr.mxu0 0.0
  %8023 = vmatpush1.msra.mxu0 %v8009
  %8024 = vmatprep.subr.mxu0 0.0
  %8025 = vmatpush1.msra.mxu0 %v8008
  %8026 = vmatprep.subr.mxu0 0.0
  %8027 = vmatpush1.msra.mxu0 %v8007
  %8028 = vmatprep.subr.mxu0 0.0
  %8029 = vmatpush1.msra.mxu0 %v8006
  %8030 = vmatprep.subr.mxu0 0.0
  %8031 = vmatpush1.msra.mxu0 %v8005
  %8032 = vmatprep.subr.mxu0 0.0
  %8033 = vmatpush1.msra.mxu0 %v8004
  %8034 = vmatprep.subr.mxu0 0.0
  %8035 = vmatpush1.msra.mxu0 %v8003
  %8036 = vmatprep.subr.mxu0 0.0
  %8037 = vmatpush1.msra.mxu0 %v8002
  %8038 = vmatprep.subr.mxu0 0.0
  %8039 = vmatpush1.msra.mxu0 %v8001
  %8040 = vmatprep.subr.mxu0 0.0
  %8041 = vmatpush1.msra.mxu0 %v8000
  %8042 = vmatprep.subr.mxu0 0.0
  %8043 = vmatpush1.msra.mxu0 %v7999
  %8044 = vmatprep.subr.mxu0 0.0
  %8045 = vmatpush1.msra.mxu0 %v7998
  %8046 = vmatprep.subr.mxu0 0.0
  %8047 = vmatpush2.msra.mxu0 0.0
  %8048 = vmatprep.subr.mxu0 0.0
  %8049 = vmatpush2.msra.mxu0 0.0
  %8050 = vmatprep.subr.mxu0 0.0
  %8051 = vmatpush2.msra.mxu0 0.0
  %8052 = vmatprep.subr.mxu0 0.0
  %8053 = vmatpush2.msra.mxu0 0.0
  %8054 = vmatprep.subr.mxu0 0.0
  %8055 = vmatpush2.msra.mxu0 0.0
  %8056 = vmatprep.subr.mxu0 0.0
  %8057 = vmatpush2.msra.mxu0 0.0
  %8058 = vmatprep.subr.mxu0 0.0
  %8059 = vmatpush2.msra.mxu0 0.0
  %8060 = vmatprep.subr.mxu0 0.0
  %8061 = vmatpush2.msra.mxu0 0.0
  %8062 = vmatprep.subr.mxu0 0.0
  %8063 = vmatpush2.msra.mxu0 0.0
  %8064 = vmatprep.subr.mxu0 0.0
  %8065 = vmatpush2.msra.mxu0 0.0
  %8066 = vmatprep.subr.mxu0 0.0
  %8067 = vmatpush2.msra.mxu0 0.0
  %8068 = vmatprep.subr.mxu0 0.0
  %8069 = vmatpush2.msra.mxu0 0.0
  %8070 = vmatprep.subr.mxu0 0.0
  %8071 = vmatpush2.msra.mxu0 0.0
  %8072 = vmatprep.subr.mxu0 0.0
  %8073 = vmatpush2.msra.mxu0 0.0
  %8074 = vmatprep.subr.mxu0 0.0
  %8075 = vmatpush2.msra.mxu0 0.0
  %8076 = vmatprep.subr.mxu0 0.0
  %8077 = vmatpush2.msra.mxu0 0.0
  %8078 = vmatprep.mubr.f32.mxu0 0.0
  %8079 = vmatmul.mubr.f32.gmra.mxu0 %v7996
  %v8080 = vpop.f32.mrf.mxu0
  %v8081 = vadd.f32 0.0, %v8080
  %v8082 = vpop.f32.mrf.mxu0
  %8083 = vdwg.mxu0
  %v8084 = vadd.f32 %v7994, %v8081
  %s8085 = scalar_lea.vmem [#allocation5], 19
  %v8086 = vld [vmem:[%s8085] ss:$30 sm:$0x3]
  %s8087 = scalar_lea.vmem [#allocation6], 2432
  %v8088 = vld [vmem:[%s8087] sm:$0xff]
  %v8089 = vld [vmem:[%s8087 + $0x8] sm:$0xff]
  %v8090 = vld [vmem:[%s8087 + $0x10] sm:$0xff]
  %v8091 = vld [vmem:[%s8087 + $0x18] sm:$0xff]
  %v8092 = vld [vmem:[%s8087 + $0x20] sm:$0xff]
  %v8093 = vld [vmem:[%s8087 + $0x28] sm:$0xff]
  %v8094 = vld [vmem:[%s8087 + $0x30] sm:$0xff]
  %v8095 = vld [vmem:[%s8087 + $0x38] sm:$0xff]
  %v8096 = vld [vmem:[%s8087 + $0x40] sm:$0xff]
  %v8097 = vld [vmem:[%s8087 + $0x48] sm:$0xff]
  %v8098 = vld [vmem:[%s8087 + $0x50] sm:$0xff]
  %v8099 = vld [vmem:[%s8087 + $0x58] sm:$0xff]
  %v8100 = vld [vmem:[%s8087 + $0x60] sm:$0xff]
  %v8101 = vld [vmem:[%s8087 + $0x68] sm:$0xff]
  %v8102 = vld [vmem:[%s8087 + $0x70] sm:$0xff]
  %v8103 = vld [vmem:[%s8087 + $0x78] sm:$0xff]
  %8104 = vmatprep.subr.mxu0 0.0
  %8105 = vmatpush1.msra.mxu0 %v8103
  %8106 = vmatprep.subr.mxu0 0.0
  %8107 = vmatpush1.msra.mxu0 %v8102
  %8108 = vmatprep.subr.mxu0 0.0
  %8109 = vmatpush1.msra.mxu0 %v8101
  %8110 = vmatprep.subr.mxu0 0.0
  %8111 = vmatpush1.msra.mxu0 %v8100
  %8112 = vmatprep.subr.mxu0 0.0
  %8113 = vmatpush1.msra.mxu0 %v8099
  %8114 = vmatprep.subr.mxu0 0.0
  %8115 = vmatpush1.msra.mxu0 %v8098
  %8116 = vmatprep.subr.mxu0 0.0
  %8117 = vmatpush1.msra.mxu0 %v8097
  %8118 = vmatprep.subr.mxu0 0.0
  %8119 = vmatpush1.msra.mxu0 %v8096
  %8120 = vmatprep.subr.mxu0 0.0
  %8121 = vmatpush1.msra.mxu0 %v8095
  %8122 = vmatprep.subr.mxu0 0.0
  %8123 = vmatpush1.msra.mxu0 %v8094
  %8124 = vmatprep.subr.mxu0 0.0
  %8125 = vmatpush1.msra.mxu0 %v8093
  %8126 = vmatprep.subr.mxu0 0.0
  %8127 = vmatpush1.msra.mxu0 %v8092
  %8128 = vmatprep.subr.mxu0 0.0
  %8129 = vmatpush1.msra.mxu0 %v8091
  %8130 = vmatprep.subr.mxu0 0.0
  %8131 = vmatpush1.msra.mxu0 %v8090
  %8132 = vmatprep.subr.mxu0 0.0
  %8133 = vmatpush1.msra.mxu0 %v8089
  %8134 = vmatprep.subr.mxu0 0.0
  %8135 = vmatpush1.msra.mxu0 %v8088
  %8136 = vmatprep.subr.mxu0 0.0
  %8137 = vmatpush2.msra.mxu0 0.0
  %8138 = vmatprep.subr.mxu0 0.0
  %8139 = vmatpush2.msra.mxu0 0.0
  %8140 = vmatprep.subr.mxu0 0.0
  %8141 = vmatpush2.msra.mxu0 0.0
  %8142 = vmatprep.subr.mxu0 0.0
  %8143 = vmatpush2.msra.mxu0 0.0
  %8144 = vmatprep.subr.mxu0 0.0
  %8145 = vmatpush2.msra.mxu0 0.0
  %8146 = vmatprep.subr.mxu0 0.0
  %8147 = vmatpush2.msra.mxu0 0.0
  %8148 = vmatprep.subr.mxu0 0.0
  %8149 = vmatpush2.msra.mxu0 0.0
  %8150 = vmatprep.subr.mxu0 0.0
  %8151 = vmatpush2.msra.mxu0 0.0
  %8152 = vmatprep.subr.mxu0 0.0
  %8153 = vmatpush2.msra.mxu0 0.0
  %8154 = vmatprep.subr.mxu0 0.0
  %8155 = vmatpush2.msra.mxu0 0.0
  %8156 = vmatprep.subr.mxu0 0.0
  %8157 = vmatpush2.msra.mxu0 0.0
  %8158 = vmatprep.subr.mxu0 0.0
  %8159 = vmatpush2.msra.mxu0 0.0
  %8160 = vmatprep.subr.mxu0 0.0
  %8161 = vmatpush2.msra.mxu0 0.0
  %8162 = vmatprep.subr.mxu0 0.0
  %8163 = vmatpush2.msra.mxu0 0.0
  %8164 = vmatprep.subr.mxu0 0.0
  %8165 = vmatpush2.msra.mxu0 0.0
  %8166 = vmatprep.subr.mxu0 0.0
  %8167 = vmatpush2.msra.mxu0 0.0
  %8168 = vmatprep.mubr.f32.mxu0 0.0
  %8169 = vmatmul.mubr.f32.gmra.mxu0 %v8086
  %v8170 = vpop.f32.mrf.mxu0
  %v8171 = vadd.f32 0.0, %v8170
  %v8172 = vpop.f32.mrf.mxu0
  %8173 = vdwg.mxu0
  %v8174 = vadd.f32 %v8084, %v8171
  %s8175 = scalar_lea.vmem [#allocation5], 20
  %v8176 = vld [vmem:[%s8175] ss:$30 sm:$0x3]
  %s8177 = scalar_lea.vmem [#allocation6], 2560
  %v8178 = vld [vmem:[%s8177] sm:$0xff]
  %v8179 = vld [vmem:[%s8177 + $0x8] sm:$0xff]
  %v8180 = vld [vmem:[%s8177 + $0x10] sm:$0xff]
  %v8181 = vld [vmem:[%s8177 + $0x18] sm:$0xff]
  %v8182 = vld [vmem:[%s8177 + $0x20] sm:$0xff]
  %v8183 = vld [vmem:[%s8177 + $0x28] sm:$0xff]
  %v8184 = vld [vmem:[%s8177 + $0x30] sm:$0xff]
  %v8185 = vld [vmem:[%s8177 + $0x38] sm:$0xff]
  %v8186 = vld [vmem:[%s8177 + $0x40] sm:$0xff]
  %v8187 = vld [vmem:[%s8177 + $0x48] sm:$0xff]
  %v8188 = vld [vmem:[%s8177 + $0x50] sm:$0xff]
  %v8189 = vld [vmem:[%s8177 + $0x58] sm:$0xff]
  %v8190 = vld [vmem:[%s8177 + $0x60] sm:$0xff]
  %v8191 = vld [vmem:[%s8177 + $0x68] sm:$0xff]
  %v8192 = vld [vmem:[%s8177 + $0x70] sm:$0xff]
  %v8193 = vld [vmem:[%s8177 + $0x78] sm:$0xff]
  %8194 = vmatprep.subr.mxu0 0.0
  %8195 = vmatpush1.msra.mxu0 %v8193
  %8196 = vmatprep.subr.mxu0 0.0
  %8197 = vmatpush1.msra.mxu0 %v8192
  %8198 = vmatprep.subr.mxu0 0.0
  %8199 = vmatpush1.msra.mxu0 %v8191
  %8200 = vmatprep.subr.mxu0 0.0
  %8201 = vmatpush1.msra.mxu0 %v8190
  %8202 = vmatprep.subr.mxu0 0.0
  %8203 = vmatpush1.msra.mxu0 %v8189
  %8204 = vmatprep.subr.mxu0 0.0
  %8205 = vmatpush1.msra.mxu0 %v8188
  %8206 = vmatprep.subr.mxu0 0.0
  %8207 = vmatpush1.msra.mxu0 %v8187
  %8208 = vmatprep.subr.mxu0 0.0
  %8209 = vmatpush1.msra.mxu0 %v8186
  %8210 = vmatprep.subr.mxu0 0.0
  %8211 = vmatpush1.msra.mxu0 %v8185
  %8212 = vmatprep.subr.mxu0 0.0
  %8213 = vmatpush1.msra.mxu0 %v8184
  %8214 = vmatprep.subr.mxu0 0.0
  %8215 = vmatpush1.msra.mxu0 %v8183
  %8216 = vmatprep.subr.mxu0 0.0
  %8217 = vmatpush1.msra.mxu0 %v8182
  %8218 = vmatprep.subr.mxu0 0.0
  %8219 = vmatpush1.msra.mxu0 %v8181
  %8220 = vmatprep.subr.mxu0 0.0
  %8221 = vmatpush1.msra.mxu0 %v8180
  %8222 = vmatprep.subr.mxu0 0.0
  %8223 = vmatpush1.msra.mxu0 %v8179
  %8224 = vmatprep.subr.mxu0 0.0
  %8225 = vmatpush1.msra.mxu0 %v8178
  %8226 = vmatprep.subr.mxu0 0.0
  %8227 = vmatpush2.msra.mxu0 0.0
  %8228 = vmatprep.subr.mxu0 0.0
  %8229 = vmatpush2.msra.mxu0 0.0
  %8230 = vmatprep.subr.mxu0 0.0
  %8231 = vmatpush2.msra.mxu0 0.0
  %8232 = vmatprep.subr.mxu0 0.0
  %8233 = vmatpush2.msra.mxu0 0.0
  %8234 = vmatprep.subr.mxu0 0.0
  %8235 = vmatpush2.msra.mxu0 0.0
  %8236 = vmatprep.subr.mxu0 0.0
  %8237 = vmatpush2.msra.mxu0 0.0
  %8238 = vmatprep.subr.mxu0 0.0
  %8239 = vmatpush2.msra.mxu0 0.0
  %8240 = vmatprep.subr.mxu0 0.0
  %8241 = vmatpush2.msra.mxu0 0.0
  %8242 = vmatprep.subr.mxu0 0.0
  %8243 = vmatpush2.msra.mxu0 0.0
  %8244 = vmatprep.subr.mxu0 0.0
  %8245 = vmatpush2.msra.mxu0 0.0
  %8246 = vmatprep.subr.mxu0 0.0
  %8247 = vmatpush2.msra.mxu0 0.0
  %8248 = vmatprep.subr.mxu0 0.0
  %8249 = vmatpush2.msra.mxu0 0.0
  %8250 = vmatprep.subr.mxu0 0.0
  %8251 = vmatpush2.msra.mxu0 0.0
  %8252 = vmatprep.subr.mxu0 0.0
  %8253 = vmatpush2.msra.mxu0 0.0
  %8254 = vmatprep.subr.mxu0 0.0
  %8255 = vmatpush2.msra.mxu0 0.0
  %8256 = vmatprep.subr.mxu0 0.0
  %8257 = vmatpush2.msra.mxu0 0.0
  %8258 = vmatprep.mubr.f32.mxu0 0.0
  %8259 = vmatmul.mubr.f32.gmra.mxu0 %v8176
  %v8260 = vpop.f32.mrf.mxu0
  %v8261 = vadd.f32 0.0, %v8260
  %v8262 = vpop.f32.mrf.mxu0
  %8263 = vdwg.mxu0
  %v8264 = vadd.f32 %v8174, %v8261
  %s8265 = scalar_lea.vmem [#allocation5], 21
  %v8266 = vld [vmem:[%s8265] ss:$30 sm:$0x3]
  %s8267 = scalar_lea.vmem [#allocation6], 2688
  %v8268 = vld [vmem:[%s8267] sm:$0xff]
  %v8269 = vld [vmem:[%s8267 + $0x8] sm:$0xff]
  %v8270 = vld [vmem:[%s8267 + $0x10] sm:$0xff]
  %v8271 = vld [vmem:[%s8267 + $0x18] sm:$0xff]
  %v8272 = vld [vmem:[%s8267 + $0x20] sm:$0xff]
  %v8273 = vld [vmem:[%s8267 + $0x28] sm:$0xff]
  %v8274 = vld [vmem:[%s8267 + $0x30] sm:$0xff]
  %v8275 = vld [vmem:[%s8267 + $0x38] sm:$0xff]
  %v8276 = vld [vmem:[%s8267 + $0x40] sm:$0xff]
  %v8277 = vld [vmem:[%s8267 + $0x48] sm:$0xff]
  %v8278 = vld [vmem:[%s8267 + $0x50] sm:$0xff]
  %v8279 = vld [vmem:[%s8267 + $0x58] sm:$0xff]
  %v8280 = vld [vmem:[%s8267 + $0x60] sm:$0xff]
  %v8281 = vld [vmem:[%s8267 + $0x68] sm:$0xff]
  %v8282 = vld [vmem:[%s8267 + $0x70] sm:$0xff]
  %v8283 = vld [vmem:[%s8267 + $0x78] sm:$0xff]
  %8284 = vmatprep.subr.mxu0 0.0
  %8285 = vmatpush1.msra.mxu0 %v8283
  %8286 = vmatprep.subr.mxu0 0.0
  %8287 = vmatpush1.msra.mxu0 %v8282
  %8288 = vmatprep.subr.mxu0 0.0
  %8289 = vmatpush1.msra.mxu0 %v8281
  %8290 = vmatprep.subr.mxu0 0.0
  %8291 = vmatpush1.msra.mxu0 %v8280
  %8292 = vmatprep.subr.mxu0 0.0
  %8293 = vmatpush1.msra.mxu0 %v8279
  %8294 = vmatprep.subr.mxu0 0.0
  %8295 = vmatpush1.msra.mxu0 %v8278
  %8296 = vmatprep.subr.mxu0 0.0
  %8297 = vmatpush1.msra.mxu0 %v8277
  %8298 = vmatprep.subr.mxu0 0.0
  %8299 = vmatpush1.msra.mxu0 %v8276
  %8300 = vmatprep.subr.mxu0 0.0
  %8301 = vmatpush1.msra.mxu0 %v8275
  %8302 = vmatprep.subr.mxu0 0.0
  %8303 = vmatpush1.msra.mxu0 %v8274
  %8304 = vmatprep.subr.mxu0 0.0
  %8305 = vmatpush1.msra.mxu0 %v8273
  %8306 = vmatprep.subr.mxu0 0.0
  %8307 = vmatpush1.msra.mxu0 %v8272
  %8308 = vmatprep.subr.mxu0 0.0
  %8309 = vmatpush1.msra.mxu0 %v8271
  %8310 = vmatprep.subr.mxu0 0.0
  %8311 = vmatpush1.msra.mxu0 %v8270
  %8312 = vmatprep.subr.mxu0 0.0
  %8313 = vmatpush1.msra.mxu0 %v8269
  %8314 = vmatprep.subr.mxu0 0.0
  %8315 = vmatpush1.msra.mxu0 %v8268
  %8316 = vmatprep.subr.mxu0 0.0
  %8317 = vmatpush2.msra.mxu0 0.0
  %8318 = vmatprep.subr.mxu0 0.0
  %8319 = vmatpush2.msra.mxu0 0.0
  %8320 = vmatprep.subr.mxu0 0.0
  %8321 = vmatpush2.msra.mxu0 0.0
  %8322 = vmatprep.subr.mxu0 0.0
  %8323 = vmatpush2.msra.mxu0 0.0
  %8324 = vmatprep.subr.mxu0 0.0
  %8325 = vmatpush2.msra.mxu0 0.0
  %8326 = vmatprep.subr.mxu0 0.0
  %8327 = vmatpush2.msra.mxu0 0.0
  %8328 = vmatprep.subr.mxu0 0.0
  %8329 = vmatpush2.msra.mxu0 0.0
  %8330 = vmatprep.subr.mxu0 0.0
  %8331 = vmatpush2.msra.mxu0 0.0
  %8332 = vmatprep.subr.mxu0 0.0
  %8333 = vmatpush2.msra.mxu0 0.0
  %8334 = vmatprep.subr.mxu0 0.0
  %8335 = vmatpush2.msra.mxu0 0.0
  %8336 = vmatprep.subr.mxu0 0.0
  %8337 = vmatpush2.msra.mxu0 0.0
  %8338 = vmatprep.subr.mxu0 0.0
  %8339 = vmatpush2.msra.mxu0 0.0
  %8340 = vmatprep.subr.mxu0 0.0
  %8341 = vmatpush2.msra.mxu0 0.0
  %8342 = vmatprep.subr.mxu0 0.0
  %8343 = vmatpush2.msra.mxu0 0.0
  %8344 = vmatprep.subr.mxu0 0.0
  %8345 = vmatpush2.msra.mxu0 0.0
  %8346 = vmatprep.subr.mxu0 0.0
  %8347 = vmatpush2.msra.mxu0 0.0
  %8348 = vmatprep.mubr.f32.mxu0 0.0
  %8349 = vmatmul.mubr.f32.gmra.mxu0 %v8266
  %v8350 = vpop.f32.mrf.mxu0
  %v8351 = vadd.f32 0.0, %v8350
  %v8352 = vpop.f32.mrf.mxu0
  %8353 = vdwg.mxu0
  %v8354 = vadd.f32 %v8264, %v8351
  %s8355 = scalar_lea.vmem [#allocation5], 22
  %v8356 = vld [vmem:[%s8355] ss:$30 sm:$0x3]
  %s8357 = scalar_lea.vmem [#allocation6], 2816
  %v8358 = vld [vmem:[%s8357] sm:$0xff]
  %v8359 = vld [vmem:[%s8357 + $0x8] sm:$0xff]
  %v8360 = vld [vmem:[%s8357 + $0x10] sm:$0xff]
  %v8361 = vld [vmem:[%s8357 + $0x18] sm:$0xff]
  %v8362 = vld [vmem:[%s8357 + $0x20] sm:$0xff]
  %v8363 = vld [vmem:[%s8357 + $0x28] sm:$0xff]
  %v8364 = vld [vmem:[%s8357 + $0x30] sm:$0xff]
  %v8365 = vld [vmem:[%s8357 + $0x38] sm:$0xff]
  %v8366 = vld [vmem:[%s8357 + $0x40] sm:$0xff]
  %v8367 = vld [vmem:[%s8357 + $0x48] sm:$0xff]
  %v8368 = vld [vmem:[%s8357 + $0x50] sm:$0xff]
  %v8369 = vld [vmem:[%s8357 + $0x58] sm:$0xff]
  %v8370 = vld [vmem:[%s8357 + $0x60] sm:$0xff]
  %v8371 = vld [vmem:[%s8357 + $0x68] sm:$0xff]
  %v8372 = vld [vmem:[%s8357 + $0x70] sm:$0xff]
  %v8373 = vld [vmem:[%s8357 + $0x78] sm:$0xff]
  %8374 = vmatprep.subr.mxu0 0.0
  %8375 = vmatpush1.msra.mxu0 %v8373
  %8376 = vmatprep.subr.mxu0 0.0
  %8377 = vmatpush1.msra.mxu0 %v8372
  %8378 = vmatprep.subr.mxu0 0.0
  %8379 = vmatpush1.msra.mxu0 %v8371
  %8380 = vmatprep.subr.mxu0 0.0
  %8381 = vmatpush1.msra.mxu0 %v8370
  %8382 = vmatprep.subr.mxu0 0.0
  %8383 = vmatpush1.msra.mxu0 %v8369
  %8384 = vmatprep.subr.mxu0 0.0
  %8385 = vmatpush1.msra.mxu0 %v8368
  %8386 = vmatprep.subr.mxu0 0.0
  %8387 = vmatpush1.msra.mxu0 %v8367
  %8388 = vmatprep.subr.mxu0 0.0
  %8389 = vmatpush1.msra.mxu0 %v8366
  %8390 = vmatprep.subr.mxu0 0.0
  %8391 = vmatpush1.msra.mxu0 %v8365
  %8392 = vmatprep.subr.mxu0 0.0
  %8393 = vmatpush1.msra.mxu0 %v8364
  %8394 = vmatprep.subr.mxu0 0.0
  %8395 = vmatpush1.msra.mxu0 %v8363
  %8396 = vmatprep.subr.mxu0 0.0
  %8397 = vmatpush1.msra.mxu0 %v8362
  %8398 = vmatprep.subr.mxu0 0.0
  %8399 = vmatpush1.msra.mxu0 %v8361
  %8400 = vmatprep.subr.mxu0 0.0
  %8401 = vmatpush1.msra.mxu0 %v8360
  %8402 = vmatprep.subr.mxu0 0.0
  %8403 = vmatpush1.msra.mxu0 %v8359
  %8404 = vmatprep.subr.mxu0 0.0
  %8405 = vmatpush1.msra.mxu0 %v8358
  %8406 = vmatprep.subr.mxu0 0.0
  %8407 = vmatpush2.msra.mxu0 0.0
  %8408 = vmatprep.subr.mxu0 0.0
  %8409 = vmatpush2.msra.mxu0 0.0
  %8410 = vmatprep.subr.mxu0 0.0
  %8411 = vmatpush2.msra.mxu0 0.0
  %8412 = vmatprep.subr.mxu0 0.0
  %8413 = vmatpush2.msra.mxu0 0.0
  %8414 = vmatprep.subr.mxu0 0.0
  %8415 = vmatpush2.msra.mxu0 0.0
  %8416 = vmatprep.subr.mxu0 0.0
  %8417 = vmatpush2.msra.mxu0 0.0
  %8418 = vmatprep.subr.mxu0 0.0
  %8419 = vmatpush2.msra.mxu0 0.0
  %8420 = vmatprep.subr.mxu0 0.0
  %8421 = vmatpush2.msra.mxu0 0.0
  %8422 = vmatprep.subr.mxu0 0.0
  %8423 = vmatpush2.msra.mxu0 0.0
  %8424 = vmatprep.subr.mxu0 0.0
  %8425 = vmatpush2.msra.mxu0 0.0
  %8426 = vmatprep.subr.mxu0 0.0
  %8427 = vmatpush2.msra.mxu0 0.0
  %8428 = vmatprep.subr.mxu0 0.0
  %8429 = vmatpush2.msra.mxu0 0.0
  %8430 = vmatprep.subr.mxu0 0.0
  %8431 = vmatpush2.msra.mxu0 0.0
  %8432 = vmatprep.subr.mxu0 0.0
  %8433 = vmatpush2.msra.mxu0 0.0
  %8434 = vmatprep.subr.mxu0 0.0
  %8435 = vmatpush2.msra.mxu0 0.0
  %8436 = vmatprep.subr.mxu0 0.0
  %8437 = vmatpush2.msra.mxu0 0.0
  %8438 = vmatprep.mubr.f32.mxu0 0.0
  %8439 = vmatmul.mubr.f32.gmra.mxu0 %v8356
  %v8440 = vpop.f32.mrf.mxu0
  %v8441 = vadd.f32 0.0, %v8440
  %v8442 = vpop.f32.mrf.mxu0
  %8443 = vdwg.mxu0
  %v8444 = vadd.f32 %v8354, %v8441
  %s8445 = scalar_lea.vmem [#allocation5], 23
  %v8446 = vld [vmem:[%s8445] ss:$30 sm:$0x3]
  %s8447 = scalar_lea.vmem [#allocation6], 2944
  %v8448 = vld [vmem:[%s8447] sm:$0xff]
  %v8449 = vld [vmem:[%s8447 + $0x8] sm:$0xff]
  %v8450 = vld [vmem:[%s8447 + $0x10] sm:$0xff]
  %v8451 = vld [vmem:[%s8447 + $0x18] sm:$0xff]
  %v8452 = vld [vmem:[%s8447 + $0x20] sm:$0xff]
  %v8453 = vld [vmem:[%s8447 + $0x28] sm:$0xff]
  %v8454 = vld [vmem:[%s8447 + $0x30] sm:$0xff]
  %v8455 = vld [vmem:[%s8447 + $0x38] sm:$0xff]
  %v8456 = vld [vmem:[%s8447 + $0x40] sm:$0xff]
  %v8457 = vld [vmem:[%s8447 + $0x48] sm:$0xff]
  %v8458 = vld [vmem:[%s8447 + $0x50] sm:$0xff]
  %v8459 = vld [vmem:[%s8447 + $0x58] sm:$0xff]
  %v8460 = vld [vmem:[%s8447 + $0x60] sm:$0xff]
  %v8461 = vld [vmem:[%s8447 + $0x68] sm:$0xff]
  %v8462 = vld [vmem:[%s8447 + $0x70] sm:$0xff]
  %v8463 = vld [vmem:[%s8447 + $0x78] sm:$0xff]
  %8464 = vmatprep.subr.mxu0 0.0
  %8465 = vmatpush1.msra.mxu0 %v8463
  %8466 = vmatprep.subr.mxu0 0.0
  %8467 = vmatpush1.msra.mxu0 %v8462
  %8468 = vmatprep.subr.mxu0 0.0
  %8469 = vmatpush1.msra.mxu0 %v8461
  %8470 = vmatprep.subr.mxu0 0.0
  %8471 = vmatpush1.msra.mxu0 %v8460
  %8472 = vmatprep.subr.mxu0 0.0
  %8473 = vmatpush1.msra.mxu0 %v8459
  %8474 = vmatprep.subr.mxu0 0.0
  %8475 = vmatpush1.msra.mxu0 %v8458
  %8476 = vmatprep.subr.mxu0 0.0
  %8477 = vmatpush1.msra.mxu0 %v8457
  %8478 = vmatprep.subr.mxu0 0.0
  %8479 = vmatpush1.msra.mxu0 %v8456
  %8480 = vmatprep.subr.mxu0 0.0
  %8481 = vmatpush1.msra.mxu0 %v8455
  %8482 = vmatprep.subr.mxu0 0.0
  %8483 = vmatpush1.msra.mxu0 %v8454
  %8484 = vmatprep.subr.mxu0 0.0
  %8485 = vmatpush1.msra.mxu0 %v8453
  %8486 = vmatprep.subr.mxu0 0.0
  %8487 = vmatpush1.msra.mxu0 %v8452
  %8488 = vmatprep.subr.mxu0 0.0
  %8489 = vmatpush1.msra.mxu0 %v8451
  %8490 = vmatprep.subr.mxu0 0.0
  %8491 = vmatpush1.msra.mxu0 %v8450
  %8492 = vmatprep.subr.mxu0 0.0
  %8493 = vmatpush1.msra.mxu0 %v8449
  %8494 = vmatprep.subr.mxu0 0.0
  %8495 = vmatpush1.msra.mxu0 %v8448
  %8496 = vmatprep.subr.mxu0 0.0
  %8497 = vmatpush2.msra.mxu0 0.0
  %8498 = vmatprep.subr.mxu0 0.0
  %8499 = vmatpush2.msra.mxu0 0.0
  %8500 = vmatprep.subr.mxu0 0.0
  %8501 = vmatpush2.msra.mxu0 0.0
  %8502 = vmatprep.subr.mxu0 0.0
  %8503 = vmatpush2.msra.mxu0 0.0
  %8504 = vmatprep.subr.mxu0 0.0
  %8505 = vmatpush2.msra.mxu0 0.0
  %8506 = vmatprep.subr.mxu0 0.0
  %8507 = vmatpush2.msra.mxu0 0.0
  %8508 = vmatprep.subr.mxu0 0.0
  %8509 = vmatpush2.msra.mxu0 0.0
  %8510 = vmatprep.subr.mxu0 0.0
  %8511 = vmatpush2.msra.mxu0 0.0
  %8512 = vmatprep.subr.mxu0 0.0
  %8513 = vmatpush2.msra.mxu0 0.0
  %8514 = vmatprep.subr.mxu0 0.0
  %8515 = vmatpush2.msra.mxu0 0.0
  %8516 = vmatprep.subr.mxu0 0.0
  %8517 = vmatpush2.msra.mxu0 0.0
  %8518 = vmatprep.subr.mxu0 0.0
  %8519 = vmatpush2.msra.mxu0 0.0
  %8520 = vmatprep.subr.mxu0 0.0
  %8521 = vmatpush2.msra.mxu0 0.0
  %8522 = vmatprep.subr.mxu0 0.0
  %8523 = vmatpush2.msra.mxu0 0.0
  %8524 = vmatprep.subr.mxu0 0.0
  %8525 = vmatpush2.msra.mxu0 0.0
  %8526 = vmatprep.subr.mxu0 0.0
  %8527 = vmatpush2.msra.mxu0 0.0
  %8528 = vmatprep.mubr.f32.mxu0 0.0
  %8529 = vmatmul.mubr.f32.gmra.mxu0 %v8446
  %v8530 = vpop.f32.mrf.mxu0
  %v8531 = vadd.f32 0.0, %v8530
  %v8532 = vpop.f32.mrf.mxu0
  %8533 = vdwg.mxu0
  %v8534 = vadd.f32 %v8444, %v8531
  %s8535 = scalar_lea.vmem [#allocation5], 24
  %v8536 = vld [vmem:[%s8535] ss:$30 sm:$0x3]
  %s8537 = scalar_lea.vmem [#allocation6], 3072
  %v8538 = vld [vmem:[%s8537] sm:$0xff]
  %v8539 = vld [vmem:[%s8537 + $0x8] sm:$0xff]
  %v8540 = vld [vmem:[%s8537 + $0x10] sm:$0xff]
  %v8541 = vld [vmem:[%s8537 + $0x18] sm:$0xff]
  %v8542 = vld [vmem:[%s8537 + $0x20] sm:$0xff]
  %v8543 = vld [vmem:[%s8537 + $0x28] sm:$0xff]
  %v8544 = vld [vmem:[%s8537 + $0x30] sm:$0xff]
  %v8545 = vld [vmem:[%s8537 + $0x38] sm:$0xff]
  %v8546 = vld [vmem:[%s8537 + $0x40] sm:$0xff]
  %v8547 = vld [vmem:[%s8537 + $0x48] sm:$0xff]
  %v8548 = vld [vmem:[%s8537 + $0x50] sm:$0xff]
  %v8549 = vld [vmem:[%s8537 + $0x58] sm:$0xff]
  %v8550 = vld [vmem:[%s8537 + $0x60] sm:$0xff]
  %v8551 = vld [vmem:[%s8537 + $0x68] sm:$0xff]
  %v8552 = vld [vmem:[%s8537 + $0x70] sm:$0xff]
  %v8553 = vld [vmem:[%s8537 + $0x78] sm:$0xff]
  %8554 = vmatprep.subr.mxu0 0.0
  %8555 = vmatpush1.msra.mxu0 %v8553
  %8556 = vmatprep.subr.mxu0 0.0
  %8557 = vmatpush1.msra.mxu0 %v8552
  %8558 = vmatprep.subr.mxu0 0.0
  %8559 = vmatpush1.msra.mxu0 %v8551
  %8560 = vmatprep.subr.mxu0 0.0
  %8561 = vmatpush1.msra.mxu0 %v8550
  %8562 = vmatprep.subr.mxu0 0.0
  %8563 = vmatpush1.msra.mxu0 %v8549
  %8564 = vmatprep.subr.mxu0 0.0
  %8565 = vmatpush1.msra.mxu0 %v8548
  %8566 = vmatprep.subr.mxu0 0.0
  %8567 = vmatpush1.msra.mxu0 %v8547
  %8568 = vmatprep.subr.mxu0 0.0
  %8569 = vmatpush1.msra.mxu0 %v8546
  %8570 = vmatprep.subr.mxu0 0.0
  %8571 = vmatpush1.msra.mxu0 %v8545
  %8572 = vmatprep.subr.mxu0 0.0
  %8573 = vmatpush1.msra.mxu0 %v8544
  %8574 = vmatprep.subr.mxu0 0.0
  %8575 = vmatpush1.msra.mxu0 %v8543
  %8576 = vmatprep.subr.mxu0 0.0
  %8577 = vmatpush1.msra.mxu0 %v8542
  %8578 = vmatprep.subr.mxu0 0.0
  %8579 = vmatpush1.msra.mxu0 %v8541
  %8580 = vmatprep.subr.mxu0 0.0
  %8581 = vmatpush1.msra.mxu0 %v8540
  %8582 = vmatprep.subr.mxu0 0.0
  %8583 = vmatpush1.msra.mxu0 %v8539
  %8584 = vmatprep.subr.mxu0 0.0
  %8585 = vmatpush1.msra.mxu0 %v8538
  %8586 = vmatprep.subr.mxu0 0.0
  %8587 = vmatpush2.msra.mxu0 0.0
  %8588 = vmatprep.subr.mxu0 0.0
  %8589 = vmatpush2.msra.mxu0 0.0
  %8590 = vmatprep.subr.mxu0 0.0
  %8591 = vmatpush2.msra.mxu0 0.0
  %8592 = vmatprep.subr.mxu0 0.0
  %8593 = vmatpush2.msra.mxu0 0.0
  %8594 = vmatprep.subr.mxu0 0.0
  %8595 = vmatpush2.msra.mxu0 0.0
  %8596 = vmatprep.subr.mxu0 0.0
  %8597 = vmatpush2.msra.mxu0 0.0
  %8598 = vmatprep.subr.mxu0 0.0
  %8599 = vmatpush2.msra.mxu0 0.0
  %8600 = vmatprep.subr.mxu0 0.0
  %8601 = vmatpush2.msra.mxu0 0.0
  %8602 = vmatprep.subr.mxu0 0.0
  %8603 = vmatpush2.msra.mxu0 0.0
  %8604 = vmatprep.subr.mxu0 0.0
  %8605 = vmatpush2.msra.mxu0 0.0
  %8606 = vmatprep.subr.mxu0 0.0
  %8607 = vmatpush2.msra.mxu0 0.0
  %8608 = vmatprep.subr.mxu0 0.0
  %8609 = vmatpush2.msra.mxu0 0.0
  %8610 = vmatprep.subr.mxu0 0.0
  %8611 = vmatpush2.msra.mxu0 0.0
  %8612 = vmatprep.subr.mxu0 0.0
  %8613 = vmatpush2.msra.mxu0 0.0
  %8614 = vmatprep.subr.mxu0 0.0
  %8615 = vmatpush2.msra.mxu0 0.0
  %8616 = vmatprep.subr.mxu0 0.0
  %8617 = vmatpush2.msra.mxu0 0.0
  %8618 = vmatprep.mubr.f32.mxu0 0.0
  %8619 = vmatmul.mubr.f32.gmra.mxu0 %v8536
  %v8620 = vpop.f32.mrf.mxu0
  %v8621 = vadd.f32 0.0, %v8620
  %v8622 = vpop.f32.mrf.mxu0
  %8623 = vdwg.mxu0
  %v8624 = vadd.f32 %v8534, %v8621
  %s8625 = scalar_lea.vmem [#allocation5], 25
  %v8626 = vld [vmem:[%s8625] ss:$30 sm:$0x3]
  %s8627 = scalar_lea.vmem [#allocation6], 3200
  %v8628 = vld [vmem:[%s8627] sm:$0xff]
  %v8629 = vld [vmem:[%s8627 + $0x8] sm:$0xff]
  %v8630 = vld [vmem:[%s8627 + $0x10] sm:$0xff]
  %v8631 = vld [vmem:[%s8627 + $0x18] sm:$0xff]
  %v8632 = vld [vmem:[%s8627 + $0x20] sm:$0xff]
  %v8633 = vld [vmem:[%s8627 + $0x28] sm:$0xff]
  %v8634 = vld [vmem:[%s8627 + $0x30] sm:$0xff]
  %v8635 = vld [vmem:[%s8627 + $0x38] sm:$0xff]
  %v8636 = vld [vmem:[%s8627 + $0x40] sm:$0xff]
  %v8637 = vld [vmem:[%s8627 + $0x48] sm:$0xff]
  %v8638 = vld [vmem:[%s8627 + $0x50] sm:$0xff]
  %v8639 = vld [vmem:[%s8627 + $0x58] sm:$0xff]
  %v8640 = vld [vmem:[%s8627 + $0x60] sm:$0xff]
  %v8641 = vld [vmem:[%s8627 + $0x68] sm:$0xff]
  %v8642 = vld [vmem:[%s8627 + $0x70] sm:$0xff]
  %v8643 = vld [vmem:[%s8627 + $0x78] sm:$0xff]
  %8644 = vmatprep.subr.mxu0 0.0
  %8645 = vmatpush1.msra.mxu0 %v8643
  %8646 = vmatprep.subr.mxu0 0.0
  %8647 = vmatpush1.msra.mxu0 %v8642
  %8648 = vmatprep.subr.mxu0 0.0
  %8649 = vmatpush1.msra.mxu0 %v8641
  %8650 = vmatprep.subr.mxu0 0.0
  %8651 = vmatpush1.msra.mxu0 %v8640
  %8652 = vmatprep.subr.mxu0 0.0
  %8653 = vmatpush1.msra.mxu0 %v8639
  %8654 = vmatprep.subr.mxu0 0.0
  %8655 = vmatpush1.msra.mxu0 %v8638
  %8656 = vmatprep.subr.mxu0 0.0
  %8657 = vmatpush1.msra.mxu0 %v8637
  %8658 = vmatprep.subr.mxu0 0.0
  %8659 = vmatpush1.msra.mxu0 %v8636
  %8660 = vmatprep.subr.mxu0 0.0
  %8661 = vmatpush1.msra.mxu0 %v8635
  %8662 = vmatprep.subr.mxu0 0.0
  %8663 = vmatpush1.msra.mxu0 %v8634
  %8664 = vmatprep.subr.mxu0 0.0
  %8665 = vmatpush1.msra.mxu0 %v8633
  %8666 = vmatprep.subr.mxu0 0.0
  %8667 = vmatpush1.msra.mxu0 %v8632
  %8668 = vmatprep.subr.mxu0 0.0
  %8669 = vmatpush1.msra.mxu0 %v8631
  %8670 = vmatprep.subr.mxu0 0.0
  %8671 = vmatpush1.msra.mxu0 %v8630
  %8672 = vmatprep.subr.mxu0 0.0
  %8673 = vmatpush1.msra.mxu0 %v8629
  %8674 = vmatprep.subr.mxu0 0.0
  %8675 = vmatpush1.msra.mxu0 %v8628
  %8676 = vmatprep.subr.mxu0 0.0
  %8677 = vmatpush2.msra.mxu0 0.0
  %8678 = vmatprep.subr.mxu0 0.0
  %8679 = vmatpush2.msra.mxu0 0.0
  %8680 = vmatprep.subr.mxu0 0.0
  %8681 = vmatpush2.msra.mxu0 0.0
  %8682 = vmatprep.subr.mxu0 0.0
  %8683 = vmatpush2.msra.mxu0 0.0
  %8684 = vmatprep.subr.mxu0 0.0
  %8685 = vmatpush2.msra.mxu0 0.0
  %8686 = vmatprep.subr.mxu0 0.0
  %8687 = vmatpush2.msra.mxu0 0.0
  %8688 = vmatprep.subr.mxu0 0.0
  %8689 = vmatpush2.msra.mxu0 0.0
  %8690 = vmatprep.subr.mxu0 0.0
  %8691 = vmatpush2.msra.mxu0 0.0
  %8692 = vmatprep.subr.mxu0 0.0
  %8693 = vmatpush2.msra.mxu0 0.0
  %8694 = vmatprep.subr.mxu0 0.0
  %8695 = vmatpush2.msra.mxu0 0.0
  %8696 = vmatprep.subr.mxu0 0.0
  %8697 = vmatpush2.msra.mxu0 0.0
  %8698 = vmatprep.subr.mxu0 0.0
  %8699 = vmatpush2.msra.mxu0 0.0
  %8700 = vmatprep.subr.mxu0 0.0
  %8701 = vmatpush2.msra.mxu0 0.0
  %8702 = vmatprep.subr.mxu0 0.0
  %8703 = vmatpush2.msra.mxu0 0.0
  %8704 = vmatprep.subr.mxu0 0.0
  %8705 = vmatpush2.msra.mxu0 0.0
  %8706 = vmatprep.subr.mxu0 0.0
  %8707 = vmatpush2.msra.mxu0 0.0
  %8708 = vmatprep.mubr.f32.mxu0 0.0
  %8709 = vmatmul.mubr.f32.gmra.mxu0 %v8626
  %v8710 = vpop.f32.mrf.mxu0
  %v8711 = vadd.f32 0.0, %v8710
  %v8712 = vpop.f32.mrf.mxu0
  %8713 = vdwg.mxu0
  %v8714 = vadd.f32 %v8624, %v8711
  %v8715 = vld [vmem:[%s7 + $0x4] sm:$0x1]
  %v8716 = vlaneseq
  %v8717 = vshrl.u32 %v8716, 7
  %v8718 = vsub.s32 0, %v8717
  %v8719 = vrot.slane %v8715, %v8718
  %v8720 = vadd.f32 %v8714, %v8719
  %v8721 = vmax.f32 %v8720, 0.0
  %v8722 = vld [vmem:[%s8] sm:$0xff]
  %v8723 = vld [vmem:[%s8 + $0x8] sm:$0xff]
  %v8724 = vld [vmem:[%s8 + $0x10] sm:$0xff]
  %v8725 = vld [vmem:[%s8 + $0x18] sm:$0xff]
  %v8726 = vld [vmem:[%s8 + $0x20] sm:$0xff]
  %v8727 = vld [vmem:[%s8 + $0x28] sm:$0xff]
  %v8728 = vld [vmem:[%s8 + $0x30] sm:$0xff]
  %v8729 = vld [vmem:[%s8 + $0x38] sm:$0xff]
  %v8730 = vld [vmem:[%s8 + $0x40] sm:$0xff]
  %v8731 = vld [vmem:[%s8 + $0x48] sm:$0xff]
  %v8732 = vld [vmem:[%s8 + $0x50] sm:$0xff]
  %v8733 = vld [vmem:[%s8 + $0x58] sm:$0xff]
  %v8734 = vld [vmem:[%s8 + $0x60] sm:$0xff]
  %v8735 = vld [vmem:[%s8 + $0x68] sm:$0xff]
  %v8736 = vld [vmem:[%s8 + $0x70] sm:$0xff]
  %v8737 = vld [vmem:[%s8 + $0x78] sm:$0xff]
  %v8738 = vld [vmem:[%s7 + $0x5] sm:$0x1]
  %v8739 = vlaneseq
  %v8740 = vshrl.u32 %v8739, 7
  %v8741 = vsub.s32 0, %v8740
  %v8742 = vrot.slane %v8738, %v8741
  %8743 = vmatprep.subr.mxu0 0.0
  %8744 = vmatpush1.msra.mxu0 %v8737
  %8745 = vmatprep.subr.mxu0 0.0
  %8746 = vmatpush1.msra.mxu0 %v8736
  %8747 = vmatprep.subr.mxu0 0.0
  %8748 = vmatpush1.msra.mxu0 %v8735
  %8749 = vmatprep.subr.mxu0 0.0
  %8750 = vmatpush1.msra.mxu0 %v8734
  %8751 = vmatprep.subr.mxu0 0.0
  %8752 = vmatpush1.msra.mxu0 %v8733
  %8753 = vmatprep.subr.mxu0 0.0
  %8754 = vmatpush1.msra.mxu0 %v8732
  %8755 = vmatprep.subr.mxu0 0.0
  %8756 = vmatpush1.msra.mxu0 %v8731
  %8757 = vmatprep.subr.mxu0 0.0
  %8758 = vmatpush1.msra.mxu0 %v8730
  %8759 = vmatprep.subr.mxu0 0.0
  %8760 = vmatpush1.msra.mxu0 %v8729
  %8761 = vmatprep.subr.mxu0 0.0
  %8762 = vmatpush1.msra.mxu0 %v8728
  %8763 = vmatprep.subr.mxu0 0.0
  %8764 = vmatpush1.msra.mxu0 %v8727
  %8765 = vmatprep.subr.mxu0 0.0
  %8766 = vmatpush1.msra.mxu0 %v8726
  %8767 = vmatprep.subr.mxu0 0.0
  %8768 = vmatpush1.msra.mxu0 %v8725
  %8769 = vmatprep.subr.mxu0 0.0
  %8770 = vmatpush1.msra.mxu0 %v8724
  %8771 = vmatprep.subr.mxu0 0.0
  %8772 = vmatpush1.msra.mxu0 %v8723
  %8773 = vmatprep.subr.mxu0 0.0
  %8774 = vmatpush1.msra.mxu0 %v8722
  %8775 = vmatprep.subr.mxu0 0.0
  %8776 = vmatpush2.msra.mxu0 0.0
  %8777 = vmatprep.subr.mxu0 0.0
  %8778 = vmatpush2.msra.mxu0 0.0
  %8779 = vmatprep.subr.mxu0 0.0
  %8780 = vmatpush2.msra.mxu0 0.0
  %8781 = vmatprep.subr.mxu0 0.0
  %8782 = vmatpush2.msra.mxu0 0.0
  %8783 = vmatprep.subr.mxu0 0.0
  %8784 = vmatpush2.msra.mxu0 0.0
  %8785 = vmatprep.subr.mxu0 0.0
  %8786 = vmatpush2.msra.mxu0 0.0
  %8787 = vmatprep.subr.mxu0 0.0
  %8788 = vmatpush2.msra.mxu0 0.0
  %8789 = vmatprep.subr.mxu0 0.0
  %8790 = vmatpush2.msra.mxu0 0.0
  %8791 = vmatprep.subr.mxu0 0.0
  %8792 = vmatpush2.msra.mxu0 0.0
  %8793 = vmatprep.subr.mxu0 0.0
  %8794 = vmatpush2.msra.mxu0 0.0
  %8795 = vmatprep.subr.mxu0 0.0
  %8796 = vmatpush2.msra.mxu0 0.0
  %8797 = vmatprep.subr.mxu0 0.0
  %8798 = vmatpush2.msra.mxu0 0.0
  %8799 = vmatprep.subr.mxu0 0.0
  %8800 = vmatpush2.msra.mxu0 0.0
  %8801 = vmatprep.subr.mxu0 0.0
  %8802 = vmatpush2.msra.mxu0 0.0
  %8803 = vmatprep.subr.mxu0 0.0
  %8804 = vmatpush2.msra.mxu0 0.0
  %8805 = vmatprep.subr.mxu0 0.0
  %8806 = vmatpush2.msra.mxu0 0.0
  %8807 = vmatprep.mubr.f32.mxu0 0.0
  %8808 = vmatmul.mubr.f32.gmra.mxu0 %v8721
  %v8809 = vpop.f32.mrf.mxu0
  %v8810 = vadd.f32 %v8742, %v8809
  %v8811 = vpop.f32.mrf.mxu0
  %8812 = vdwg.mxu0
  %v8813 = vmax.f32 %v8810, 0.0
  %v8814 = vld [vmem:[%s8 + $0x80] sm:$0xff]
  %v8815 = vld [vmem:[%s8 + $0x88] sm:$0x3]
  %v8816 = vld [vmem:[%s8 + $0x8a] sm:$0x1f]
  %v8817 = vld [vmem:[%s1] sm:$0x3]
  %v8818 = vld [vmem:[%s7 + $0x6] sm:$0x1]
  %v8819 = vlaneseq
  %v8820 = vshrl.u32 %v8819, 7
  %v8821 = vsub.s32 0, %v8820
  %v8822 = vrot.slane %v8818, %v8821
  %vm8823 = vcmask 80896
  %v8825 = vsel %vm8823, %v8817, 0
  %v8828 = vsel %vm1160, %v8815, 0
  %8830 = vmatprep.subr.mxu0 0.0
  %8831 = vmatpush1.msra.mxu0 0.0
  %8832 = vmatprep.subr.mxu0 0.0
  %8833 = vmatpush1.msra.mxu0 0.0
  %8834 = vmatprep.subr.mxu0 0.0
  %8835 = vmatpush1.msra.mxu0 0.0
  %8836 = vmatprep.subr.mxu0 0.0
  %8837 = vmatpush1.msra.mxu0 0.0
  %8838 = vmatprep.subr.mxu0 0.0
  %8839 = vmatpush1.msra.mxu0 0.0
  %8840 = vmatprep.subr.mxu0 0.0
  %8841 = vmatpush1.msra.mxu0 0.0
  %8842 = vmatprep.subr.mxu0 0.0
  %8843 = vmatpush1.msra.mxu0 0.0
  %8844 = vmatprep.subr.mxu0 0.0
  %8845 = vmatpush1.msra.mxu0 0.0
  %8846 = vmatprep.subr.mxu0 0.0
  %8847 = vmatpush1.msra.mxu0 0.0
  %8848 = vmatprep.subr.mxu0 0.0
  %8849 = vmatpush1.msra.mxu0 0.0
  %8850 = vmatprep.subr.mxu0 0.0
  %8851 = vmatpush1.msra.mxu0 0.0
  %8852 = vmatprep.subr.mxu0 0.0
  %8853 = vmatpush1.msra.mxu0 0.0
  %8854 = vmatprep.subr.mxu0 0.0
  %8855 = vmatpush1.msra.mxu0 0.0
  %8856 = vmatprep.subr.mxu0 0.0
  %8857 = vmatpush1.msra.mxu0 0.0
  %8858 = vmatprep.subr.mxu0 0.0
  %8859 = vmatpush1.msra.mxu0 %v8828
  %8860 = vmatprep.subr.mxu0 0.0
  %8861 = vmatpush1.msra.mxu0 %v8814
  %8862 = vmatprep.subr.mxu0 0.0
  %8863 = vmatpush2.msra.mxu0 0.0
  %8864 = vmatprep.subr.mxu0 0.0
  %8865 = vmatpush2.msra.mxu0 0.0
  %8866 = vmatprep.subr.mxu0 0.0
  %8867 = vmatpush2.msra.mxu0 0.0
  %8868 = vmatprep.subr.mxu0 0.0
  %8869 = vmatpush2.msra.mxu0 0.0
  %8870 = vmatprep.subr.mxu0 0.0
  %8871 = vmatpush2.msra.mxu0 0.0
  %8872 = vmatprep.subr.mxu0 0.0
  %8873 = vmatpush2.msra.mxu0 0.0
  %8874 = vmatprep.subr.mxu0 0.0
  %8875 = vmatpush2.msra.mxu0 0.0
  %8876 = vmatprep.subr.mxu0 0.0
  %8877 = vmatpush2.msra.mxu0 0.0
  %8878 = vmatprep.subr.mxu0 0.0
  %8879 = vmatpush2.msra.mxu0 0.0
  %8880 = vmatprep.subr.mxu0 0.0
  %8881 = vmatpush2.msra.mxu0 0.0
  %8882 = vmatprep.subr.mxu0 0.0
  %8883 = vmatpush2.msra.mxu0 0.0
  %8884 = vmatprep.subr.mxu0 0.0
  %8885 = vmatpush2.msra.mxu0 0.0
  %8886 = vmatprep.subr.mxu0 0.0
  %8887 = vmatpush2.msra.mxu0 0.0
  %8888 = vmatprep.subr.mxu0 0.0
  %8889 = vmatpush2.msra.mxu0 0.0
  %8890 = vmatprep.subr.mxu0 0.0
  %8891 = vmatpush2.msra.mxu0 0.0
  %8892 = vmatprep.subr.mxu0 0.0
  %8893 = vmatpush2.msra.mxu0 0.0
  %8894 = vmatprep.mubr.f32.mxu0 0.0
  %8895 = vmatmul.mubr.f32.gmra.mxu0 %v8825
  %v8896 = vpop.f32.mrf.mxu0
  %v8897 = vadd.f32 %v8822, %v8896
  %v8898 = vpop.f32.mrf.mxu0
  %8899 = vdwg.mxu0
  %v8900 = vmax.f32 %v8897, 0.0
  %v8901 = vld [vmem:[%s7 + $0x7] sm:$0x1]
  %v8902 = vlaneseq
  %v8903 = vshrl.u32 %v8902, 7
  %v8904 = vsub.s32 0, %v8903
  %v8905 = vrot.slane %v8901, %v8904
  %vm8906 = vcmask 39936
  %v8908 = vsel %vm8906, %v8900, 0
  %vm8910 = vcmask 1044480
  %v8912 = vsel %vm8910, %v8816, 0
  %8914 = vmatprep.subr.mxu0 0.0
  %8915 = vmatpush1.msra.mxu0 0.0
  %8916 = vmatprep.subr.mxu0 0.0
  %8917 = vmatpush1.msra.mxu0 0.0
  %8918 = vmatprep.subr.mxu0 0.0
  %8919 = vmatpush1.msra.mxu0 0.0
  %8920 = vmatprep.subr.mxu0 0.0
  %8921 = vmatpush1.msra.mxu0 0.0
  %8922 = vmatprep.subr.mxu0 0.0
  %8923 = vmatpush1.msra.mxu0 0.0
  %8924 = vmatprep.subr.mxu0 0.0
  %8925 = vmatpush1.msra.mxu0 0.0
  %8926 = vmatprep.subr.mxu0 0.0
  %8927 = vmatpush1.msra.mxu0 0.0
  %8928 = vmatprep.subr.mxu0 0.0
  %8929 = vmatpush1.msra.mxu0 0.0
  %8930 = vmatprep.subr.mxu0 0.0
  %8931 = vmatpush1.msra.mxu0 0.0
  %8932 = vmatprep.subr.mxu0 0.0
  %8933 = vmatpush1.msra.mxu0 0.0
  %8934 = vmatprep.subr.mxu0 0.0
  %8935 = vmatpush1.msra.mxu0 0.0
  %8936 = vmatprep.subr.mxu0 0.0
  %8937 = vmatpush1.msra.mxu0 0.0
  %8938 = vmatprep.subr.mxu0 0.0
  %8939 = vmatpush1.msra.mxu0 0.0
  %8940 = vmatprep.subr.mxu0 0.0
  %8941 = vmatpush1.msra.mxu0 0.0
  %8942 = vmatprep.subr.mxu0 0.0
  %8943 = vmatpush1.msra.mxu0 0.0
  %8944 = vmatprep.subr.mxu0 0.0
  %8945 = vmatpush1.msra.mxu0 %v8912
  %8946 = vmatprep.subr.mxu0 0.0
  %8947 = vmatpush2.msra.mxu0 0.0
  %8948 = vmatprep.subr.mxu0 0.0
  %8949 = vmatpush2.msra.mxu0 0.0
  %8950 = vmatprep.subr.mxu0 0.0
  %8951 = vmatpush2.msra.mxu0 0.0
  %8952 = vmatprep.subr.mxu0 0.0
  %8953 = vmatpush2.msra.mxu0 0.0
  %8954 = vmatprep.subr.mxu0 0.0
  %8955 = vmatpush2.msra.mxu0 0.0
  %8956 = vmatprep.subr.mxu0 0.0
  %8957 = vmatpush2.msra.mxu0 0.0
  %8958 = vmatprep.subr.mxu0 0.0
  %8959 = vmatpush2.msra.mxu0 0.0
  %8960 = vmatprep.subr.mxu0 0.0
  %8961 = vmatpush2.msra.mxu0 0.0
  %8962 = vmatprep.subr.mxu0 0.0
  %8963 = vmatpush2.msra.mxu0 0.0
  %8964 = vmatprep.subr.mxu0 0.0
  %8965 = vmatpush2.msra.mxu0 0.0
  %8966 = vmatprep.subr.mxu0 0.0
  %8967 = vmatpush2.msra.mxu0 0.0
  %8968 = vmatprep.subr.mxu0 0.0
  %8969 = vmatpush2.msra.mxu0 0.0
  %8970 = vmatprep.subr.mxu0 0.0
  %8971 = vmatpush2.msra.mxu0 0.0
  %8972 = vmatprep.subr.mxu0 0.0
  %8973 = vmatpush2.msra.mxu0 0.0
  %8974 = vmatprep.subr.mxu0 0.0
  %8975 = vmatpush2.msra.mxu0 0.0
  %8976 = vmatprep.subr.mxu0 0.0
  %8977 = vmatpush2.msra.mxu0 0.0
  %8978 = vmatprep.mubr.f32.mxu0 0.0
  %8979 = vmatmul.mubr.f32.gmra.mxu0 %v8908
  %v8980 = vpop.f32.mrf.mxu0
  %v8981 = vadd.f32 %v8905, %v8980
  %v8982 = vpop.f32.mrf.mxu0
  %8983 = vdwg.mxu0
  %v8984 = vmax.f32 %v8981, 0.0
  %v8985 = vld [vmem:[%s8 + $0x8f] sm:$0xff]
  %v8986 = vld [vmem:[%s8 + $0x97] sm:$0x3]
  %v8987 = vld [vmem:[%s8 + $0x99] sm:$0x1f]
  %v8989 = vsel %vm8906, %v8984, 0
  %v8992 = vsel %vm8910, %v8987, 0
  %8994 = vmatprep.subr.mxu0 0.0
  %8995 = vmatpush1.msra.mxu0 0.0
  %8996 = vmatprep.subr.mxu0 0.0
  %8997 = vmatpush1.msra.mxu0 0.0
  %8998 = vmatprep.subr.mxu0 0.0
  %8999 = vmatpush1.msra.mxu0 0.0
  %9000 = vmatprep.subr.mxu0 0.0
  %9001 = vmatpush1.msra.mxu0 0.0
  %9002 = vmatprep.subr.mxu0 0.0
  %9003 = vmatpush1.msra.mxu0 0.0
  %9004 = vmatprep.subr.mxu0 0.0
  %9005 = vmatpush1.msra.mxu0 0.0
  %9006 = vmatprep.subr.mxu0 0.0
  %9007 = vmatpush1.msra.mxu0 0.0
  %9008 = vmatprep.subr.mxu0 0.0
  %9009 = vmatpush1.msra.mxu0 0.0
  %9010 = vmatprep.subr.mxu0 0.0
  %9011 = vmatpush1.msra.mxu0 0.0
  %9012 = vmatprep.subr.mxu0 0.0
  %9013 = vmatpush1.msra.mxu0 0.0
  %9014 = vmatprep.subr.mxu0 0.0
  %9015 = vmatpush1.msra.mxu0 0.0
  %9016 = vmatprep.subr.mxu0 0.0
  %9017 = vmatpush1.msra.mxu0 0.0
  %9018 = vmatprep.subr.mxu0 0.0
  %9019 = vmatpush1.msra.mxu0 0.0
  %9020 = vmatprep.subr.mxu0 0.0
  %9021 = vmatpush1.msra.mxu0 0.0
  %9022 = vmatprep.subr.mxu0 0.0
  %9023 = vmatpush1.msra.mxu0 0.0
  %9024 = vmatprep.subr.mxu0 0.0
  %9025 = vmatpush1.msra.mxu0 %v8992
  %9026 = vmatprep.subr.mxu0 0.0
  %9027 = vmatpush2.msra.mxu0 0.0
  %9028 = vmatprep.subr.mxu0 0.0
  %9029 = vmatpush2.msra.mxu0 0.0
  %9030 = vmatprep.subr.mxu0 0.0
  %9031 = vmatpush2.msra.mxu0 0.0
  %9032 = vmatprep.subr.mxu0 0.0
  %9033 = vmatpush2.msra.mxu0 0.0
  %9034 = vmatprep.subr.mxu0 0.0
  %9035 = vmatpush2.msra.mxu0 0.0
  %9036 = vmatprep.subr.mxu0 0.0
  %9037 = vmatpush2.msra.mxu0 0.0
  %9038 = vmatprep.subr.mxu0 0.0
  %9039 = vmatpush2.msra.mxu0 0.0
  %9040 = vmatprep.subr.mxu0 0.0
  %9041 = vmatpush2.msra.mxu0 0.0
  %9042 = vmatprep.subr.mxu0 0.0
  %9043 = vmatpush2.msra.mxu0 0.0
  %9044 = vmatprep.subr.mxu0 0.0
  %9045 = vmatpush2.msra.mxu0 0.0
  %9046 = vmatprep.subr.mxu0 0.0
  %9047 = vmatpush2.msra.mxu0 0.0
  %9048 = vmatprep.subr.mxu0 0.0
  %9049 = vmatpush2.msra.mxu0 0.0
  %9050 = vmatprep.subr.mxu0 0.0
  %9051 = vmatpush2.msra.mxu0 0.0
  %9052 = vmatprep.subr.mxu0 0.0
  %9053 = vmatpush2.msra.mxu0 0.0
  %9054 = vmatprep.subr.mxu0 0.0
  %9055 = vmatpush2.msra.mxu0 0.0
  %9056 = vmatprep.subr.mxu0 0.0
  %9057 = vmatpush2.msra.mxu0 0.0
  %9058 = vmatprep.mubr.f32.mxu0 0.0
  %9059 = vmatmul.mubr.f32.gmra.mxu0 %v8989
  %v9060 = vpop.f32.mrf.mxu0
  %v9061 = vadd.f32 0.0, %v9060
  %v9062 = vpop.f32.mrf.mxu0
  %9063 = vdwg.mxu0
  %v9065 = vsel %vm8823, %v8813, 0
  %v9068 = vsel %vm1160, %v8986, 0
  %9070 = vmatprep.subr.mxu0 0.0
  %9071 = vmatpush1.msra.mxu0 0.0
  %9072 = vmatprep.subr.mxu0 0.0
  %9073 = vmatpush1.msra.mxu0 0.0
  %9074 = vmatprep.subr.mxu0 0.0
  %9075 = vmatpush1.msra.mxu0 0.0
  %9076 = vmatprep.subr.mxu0 0.0
  %9077 = vmatpush1.msra.mxu0 0.0
  %9078 = vmatprep.subr.mxu0 0.0
  %9079 = vmatpush1.msra.mxu0 0.0
  %9080 = vmatprep.subr.mxu0 0.0
  %9081 = vmatpush1.msra.mxu0 0.0
  %9082 = vmatprep.subr.mxu0 0.0
  %9083 = vmatpush1.msra.mxu0 0.0
  %9084 = vmatprep.subr.mxu0 0.0
  %9085 = vmatpush1.msra.mxu0 0.0
  %9086 = vmatprep.subr.mxu0 0.0
  %9087 = vmatpush1.msra.mxu0 0.0
  %9088 = vmatprep.subr.mxu0 0.0
  %9089 = vmatpush1.msra.mxu0 0.0
  %9090 = vmatprep.subr.mxu0 0.0
  %9091 = vmatpush1.msra.mxu0 0.0
  %9092 = vmatprep.subr.mxu0 0.0
  %9093 = vmatpush1.msra.mxu0 0.0
  %9094 = vmatprep.subr.mxu0 0.0
  %9095 = vmatpush1.msra.mxu0 0.0
  %9096 = vmatprep.subr.mxu0 0.0
  %9097 = vmatpush1.msra.mxu0 0.0
  %9098 = vmatprep.subr.mxu0 0.0
  %9099 = vmatpush1.msra.mxu0 %v9068
  %9100 = vmatprep.subr.mxu0 0.0
  %9101 = vmatpush1.msra.mxu0 %v8985
  %9102 = vmatprep.subr.mxu0 0.0
  %9103 = vmatpush2.msra.mxu0 0.0
  %9104 = vmatprep.subr.mxu0 0.0
  %9105 = vmatpush2.msra.mxu0 0.0
  %9106 = vmatprep.subr.mxu0 0.0
  %9107 = vmatpush2.msra.mxu0 0.0
  %9108 = vmatprep.subr.mxu0 0.0
  %9109 = vmatpush2.msra.mxu0 0.0
  %9110 = vmatprep.subr.mxu0 0.0
  %9111 = vmatpush2.msra.mxu0 0.0
  %9112 = vmatprep.subr.mxu0 0.0
  %9113 = vmatpush2.msra.mxu0 0.0
  %9114 = vmatprep.subr.mxu0 0.0
  %9115 = vmatpush2.msra.mxu0 0.0
  %9116 = vmatprep.subr.mxu0 0.0
  %9117 = vmatpush2.msra.mxu0 0.0
  %9118 = vmatprep.subr.mxu0 0.0
  %9119 = vmatpush2.msra.mxu0 0.0
  %9120 = vmatprep.subr.mxu0 0.0
  %9121 = vmatpush2.msra.mxu0 0.0
  %9122 = vmatprep.subr.mxu0 0.0
  %9123 = vmatpush2.msra.mxu0 0.0
  %9124 = vmatprep.subr.mxu0 0.0
  %9125 = vmatpush2.msra.mxu0 0.0
  %9126 = vmatprep.subr.mxu0 0.0
  %9127 = vmatpush2.msra.mxu0 0.0
  %9128 = vmatprep.subr.mxu0 0.0
  %9129 = vmatpush2.msra.mxu0 0.0
  %9130 = vmatprep.subr.mxu0 0.0
  %9131 = vmatpush2.msra.mxu0 0.0
  %9132 = vmatprep.subr.mxu0 0.0
  %9133 = vmatpush2.msra.mxu0 0.0
  %9134 = vmatprep.mubr.f32.mxu0 0.0
  %9135 = vmatmul.mubr.f32.gmra.mxu0 %v9065
  %v9136 = vpop.f32.mrf.mxu0
  %v9137 = vadd.f32 %v9061, %v9136
  %v9138 = vpop.f32.mrf.mxu0
  %9139 = vdwg.mxu0
  %v9140 = vld [vmem:[%s7 + $0x8] sm:$0x1]
  %v9141 = vlaneseq
  %v9142 = vshrl.u32 %v9141, 7
  %v9143 = vsub.s32 0, %v9142
  %v9144 = vrot.slane %v9140, %v9143
  %v9145 = vadd.f32 %v9137, %v9144
  %v9146 = vand.u32 2147483647, %v9145
  %v9147 = vsub.f32 0.0, %v9146
  %v9148 = vmul.f32 %v9147, 1.442695
  %v9149 = vpow.pop %v9148
  %v9150 = vadd.f32 %v9149, 1.0
  %v9151 = vrcp.pop %v9150
  %v9152 = vmul.f32 1.0, %v9151
  %vm9153 = vcmp.ge.f32.partialorder %v9145, 0.0
  %v9154 = vsub.f32 1.0, %v9152
  %v9155 = vsel %vm9153, %v9152, %v9154
  %vm9156 = vcmask 1024
  %9157 = vst.msk [vmem:[%s9] sm:$0x3] %vm9156, %v9155
  // Predicated region
  $region68: #{forward.1} parent=0 // pred_check
    _
  $region69: #{forward.1} parent=0 // pred_check_branch
    %9159 = sbr.rel (0) target = $region71
  $region70: #{forward.1} parent=0 // pred_region
    _
  $region71: #{forward.1} parent=0 // pred_fallthru
    _
  // Predicated region
  $region72: #{forward.1} parent=0 // pred_check
    _
  $region73: #{forward.1} parent=0 // pred_check_branch
    %9161 = sbr.rel (0) target = $region75
  $region74: #{forward.1} parent=0 // pred_region
    _
  $region75: #{forward.1} parent=0 // pred_fallthru
    _
  %9162 = vsyncmov [#allocation7]
  %s9163 = vpop.sfrf %9162
  %p9164 = scmp.eq.s32.totalorder %s9163, 0
  %p9165 = pneg %p9164
  %9167 = shalt.err (%p9165)

</llo_original>
